<compile_context>
chip_gen: v6e
topology: v6e:2x2x1
jax: 0.10.0
libtpu: 0.0.40
codegen_flags: <defaults>
</compile_context>

<pallas_src>
import math
from functools import partial

import jax
import jax.numpy as jnp
from jax.experimental import pallas as pl
from jax.experimental.pallas import tpu as pltpu

EPS = 1e-5                      # nn.LayerNorm default eps used by DecoderLayer
_SQRT1_2 = 1.0 / math.sqrt(2.0)
_NEG_BIG = -1e30

_W_ORDER = (
    'wq_sa', 'bq_sa', 'wkv_sa', 'bkv_sa', 'wo_sa', 'bo_sa',
    'wq_ca', 'bq_ca', 'wkv_ca', 'bkv_ca', 'wo_ca', 'bo_ca',
    'nq_g', 'nq_b', 'nc_g', 'nc_b', 'n1_g', 'n1_b', 'n2_g', 'n2_b',
    'w1', 'b1', 'w2', 'b2',
)


# ----------------------------------------------------------------------------- in-kernel helpers

def _ln(x, g, b):
    """LayerNorm over last dim, f32 math, biased variance (matches nn.LayerNorm)."""
    m = jnp.mean(x, axis=-1, keepdims=True)
    v = jnp.mean((x - m) ** 2, axis=-1, keepdims=True)
    return (x - m) * jax.lax.rsqrt(v + EPS) * g + b


# ----------------------------------------------------------------------------- fused decoder kernel

def _make_decoder_kernel(nhead, D, has_q_mask, has_c_mask, slab_pad):
    """One fused kernel for the whole decoder stack, specialized on static flags."""
    dh = D // nhead

    def kernel(*refs):
        it = iter(refs)
        q_ref, c_ref, m_ref = next(it), next(it), next(it)
        qmask_ref = next(it) if has_q_mask else None
        cmask_ref = next(it) if has_c_mask else None
        (wq_sa, bq_sa, wkv_sa, bkv_sa, wo_sa, bo_sa,
         wq_ca, bq_ca, wkv_ca, bkv_ca, wo_ca, bo_ca,
         nq_g, nq_b, nc_g, nc_b, n1_g, n1_b, n2_g, n2_b,
         w1, b1, w2, b2) = (next(it) for _ in range(24))
        fg_ref, fb_ref = next(it), next(it)
        out_q_ref = next(it)
        attw_ref = next(it)
        q_scr = next(it)
        c_scr = next(it)

        l = pl.program_id(1)
        n_layers = pl.num_programs(1)
        is_first = l == 0
        is_last = l == n_layers - 1

        @pl.when(is_first)
        def _():
            q_scr[...] = q_ref[0].astype(jnp.float32)
            c_scr[...] = c_ref[0].astype(jnp.float32)

        query = q_scr[...]                       # (Tq, D) running query stream
        content = c_scr[...]                     # (Tc, D) running content stream
        memory = m_ref[0].astype(jnp.float32)    # (Tm, D) encoder memory (resident)

        query_norm = _ln(query, nq_g[0], nq_b[0])
        content_norm = _ln(content, nc_g[0], nc_b[0])

        # ---- shared K/V projections (hoisted: used by both streams) -----------
        kv_sa = jnp.dot(content_norm, wkv_sa[0],
                        preferred_element_type=jnp.float32) + bkv_sa[0]   # (Tc, 2D)
        kv_ca = jnp.dot(memory, wkv_ca[0],
                        preferred_element_type=jnp.float32) + bkv_ca[0]   # (Tm, 2D)
        k_sa, v_sa = kv_sa[:, :D], kv_sa[:, D:]
        k_ca, v_ca = kv_ca[:, :D], kv_ca[:, D:]

        def attn(xq_norm, k, v, mask, wq, bq, wo, bo, want_w):
            # 1/sqrt(dh) is folded into wq/bq by the wrapper.
            q = jnp.dot(xq_norm, wq, preferred_element_type=jnp.float32) + bq   # (Tq, D)
            heads = []
            p_sum = None
            for h in range(nhead):
                hs = slice(h * dh, (h + 1) * dh)
                s = jax.lax.dot_general(
                    q[:, hs], k[:, hs],
                    dimension_numbers=(((1,), (1,)), ((), ())),
                    preferred_element_type=jnp.float32)                   # (Tq, Tk)
                if mask is not None:
                    s = s + mask
                s = s - jnp.max(s, axis=-1, keepdims=True)
                e = jnp.exp(s)
                p = e * pl.reciprocal(jnp.sum(e, axis=-1, keepdims=True), approx=True)
                heads.append(jnp.dot(p, v[:, hs], preferred_element_type=jnp.float32))
                if want_w:
                    p_sum = p if p_sum is None else p_sum + p
            o = jnp.concatenate(heads, axis=-1)                           # (Tq, D)
            out = jnp.dot(o, wo, preferred_element_type=jnp.float32) + bo
            attw = p_sum * (1.0 / nhead) if want_w else None
            return out, attw

        def ffn(x):
            xn = _ln(x, n2_g[0], n2_b[0])
            h = jnp.dot(xn, w1[0], preferred_element_type=jnp.float32) + b1[0]
            h = 0.5 * h * (1.0 + jax.lax.erf(h * _SQRT1_2))   # exact (erf) GELU = F.gelu
            return jnp.dot(h, w2[0], preferred_element_type=jnp.float32) + b2[0]

        def stream(tgt, tgt_norm, mask, want_w):
            sa_out, sa_w = attn(tgt_norm, k_sa, v_sa, mask,
                                wq_sa[0], bq_sa[0], wo_sa[0], bo_sa[0], want_w)
            tgt = tgt + sa_out                                 # dropout1 = identity (eval)
            ca_out, ca_w = attn(_ln(tgt, n1_g[0], n1_b[0]), k_ca, v_ca, None,
                                wq_ca[0], bq_ca[0], wo_ca[0], bo_ca[0], want_w)
            tgt = tgt + ca_out                                 # dropout2 = identity
            tgt = tgt + ffn(tgt)                               # dropout / dropout3 = identity
            return tgt, sa_w, ca_w

        q_mask = qmask_ref[0].astype(jnp.float32) if has_q_mask else None
        new_q, sa_w, ca_w = stream(query, query_norm, q_mask, True)
        q_scr[...] = new_q

        @pl.when(l < n_layers - 1)
        def _():   # update_content = not last
            c_mask = cmask_ref[0].astype(jnp.float32) if has_c_mask else None
            new_c, _, _ = stream(content, content_norm, c_mask, False)
            c_scr[...] = new_c

        @pl.when(is_last)
        def _():
            out_q_ref[0] = _ln(new_q, fg_ref[...], fb_ref[...]).astype(out_q_ref.dtype)
            # lane-dense packed attention-weight slab: [sa (Tq,Tc) | ca (Tq,Tm) | 0-pad]
            parts = [sa_w, ca_w]
            if slab_pad > 0:
                parts.append(jnp.zeros((sa_w.shape[0], slab_pad), jnp.float32))
            attw_ref[0] = jnp.concatenate(parts, axis=-1)

    return kernel


# ----------------------------------------------------------------------------- wrapper helpers

def _layer_w_spec(w):
    """Per-layer-indexed weight: leading L axis, rest full-extent."""
    nd = w.ndim
    return pl.BlockSpec((1,) + w.shape[1:],
                        lambda b, l, _nd=nd: (l,) + (0,) * (_nd - 1))


def _const_w_spec(w):
    nd = w.ndim
    return pl.BlockSpec(w.shape, lambda b, l, _nd=nd: (0,) * _nd)


def _stack_params(layer_params, nhead):
    """Fuse per-layer MHA weights (fold 1/sqrt(dh) into Wq, concat Wk|Wv) and stack over L."""
    D = layer_params[0]['w1'].shape[0]
    dh = D // nhead
    scale = 1.0 / math.sqrt(dh)

    def prep(p):
        sa, ca = p['self_attn'], p['cross_attn']
        return {
            'wq_sa': sa['wq'] * scale, 'bq_sa': sa['bq'] * scale,
            'wkv_sa': jnp.concatenate([sa['wk'], sa['wv']], axis=1),
            'bkv_sa': jnp.concatenate([sa['bk'], sa['bv']], axis=1),
            'wo_sa': sa['wo'], 'bo_sa': sa['bo'],
            'wq_ca': ca['wq'] * scale, 'bq_ca': ca['bq'] * scale,
            'wkv_ca': jnp.concatenate([ca['wk'], ca['wv']], axis=1),
            'bkv_ca': jnp.concatenate([ca['bk'], ca['bv']], axis=1),
            'wo_ca': ca['wo'], 'bo_ca': ca['bo'],
            'nq_g': p['norm_q'][0], 'nq_b': p['norm_q'][1],
            'nc_g': p['norm_c'][0], 'nc_b': p['norm_c'][1],
            'n1_g': p['norm1'][0], 'n1_b': p['norm1'][1],
            'n2_g': p['norm2'][0], 'n2_b': p['norm2'][1],
            'w1': p['w1'], 'b1': p['b1'], 'w2': p['w2'], 'b2': p['b2'],
        }

    per_layer = [prep(p) for p in layer_params]
    return [jnp.stack([pl_[k] for pl_ in per_layer], axis=0) for k in _W_ORDER]


def build_additive_mask(attn_mask, key_padding_mask, B, Tq, Tk):
    """Fold additive attn_mask + bool key_padding_mask (True=pad) into a finite additive bias."""
    if attn_mask is None and key_padding_mask is None:
        return None
    m = jnp.zeros((B, Tq, Tk), jnp.float32)
    if attn_mask is not None:
        am = attn_mask.astype(jnp.float32)
        m = m + (am[None, :, :] if am.ndim == 2 else am)
    if key_padding_mask is not None:
        m = m + jnp.where(key_padding_mask[:, None, :], _NEG_BIG, 0.0)
    # clamp: -inf masks -> large finite negative (fully-masked rows give a uniform
    # distribution instead of NaN; documented difference vs. nn.MultiheadAttention)
    return jnp.maximum(m, _NEG_BIG)


def _vmem_limit_bytes(Tq, Tc, Tm, D, slab_w, stacked, has_q_mask, has_c_mask):
    act = (Tq + Tc + Tm) * D * 4
    if has_q_mask:
        act += Tq * Tc * 4
    if has_c_mask:
        act += Tc * Tc * 4
    per_layer_w = sum(math.prod(w.shape[1:]) * w.dtype.itemsize for w in stacked)
    outs = (Tq * D + Tq * slab_w) * 4
    scratch = (Tq + Tc) * D * 4
    est = 2 * (act + per_layer_w + outs) + scratch
    # generous headroom for compiler temporaries; >=16MiB (v5e default), <=48MiB (v7x safe)
    return int(min(max(4 * est, 16 * 2 ** 20), 48 * 2 ** 20))


# ----------------------------------------------------------------------------- module forward

def decoder_forward(query, content, memory, layer_params, final_norm, nhead,
                    query_mask=None, content_mask=None, content_key_padding_mask=None):
    B, Tq, D = query.shape
    Tc = content.shape[1]
    Tm = memory.shape[1]
    L = len(layer_params)

    q_mask = build_additive_mask(query_mask, content_key_padding_mask, B, Tq, Tc)
    c_mask = (build_additive_mask(content_mask, content_key_padding_mask, B, Tc, Tc)
              if L > 1 else None)          # content only updated on non-last layers

    has_q_mask = q_mask is not None
    has_c_mask = c_mask is not None

    stacked = _stack_params(layer_params, nhead)

    slab_w = max(128, -((Tc + Tm) // -128) * 128)   # lane-dense packed weight slab width
    slab_pad = slab_w - (Tc + Tm)

    args = [query, content, memory]
    in_specs = [
        pl.BlockSpec((1, Tq, D), lambda b, l: (b, 0, 0)),
        pl.BlockSpec((1, Tc, D), lambda b, l: (b, 0, 0)),
        pl.BlockSpec((1, Tm, D), lambda b, l: (b, 0, 0)),
    ]
    if has_q_mask:
        args.append(q_mask)
        in_specs.append(pl.BlockSpec((1, Tq, Tc), lambda b, l: (b, 0, 0)))
    if has_c_mask:
        args.append(c_mask)
        in_specs.append(pl.BlockSpec((1, Tc, Tc), lambda b, l: (b, 0, 0)))
    for w in stacked:
        args.append(w)
        in_specs.append(_layer_w_spec(w))     # indexed by layer -> prefetched while computing
    for w in final_norm:
        args.append(w)
        in_specs.append(_const_w_spec(w))     # DMA'd once, resident

    out_shapes = (jax.ShapeDtypeStruct((B, Tq, D), query.dtype),
                  jax.ShapeDtypeStruct((B, Tq, slab_w), jnp.float32))
    out_specs = (pl.BlockSpec((1, Tq, D), lambda b, l: (b, 0, 0)),
                 pl.BlockSpec((1, Tq, slab_w), lambda b, l: (b, 0, 0)))

    kernel = _make_decoder_kernel(nhead, D, has_q_mask, has_c_mask, slab_pad)

    out_q, slab = pl.pallas_call(
        kernel,
        out_shape=out_shapes,
        grid=(B, L),
        in_specs=in_specs,
        out_specs=out_specs,
        scratch_shapes=[pltpu.VMEM((Tq, D), jnp.float32),
                        pltpu.VMEM((Tc, D), jnp.float32)],
        compiler_params=pltpu.CompilerParams(
            # batch parallel (v7x megacore sharding), layer axis sequential (content carry)
            dimension_semantics=("parallel", "arbitrary"),
            vmem_limit_bytes=_vmem_limit_bytes(Tq, Tc, Tm, D, slab_w, stacked,
                                               has_q_mask, has_c_mask)),
    )(*args)

    sa_w = slab[:, :, :Tc]
    ca_w = slab[:, :, Tc:Tc + Tm]
    return out_q, sa_w, ca_w


# ----------------------------------------------------------------------------- deterministic params

def _lin(key, din, dout, scale=0.05):
    kw, kb = jax.random.split(key)
    return (jax.random.normal(kw, (din, dout), jnp.float32) * scale,
            jax.random.normal(kb, (1, dout), jnp.float32) * 0.01)


def _attn_params(key, D):
    ks = jax.random.split(key, 4)
    wq, bq = _lin(ks[0], D, D)
    wk, bk = _lin(ks[1], D, D)
    wv, bv = _lin(ks[2], D, D)
    wo, bo = _lin(ks[3], D, D)
    return dict(wq=wq, bq=bq, wk=wk, bk=bk, wv=wv, bv=bv, wo=wo, bo=bo)


def _ln_params(D):
    return (jnp.ones((1, D), jnp.float32), jnp.zeros((1, D), jnp.float32))


def init_layer_params(key, D, F_):
    ks = jax.random.split(key, 4)
    w1, b1 = _lin(ks[2], D, F_)
    w2, b2 = _lin(ks[3], F_, D)
    return dict(
        self_attn=_attn_params(ks[0], D),
        cross_attn=_attn_params(ks[1], D),
        w1=w1, b1=b1, w2=w2, b2=b2,
        norm1=_ln_params(D), norm2=_ln_params(D),
        norm_q=_ln_params(D), norm_c=_ln_params(D),
    )


# ----------------------------------------------------------------------------- main

if __name__ == "__main__":
    B, Tq, Tm, D, NHEAD, FF, NUM_LAYERS = 2, 8, 16, 32, 4, 64, 2

    root = jax.random.PRNGKey(0)
    k_q, k_c, k_m, k_p = jax.random.split(root, 4)

    query = jax.random.normal(k_q, (B, Tq, D), jnp.float32)    # query stream (pos queries)
    content = jax.random.normal(k_c, (B, Tq, D), jnp.float32)  # content stream (token embs)
    memory = jax.random.normal(k_m, (B, Tm, D), jnp.float32)   # encoder (ViT) memory

    layer_keys = jax.random.split(k_p, NUM_LAYERS)
    layer_params = [init_layer_params(k, D, FF) for k in layer_keys]
    final_norm = _ln_params(D)

    fwd = jax.jit(partial(decoder_forward, nhead=NHEAD))
    out_q, sa_w, ca_w = fwd(query, content, memory, layer_params, final_norm)

    jax.block_until_ready((out_q, sa_w, ca_w))
    assert out_q.shape == (B, Tq, D)
    assert sa_w.shape == (B, Tq, Tq)
    assert ca_w.shape == (B, Tq, Tm)
    assert bool(jnp.isfinite(out_q).all())
    assert bool(jnp.isfinite(sa_w).all()) and bool(jnp.isfinite(ca_w).all())
    print("KERNEL_OK")
</pallas_src>

<mosaic_0001>
module attributes {stable_mosaic.version = 11 : i64} {
  func.func @kernel(%arg0: i32, %arg1: i32, %arg2: memref<1x8x32xf32, #tpu.memory_space<vmem>>, %arg3: memref<1x8x32xf32, #tpu.memory_space<vmem>>, %arg4: memref<1x16x32xf32, #tpu.memory_space<vmem>>, %arg5: memref<1x32x32xf32, #tpu.memory_space<vmem>>, %arg6: memref<1x1x32xf32, #tpu.memory_space<vmem>>, %arg7: memref<1x32x64xf32, #tpu.memory_space<vmem>>, %arg8: memref<1x1x64xf32, #tpu.memory_space<vmem>>, %arg9: memref<1x32x32xf32, #tpu.memory_space<vmem>>, %arg10: memref<1x1x32xf32, #tpu.memory_space<vmem>>, %arg11: memref<1x32x32xf32, #tpu.memory_space<vmem>>, %arg12: memref<1x1x32xf32, #tpu.memory_space<vmem>>, %arg13: memref<1x32x64xf32, #tpu.memory_space<vmem>>, %arg14: memref<1x1x64xf32, #tpu.memory_space<vmem>>, %arg15: memref<1x32x32xf32, #tpu.memory_space<vmem>>, %arg16: memref<1x1x32xf32, #tpu.memory_space<vmem>>, %arg17: memref<1x1x32xf32, #tpu.memory_space<vmem>>, %arg18: memref<1x1x32xf32, #tpu.memory_space<vmem>>, %arg19: memref<1x1x32xf32, #tpu.memory_space<vmem>>, %arg20: memref<1x1x32xf32, #tpu.memory_space<vmem>>, %arg21: memref<1x1x32xf32, #tpu.memory_space<vmem>>, %arg22: memref<1x1x32xf32, #tpu.memory_space<vmem>>, %arg23: memref<1x1x32xf32, #tpu.memory_space<vmem>>, %arg24: memref<1x1x32xf32, #tpu.memory_space<vmem>>, %arg25: memref<1x32x64xf32, #tpu.memory_space<vmem>>, %arg26: memref<1x1x64xf32, #tpu.memory_space<vmem>>, %arg27: memref<1x64x32xf32, #tpu.memory_space<vmem>>, %arg28: memref<1x1x32xf32, #tpu.memory_space<vmem>>, %arg29: memref<1x32xf32, #tpu.memory_space<vmem>>, %arg30: memref<1x32xf32, #tpu.memory_space<vmem>>, %arg31: memref<1x8x32xf32, #tpu.memory_space<vmem>>, %arg32: memref<1x8x128xf32, #tpu.memory_space<vmem>>, %arg33: memref<8x32xf32, #tpu.memory_space<vmem>>, %arg34: memref<8x32xf32, #tpu.memory_space<vmem>>) attributes {dimension_semantics = [#tpu.dimension_semantics<parallel>, #tpu.dimension_semantics<arbitrary>], iteration_bounds = array<i64: 2, 2>, scalar_prefetch = 0 : i64, scratch_operands = 2 : i64, tpu.core_type = #tpu.core_type<tc>, window_params = [{transform_indices = @transform_0, window_bounds = array<i64: 1, 8, 32>}, {transform_indices = @transform_1, window_bounds = array<i64: 1, 8, 32>}, {transform_indices = @transform_2, window_bounds = array<i64: 1, 16, 32>}, {transform_indices = @transform_3, window_bounds = array<i64: 1, 32, 32>}, {transform_indices = @transform_4, window_bounds = array<i64: 1, 1, 32>}, {transform_indices = @transform_5, window_bounds = array<i64: 1, 32, 64>}, {transform_indices = @transform_6, window_bounds = array<i64: 1, 1, 64>}, {transform_indices = @transform_7, window_bounds = array<i64: 1, 32, 32>}, {transform_indices = @transform_8, window_bounds = array<i64: 1, 1, 32>}, {transform_indices = @transform_9, window_bounds = array<i64: 1, 32, 32>}, {transform_indices = @transform_10, window_bounds = array<i64: 1, 1, 32>}, {transform_indices = @transform_11, window_bounds = array<i64: 1, 32, 64>}, {transform_indices = @transform_12, window_bounds = array<i64: 1, 1, 64>}, {transform_indices = @transform_13, window_bounds = array<i64: 1, 32, 32>}, {transform_indices = @transform_14, window_bounds = array<i64: 1, 1, 32>}, {transform_indices = @transform_15, window_bounds = array<i64: 1, 1, 32>}, {transform_indices = @transform_16, window_bounds = array<i64: 1, 1, 32>}, {transform_indices = @transform_17, window_bounds = array<i64: 1, 1, 32>}, {transform_indices = @transform_18, window_bounds = array<i64: 1, 1, 32>}, {transform_indices = @transform_19, window_bounds = array<i64: 1, 1, 32>}, {transform_indices = @transform_20, window_bounds = array<i64: 1, 1, 32>}, {transform_indices = @transform_21, window_bounds = array<i64: 1, 1, 32>}, {transform_indices = @transform_22, window_bounds = array<i64: 1, 1, 32>}, {transform_indices = @transform_23, window_bounds = array<i64: 1, 32, 64>}, {transform_indices = @transform_24, window_bounds = array<i64: 1, 1, 64>}, {transform_indices = @transform_25, window_bounds = array<i64: 1, 64, 32>}, {transform_indices = @transform_26, window_bounds = array<i64: 1, 1, 32>}, {pipeline_mode = #tpu.pipeline_mode<synchronous>, transform_indices = @transform_27, window_bounds = array<i64: 1, 32>}, {pipeline_mode = #tpu.pipeline_mode<synchronous>, transform_indices = @transform_28, window_bounds = array<i64: 1, 32>}, {transform_indices = @transform_29, window_bounds = array<i64: 1, 8, 32>}, {transform_indices = @transform_30, window_bounds = array<i64: 1, 8, 128>}]} {
    %c0_i32 = arith.constant 0 : i32
    %0 = arith.cmpi eq, %arg1, %c0_i32 : i32
    %c1_i32 = arith.constant 1 : i32
    %1 = arith.cmpi eq, %arg1, %c1_i32 : i32
    %2 = arith.extui %0 : i1 to i32
    %c0_i32_0 = arith.constant 0 : i32
    %3 = arith.cmpi ne, %2, %c0_i32_0 : i32
    scf.if %3 {
      %c0_148 = arith.constant 0 : index
      %c0_149 = arith.constant 0 : index
      %c0_150 = arith.constant 0 : index
      %321 = vector.load %arg2[%c0_148, %c0_149, %c0_150] : memref<1x8x32xf32, #tpu.memory_space<vmem>>, vector<1x8x32xf32>
      %322 = vector.shape_cast %321 : vector<1x8x32xf32> to vector<8x32xf32>
      %c0_151 = arith.constant 0 : index
      %c0_152 = arith.constant 0 : index
      %323 = vector.load %arg33[%c0_151, %c0_152] : memref<8x32xf32, #tpu.memory_space<vmem>>, vector<8x32xf32>
      tpu.vector_store %arg33[%c0_151, %c0_152], %322 {strides = array<i32>} : memref<8x32xf32, #tpu.memory_space<vmem>>, vector<8x32xf32>,
      %c0_153 = arith.constant 0 : index
      %c0_154 = arith.constant 0 : index
      %c0_155 = arith.constant 0 : index
      %324 = vector.load %arg3[%c0_153, %c0_154, %c0_155] : memref<1x8x32xf32, #tpu.memory_space<vmem>>, vector<1x8x32xf32>
      %325 = vector.shape_cast %324 : vector<1x8x32xf32> to vector<8x32xf32>
      %c0_156 = arith.constant 0 : index
      %c0_157 = arith.constant 0 : index
      %326 = vector.load %arg34[%c0_156, %c0_157] : memref<8x32xf32, #tpu.memory_space<vmem>>, vector<8x32xf32>
      tpu.vector_store %arg34[%c0_156, %c0_157], %325 {strides = array<i32>} : memref<8x32xf32, #tpu.memory_space<vmem>>, vector<8x32xf32>,
    } else {
    }
    %c0 = arith.constant 0 : index
    %c0_1 = arith.constant 0 : index
    %4 = vector.load %arg33[%c0, %c0_1] : memref<8x32xf32, #tpu.memory_space<vmem>>, vector<8x32xf32>
    %c0_2 = arith.constant 0 : index
    %c0_3 = arith.constant 0 : index
    %5 = vector.load %arg34[%c0_2, %c0_3] : memref<8x32xf32, #tpu.memory_space<vmem>>, vector<8x32xf32>
    %c0_4 = arith.constant 0 : index
    %c0_5 = arith.constant 0 : index
    %c0_6 = arith.constant 0 : index
    %6 = vector.load %arg4[%c0_4, %c0_5, %c0_6] : memref<1x16x32xf32, #tpu.memory_space<vmem>>, vector<1x16x32xf32>
    %7 = vector.shape_cast %6 : vector<1x16x32xf32> to vector<16x32xf32>
    %c0_7 = arith.constant 0 : index
    %c0_8 = arith.constant 0 : index
    %c0_9 = arith.constant 0 : index
    %8 = vector.load %arg17[%c0_7, %c0_8, %c0_9] : memref<1x1x32xf32, #tpu.memory_space<vmem>>, vector<1x1x32xf32>
    %9 = vector.shape_cast %8 : vector<1x1x32xf32> to vector<1x32xf32>
    %c0_10 = arith.constant 0 : index
    %c0_11 = arith.constant 0 : index
    %c0_12 = arith.constant 0 : index
    %10 = vector.load %arg18[%c0_10, %c0_11, %c0_12] : memref<1x1x32xf32, #tpu.memory_space<vmem>>, vector<1x1x32xf32>
    %11 = vector.shape_cast %10 : vector<1x1x32xf32> to vector<1x32xf32>
    %cst = arith.constant dense<0.000000e+00> : vector<8xf32>
    %12 = vector.multi_reduction <add>, %4, %cst [1] : vector<8x32xf32> to vector<8xf32>
    %13 = vector.shape_cast %12 : vector<8xf32> to vector<8x1xf32>
    %cst_13 = arith.constant 3.200000e+01 : f32
    %14 = vector.broadcast %cst_13 : f32 to vector<8x1xf32>
    %15 = arith.divf %13, %14 : vector<8x1xf32>
    %16 = vector.broadcast %15 : vector<8x1xf32> to vector<8x32xf32>
    %17 = arith.subf %4, %16 : vector<8x32xf32>
    %18 = arith.mulf %17, %17 : vector<8x32xf32>
    %cst_14 = arith.constant dense<0.000000e+00> : vector<8xf32>
    %19 = vector.multi_reduction <add>, %18, %cst_14 [1] : vector<8x32xf32> to vector<8xf32>
    %20 = vector.shape_cast %19 : vector<8xf32> to vector<8x1xf32>
    %cst_15 = arith.constant 3.200000e+01 : f32
    %21 = vector.broadcast %cst_15 : f32 to vector<8x1xf32>
    %22 = arith.divf %20, %21 : vector<8x1xf32>
    %23 = vector.broadcast %15 : vector<8x1xf32> to vector<8x32xf32>
    %24 = arith.subf %4, %23 : vector<8x32xf32>
    %cst_16 = arith.constant 9.99999974E-6 : f32
    %25 = vector.broadcast %cst_16 : f32 to vector<8x1xf32>
    %26 = arith.addf %22, %25 : vector<8x1xf32>
    %27 = math.rsqrt %26 : vector<8x1xf32>
    %28 = vector.broadcast %27 : vector<8x1xf32> to vector<8x32xf32>
    %29 = arith.mulf %24, %28 : vector<8x32xf32>
    %30 = vector.broadcast %9 : vector<1x32xf32> to vector<8x32xf32>
    %31 = arith.mulf %29, %30 : vector<8x32xf32>
    %32 = vector.broadcast %11 : vector<1x32xf32> to vector<8x32xf32>
    %33 = arith.addf %31, %32 : vector<8x32xf32>
    %c0_17 = arith.constant 0 : index
    %c0_18 = arith.constant 0 : index
    %c0_19 = arith.constant 0 : index
    %34 = vector.load %arg19[%c0_17, %c0_18, %c0_19] : memref<1x1x32xf32, #tpu.memory_space<vmem>>, vector<1x1x32xf32>
    %35 = vector.shape_cast %34 : vector<1x1x32xf32> to vector<1x32xf32>
    %c0_20 = arith.constant 0 : index
    %c0_21 = arith.constant 0 : index
    %c0_22 = arith.constant 0 : index
    %36 = vector.load %arg20[%c0_20, %c0_21, %c0_22] : memref<1x1x32xf32, #tpu.memory_space<vmem>>, vector<1x1x32xf32>
    %37 = vector.shape_cast %36 : vector<1x1x32xf32> to vector<1x32xf32>
    %cst_23 = arith.constant dense<0.000000e+00> : vector<8xf32>
    %38 = vector.multi_reduction <add>, %5, %cst_23 [1] : vector<8x32xf32> to vector<8xf32>
    %39 = vector.shape_cast %38 : vector<8xf32> to vector<8x1xf32>
    %cst_24 = arith.constant 3.200000e+01 : f32
    %40 = vector.broadcast %cst_24 : f32 to vector<8x1xf32>
    %41 = arith.divf %39, %40 : vector<8x1xf32>
    %42 = vector.broadcast %41 : vector<8x1xf32> to vector<8x32xf32>
    %43 = arith.subf %5, %42 : vector<8x32xf32>
    %44 = arith.mulf %43, %43 : vector<8x32xf32>
    %cst_25 = arith.constant dense<0.000000e+00> : vector<8xf32>
    %45 = vector.multi_reduction <add>, %44, %cst_25 [1] : vector<8x32xf32> to vector<8xf32>
    %46 = vector.shape_cast %45 : vector<8xf32> to vector<8x1xf32>
    %cst_26 = arith.constant 3.200000e+01 : f32
    %47 = vector.broadcast %cst_26 : f32 to vector<8x1xf32>
    %48 = arith.divf %46, %47 : vector<8x1xf32>
    %49 = vector.broadcast %41 : vector<8x1xf32> to vector<8x32xf32>
    %50 = arith.subf %5, %49 : vector<8x32xf32>
    %cst_27 = arith.constant 9.99999974E-6 : f32
    %51 = vector.broadcast %cst_27 : f32 to vector<8x1xf32>
    %52 = arith.addf %48, %51 : vector<8x1xf32>
    %53 = math.rsqrt %52 : vector<8x1xf32>
    %54 = vector.broadcast %53 : vector<8x1xf32> to vector<8x32xf32>
    %55 = arith.mulf %50, %54 : vector<8x32xf32>
    %56 = vector.broadcast %35 : vector<1x32xf32> to vector<8x32xf32>
    %57 = arith.mulf %55, %56 : vector<8x32xf32>
    %58 = vector.broadcast %37 : vector<1x32xf32> to vector<8x32xf32>
    %59 = arith.addf %57, %58 : vector<8x32xf32>
    %c0_28 = arith.constant 0 : index
    %c0_29 = arith.constant 0 : index
    %c0_30 = arith.constant 0 : index
    %60 = vector.load %arg7[%c0_28, %c0_29, %c0_30] : memref<1x32x64xf32, #tpu.memory_space<vmem>>, vector<1x32x64xf32>
    %61 = vector.shape_cast %60 : vector<1x32x64xf32> to vector<32x64xf32>
    %cst_31 = arith.constant dense<0.000000e+00> : vector<8x64xf32>
    %62 = tpu.matmul %59, %61, %cst_31 {dimension_numbers = #tpu.dot_dimension_numbers<[1], [0], [0], [1], [0, 0, 1, 1], [], []>} : vector<8x32xf32>, vector<32x64xf32>, vector<8x64xf32> -> vector<8x64xf32>
    %c0_32 = arith.constant 0 : index
    %c0_33 = arith.constant 0 : index
    %c0_34 = arith.constant 0 : index
    %63 = vector.load %arg8[%c0_32, %c0_33, %c0_34] : memref<1x1x64xf32, #tpu.memory_space<vmem>>, vector<1x1x64xf32>
    %64 = vector.shape_cast %63 : vector<1x1x64xf32> to vector<1x64xf32>
    %65 = vector.broadcast %64 : vector<1x64xf32> to vector<8x64xf32>
    %66 = arith.addf %62, %65 : vector<8x64xf32>
    %c0_35 = arith.constant 0 : index
    %c0_36 = arith.constant 0 : index
    %c0_37 = arith.constant 0 : index
    %67 = vector.load %arg13[%c0_35, %c0_36, %c0_37] : memref<1x32x64xf32, #tpu.memory_space<vmem>>, vector<1x32x64xf32>
    %68 = vector.shape_cast %67 : vector<1x32x64xf32> to vector<32x64xf32>
    %cst_38 = arith.constant dense<0.000000e+00> : vector<16x64xf32>
    %69 = tpu.matmul %7, %68, %cst_38 {dimension_numbers = #tpu.dot_dimension_numbers<[1], [0], [0], [1], [0, 0, 1, 1], [], []>} : vector<16x32xf32>, vector<32x64xf32>, vector<16x64xf32> -> vector<16x64xf32>
    %c0_39 = arith.constant 0 : index
    %c0_40 = arith.constant 0 : index
    %c0_41 = arith.constant 0 : index
    %70 = vector.load %arg14[%c0_39, %c0_40, %c0_41] : memref<1x1x64xf32, #tpu.memory_space<vmem>>, vector<1x1x64xf32>
    %71 = vector.shape_cast %70 : vector<1x1x64xf32> to vector<1x64xf32>
    %72 = vector.broadcast %71 : vector<1x64xf32> to vector<16x64xf32>
    %73 = arith.addf %69, %72 : vector<16x64xf32>
    %74 = vector.extract_strided_slice %66 {offsets = [0, 0], sizes = [8, 32], strides = [1, 1]} : vector<8x64xf32> to vector<8x32xf32>
    %75 = vector.extract_strided_slice %66 {offsets = [0, 32], sizes = [8, 32], strides = [1, 1]} : vector<8x64xf32> to vector<8x32xf32>
    %76 = vector.extract_strided_slice %73 {offsets = [0, 0], sizes = [16, 32], strides = [1, 1]} : vector<16x64xf32> to vector<16x32xf32>
    %77 = vector.extract_strided_slice %73 {offsets = [0, 32], sizes = [16, 32], strides = [1, 1]} : vector<16x64xf32> to vector<16x32xf32>
    %c0_42 = arith.constant 0 : index
    %c0_43 = arith.constant 0 : index
    %c0_44 = arith.constant 0 : index
    %78 = vector.load %arg5[%c0_42, %c0_43, %c0_44] : memref<1x32x32xf32, #tpu.memory_space<vmem>>, vector<1x32x32xf32>
    %79 = vector.shape_cast %78 : vector<1x32x32xf32> to vector<32x32xf32>
    %c0_45 = arith.constant 0 : index
    %c0_46 = arith.constant 0 : index
    %c0_47 = arith.constant 0 : index
    %80 = vector.load %arg6[%c0_45, %c0_46, %c0_47] : memref<1x1x32xf32, #tpu.memory_space<vmem>>, vector<1x1x32xf32>
    %81 = vector.shape_cast %80 : vector<1x1x32xf32> to vector<1x32xf32>
    %c0_48 = arith.constant 0 : index
    %c0_49 = arith.constant 0 : index
    %c0_50 = arith.constant 0 : index
    %82 = vector.load %arg9[%c0_48, %c0_49, %c0_50] : memref<1x32x32xf32, #tpu.memory_space<vmem>>, vector<1x32x32xf32>
    %83 = vector.shape_cast %82 : vector<1x32x32xf32> to vector<32x32xf32>
    %c0_51 = arith.constant 0 : index
    %c0_52 = arith.constant 0 : index
    %c0_53 = arith.constant 0 : index
    %84 = vector.load %arg10[%c0_51, %c0_52, %c0_53] : memref<1x1x32xf32, #tpu.memory_space<vmem>>, vector<1x1x32xf32>
    %85 = vector.shape_cast %84 : vector<1x1x32xf32> to vector<1x32xf32>
    %cst_54 = arith.constant dense<0.000000e+00> : vector<8x32xf32>
    %86 = tpu.matmul %33, %79, %cst_54 {dimension_numbers = #tpu.dot_dimension_numbers<[1], [0], [0], [1], [0, 0, 1, 1], [], []>} : vector<8x32xf32>, vector<32x32xf32>, vector<8x32xf32> -> vector<8x32xf32>
    %87 = vector.broadcast %81 : vector<1x32xf32> to vector<8x32xf32>
    %88 = arith.addf %86, %87 : vector<8x32xf32>
    %89 = vector.extract_strided_slice %88 {offsets = [0, 0], sizes = [8, 8], strides = [1, 1]} : vector<8x32xf32> to vector<8x8xf32>
    %90 = vector.extract_strided_slice %74 {offsets = [0, 0], sizes = [8, 8], strides = [1, 1]} : vector<8x32xf32> to vector<8x8xf32>
    %cst_55 = arith.constant dense<0.000000e+00> : vector<8x8xf32>
    %91 = tpu.matmul %89, %90, %cst_55 {dimension_numbers = #tpu.dot_dimension_numbers<[1], [1], [0], [0], [0, 0, 1, 0], [], []>} : vector<8x8xf32>, vector<8x8xf32>, vector<8x8xf32> -> vector<8x8xf32>
    %cst_56 = arith.constant dense<0xFF800000> : vector<8xf32>
    %92 = vector.multi_reduction <maximumf>, %91, %cst_56 [1] : vector<8x8xf32> to vector<8xf32>
    %93 = vector.shape_cast %92 : vector<8xf32> to vector<8x1xf32>
    %94 = vector.broadcast %93 : vector<8x1xf32> to vector<8x8xf32>
    %95 = arith.subf %91, %94 : vector<8x8xf32>
    %96 = math.exp %95 : vector<8x8xf32>
    %cst_57 = arith.constant dense<0.000000e+00> : vector<8xf32>
    %97 = vector.multi_reduction <add>, %96, %cst_57 [1] : vector<8x8xf32> to vector<8xf32>
    %98 = vector.shape_cast %97 : vector<8xf32> to vector<8x1xf32>
    %99 = tpu.reciprocal %98 {approx = true} : vector<8x1xf32> -> vector<8x1xf32>
    %100 = vector.broadcast %99 : vector<8x1xf32> to vector<8x8xf32>
    %101 = arith.mulf %96, %100 : vector<8x8xf32>
    %102 = vector.extract_strided_slice %75 {offsets = [0, 0], sizes = [8, 8], strides = [1, 1]} : vector<8x32xf32> to vector<8x8xf32>
    %cst_58 = arith.constant dense<0.000000e+00> : vector<8x8xf32>
    %103 = tpu.matmul %101, %102, %cst_58 {dimension_numbers = #tpu.dot_dimension_numbers<[1], [0], [0], [1], [0, 0, 1, 1], [], []>} : vector<8x8xf32>, vector<8x8xf32>, vector<8x8xf32> -> vector<8x8xf32>
    %104 = vector.extract_strided_slice %88 {offsets = [0, 8], sizes = [8, 8], strides = [1, 1]} : vector<8x32xf32> to vector<8x8xf32>
    %105 = vector.extract_strided_slice %74 {offsets = [0, 8], sizes = [8, 8], strides = [1, 1]} : vector<8x32xf32> to vector<8x8xf32>
    %cst_59 = arith.constant dense<0.000000e+00> : vector<8x8xf32>
    %106 = tpu.matmul %104, %105, %cst_59 {dimension_numbers = #tpu.dot_dimension_numbers<[1], [1], [0], [0], [0, 0, 1, 0], [], []>} : vector<8x8xf32>, vector<8x8xf32>, vector<8x8xf32> -> vector<8x8xf32>
    %cst_60 = arith.constant dense<0xFF800000> : vector<8xf32>
    %107 = vector.multi_reduction <maximumf>, %106, %cst_60 [1] : vector<8x8xf32> to vector<8xf32>
    %108 = vector.shape_cast %107 : vector<8xf32> to vector<8x1xf32>
    %109 = vector.broadcast %108 : vector<8x1xf32> to vector<8x8xf32>
    %110 = arith.subf %106, %109 : vector<8x8xf32>
    %111 = math.exp %110 : vector<8x8xf32>
    %cst_61 = arith.constant dense<0.000000e+00> : vector<8xf32>
    %112 = vector.multi_reduction <add>, %111, %cst_61 [1] : vector<8x8xf32> to vector<8xf32>
    %113 = vector.shape_cast %112 : vector<8xf32> to vector<8x1xf32>
    %114 = tpu.reciprocal %113 {approx = true} : vector<8x1xf32> -> vector<8x1xf32>
    %115 = vector.broadcast %114 : vector<8x1xf32> to vector<8x8xf32>
    %116 = arith.mulf %111, %115 : vector<8x8xf32>
    %117 = vector.extract_strided_slice %75 {offsets = [0, 8], sizes = [8, 8], strides = [1, 1]} : vector<8x32xf32> to vector<8x8xf32>
    %cst_62 = arith.constant dense<0.000000e+00> : vector<8x8xf32>
    %118 = tpu.matmul %116, %117, %cst_62 {dimension_numbers = #tpu.dot_dimension_numbers<[1], [0], [0], [1], [0, 0, 1, 1], [], []>} : vector<8x8xf32>, vector<8x8xf32>, vector<8x8xf32> -> vector<8x8xf32>
    %119 = arith.addf %101, %116 : vector<8x8xf32>
    %120 = vector.extract_strided_slice %88 {offsets = [0, 16], sizes = [8, 8], strides = [1, 1]} : vector<8x32xf32> to vector<8x8xf32>
    %121 = vector.extract_strided_slice %74 {offsets = [0, 16], sizes = [8, 8], strides = [1, 1]} : vector<8x32xf32> to vector<8x8xf32>
    %cst_63 = arith.constant dense<0.000000e+00> : vector<8x8xf32>
    %122 = tpu.matmul %120, %121, %cst_63 {dimension_numbers = #tpu.dot_dimension_numbers<[1], [1], [0], [0], [0, 0, 1, 0], [], []>} : vector<8x8xf32>, vector<8x8xf32>, vector<8x8xf32> -> vector<8x8xf32>
    %cst_64 = arith.constant dense<0xFF800000> : vector<8xf32>
    %123 = vector.multi_reduction <maximumf>, %122, %cst_64 [1] : vector<8x8xf32> to vector<8xf32>
    %124 = vector.shape_cast %123 : vector<8xf32> to vector<8x1xf32>
    %125 = vector.broadcast %124 : vector<8x1xf32> to vector<8x8xf32>
    %126 = arith.subf %122, %125 : vector<8x8xf32>
    %127 = math.exp %126 : vector<8x8xf32>
    %cst_65 = arith.constant dense<0.000000e+00> : vector<8xf32>
    %128 = vector.multi_reduction <add>, %127, %cst_65 [1] : vector<8x8xf32> to vector<8xf32>
    %129 = vector.shape_cast %128 : vector<8xf32> to vector<8x1xf32>
    %130 = tpu.reciprocal %129 {approx = true} : vector<8x1xf32> -> vector<8x1xf32>
    %131 = vector.broadcast %130 : vector<8x1xf32> to vector<8x8xf32>
    %132 = arith.mulf %127, %131 : vector<8x8xf32>
    %133 = vector.extract_strided_slice %75 {offsets = [0, 16], sizes = [8, 8], strides = [1, 1]} : vector<8x32xf32> to vector<8x8xf32>
    %cst_66 = arith.constant dense<0.000000e+00> : vector<8x8xf32>
    %134 = tpu.matmul %132, %133, %cst_66 {dimension_numbers = #tpu.dot_dimension_numbers<[1], [0], [0], [1], [0, 0, 1, 1], [], []>} : vector<8x8xf32>, vector<8x8xf32>, vector<8x8xf32> -> vector<8x8xf32>
    %135 = arith.addf %119, %132 : vector<8x8xf32>
    %136 = vector.extract_strided_slice %88 {offsets = [0, 24], sizes = [8, 8], strides = [1, 1]} : vector<8x32xf32> to vector<8x8xf32>
    %137 = vector.extract_strided_slice %74 {offsets = [0, 24], sizes = [8, 8], strides = [1, 1]} : vector<8x32xf32> to vector<8x8xf32>
    %cst_67 = arith.constant dense<0.000000e+00> : vector<8x8xf32>
    %138 = tpu.matmul %136, %137, %cst_67 {dimension_numbers = #tpu.dot_dimension_numbers<[1], [1], [0], [0], [0, 0, 1, 0], [], []>} : vector<8x8xf32>, vector<8x8xf32>, vector<8x8xf32> -> vector<8x8xf32>
    %cst_68 = arith.constant dense<0xFF800000> : vector<8xf32>
    %139 = vector.multi_reduction <maximumf>, %138, %cst_68 [1] : vector<8x8xf32> to vector<8xf32>
    %140 = vector.shape_cast %139 : vector<8xf32> to vector<8x1xf32>
    %141 = vector.broadcast %140 : vector<8x1xf32> to vector<8x8xf32>
    %142 = arith.subf %138, %141 : vector<8x8xf32>
    %143 = math.exp %142 : vector<8x8xf32>
    %cst_69 = arith.constant dense<0.000000e+00> : vector<8xf32>
    %144 = vector.multi_reduction <add>, %143, %cst_69 [1] : vector<8x8xf32> to vector<8xf32>
    %145 = vector.shape_cast %144 : vector<8xf32> to vector<8x1xf32>
    %146 = tpu.reciprocal %145 {approx = true} : vector<8x1xf32> -> vector<8x1xf32>
    %147 = vector.broadcast %146 : vector<8x1xf32> to vector<8x8xf32>
    %148 = arith.mulf %143, %147 : vector<8x8xf32>
    %149 = vector.extract_strided_slice %75 {offsets = [0, 24], sizes = [8, 8], strides = [1, 1]} : vector<8x32xf32> to vector<8x8xf32>
    %cst_70 = arith.constant dense<0.000000e+00> : vector<8x8xf32>
    %150 = tpu.matmul %148, %149, %cst_70 {dimension_numbers = #tpu.dot_dimension_numbers<[1], [0], [0], [1], [0, 0, 1, 1], [], []>} : vector<8x8xf32>, vector<8x8xf32>, vector<8x8xf32> -> vector<8x8xf32>
    %151 = arith.addf %135, %148 : vector<8x8xf32>
    %152 = tpu.concatenate %103, %118, %134, %150 in 1 : vector<8x8xf32>, vector<8x8xf32>, vector<8x8xf32>, vector<8x8xf32> -> vector<8x32xf32>
    %cst_71 = arith.constant dense<0.000000e+00> : vector<8x32xf32>
    %153 = tpu.matmul %152, %83, %cst_71 {dimension_numbers = #tpu.dot_dimension_numbers<[1], [0], [0], [1], [0, 0, 1, 1], [], []>} : vector<8x32xf32>, vector<32x32xf32>, vector<8x32xf32> -> vector<8x32xf32>
    %154 = vector.broadcast %85 : vector<1x32xf32> to vector<8x32xf32>
    %155 = arith.addf %153, %154 : vector<8x32xf32>
    %cst_72 = arith.constant 2.500000e-01 : f32
    %156 = vector.broadcast %cst_72 : f32 to vector<8x8xf32>
    %157 = arith.mulf %151, %156 : vector<8x8xf32>
    %158 = arith.addf %4, %155 : vector<8x32xf32>
    %c0_73 = arith.constant 0 : index
    %c0_74 = arith.constant 0 : index
    %c0_75 = arith.constant 0 : index
    %159 = vector.load %arg21[%c0_73, %c0_74, %c0_75] : memref<1x1x32xf32, #tpu.memory_space<vmem>>, vector<1x1x32xf32>
    %160 = vector.shape_cast %159 : vector<1x1x32xf32> to vector<1x32xf32>
    %c0_76 = arith.constant 0 : index
    %c0_77 = arith.constant 0 : index
    %c0_78 = arith.constant 0 : index
    %161 = vector.load %arg22[%c0_76, %c0_77, %c0_78] : memref<1x1x32xf32, #tpu.memory_space<vmem>>, vector<1x1x32xf32>
    %162 = vector.shape_cast %161 : vector<1x1x32xf32> to vector<1x32xf32>
    %cst_79 = arith.constant dense<0.000000e+00> : vector<8xf32>
    %163 = vector.multi_reduction <add>, %158, %cst_79 [1] : vector<8x32xf32> to vector<8xf32>
    %164 = vector.shape_cast %163 : vector<8xf32> to vector<8x1xf32>
    %cst_80 = arith.constant 3.200000e+01 : f32
    %165 = vector.broadcast %cst_80 : f32 to vector<8x1xf32>
    %166 = arith.divf %164, %165 : vector<8x1xf32>
    %167 = vector.broadcast %166 : vector<8x1xf32> to vector<8x32xf32>
    %168 = arith.subf %158, %167 : vector<8x32xf32>
    %169 = arith.mulf %168, %168 : vector<8x32xf32>
    %cst_81 = arith.constant dense<0.000000e+00> : vector<8xf32>
    %170 = vector.multi_reduction <add>, %169, %cst_81 [1] : vector<8x32xf32> to vector<8xf32>
    %171 = vector.shape_cast %170 : vector<8xf32> to vector<8x1xf32>
    %cst_82 = arith.constant 3.200000e+01 : f32
    %172 = vector.broadcast %cst_82 : f32 to vector<8x1xf32>
    %173 = arith.divf %171, %172 : vector<8x1xf32>
    %174 = vector.broadcast %166 : vector<8x1xf32> to vector<8x32xf32>
    %175 = arith.subf %158, %174 : vector<8x32xf32>
    %cst_83 = arith.constant 9.99999974E-6 : f32
    %176 = vector.broadcast %cst_83 : f32 to vector<8x1xf32>
    %177 = arith.addf %173, %176 : vector<8x1xf32>
    %178 = math.rsqrt %177 : vector<8x1xf32>
    %179 = vector.broadcast %178 : vector<8x1xf32> to vector<8x32xf32>
    %180 = arith.mulf %175, %179 : vector<8x32xf32>
    %181 = vector.broadcast %160 : vector<1x32xf32> to vector<8x32xf32>
    %182 = arith.mulf %180, %181 : vector<8x32xf32>
    %183 = vector.broadcast %162 : vector<1x32xf32> to vector<8x32xf32>
    %184 = arith.addf %182, %183 : vector<8x32xf32>
    %c0_84 = arith.constant 0 : index
    %c0_85 = arith.constant 0 : index
    %c0_86 = arith.constant 0 : index
    %185 = vector.load %arg11[%c0_84, %c0_85, %c0_86] : memref<1x32x32xf32, #tpu.memory_space<vmem>>, vector<1x32x32xf32>
    %186 = vector.shape_cast %185 : vector<1x32x32xf32> to vector<32x32xf32>
    %c0_87 = arith.constant 0 : index
    %c0_88 = arith.constant 0 : index
    %c0_89 = arith.constant 0 : index
    %187 = vector.load %arg12[%c0_87, %c0_88, %c0_89] : memref<1x1x32xf32, #tpu.memory_space<vmem>>, vector<1x1x32xf32>
    %188 = vector.shape_cast %187 : vector<1x1x32xf32> to vector<1x32xf32>
    %c0_90 = arith.constant 0 : index
    %c0_91 = arith.constant 0 : index
    %c0_92 = arith.constant 0 : index
    %189 = vector.load %arg15[%c0_90, %c0_91, %c0_92] : memref<1x32x32xf32, #tpu.memory_space<vmem>>, vector<1x32x32xf32>
    %190 = vector.shape_cast %189 : vector<1x32x32xf32> to vector<32x32xf32>
    %c0_93 = arith.constant 0 : index
    %c0_94 = arith.constant 0 : index
    %c0_95 = arith.constant 0 : index
    %191 = vector.load %arg16[%c0_93, %c0_94, %c0_95] : memref<1x1x32xf32, #tpu.memory_space<vmem>>, vector<1x1x32xf32>
    %192 = vector.shape_cast %191 : vector<1x1x32xf32> to vector<1x32xf32>
    %cst_96 = arith.constant dense<0.000000e+00> : vector<8x32xf32>
    %193 = tpu.matmul %184, %186, %cst_96 {dimension_numbers = #tpu.dot_dimension_numbers<[1], [0], [0], [1], [0, 0, 1, 1], [], []>} : vector<8x32xf32>, vector<32x32xf32>, vector<8x32xf32> -> vector<8x32xf32>
    %194 = vector.broadcast %188 : vector<1x32xf32> to vector<8x32xf32>
    %195 = arith.addf %193, %194 : vector<8x32xf32>
    %196 = vector.extract_strided_slice %195 {offsets = [0, 0], sizes = [8, 8], strides = [1, 1]} : vector<8x32xf32> to vector<8x8xf32>
    %197 = vector.extract_strided_slice %76 {offsets = [0, 0], sizes = [16, 8], strides = [1, 1]} : vector<16x32xf32> to vector<16x8xf32>
    %cst_97 = arith.constant dense<0.000000e+00> : vector<8x16xf32>
    %198 = tpu.matmul %196, %197, %cst_97 {dimension_numbers = #tpu.dot_dimension_numbers<[1], [1], [0], [0], [0, 0, 1, 0], [], []>} : vector<8x8xf32>, vector<16x8xf32>, vector<8x16xf32> -> vector<8x16xf32>
    %cst_98 = arith.constant dense<0xFF800000> : vector<8xf32>
    %199 = vector.multi_reduction <maximumf>, %198, %cst_98 [1] : vector<8x16xf32> to vector<8xf32>
    %200 = vector.shape_cast %199 : vector<8xf32> to vector<8x1xf32>
    %201 = vector.broadcast %200 : vector<8x1xf32> to vector<8x16xf32>
    %202 = arith.subf %198, %201 : vector<8x16xf32>
    %203 = math.exp %202 : vector<8x16xf32>
    %cst_99 = arith.constant dense<0.000000e+00> : vector<8xf32>
    %204 = vector.multi_reduction <add>, %203, %cst_99 [1] : vector<8x16xf32> to vector<8xf32>
    %205 = vector.shape_cast %204 : vector<8xf32> to vector<8x1xf32>
    %206 = tpu.reciprocal %205 {approx = true} : vector<8x1xf32> -> vector<8x1xf32>
    %207 = vector.broadcast %206 : vector<8x1xf32> to vector<8x16xf32>
    %208 = arith.mulf %203, %207 : vector<8x16xf32>
    %209 = vector.extract_strided_slice %77 {offsets = [0, 0], sizes = [16, 8], strides = [1, 1]} : vector<16x32xf32> to vector<16x8xf32>
    %cst_100 = arith.constant dense<0.000000e+00> : vector<8x8xf32>
    %210 = tpu.matmul %208, %209, %cst_100 {dimension_numbers = #tpu.dot_dimension_numbers<[1], [0], [0], [1], [0, 0, 1, 1], [], []>} : vector<8x16xf32>, vector<16x8xf32>, vector<8x8xf32> -> vector<8x8xf32>
    %211 = vector.extract_strided_slice %195 {offsets = [0, 8], sizes = [8, 8], strides = [1, 1]} : vector<8x32xf32> to vector<8x8xf32>
    %212 = vector.extract_strided_slice %76 {offsets = [0, 8], sizes = [16, 8], strides = [1, 1]} : vector<16x32xf32> to vector<16x8xf32>
    %cst_101 = arith.constant dense<0.000000e+00> : vector<8x16xf32>
    %213 = tpu.matmul %211, %212, %cst_101 {dimension_numbers = #tpu.dot_dimension_numbers<[1], [1], [0], [0], [0, 0, 1, 0], [], []>} : vector<8x8xf32>, vector<16x8xf32>, vector<8x16xf32> -> vector<8x16xf32>
    %cst_102 = arith.constant dense<0xFF800000> : vector<8xf32>
    %214 = vector.multi_reduction <maximumf>, %213, %cst_102 [1] : vector<8x16xf32> to vector<8xf32>
    %215 = vector.shape_cast %214 : vector<8xf32> to vector<8x1xf32>
    %216 = vector.broadcast %215 : vector<8x1xf32> to vector<8x16xf32>
    %217 = arith.subf %213, %216 : vector<8x16xf32>
    %218 = math.exp %217 : vector<8x16xf32>
    %cst_103 = arith.constant dense<0.000000e+00> : vector<8xf32>
    %219 = vector.multi_reduction <add>, %218, %cst_103 [1] : vector<8x16xf32> to vector<8xf32>
    %220 = vector.shape_cast %219 : vector<8xf32> to vector<8x1xf32>
    %221 = tpu.reciprocal %220 {approx = true} : vector<8x1xf32> -> vector<8x1xf32>
    %222 = vector.broadcast %221 : vector<8x1xf32> to vector<8x16xf32>
    %223 = arith.mulf %218, %222 : vector<8x16xf32>
    %224 = vector.extract_strided_slice %77 {offsets = [0, 8], sizes = [16, 8], strides = [1, 1]} : vector<16x32xf32> to vector<16x8xf32>
    %cst_104 = arith.constant dense<0.000000e+00> : vector<8x8xf32>
    %225 = tpu.matmul %223, %224, %cst_104 {dimension_numbers = #tpu.dot_dimension_numbers<[1], [0], [0], [1], [0, 0, 1, 1], [], []>} : vector<8x16xf32>, vector<16x8xf32>, vector<8x8xf32> -> vector<8x8xf32>
    %226 = arith.addf %208, %223 : vector<8x16xf32>
    %227 = vector.extract_strided_slice %195 {offsets = [0, 16], sizes = [8, 8], strides = [1, 1]} : vector<8x32xf32> to vector<8x8xf32>
    %228 = vector.extract_strided_slice %76 {offsets = [0, 16], sizes = [16, 8], strides = [1, 1]} : vector<16x32xf32> to vector<16x8xf32>
    %cst_105 = arith.constant dense<0.000000e+00> : vector<8x16xf32>
    %229 = tpu.matmul %227, %228, %cst_105 {dimension_numbers = #tpu.dot_dimension_numbers<[1], [1], [0], [0], [0, 0, 1, 0], [], []>} : vector<8x8xf32>, vector<16x8xf32>, vector<8x16xf32> -> vector<8x16xf32>
    %cst_106 = arith.constant dense<0xFF800000> : vector<8xf32>
    %230 = vector.multi_reduction <maximumf>, %229, %cst_106 [1] : vector<8x16xf32> to vector<8xf32>
    %231 = vector.shape_cast %230 : vector<8xf32> to vector<8x1xf32>
    %232 = vector.broadcast %231 : vector<8x1xf32> to vector<8x16xf32>
    %233 = arith.subf %229, %232 : vector<8x16xf32>
    %234 = math.exp %233 : vector<8x16xf32>
    %cst_107 = arith.constant dense<0.000000e+00> : vector<8xf32>
    %235 = vector.multi_reduction <add>, %234, %cst_107 [1] : vector<8x16xf32> to vector<8xf32>
    %236 = vector.shape_cast %235 : vector<8xf32> to vector<8x1xf32>
    %237 = tpu.reciprocal %236 {approx = true} : vector<8x1xf32> -> vector<8x1xf32>
    %238 = vector.broadcast %237 : vector<8x1xf32> to vector<8x16xf32>
    %239 = arith.mulf %234, %238 : vector<8x16xf32>
    %240 = vector.extract_strided_slice %77 {offsets = [0, 16], sizes = [16, 8], strides = [1, 1]} : vector<16x32xf32> to vector<16x8xf32>
    %cst_108 = arith.constant dense<0.000000e+00> : vector<8x8xf32>
    %241 = tpu.matmul %239, %240, %cst_108 {dimension_numbers = #tpu.dot_dimension_numbers<[1], [0], [0], [1], [0, 0, 1, 1], [], []>} : vector<8x16xf32>, vector<16x8xf32>, vector<8x8xf32> -> vector<8x8xf32>
    %242 = arith.addf %226, %239 : vector<8x16xf32>
    %243 = vector.extract_strided_slice %195 {offsets = [0, 24], sizes = [8, 8], strides = [1, 1]} : vector<8x32xf32> to vector<8x8xf32>
    %244 = vector.extract_strided_slice %76 {offsets = [0, 24], sizes = [16, 8], strides = [1, 1]} : vector<16x32xf32> to vector<16x8xf32>
    %cst_109 = arith.constant dense<0.000000e+00> : vector<8x16xf32>
    %245 = tpu.matmul %243, %244, %cst_109 {dimension_numbers = #tpu.dot_dimension_numbers<[1], [1], [0], [0], [0, 0, 1, 0], [], []>} : vector<8x8xf32>, vector<16x8xf32>, vector<8x16xf32> -> vector<8x16xf32>
    %cst_110 = arith.constant dense<0xFF800000> : vector<8xf32>
    %246 = vector.multi_reduction <maximumf>, %245, %cst_110 [1] : vector<8x16xf32> to vector<8xf32>
    %247 = vector.shape_cast %246 : vector<8xf32> to vector<8x1xf32>
    %248 = vector.broadcast %247 : vector<8x1xf32> to vector<8x16xf32>
    %249 = arith.subf %245, %248 : vector<8x16xf32>
    %250 = math.exp %249 : vector<8x16xf32>
    %cst_111 = arith.constant dense<0.000000e+00> : vector<8xf32>
    %251 = vector.multi_reduction <add>, %250, %cst_111 [1] : vector<8x16xf32> to vector<8xf32>
    %252 = vector.shape_cast %251 : vector<8xf32> to vector<8x1xf32>
    %253 = tpu.reciprocal %252 {approx = true} : vector<8x1xf32> -> vector<8x1xf32>
    %254 = vector.broadcast %253 : vector<8x1xf32> to vector<8x16xf32>
    %255 = arith.mulf %250, %254 : vector<8x16xf32>
    %256 = vector.extract_strided_slice %77 {offsets = [0, 24], sizes = [16, 8], strides = [1, 1]} : vector<16x32xf32> to vector<16x8xf32>
    %cst_112 = arith.constant dense<0.000000e+00> : vector<8x8xf32>
    %257 = tpu.matmul %255, %256, %cst_112 {dimension_numbers = #tpu.dot_dimension_numbers<[1], [0], [0], [1], [0, 0, 1, 1], [], []>} : vector<8x16xf32>, vector<16x8xf32>, vector<8x8xf32> -> vector<8x8xf32>
    %258 = arith.addf %242, %255 : vector<8x16xf32>
    %259 = tpu.concatenate %210, %225, %241, %257 in 1 : vector<8x8xf32>, vector<8x8xf32>, vector<8x8xf32>, vector<8x8xf32> -> vector<8x32xf32>
    %cst_113 = arith.constant dense<0.000000e+00> : vector<8x32xf32>
    %260 = tpu.matmul %259, %190, %cst_113 {dimension_numbers = #tpu.dot_dimension_numbers<[1], [0], [0], [1], [0, 0, 1, 1], [], []>} : vector<8x32xf32>, vector<32x32xf32>, vector<8x32xf32> -> vector<8x32xf32>
    %261 = vector.broadcast %192 : vector<1x32xf32> to vector<8x32xf32>
    %262 = arith.addf %260, %261 : vector<8x32xf32>
    %cst_114 = arith.constant 2.500000e-01 : f32
    %263 = vector.broadcast %cst_114 : f32 to vector<8x16xf32>
    %264 = arith.mulf %258, %263 : vector<8x16xf32>
    %265 = arith.addf %158, %262 : vector<8x32xf32>
    %c0_115 = arith.constant 0 : index
    %c0_116 = arith.constant 0 : index
    %c0_117 = arith.constant 0 : index
    %266 = vector.load %arg23[%c0_115, %c0_116, %c0_117] : memref<1x1x32xf32, #tpu.memory_space<vmem>>, vector<1x1x32xf32>
    %267 = vector.shape_cast %266 : vector<1x1x32xf32> to vector<1x32xf32>
    %c0_118 = arith.constant 0 : index
    %c0_119 = arith.constant 0 : index
    %c0_120 = arith.constant 0 : index
    %268 = vector.load %arg24[%c0_118, %c0_119, %c0_120] : memref<1x1x32xf32, #tpu.memory_space<vmem>>, vector<1x1x32xf32>
    %269 = vector.shape_cast %268 : vector<1x1x32xf32> to vector<1x32xf32>
    %cst_121 = arith.constant dense<0.000000e+00> : vector<8xf32>
    %270 = vector.multi_reduction <add>, %265, %cst_121 [1] : vector<8x32xf32> to vector<8xf32>
    %271 = vector.shape_cast %270 : vector<8xf32> to vector<8x1xf32>
    %cst_122 = arith.constant 3.200000e+01 : f32
    %272 = vector.broadcast %cst_122 : f32 to vector<8x1xf32>
    %273 = arith.divf %271, %272 : vector<8x1xf32>
    %274 = vector.broadcast %273 : vector<8x1xf32> to vector<8x32xf32>
    %275 = arith.subf %265, %274 : vector<8x32xf32>
    %276 = arith.mulf %275, %275 : vector<8x32xf32>
    %cst_123 = arith.constant dense<0.000000e+00> : vector<8xf32>
    %277 = vector.multi_reduction <add>, %276, %cst_123 [1] : vector<8x32xf32> to vector<8xf32>
    %278 = vector.shape_cast %277 : vector<8xf32> to vector<8x1xf32>
    %cst_124 = arith.constant 3.200000e+01 : f32
    %279 = vector.broadcast %cst_124 : f32 to vector<8x1xf32>
    %280 = arith.divf %278, %279 : vector<8x1xf32>
    %281 = vector.broadcast %273 : vector<8x1xf32> to vector<8x32xf32>
    %282 = arith.subf %265, %281 : vector<8x32xf32>
    %cst_125 = arith.constant 9.99999974E-6 : f32
    %283 = vector.broadcast %cst_125 : f32 to vector<8x1xf32>
    %284 = arith.addf %280, %283 : vector<8x1xf32>
    %285 = math.rsqrt %284 : vector<8x1xf32>
    %286 = vector.broadcast %285 : vector<8x1xf32> to vector<8x32xf32>
    %287 = arith.mulf %282, %286 : vector<8x32xf32>
    %288 = vector.broadcast %267 : vector<1x32xf32> to vector<8x32xf32>
    %289 = arith.mulf %287, %288 : vector<8x32xf32>
    %290 = vector.broadcast %269 : vector<1x32xf32> to vector<8x32xf32>
    %291 = arith.addf %289, %290 : vector<8x32xf32>
    %c0_126 = arith.constant 0 : index
    %c0_127 = arith.constant 0 : index
    %c0_128 = arith.constant 0 : index
    %292 = vector.load %arg25[%c0_126, %c0_127, %c0_128] : memref<1x32x64xf32, #tpu.memory_space<vmem>>, vector<1x32x64xf32>
    %293 = vector.shape_cast %292 : vector<1x32x64xf32> to vector<32x64xf32>
    %cst_129 = arith.constant dense<0.000000e+00> : vector<8x64xf32>
    %294 = tpu.matmul %291, %293, %cst_129 {dimension_numbers = #tpu.dot_dimension_numbers<[1], [0], [0], [1], [0, 0, 1, 1], [], []>} : vector<8x32xf32>, vector<32x64xf32>, vector<8x64xf32> -> vector<8x64xf32>
    %c0_130 = arith.constant 0 : index
    %c0_131 = arith.constant 0 : index
    %c0_132 = arith.constant 0 : index
    %295 = vector.load %arg26[%c0_130, %c0_131, %c0_132] : memref<1x1x64xf32, #tpu.memory_space<vmem>>, vector<1x1x64xf32>
    %296 = vector.shape_cast %295 : vector<1x1x64xf32> to vector<1x64xf32>
    %297 = vector.broadcast %296 : vector<1x64xf32> to vector<8x64xf32>
    %298 = arith.addf %294, %297 : vector<8x64xf32>
    %cst_133 = arith.constant 5.000000e-01 : f32
    %299 = vector.broadcast %cst_133 : f32 to vector<8x64xf32>
    %300 = arith.mulf %299, %298 : vector<8x64xf32>
    %cst_134 = arith.constant 0.707106769 : f32
    %301 = vector.broadcast %cst_134 : f32 to vector<8x64xf32>
    %302 = arith.mulf %298, %301 : vector<8x64xf32>
    %303 = math.erf %302 : vector<8x64xf32>
    %cst_135 = arith.constant 1.000000e+00 : f32
    %304 = vector.broadcast %cst_135 : f32 to vector<8x64xf32>
    %305 = arith.addf %304, %303 : vector<8x64xf32>
    %306 = arith.mulf %300, %305 : vector<8x64xf32>
    %c0_136 = arith.constant 0 : index
    %c0_137 = arith.constant 0 : index
    %c0_138 = arith.constant 0 : index
    %307 = vector.load %arg27[%c0_136, %c0_137, %c0_138] : memref<1x64x32xf32, #tpu.memory_space<vmem>>, vector<1x64x32xf32>
    %308 = vector.shape_cast %307 : vector<1x64x32xf32> to vector<64x32xf32>
    %cst_139 = arith.constant dense<0.000000e+00> : vector<8x32xf32>
    %309 = tpu.matmul %306, %308, %cst_139 {dimension_numbers = #tpu.dot_dimension_numbers<[1], [0], [0], [1], [0, 0, 1, 1], [], []>} : vector<8x64xf32>, vector<64x32xf32>, vector<8x32xf32> -> vector<8x32xf32>
    %c0_140 = arith.constant 0 : index
    %c0_141 = arith.constant 0 : index
    %c0_142 = arith.constant 0 : index
    %310 = vector.load %arg28[%c0_140, %c0_141, %c0_142] : memref<1x1x32xf32, #tpu.memory_space<vmem>>, vector<1x1x32xf32>
    %311 = vector.shape_cast %310 : vector<1x1x32xf32> to vector<1x32xf32>
    %312 = vector.broadcast %311 : vector<1x32xf32> to vector<8x32xf32>
    %313 = arith.addf %309, %312 : vector<8x32xf32>
    %314 = arith.addf %265, %313 : vector<8x32xf32>
    %c0_143 = arith.constant 0 : index
    %c0_144 = arith.constant 0 : index
    %315 = vector.load %arg33[%c0_143, %c0_144] : memref<8x32xf32, #tpu.memory_space<vmem>>, vector<8x32xf32>
    tpu.vector_store %arg33[%c0_143, %c0_144], %314 {strides = array<i32>} : memref<8x32xf32, #tpu.memory_space<vmem>>, vector<8x32xf32>,
    %c1_i32_145 = arith.constant 1 : i32
    %316 = arith.cmpi slt, %arg1, %c1_i32_145 : i32
    %317 = arith.extui %316 : i1 to i32
    %c0_i32_146 = arith.constant 0 : i32
    %318 = arith.cmpi ne, %317, %c0_i32_146 : i32
    scf.if %318 {
      %c0_148 = arith.constant 0 : index
      %c0_149 = arith.constant 0 : index
      %c0_150 = arith.constant 0 : index
      %321 = vector.load %arg5[%c0_148, %c0_149, %c0_150] : memref<1x32x32xf32, #tpu.memory_space<vmem>>, vector<1x32x32xf32>
      %322 = vector.shape_cast %321 : vector<1x32x32xf32> to vector<32x32xf32>
      %c0_151 = arith.constant 0 : index
      %c0_152 = arith.constant 0 : index
      %c0_153 = arith.constant 0 : index
      %323 = vector.load %arg6[%c0_151, %c0_152, %c0_153] : memref<1x1x32xf32, #tpu.memory_space<vmem>>, vector<1x1x32xf32>
      %324 = vector.shape_cast %323 : vector<1x1x32xf32> to vector<1x32xf32>
      %c0_154 = arith.constant 0 : index
      %c0_155 = arith.constant 0 : index
      %c0_156 = arith.constant 0 : index
      %325 = vector.load %arg9[%c0_154, %c0_155, %c0_156] : memref<1x32x32xf32, #tpu.memory_space<vmem>>, vector<1x32x32xf32>
      %326 = vector.shape_cast %325 : vector<1x32x32xf32> to vector<32x32xf32>
      %c0_157 = arith.constant 0 : index
      %c0_158 = arith.constant 0 : index
      %c0_159 = arith.constant 0 : index
      %327 = vector.load %arg10[%c0_157, %c0_158, %c0_159] : memref<1x1x32xf32, #tpu.memory_space<vmem>>, vector<1x1x32xf32>
      %328 = vector.shape_cast %327 : vector<1x1x32xf32> to vector<1x32xf32>
      %cst_160 = arith.constant dense<0.000000e+00> : vector<8x32xf32>
      %329 = tpu.matmul %59, %322, %cst_160 {dimension_numbers = #tpu.dot_dimension_numbers<[1], [0], [0], [1], [0, 0, 1, 1], [], []>} : vector<8x32xf32>, vector<32x32xf32>, vector<8x32xf32> -> vector<8x32xf32>
      %330 = vector.broadcast %324 : vector<1x32xf32> to vector<8x32xf32>
      %331 = arith.addf %329, %330 : vector<8x32xf32>
      %332 = vector.extract_strided_slice %331 {offsets = [0, 0], sizes = [8, 8], strides = [1, 1]} : vector<8x32xf32> to vector<8x8xf32>
      %333 = vector.extract_strided_slice %74 {offsets = [0, 0], sizes = [8, 8], strides = [1, 1]} : vector<8x32xf32> to vector<8x8xf32>
      %cst_161 = arith.constant dense<0.000000e+00> : vector<8x8xf32>
      %334 = tpu.matmul %332, %333, %cst_161 {dimension_numbers = #tpu.dot_dimension_numbers<[1], [1], [0], [0], [0, 0, 1, 0], [], []>} : vector<8x8xf32>, vector<8x8xf32>, vector<8x8xf32> -> vector<8x8xf32>
      %cst_162 = arith.constant dense<0xFF800000> : vector<8xf32>
      %335 = vector.multi_reduction <maximumf>, %334, %cst_162 [1] : vector<8x8xf32> to vector<8xf32>
      %336 = vector.shape_cast %335 : vector<8xf32> to vector<8x1xf32>
      %337 = vector.broadcast %336 : vector<8x1xf32> to vector<8x8xf32>
      %338 = arith.subf %334, %337 : vector<8x8xf32>
      %339 = math.exp %338 : vector<8x8xf32>
      %cst_163 = arith.constant dense<0.000000e+00> : vector<8xf32>
      %340 = vector.multi_reduction <add>, %339, %cst_163 [1] : vector<8x8xf32> to vector<8xf32>
      %341 = vector.shape_cast %340 : vector<8xf32> to vector<8x1xf32>
      %342 = tpu.reciprocal %341 {approx = true} : vector<8x1xf32> -> vector<8x1xf32>
      %343 = vector.broadcast %342 : vector<8x1xf32> to vector<8x8xf32>
      %344 = arith.mulf %339, %343 : vector<8x8xf32>
      %345 = vector.extract_strided_slice %75 {offsets = [0, 0], sizes = [8, 8], strides = [1, 1]} : vector<8x32xf32> to vector<8x8xf32>
      %cst_164 = arith.constant dense<0.000000e+00> : vector<8x8xf32>
      %346 = tpu.matmul %344, %345, %cst_164 {dimension_numbers = #tpu.dot_dimension_numbers<[1], [0], [0], [1], [0, 0, 1, 1], [], []>} : vector<8x8xf32>, vector<8x8xf32>, vector<8x8xf32> -> vector<8x8xf32>
      %347 = vector.extract_strided_slice %331 {offsets = [0, 8], sizes = [8, 8], strides = [1, 1]} : vector<8x32xf32> to vector<8x8xf32>
      %348 = vector.extract_strided_slice %74 {offsets = [0, 8], sizes = [8, 8], strides = [1, 1]} : vector<8x32xf32> to vector<8x8xf32>
      %cst_165 = arith.constant dense<0.000000e+00> : vector<8x8xf32>
      %349 = tpu.matmul %347, %348, %cst_165 {dimension_numbers = #tpu.dot_dimension_numbers<[1], [1], [0], [0], [0, 0, 1, 0], [], []>} : vector<8x8xf32>, vector<8x8xf32>, vector<8x8xf32> -> vector<8x8xf32>
      %cst_166 = arith.constant dense<0xFF800000> : vector<8xf32>
      %350 = vector.multi_reduction <maximumf>, %349, %cst_166 [1] : vector<8x8xf32> to vector<8xf32>
      %351 = vector.shape_cast %350 : vector<8xf32> to vector<8x1xf32>
      %352 = vector.broadcast %351 : vector<8x1xf32> to vector<8x8xf32>
      %353 = arith.subf %349, %352 : vector<8x8xf32>
      %354 = math.exp %353 : vector<8x8xf32>
      %cst_167 = arith.constant dense<0.000000e+00> : vector<8xf32>
      %355 = vector.multi_reduction <add>, %354, %cst_167 [1] : vector<8x8xf32> to vector<8xf32>
      %356 = vector.shape_cast %355 : vector<8xf32> to vector<8x1xf32>
      %357 = tpu.reciprocal %356 {approx = true} : vector<8x1xf32> -> vector<8x1xf32>
      %358 = vector.broadcast %357 : vector<8x1xf32> to vector<8x8xf32>
      %359 = arith.mulf %354, %358 : vector<8x8xf32>
      %360 = vector.extract_strided_slice %75 {offsets = [0, 8], sizes = [8, 8], strides = [1, 1]} : vector<8x32xf32> to vector<8x8xf32>
      %cst_168 = arith.constant dense<0.000000e+00> : vector<8x8xf32>
      %361 = tpu.matmul %359, %360, %cst_168 {dimension_numbers = #tpu.dot_dimension_numbers<[1], [0], [0], [1], [0, 0, 1, 1], [], []>} : vector<8x8xf32>, vector<8x8xf32>, vector<8x8xf32> -> vector<8x8xf32>
      %362 = vector.extract_strided_slice %331 {offsets = [0, 16], sizes = [8, 8], strides = [1, 1]} : vector<8x32xf32> to vector<8x8xf32>
      %363 = vector.extract_strided_slice %74 {offsets = [0, 16], sizes = [8, 8], strides = [1, 1]} : vector<8x32xf32> to vector<8x8xf32>
      %cst_169 = arith.constant dense<0.000000e+00> : vector<8x8xf32>
      %364 = tpu.matmul %362, %363, %cst_169 {dimension_numbers = #tpu.dot_dimension_numbers<[1], [1], [0], [0], [0, 0, 1, 0], [], []>} : vector<8x8xf32>, vector<8x8xf32>, vector<8x8xf32> -> vector<8x8xf32>
      %cst_170 = arith.constant dense<0xFF800000> : vector<8xf32>
      %365 = vector.multi_reduction <maximumf>, %364, %cst_170 [1] : vector<8x8xf32> to vector<8xf32>
      %366 = vector.shape_cast %365 : vector<8xf32> to vector<8x1xf32>
      %367 = vector.broadcast %366 : vector<8x1xf32> to vector<8x8xf32>
      %368 = arith.subf %364, %367 : vector<8x8xf32>
      %369 = math.exp %368 : vector<8x8xf32>
      %cst_171 = arith.constant dense<0.000000e+00> : vector<8xf32>
      %370 = vector.multi_reduction <add>, %369, %cst_171 [1] : vector<8x8xf32> to vector<8xf32>
      %371 = vector.shape_cast %370 : vector<8xf32> to vector<8x1xf32>
      %372 = tpu.reciprocal %371 {approx = true} : vector<8x1xf32> -> vector<8x1xf32>
      %373 = vector.broadcast %372 : vector<8x1xf32> to vector<8x8xf32>
      %374 = arith.mulf %369, %373 : vector<8x8xf32>
      %375 = vector.extract_strided_slice %75 {offsets = [0, 16], sizes = [8, 8], strides = [1, 1]} : vector<8x32xf32> to vector<8x8xf32>
      %cst_172 = arith.constant dense<0.000000e+00> : vector<8x8xf32>
      %376 = tpu.matmul %374, %375, %cst_172 {dimension_numbers = #tpu.dot_dimension_numbers<[1], [0], [0], [1], [0, 0, 1, 1], [], []>} : vector<8x8xf32>, vector<8x8xf32>, vector<8x8xf32> -> vector<8x8xf32>
      %377 = vector.extract_strided_slice %331 {offsets = [0, 24], sizes = [8, 8], strides = [1, 1]} : vector<8x32xf32> to vector<8x8xf32>
      %378 = vector.extract_strided_slice %74 {offsets = [0, 24], sizes = [8, 8], strides = [1, 1]} : vector<8x32xf32> to vector<8x8xf32>
      %cst_173 = arith.constant dense<0.000000e+00> : vector<8x8xf32>
      %379 = tpu.matmul %377, %378, %cst_173 {dimension_numbers = #tpu.dot_dimension_numbers<[1], [1], [0], [0], [0, 0, 1, 0], [], []>} : vector<8x8xf32>, vector<8x8xf32>, vector<8x8xf32> -> vector<8x8xf32>
      %cst_174 = arith.constant dense<0xFF800000> : vector<8xf32>
      %380 = vector.multi_reduction <maximumf>, %379, %cst_174 [1] : vector<8x8xf32> to vector<8xf32>
      %381 = vector.shape_cast %380 : vector<8xf32> to vector<8x1xf32>
      %382 = vector.broadcast %381 : vector<8x1xf32> to vector<8x8xf32>
      %383 = arith.subf %379, %382 : vector<8x8xf32>
      %384 = math.exp %383 : vector<8x8xf32>
      %cst_175 = arith.constant dense<0.000000e+00> : vector<8xf32>
      %385 = vector.multi_reduction <add>, %384, %cst_175 [1] : vector<8x8xf32> to vector<8xf32>
      %386 = vector.shape_cast %385 : vector<8xf32> to vector<8x1xf32>
      %387 = tpu.reciprocal %386 {approx = true} : vector<8x1xf32> -> vector<8x1xf32>
      %388 = vector.broadcast %387 : vector<8x1xf32> to vector<8x8xf32>
      %389 = arith.mulf %384, %388 : vector<8x8xf32>
      %390 = vector.extract_strided_slice %75 {offsets = [0, 24], sizes = [8, 8], strides = [1, 1]} : vector<8x32xf32> to vector<8x8xf32>
      %cst_176 = arith.constant dense<0.000000e+00> : vector<8x8xf32>
      %391 = tpu.matmul %389, %390, %cst_176 {dimension_numbers = #tpu.dot_dimension_numbers<[1], [0], [0], [1], [0, 0, 1, 1], [], []>} : vector<8x8xf32>, vector<8x8xf32>, vector<8x8xf32> -> vector<8x8xf32>
      %392 = tpu.concatenate %346, %361, %376, %391 in 1 : vector<8x8xf32>, vector<8x8xf32>, vector<8x8xf32>, vector<8x8xf32> -> vector<8x32xf32>
      %cst_177 = arith.constant dense<0.000000e+00> : vector<8x32xf32>
      %393 = tpu.matmul %392, %326, %cst_177 {dimension_numbers = #tpu.dot_dimension_numbers<[1], [0], [0], [1], [0, 0, 1, 1], [], []>} : vector<8x32xf32>, vector<32x32xf32>, vector<8x32xf32> -> vector<8x32xf32>
      %394 = vector.broadcast %328 : vector<1x32xf32> to vector<8x32xf32>
      %395 = arith.addf %393, %394 : vector<8x32xf32>
      %396 = arith.addf %5, %395 : vector<8x32xf32>
      %c0_178 = arith.constant 0 : index
      %c0_179 = arith.constant 0 : index
      %c0_180 = arith.constant 0 : index
      %397 = vector.load %arg21[%c0_178, %c0_179, %c0_180] : memref<1x1x32xf32, #tpu.memory_space<vmem>>, vector<1x1x32xf32>
      %398 = vector.shape_cast %397 : vector<1x1x32xf32> to vector<1x32xf32>
      %c0_181 = arith.constant 0 : index
      %c0_182 = arith.constant 0 : index
      %c0_183 = arith.constant 0 : index
      %399 = vector.load %arg22[%c0_181, %c0_182, %c0_183] : memref<1x1x32xf32, #tpu.memory_space<vmem>>, vector<1x1x32xf32>
      %400 = vector.shape_cast %399 : vector<1x1x32xf32> to vector<1x32xf32>
      %cst_184 = arith.constant dense<0.000000e+00> : vector<8xf32>
      %401 = vector.multi_reduction <add>, %396, %cst_184 [1] : vector<8x32xf32> to vector<8xf32>
      %402 = vector.shape_cast %401 : vector<8xf32> to vector<8x1xf32>
      %cst_185 = arith.constant 3.200000e+01 : f32
      %403 = vector.broadcast %cst_185 : f32 to vector<8x1xf32>
      %404 = arith.divf %402, %403 : vector<8x1xf32>
      %405 = vector.broadcast %404 : vector<8x1xf32> to vector<8x32xf32>
      %406 = arith.subf %396, %405 : vector<8x32xf32>
      %407 = arith.mulf %406, %406 : vector<8x32xf32>
      %cst_186 = arith.constant dense<0.000000e+00> : vector<8xf32>
      %408 = vector.multi_reduction <add>, %407, %cst_186 [1] : vector<8x32xf32> to vector<8xf32>
      %409 = vector.shape_cast %408 : vector<8xf32> to vector<8x1xf32>
      %cst_187 = arith.constant 3.200000e+01 : f32
      %410 = vector.broadcast %cst_187 : f32 to vector<8x1xf32>
      %411 = arith.divf %409, %410 : vector<8x1xf32>
      %412 = vector.broadcast %404 : vector<8x1xf32> to vector<8x32xf32>
      %413 = arith.subf %396, %412 : vector<8x32xf32>
      %cst_188 = arith.constant 9.99999974E-6 : f32
      %414 = vector.broadcast %cst_188 : f32 to vector<8x1xf32>
      %415 = arith.addf %411, %414 : vector<8x1xf32>
      %416 = math.rsqrt %415 : vector<8x1xf32>
      %417 = vector.broadcast %416 : vector<8x1xf32> to vector<8x32xf32>
      %418 = arith.mulf %413, %417 : vector<8x32xf32>
      %419 = vector.broadcast %398 : vector<1x32xf32> to vector<8x32xf32>
      %420 = arith.mulf %418, %419 : vector<8x32xf32>
      %421 = vector.broadcast %400 : vector<1x32xf32> to vector<8x32xf32>
      %422 = arith.addf %420, %421 : vector<8x32xf32>
      %c0_189 = arith.constant 0 : index
      %c0_190 = arith.constant 0 : index
      %c0_191 = arith.constant 0 : index
      %423 = vector.load %arg11[%c0_189, %c0_190, %c0_191] : memref<1x32x32xf32, #tpu.memory_space<vmem>>, vector<1x32x32xf32>
      %424 = vector.shape_cast %423 : vector<1x32x32xf32> to vector<32x32xf32>
      %c0_192 = arith.constant 0 : index
      %c0_193 = arith.constant 0 : index
      %c0_194 = arith.constant 0 : index
      %425 = vector.load %arg12[%c0_192, %c0_193, %c0_194] : memref<1x1x32xf32, #tpu.memory_space<vmem>>, vector<1x1x32xf32>
      %426 = vector.shape_cast %425 : vector<1x1x32xf32> to vector<1x32xf32>
      %c0_195 = arith.constant 0 : index
      %c0_196 = arith.constant 0 : index
      %c0_197 = arith.constant 0 : index
      %427 = vector.load %arg15[%c0_195, %c0_196, %c0_197] : memref<1x32x32xf32, #tpu.memory_space<vmem>>, vector<1x32x32xf32>
      %428 = vector.shape_cast %427 : vector<1x32x32xf32> to vector<32x32xf32>
      %c0_198 = arith.constant 0 : index
      %c0_199 = arith.constant 0 : index
      %c0_200 = arith.constant 0 : index
      %429 = vector.load %arg16[%c0_198, %c0_199, %c0_200] : memref<1x1x32xf32, #tpu.memory_space<vmem>>, vector<1x1x32xf32>
      %430 = vector.shape_cast %429 : vector<1x1x32xf32> to vector<1x32xf32>
      %cst_201 = arith.constant dense<0.000000e+00> : vector<8x32xf32>
      %431 = tpu.matmul %422, %424, %cst_201 {dimension_numbers = #tpu.dot_dimension_numbers<[1], [0], [0], [1], [0, 0, 1, 1], [], []>} : vector<8x32xf32>, vector<32x32xf32>, vector<8x32xf32> -> vector<8x32xf32>
      %432 = vector.broadcast %426 : vector<1x32xf32> to vector<8x32xf32>
      %433 = arith.addf %431, %432 : vector<8x32xf32>
      %434 = vector.extract_strided_slice %433 {offsets = [0, 0], sizes = [8, 8], strides = [1, 1]} : vector<8x32xf32> to vector<8x8xf32>
      %435 = vector.extract_strided_slice %76 {offsets = [0, 0], sizes = [16, 8], strides = [1, 1]} : vector<16x32xf32> to vector<16x8xf32>
      %cst_202 = arith.constant dense<0.000000e+00> : vector<8x16xf32>
      %436 = tpu.matmul %434, %435, %cst_202 {dimension_numbers = #tpu.dot_dimension_numbers<[1], [1], [0], [0], [0, 0, 1, 0], [], []>} : vector<8x8xf32>, vector<16x8xf32>, vector<8x16xf32> -> vector<8x16xf32>
      %cst_203 = arith.constant dense<0xFF800000> : vector<8xf32>
      %437 = vector.multi_reduction <maximumf>, %436, %cst_203 [1] : vector<8x16xf32> to vector<8xf32>
      %438 = vector.shape_cast %437 : vector<8xf32> to vector<8x1xf32>
      %439 = vector.broadcast %438 : vector<8x1xf32> to vector<8x16xf32>
      %440 = arith.subf %436, %439 : vector<8x16xf32>
      %441 = math.exp %440 : vector<8x16xf32>
      %cst_204 = arith.constant dense<0.000000e+00> : vector<8xf32>
      %442 = vector.multi_reduction <add>, %441, %cst_204 [1] : vector<8x16xf32> to vector<8xf32>
      %443 = vector.shape_cast %442 : vector<8xf32> to vector<8x1xf32>
      %444 = tpu.reciprocal %443 {approx = true} : vector<8x1xf32> -> vector<8x1xf32>
      %445 = vector.broadcast %444 : vector<8x1xf32> to vector<8x16xf32>
      %446 = arith.mulf %441, %445 : vector<8x16xf32>
      %447 = vector.extract_strided_slice %77 {offsets = [0, 0], sizes = [16, 8], strides = [1, 1]} : vector<16x32xf32> to vector<16x8xf32>
      %cst_205 = arith.constant dense<0.000000e+00> : vector<8x8xf32>
      %448 = tpu.matmul %446, %447, %cst_205 {dimension_numbers = #tpu.dot_dimension_numbers<[1], [0], [0], [1], [0, 0, 1, 1], [], []>} : vector<8x16xf32>, vector<16x8xf32>, vector<8x8xf32> -> vector<8x8xf32>
      %449 = vector.extract_strided_slice %433 {offsets = [0, 8], sizes = [8, 8], strides = [1, 1]} : vector<8x32xf32> to vector<8x8xf32>
      %450 = vector.extract_strided_slice %76 {offsets = [0, 8], sizes = [16, 8], strides = [1, 1]} : vector<16x32xf32> to vector<16x8xf32>
      %cst_206 = arith.constant dense<0.000000e+00> : vector<8x16xf32>
      %451 = tpu.matmul %449, %450, %cst_206 {dimension_numbers = #tpu.dot_dimension_numbers<[1], [1], [0], [0], [0, 0, 1, 0], [], []>} : vector<8x8xf32>, vector<16x8xf32>, vector<8x16xf32> -> vector<8x16xf32>
      %cst_207 = arith.constant dense<0xFF800000> : vector<8xf32>
      %452 = vector.multi_reduction <maximumf>, %451, %cst_207 [1] : vector<8x16xf32> to vector<8xf32>
      %453 = vector.shape_cast %452 : vector<8xf32> to vector<8x1xf32>
      %454 = vector.broadcast %453 : vector<8x1xf32> to vector<8x16xf32>
      %455 = arith.subf %451, %454 : vector<8x16xf32>
      %456 = math.exp %455 : vector<8x16xf32>
      %cst_208 = arith.constant dense<0.000000e+00> : vector<8xf32>
      %457 = vector.multi_reduction <add>, %456, %cst_208 [1] : vector<8x16xf32> to vector<8xf32>
      %458 = vector.shape_cast %457 : vector<8xf32> to vector<8x1xf32>
      %459 = tpu.reciprocal %458 {approx = true} : vector<8x1xf32> -> vector<8x1xf32>
      %460 = vector.broadcast %459 : vector<8x1xf32> to vector<8x16xf32>
      %461 = arith.mulf %456, %460 : vector<8x16xf32>
      %462 = vector.extract_strided_slice %77 {offsets = [0, 8], sizes = [16, 8], strides = [1, 1]} : vector<16x32xf32> to vector<16x8xf32>
      %cst_209 = arith.constant dense<0.000000e+00> : vector<8x8xf32>
      %463 = tpu.matmul %461, %462, %cst_209 {dimension_numbers = #tpu.dot_dimension_numbers<[1], [0], [0], [1], [0, 0, 1, 1], [], []>} : vector<8x16xf32>, vector<16x8xf32>, vector<8x8xf32> -> vector<8x8xf32>
      %464 = vector.extract_strided_slice %433 {offsets = [0, 16], sizes = [8, 8], strides = [1, 1]} : vector<8x32xf32> to vector<8x8xf32>
      %465 = vector.extract_strided_slice %76 {offsets = [0, 16], sizes = [16, 8], strides = [1, 1]} : vector<16x32xf32> to vector<16x8xf32>
      %cst_210 = arith.constant dense<0.000000e+00> : vector<8x16xf32>
      %466 = tpu.matmul %464, %465, %cst_210 {dimension_numbers = #tpu.dot_dimension_numbers<[1], [1], [0], [0], [0, 0, 1, 0], [], []>} : vector<8x8xf32>, vector<16x8xf32>, vector<8x16xf32> -> vector<8x16xf32>
      %cst_211 = arith.constant dense<0xFF800000> : vector<8xf32>
      %467 = vector.multi_reduction <maximumf>, %466, %cst_211 [1] : vector<8x16xf32> to vector<8xf32>
      %468 = vector.shape_cast %467 : vector<8xf32> to vector<8x1xf32>
      %469 = vector.broadcast %468 : vector<8x1xf32> to vector<8x16xf32>
      %470 = arith.subf %466, %469 : vector<8x16xf32>
      %471 = math.exp %470 : vector<8x16xf32>
      %cst_212 = arith.constant dense<0.000000e+00> : vector<8xf32>
      %472 = vector.multi_reduction <add>, %471, %cst_212 [1] : vector<8x16xf32> to vector<8xf32>
      %473 = vector.shape_cast %472 : vector<8xf32> to vector<8x1xf32>
      %474 = tpu.reciprocal %473 {approx = true} : vector<8x1xf32> -> vector<8x1xf32>
      %475 = vector.broadcast %474 : vector<8x1xf32> to vector<8x16xf32>
      %476 = arith.mulf %471, %475 : vector<8x16xf32>
      %477 = vector.extract_strided_slice %77 {offsets = [0, 16], sizes = [16, 8], strides = [1, 1]} : vector<16x32xf32> to vector<16x8xf32>
      %cst_213 = arith.constant dense<0.000000e+00> : vector<8x8xf32>
      %478 = tpu.matmul %476, %477, %cst_213 {dimension_numbers = #tpu.dot_dimension_numbers<[1], [0], [0], [1], [0, 0, 1, 1], [], []>} : vector<8x16xf32>, vector<16x8xf32>, vector<8x8xf32> -> vector<8x8xf32>
      %479 = vector.extract_strided_slice %433 {offsets = [0, 24], sizes = [8, 8], strides = [1, 1]} : vector<8x32xf32> to vector<8x8xf32>
      %480 = vector.extract_strided_slice %76 {offsets = [0, 24], sizes = [16, 8], strides = [1, 1]} : vector<16x32xf32> to vector<16x8xf32>
      %cst_214 = arith.constant dense<0.000000e+00> : vector<8x16xf32>
      %481 = tpu.matmul %479, %480, %cst_214 {dimension_numbers = #tpu.dot_dimension_numbers<[1], [1], [0], [0], [0, 0, 1, 0], [], []>} : vector<8x8xf32>, vector<16x8xf32>, vector<8x16xf32> -> vector<8x16xf32>
      %cst_215 = arith.constant dense<0xFF800000> : vector<8xf32>
      %482 = vector.multi_reduction <maximumf>, %481, %cst_215 [1] : vector<8x16xf32> to vector<8xf32>
      %483 = vector.shape_cast %482 : vector<8xf32> to vector<8x1xf32>
      %484 = vector.broadcast %483 : vector<8x1xf32> to vector<8x16xf32>
      %485 = arith.subf %481, %484 : vector<8x16xf32>
      %486 = math.exp %485 : vector<8x16xf32>
      %cst_216 = arith.constant dense<0.000000e+00> : vector<8xf32>
      %487 = vector.multi_reduction <add>, %486, %cst_216 [1] : vector<8x16xf32> to vector<8xf32>
      %488 = vector.shape_cast %487 : vector<8xf32> to vector<8x1xf32>
      %489 = tpu.reciprocal %488 {approx = true} : vector<8x1xf32> -> vector<8x1xf32>
      %490 = vector.broadcast %489 : vector<8x1xf32> to vector<8x16xf32>
      %491 = arith.mulf %486, %490 : vector<8x16xf32>
      %492 = vector.extract_strided_slice %77 {offsets = [0, 24], sizes = [16, 8], strides = [1, 1]} : vector<16x32xf32> to vector<16x8xf32>
      %cst_217 = arith.constant dense<0.000000e+00> : vector<8x8xf32>
      %493 = tpu.matmul %491, %492, %cst_217 {dimension_numbers = #tpu.dot_dimension_numbers<[1], [0], [0], [1], [0, 0, 1, 1], [], []>} : vector<8x16xf32>, vector<16x8xf32>, vector<8x8xf32> -> vector<8x8xf32>
      %494 = tpu.concatenate %448, %463, %478, %493 in 1 : vector<8x8xf32>, vector<8x8xf32>, vector<8x8xf32>, vector<8x8xf32> -> vector<8x32xf32>
      %cst_218 = arith.constant dense<0.000000e+00> : vector<8x32xf32>
      %495 = tpu.matmul %494, %428, %cst_218 {dimension_numbers = #tpu.dot_dimension_numbers<[1], [0], [0], [1], [0, 0, 1, 1], [], []>} : vector<8x32xf32>, vector<32x32xf32>, vector<8x32xf32> -> vector<8x32xf32>
      %496 = vector.broadcast %430 : vector<1x32xf32> to vector<8x32xf32>
      %497 = arith.addf %495, %496 : vector<8x32xf32>
      %498 = arith.addf %396, %497 : vector<8x32xf32>
      %c0_219 = arith.constant 0 : index
      %c0_220 = arith.constant 0 : index
      %c0_221 = arith.constant 0 : index
      %499 = vector.load %arg23[%c0_219, %c0_220, %c0_221] : memref<1x1x32xf32, #tpu.memory_space<vmem>>, vector<1x1x32xf32>
      %500 = vector.shape_cast %499 : vector<1x1x32xf32> to vector<1x32xf32>
      %c0_222 = arith.constant 0 : index
      %c0_223 = arith.constant 0 : index
      %c0_224 = arith.constant 0 : index
      %501 = vector.load %arg24[%c0_222, %c0_223, %c0_224] : memref<1x1x32xf32, #tpu.memory_space<vmem>>, vector<1x1x32xf32>
      %502 = vector.shape_cast %501 : vector<1x1x32xf32> to vector<1x32xf32>
      %cst_225 = arith.constant dense<0.000000e+00> : vector<8xf32>
      %503 = vector.multi_reduction <add>, %498, %cst_225 [1] : vector<8x32xf32> to vector<8xf32>
      %504 = vector.shape_cast %503 : vector<8xf32> to vector<8x1xf32>
      %cst_226 = arith.constant 3.200000e+01 : f32
      %505 = vector.broadcast %cst_226 : f32 to vector<8x1xf32>
      %506 = arith.divf %504, %505 : vector<8x1xf32>
      %507 = vector.broadcast %506 : vector<8x1xf32> to vector<8x32xf32>
      %508 = arith.subf %498, %507 : vector<8x32xf32>
      %509 = arith.mulf %508, %508 : vector<8x32xf32>
      %cst_227 = arith.constant dense<0.000000e+00> : vector<8xf32>
      %510 = vector.multi_reduction <add>, %509, %cst_227 [1] : vector<8x32xf32> to vector<8xf32>
      %511 = vector.shape_cast %510 : vector<8xf32> to vector<8x1xf32>
      %cst_228 = arith.constant 3.200000e+01 : f32
      %512 = vector.broadcast %cst_228 : f32 to vector<8x1xf32>
      %513 = arith.divf %511, %512 : vector<8x1xf32>
      %514 = vector.broadcast %506 : vector<8x1xf32> to vector<8x32xf32>
      %515 = arith.subf %498, %514 : vector<8x32xf32>
      %cst_229 = arith.constant 9.99999974E-6 : f32
      %516 = vector.broadcast %cst_229 : f32 to vector<8x1xf32>
      %517 = arith.addf %513, %516 : vector<8x1xf32>
      %518 = math.rsqrt %517 : vector<8x1xf32>
      %519 = vector.broadcast %518 : vector<8x1xf32> to vector<8x32xf32>
      %520 = arith.mulf %515, %519 : vector<8x32xf32>
      %521 = vector.broadcast %500 : vector<1x32xf32> to vector<8x32xf32>
      %522 = arith.mulf %520, %521 : vector<8x32xf32>
      %523 = vector.broadcast %502 : vector<1x32xf32> to vector<8x32xf32>
      %524 = arith.addf %522, %523 : vector<8x32xf32>
      %c0_230 = arith.constant 0 : index
      %c0_231 = arith.constant 0 : index
      %c0_232 = arith.constant 0 : index
      %525 = vector.load %arg25[%c0_230, %c0_231, %c0_232] : memref<1x32x64xf32, #tpu.memory_space<vmem>>, vector<1x32x64xf32>
      %526 = vector.shape_cast %525 : vector<1x32x64xf32> to vector<32x64xf32>
      %cst_233 = arith.constant dense<0.000000e+00> : vector<8x64xf32>
      %527 = tpu.matmul %524, %526, %cst_233 {dimension_numbers = #tpu.dot_dimension_numbers<[1], [0], [0], [1], [0, 0, 1, 1], [], []>} : vector<8x32xf32>, vector<32x64xf32>, vector<8x64xf32> -> vector<8x64xf32>
      %c0_234 = arith.constant 0 : index
      %c0_235 = arith.constant 0 : index
      %c0_236 = arith.constant 0 : index
      %528 = vector.load %arg26[%c0_234, %c0_235, %c0_236] : memref<1x1x64xf32, #tpu.memory_space<vmem>>, vector<1x1x64xf32>
      %529 = vector.shape_cast %528 : vector<1x1x64xf32> to vector<1x64xf32>
      %530 = vector.broadcast %529 : vector<1x64xf32> to vector<8x64xf32>
      %531 = arith.addf %527, %530 : vector<8x64xf32>
      %cst_237 = arith.constant 5.000000e-01 : f32
      %532 = vector.broadcast %cst_237 : f32 to vector<8x64xf32>
      %533 = arith.mulf %532, %531 : vector<8x64xf32>
      %cst_238 = arith.constant 0.707106769 : f32
      %534 = vector.broadcast %cst_238 : f32 to vector<8x64xf32>
      %535 = arith.mulf %531, %534 : vector<8x64xf32>
      %536 = math.erf %535 : vector<8x64xf32>
      %cst_239 = arith.constant 1.000000e+00 : f32
      %537 = vector.broadcast %cst_239 : f32 to vector<8x64xf32>
      %538 = arith.addf %537, %536 : vector<8x64xf32>
      %539 = arith.mulf %533, %538 : vector<8x64xf32>
      %c0_240 = arith.constant 0 : index
      %c0_241 = arith.constant 0 : index
      %c0_242 = arith.constant 0 : index
      %540 = vector.load %arg27[%c0_240, %c0_241, %c0_242] : memref<1x64x32xf32, #tpu.memory_space<vmem>>, vector<1x64x32xf32>
      %541 = vector.shape_cast %540 : vector<1x64x32xf32> to vector<64x32xf32>
      %cst_243 = arith.constant dense<0.000000e+00> : vector<8x32xf32>
      %542 = tpu.matmul %539, %541, %cst_243 {dimension_numbers = #tpu.dot_dimension_numbers<[1], [0], [0], [1], [0, 0, 1, 1], [], []>} : vector<8x64xf32>, vector<64x32xf32>, vector<8x32xf32> -> vector<8x32xf32>
      %c0_244 = arith.constant 0 : index
      %c0_245 = arith.constant 0 : index
      %c0_246 = arith.constant 0 : index
      %543 = vector.load %arg28[%c0_244, %c0_245, %c0_246] : memref<1x1x32xf32, #tpu.memory_space<vmem>>, vector<1x1x32xf32>
      %544 = vector.shape_cast %543 : vector<1x1x32xf32> to vector<1x32xf32>
      %545 = vector.broadcast %544 : vector<1x32xf32> to vector<8x32xf32>
      %546 = arith.addf %542, %545 : vector<8x32xf32>
      %547 = arith.addf %498, %546 : vector<8x32xf32>
      %c0_247 = arith.constant 0 : index
      %c0_248 = arith.constant 0 : index
      %548 = vector.load %arg34[%c0_247, %c0_248] : memref<8x32xf32, #tpu.memory_space<vmem>>, vector<8x32xf32>
      tpu.vector_store %arg34[%c0_247, %c0_248], %547 {strides = array<i32>} : memref<8x32xf32, #tpu.memory_space<vmem>>, vector<8x32xf32>,
    } else {
    }
    %319 = arith.extui %1 : i1 to i32
    %c0_i32_147 = arith.constant 0 : i32
    %320 = arith.cmpi ne, %319, %c0_i32_147 : i32
    scf.if %320 {
      %c0_148 = arith.constant 0 : index
      %c0_149 = arith.constant 0 : index
      %321 = vector.load %arg29[%c0_148, %c0_149] : memref<1x32xf32, #tpu.memory_space<vmem>>, vector<1x32xf32>
      %c0_150 = arith.constant 0 : index
      %c0_151 = arith.constant 0 : index
      %322 = vector.load %arg30[%c0_150, %c0_151] : memref<1x32xf32, #tpu.memory_space<vmem>>, vector<1x32xf32>
      %cst_152 = arith.constant dense<0.000000e+00> : vector<8xf32>
      %323 = vector.multi_reduction <add>, %314, %cst_152 [1] : vector<8x32xf32> to vector<8xf32>
      %324 = vector.shape_cast %323 : vector<8xf32> to vector<8x1xf32>
      %cst_153 = arith.constant 3.200000e+01 : f32
      %325 = vector.broadcast %cst_153 : f32 to vector<8x1xf32>
      %326 = arith.divf %324, %325 : vector<8x1xf32>
      %327 = vector.broadcast %326 : vector<8x1xf32> to vector<8x32xf32>
      %328 = arith.subf %314, %327 : vector<8x32xf32>
      %329 = arith.mulf %328, %328 : vector<8x32xf32>
      %cst_154 = arith.constant dense<0.000000e+00> : vector<8xf32>
      %330 = vector.multi_reduction <add>, %329, %cst_154 [1] : vector<8x32xf32> to vector<8xf32>
      %331 = vector.shape_cast %330 : vector<8xf32> to vector<8x1xf32>
      %cst_155 = arith.constant 3.200000e+01 : f32
      %332 = vector.broadcast %cst_155 : f32 to vector<8x1xf32>
      %333 = arith.divf %331, %332 : vector<8x1xf32>
      %334 = vector.broadcast %326 : vector<8x1xf32> to vector<8x32xf32>
      %335 = arith.subf %314, %334 : vector<8x32xf32>
      %cst_156 = arith.constant 9.99999974E-6 : f32
      %336 = vector.broadcast %cst_156 : f32 to vector<8x1xf32>
      %337 = arith.addf %333, %336 : vector<8x1xf32>
      %338 = math.rsqrt %337 : vector<8x1xf32>
      %339 = vector.broadcast %338 : vector<8x1xf32> to vector<8x32xf32>
      %340 = arith.mulf %335, %339 : vector<8x32xf32>
      %341 = vector.broadcast %321 : vector<1x32xf32> to vector<8x32xf32>
      %342 = arith.mulf %340, %341 : vector<8x32xf32>
      %343 = vector.broadcast %322 : vector<1x32xf32> to vector<8x32xf32>
      %344 = arith.addf %342, %343 : vector<8x32xf32>
      %c0_157 = arith.constant 0 : index
      %c0_158 = arith.constant 0 : index
      %c0_159 = arith.constant 0 : index
      %345 = vector.load %arg31[%c0_157, %c0_158, %c0_159] : memref<1x8x32xf32, #tpu.memory_space<vmem>>, vector<1x8x32xf32>
      %346 = vector.shape_cast %345 : vector<1x8x32xf32> to vector<8x32xf32>
      %347 = vector.shape_cast %344 : vector<8x32xf32> to vector<1x8x32xf32>
      tpu.vector_store %arg31[%c0_157, %c0_158, %c0_159], %347 {strides = array<i32>} : memref<1x8x32xf32, #tpu.memory_space<vmem>>, vector<1x8x32xf32>,
      %cst_160 = arith.constant 0.000000e+00 : f32
      %348 = vector.broadcast %cst_160 : f32 to vector<8x104xf32>
      %349 = tpu.concatenate %157, %264, %348 in 1 : vector<8x8xf32>, vector<8x16xf32>, vector<8x104xf32> -> vector<8x128xf32>
      %c0_161 = arith.constant 0 : index
      %c0_162 = arith.constant 0 : index
      %c0_163 = arith.constant 0 : index
      %350 = vector.load %arg32[%c0_161, %c0_162, %c0_163] : memref<1x8x128xf32, #tpu.memory_space<vmem>>, vector<1x8x128xf32>
      %351 = vector.shape_cast %350 : vector<1x8x128xf32> to vector<8x128xf32>
      %352 = vector.shape_cast %349 : vector<8x128xf32> to vector<1x8x128xf32>
      tpu.vector_store %arg32[%c0_161, %c0_162, %c0_163], %352 {strides = array<i32>} : memref<1x8x128xf32, #tpu.memory_space<vmem>>, vector<1x8x128xf32>,
    } else {
    }
    return
  }
  func.func @transform_0(%arg0: i32, %arg1: i32) -> (i32, i32, i32) {
    %c0_i32 = arith.constant 0 : i32
    %c0_i32_0 = arith.constant 0 : i32
    %c0_i32_1 = arith.constant 0 : i32
    return %arg0, %c0_i32, %c0_i32_0 : i32, i32, i32
  }
  func.func @transform_1(%arg0: i32, %arg1: i32) -> (i32, i32, i32) {
    %c0_i32 = arith.constant 0 : i32
    %c0_i32_0 = arith.constant 0 : i32
    %c0_i32_1 = arith.constant 0 : i32
    return %arg0, %c0_i32, %c0_i32_0 : i32, i32, i32
  }
  func.func @transform_2(%arg0: i32, %arg1: i32) -> (i32, i32, i32) {
    %c0_i32 = arith.constant 0 : i32
    %c0_i32_0 = arith.constant 0 : i32
    %c0_i32_1 = arith.constant 0 : i32
    return %arg0, %c0_i32, %c0_i32_0 : i32, i32, i32
  }
  func.func @transform_3(%arg0: i32, %arg1: i32) -> (i32, i32, i32) {
    %c0_i32 = arith.constant 0 : i32
    %c0_i32_0 = arith.constant 0 : i32
    %c0_i32_1 = arith.constant 0 : i32
    return %arg1, %c0_i32, %c0_i32_0 : i32, i32, i32
  }
  func.func @transform_4(%arg0: i32, %arg1: i32) -> (i32, i32, i32) {
    %c0_i32 = arith.constant 0 : i32
    %c0_i32_0 = arith.constant 0 : i32
    %c0_i32_1 = arith.constant 0 : i32
    return %arg1, %c0_i32, %c0_i32_0 : i32, i32, i32
  }
  func.func @transform_5(%arg0: i32, %arg1: i32) -> (i32, i32, i32) {
    %c0_i32 = arith.constant 0 : i32
    %c0_i32_0 = arith.constant 0 : i32
    %c0_i32_1 = arith.constant 0 : i32
    return %arg1, %c0_i32, %c0_i32_0 : i32, i32, i32
  }
  func.func @transform_6(%arg0: i32, %arg1: i32) -> (i32, i32, i32) {
    %c0_i32 = arith.constant 0 : i32
    %c0_i32_0 = arith.constant 0 : i32
    %c0_i32_1 = arith.constant 0 : i32
    return %arg1, %c0_i32, %c0_i32_0 : i32, i32, i32
  }
  func.func @transform_7(%arg0: i32, %arg1: i32) -> (i32, i32, i32) {
    %c0_i32 = arith.constant 0 : i32
    %c0_i32_0 = arith.constant 0 : i32
    %c0_i32_1 = arith.constant 0 : i32
    return %arg1, %c0_i32, %c0_i32_0 : i32, i32, i32
  }
  func.func @transform_8(%arg0: i32, %arg1: i32) -> (i32, i32, i32) {
    %c0_i32 = arith.constant 0 : i32
    %c0_i32_0 = arith.constant 0 : i32
    %c0_i32_1 = arith.constant 0 : i32
    return %arg1, %c0_i32, %c0_i32_0 : i32, i32, i32
  }
  func.func @transform_9(%arg0: i32, %arg1: i32) -> (i32, i32, i32) {
    %c0_i32 = arith.constant 0 : i32
    %c0_i32_0 = arith.constant 0 : i32
    %c0_i32_1 = arith.constant 0 : i32
    return %arg1, %c0_i32, %c0_i32_0 : i32, i32, i32
  }
  func.func @transform_10(%arg0: i32, %arg1: i32) -> (i32, i32, i32) {
    %c0_i32 = arith.constant 0 : i32
    %c0_i32_0 = arith.constant 0 : i32
    %c0_i32_1 = arith.constant 0 : i32
    return %arg1, %c0_i32, %c0_i32_0 : i32, i32, i32
  }
  func.func @transform_11(%arg0: i32, %arg1: i32) -> (i32, i32, i32) {
    %c0_i32 = arith.constant 0 : i32
    %c0_i32_0 = arith.constant 0 : i32
    %c0_i32_1 = arith.constant 0 : i32
    return %arg1, %c0_i32, %c0_i32_0 : i32, i32, i32
  }
  func.func @transform_12(%arg0: i32, %arg1: i32) -> (i32, i32, i32) {
    %c0_i32 = arith.constant 0 : i32
    %c0_i32_0 = arith.constant 0 : i32
    %c0_i32_1 = arith.constant 0 : i32
    return %arg1, %c0_i32, %c0_i32_0 : i32, i32, i32
  }
  func.func @transform_13(%arg0: i32, %arg1: i32) -> (i32, i32, i32) {
    %c0_i32 = arith.constant 0 : i32
    %c0_i32_0 = arith.constant 0 : i32
    %c0_i32_1 = arith.constant 0 : i32
    return %arg1, %c0_i32, %c0_i32_0 : i32, i32, i32
  }
  func.func @transform_14(%arg0: i32, %arg1: i32) -> (i32, i32, i32) {
    %c0_i32 = arith.constant 0 : i32
    %c0_i32_0 = arith.constant 0 : i32
    %c0_i32_1 = arith.constant 0 : i32
    return %arg1, %c0_i32, %c0_i32_0 : i32, i32, i32
  }
  func.func @transform_15(%arg0: i32, %arg1: i32) -> (i32, i32, i32) {
    %c0_i32 = arith.constant 0 : i32
    %c0_i32_0 = arith.constant 0 : i32
    %c0_i32_1 = arith.constant 0 : i32
    return %arg1, %c0_i32, %c0_i32_0 : i32, i32, i32
  }
  func.func @transform_16(%arg0: i32, %arg1: i32) -> (i32, i32, i32) {
    %c0_i32 = arith.constant 0 : i32
    %c0_i32_0 = arith.constant 0 : i32
    %c0_i32_1 = arith.constant 0 : i32
    return %arg1, %c0_i32, %c0_i32_0 : i32, i32, i32
  }
  func.func @transform_17(%arg0: i32, %arg1: i32) -> (i32, i32, i32) {
    %c0_i32 = arith.constant 0 : i32
    %c0_i32_0 = arith.constant 0 : i32
    %c0_i32_1 = arith.constant 0 : i32
    return %arg1, %c0_i32, %c0_i32_0 : i32, i32, i32
  }
  func.func @transform_18(%arg0: i32, %arg1: i32) -> (i32, i32, i32) {
    %c0_i32 = arith.constant 0 : i32
    %c0_i32_0 = arith.constant 0 : i32
    %c0_i32_1 = arith.constant 0 : i32
    return %arg1, %c0_i32, %c0_i32_0 : i32, i32, i32
  }
  func.func @transform_19(%arg0: i32, %arg1: i32) -> (i32, i32, i32) {
    %c0_i32 = arith.constant 0 : i32
    %c0_i32_0 = arith.constant 0 : i32
    %c0_i32_1 = arith.constant 0 : i32
    return %arg1, %c0_i32, %c0_i32_0 : i32, i32, i32
  }
  func.func @transform_20(%arg0: i32, %arg1: i32) -> (i32, i32, i32) {
    %c0_i32 = arith.constant 0 : i32
    %c0_i32_0 = arith.constant 0 : i32
    %c0_i32_1 = arith.constant 0 : i32
    return %arg1, %c0_i32, %c0_i32_0 : i32, i32, i32
  }
  func.func @transform_21(%arg0: i32, %arg1: i32) -> (i32, i32, i32) {
    %c0_i32 = arith.constant 0 : i32
    %c0_i32_0 = arith.constant 0 : i32
    %c0_i32_1 = arith.constant 0 : i32
    return %arg1, %c0_i32, %c0_i32_0 : i32, i32, i32
  }
  func.func @transform_22(%arg0: i32, %arg1: i32) -> (i32, i32, i32) {
    %c0_i32 = arith.constant 0 : i32
    %c0_i32_0 = arith.constant 0 : i32
    %c0_i32_1 = arith.constant 0 : i32
    return %arg1, %c0_i32, %c0_i32_0 : i32, i32, i32
  }
  func.func @transform_23(%arg0: i32, %arg1: i32) -> (i32, i32, i32) {
    %c0_i32 = arith.constant 0 : i32
    %c0_i32_0 = arith.constant 0 : i32
    %c0_i32_1 = arith.constant 0 : i32
    return %arg1, %c0_i32, %c0_i32_0 : i32, i32, i32
  }
  func.func @transform_24(%arg0: i32, %arg1: i32) -> (i32, i32, i32) {
    %c0_i32 = arith.constant 0 : i32
    %c0_i32_0 = arith.constant 0 : i32
    %c0_i32_1 = arith.constant 0 : i32
    return %arg1, %c0_i32, %c0_i32_0 : i32, i32, i32
  }
  func.func @transform_25(%arg0: i32, %arg1: i32) -> (i32, i32, i32) {
    %c0_i32 = arith.constant 0 : i32
    %c0_i32_0 = arith.constant 0 : i32
    %c0_i32_1 = arith.constant 0 : i32
    return %arg1, %c0_i32, %c0_i32_0 : i32, i32, i32
  }
  func.func @transform_26(%arg0: i32, %arg1: i32) -> (i32, i32, i32) {
    %c0_i32 = arith.constant 0 : i32
    %c0_i32_0 = arith.constant 0 : i32
    %c0_i32_1 = arith.constant 0 : i32
    return %arg1, %c0_i32, %c0_i32_0 : i32, i32, i32
  }
  func.func @transform_27(%arg0: i32, %arg1: i32) -> (i32, i32) {
    %c0_i32 = arith.constant 0 : i32
    %c0_i32_0 = arith.constant 0 : i32
    %c0_i32_1 = arith.constant 0 : i32
    return %c0_i32, %c0_i32_0 : i32, i32
  }
  func.func @transform_28(%arg0: i32, %arg1: i32) -> (i32, i32) {
    %c0_i32 = arith.constant 0 : i32
    %c0_i32_0 = arith.constant 0 : i32
    %c0_i32_1 = arith.constant 0 : i32
    return %c0_i32, %c0_i32_0 : i32, i32
  }
  func.func @transform_29(%arg0: i32, %arg1: i32) -> (i32, i32, i32) {
    %c0_i32 = arith.constant 0 : i32
    %c0_i32_0 = arith.constant 0 : i32
    %c0_i32_1 = arith.constant 0 : i32
    return %arg0, %c0_i32, %c0_i32_0 : i32, i32, i32
  }
  func.func @transform_30(%arg0: i32, %arg1: i32) -> (i32, i32, i32) {
    %c0_i32 = arith.constant 0 : i32
    %c0_i32_0 = arith.constant 0 : i32
    %c0_i32_1 = arith.constant 0 : i32
    return %arg0, %c0_i32, %c0_i32_0 : i32, i32, i32
  }
}

</mosaic_0001>

<llo_original>
// kernel: decoder_forward.1
$region0: #{decoder_forward.1}
  #allocation0 [shape = 'u32[]', space=smem, size = 0x4, offset = 0x4, fixed_abs, tag = 'smem constant byte address 0x4 - core index']
  #allocation1 [shape = 'u32[144,128]{1,0:T(1,128)}', space=vmem, size = 0x12000, scoped, tag = 'internal scratch']
  #allocation2 [shape = 'f32[8,32]{1,0:T(8,128)}', space=vmem, size = 0x1000, scoped, tag = 'scratch operand']
  #allocation3 [shape = 'f32[8,32]{1,0:T(8,128)}', space=vmem, size = 0x1000, scoped, tag = 'scratch operand']
  %s0 = inlined_call_operand.smem [shape: u32[31], index: -1, kind: input, shape index: {}]
  %s1 = sld [smem:[%s0]]
  %s2 = scalar_lea.smem %s0, 1
  %s3 = sld [smem:[%s2]]
  %s4 = scalar_lea.smem %s0, 2
  %s5 = sld [smem:[%s4]]
  %s6 = scalar_lea.smem %s0, 3
  %s7 = sld [smem:[%s6]]
  %s8 = scalar_lea.smem %s0, 4
  %s9 = sld [smem:[%s8]]
  %s10 = scalar_lea.smem %s0, 5
  %s11 = sld [smem:[%s10]]
  %s12 = scalar_lea.smem %s0, 6
  %s13 = sld [smem:[%s12]]
  %s14 = scalar_lea.smem %s0, 7
  %s15 = sld [smem:[%s14]]
  %s16 = scalar_lea.smem %s0, 8
  %s17 = sld [smem:[%s16]]
  %s18 = scalar_lea.smem %s0, 9
  %s19 = sld [smem:[%s18]]
  %s20 = scalar_lea.smem %s0, 10
  %s21 = sld [smem:[%s20]]
  %s22 = scalar_lea.smem %s0, 11
  %s23 = sld [smem:[%s22]]
  %s24 = scalar_lea.smem %s0, 12
  %s25 = sld [smem:[%s24]]
  %s26 = scalar_lea.smem %s0, 13
  %s27 = sld [smem:[%s26]]
  %s28 = scalar_lea.smem %s0, 14
  %s29 = sld [smem:[%s28]]
  %s30 = scalar_lea.smem %s0, 15
  %s31 = sld [smem:[%s30]]
  %s32 = scalar_lea.smem %s0, 16
  %s33 = sld [smem:[%s32]]
  %s34 = scalar_lea.smem %s0, 17
  %s35 = sld [smem:[%s34]]
  %s36 = scalar_lea.smem %s0, 18
  %s37 = sld [smem:[%s36]]
  %s38 = scalar_lea.smem %s0, 19
  %s39 = sld [smem:[%s38]]
  %s40 = scalar_lea.smem %s0, 20
  %s41 = sld [smem:[%s40]]
  %s42 = scalar_lea.smem %s0, 21
  %s43 = sld [smem:[%s42]]
  %s44 = scalar_lea.smem %s0, 22
  %s45 = sld [smem:[%s44]]
  %s46 = scalar_lea.smem %s0, 23
  %s47 = sld [smem:[%s46]]
  %s48 = scalar_lea.smem %s0, 24
  %s49 = sld [smem:[%s48]]
  %s50 = scalar_lea.smem %s0, 25
  %s51 = sld [smem:[%s50]]
  %s52 = scalar_lea.smem %s0, 26
  %s53 = sld [smem:[%s52]]
  %s54 = scalar_lea.smem %s0, 27
  %s55 = sld [smem:[%s54]]
  %s56 = scalar_lea.smem %s0, 28
  %s57 = sld [smem:[%s56]]
  %s58 = scalar_lea.smem %s0, 29
  %s59 = sld [smem:[%s58]]
  %s60 = scalar_lea.smem %s0, 30
  %s61 = sld [smem:[%s60]]
  %62 = xla_tuple %s59, %s61
  %s63 = sld [smem:[#allocation0]]
  $region169: #{decoder_forward.1} parent=0
    _
  %s65 = ssub.s32 1, %s63
  %s66 = scalar_select 0, %s65, %s63
  $region1: #{decoder_forward.1} parent=0
    #allocation4 [shape = 'u8[8192]{0}', space=vmem, size = 0x2000, scoped, tag = 'output window, operand 0']
    #allocation5 [shape = 's32[2]{0}', space=sflag, size = 0x8, scoped, tag = 'scoped memory for decoder_forward.1']
    %67 = vsyncpa [#allocation5], 0
    %s68 = scalar_lea.sflag [#allocation5], 1
    %69 = vsyncpa %s68, 0
    loop: start=0, step=1, limit=6
    $region2: #{decoder_forward.1} parent=1 // loop_pre_header
      _
    $region3: #{decoder_forward.1} parent=1 // loop_header
      %s71 = sphi 0, %s75
      %p72 = scmp.ge.s32.totalorder %s71, 6
      %s78 = sphi 0, %s90
      %s79 = sphi 0, %s86
      %s80 = sphi 0, %s78
      %s81 = sphi 0, %s79
      %s82 = sphi 0, %s80
      %s83 = sphi 0, %s81
      %s93 = sphi 0, %s95
      %s96 = sphi 0, %s93
      %s97 = sphi 0, %s96
      %s113 = sphi 0, %s97
      %s119 = sphi 0, %s121
      %s122 = sphi 0, %s119
      %s123 = sphi 0, %s122
      %s139 = sphi 0, %s123
      %s145 = sphi 0, %s147
      %s148 = sphi 0, %s145
      %s149 = sphi 0, %s148
      %s165 = sphi 0, %s149
      %s171 = sphi 0, %s173
      %s174 = sphi 0, %s171
      %s175 = sphi 0, %s174
      %s191 = sphi 0, %s175
      %s197 = sphi 0, %s199
      %s200 = sphi 0, %s197
      %s201 = sphi 0, %s200
      %s217 = sphi 0, %s201
      %s223 = sphi 0, %s225
      %s226 = sphi 0, %s223
      %s227 = sphi 0, %s226
      %s243 = sphi 0, %s227
      %s249 = sphi 0, %s251
      %s252 = sphi 0, %s249
      %s253 = sphi 0, %s252
      %s269 = sphi 0, %s253
      %s275 = sphi 0, %s277
      %s278 = sphi 0, %s275
      %s279 = sphi 0, %s278
      %s295 = sphi 0, %s279
      %s301 = sphi 0, %s303
      %s304 = sphi 0, %s301
      %s305 = sphi 0, %s304
      %s321 = sphi 0, %s305
      %s327 = sphi 0, %s329
      %s330 = sphi 0, %s327
      %s331 = sphi 0, %s330
      %s347 = sphi 0, %s331
      %s353 = sphi 0, %s355
      %s356 = sphi 0, %s353
      %s357 = sphi 0, %s356
      %s373 = sphi 0, %s357
      %s379 = sphi 0, %s381
      %s382 = sphi 0, %s379
      %s383 = sphi 0, %s382
      %s399 = sphi 0, %s383
      %s405 = sphi 0, %s407
      %s408 = sphi 0, %s405
      %s409 = sphi 0, %s408
      %s425 = sphi 0, %s409
      %s431 = sphi 0, %s433
      %s434 = sphi 0, %s431
      %s435 = sphi 0, %s434
      %s451 = sphi 0, %s435
      %s457 = sphi 0, %s459
      %s460 = sphi 0, %s457
      %s461 = sphi 0, %s460
      %s477 = sphi 0, %s461
      %s483 = sphi 0, %s485
      %s486 = sphi 0, %s483
      %s487 = sphi 0, %s486
      %s503 = sphi 0, %s487
      %s509 = sphi 0, %s511
      %s512 = sphi 0, %s509
      %s513 = sphi 0, %s512
      %s529 = sphi 0, %s513
      %s535 = sphi 0, %s537
      %s538 = sphi 0, %s535
      %s539 = sphi 0, %s538
      %s555 = sphi 0, %s539
      %s561 = sphi 0, %s563
      %s564 = sphi 0, %s561
      %s565 = sphi 0, %s564
      %s581 = sphi 0, %s565
      %s587 = sphi 0, %s589
      %s590 = sphi 0, %s587
      %s591 = sphi 0, %s590
      %s607 = sphi 0, %s591
      %s613 = sphi 0, %s615
      %s616 = sphi 0, %s613
      %s617 = sphi 0, %s616
      %s633 = sphi 0, %s617
      %s639 = sphi 0, %s641
      %s642 = sphi 0, %s639
      %s643 = sphi 0, %s642
      %s659 = sphi 0, %s643
      %s665 = sphi 0, %s667
      %s668 = sphi 0, %s665
      %s669 = sphi 0, %s668
      %s685 = sphi 0, %s669
      %s691 = sphi 0, %s693
      %s694 = sphi 0, %s691
      %s695 = sphi 0, %s694
      %s711 = sphi 0, %s695
      %s717 = sphi 0, %s719
      %s720 = sphi 0, %s717
      %s721 = sphi 0, %s720
      %s737 = sphi 0, %s721
      %s743 = sphi 0, %s745
      %s746 = sphi 0, %s743
      %s747 = sphi 0, %s746
      %s763 = sphi 0, %s747
      %s769 = sphi 0, %s771
      %s772 = sphi 0, %s769
      %s773 = sphi 0, %s772
      %s789 = sphi 0, %s773
      %s793 = sphi 0, %s793
      %s795 = sphi 0, %s793
      %s796 = sphi 0, %s795
      %s810 = sphi 0, %s796
      %s814 = sphi 0, %s814
      %s816 = sphi 0, %s814
      %s817 = sphi 0, %s816
      %s831 = sphi 0, %s817
      %s837 = sphi 0, %s839
      %s840 = sphi 0, %s837
      %s841 = sphi 0, %s840
      %s857 = sphi 0, %s841
      %s863 = sphi 0, %s865
      %s866 = sphi 0, %s863
      %s867 = sphi 0, %s866
      %s883 = sphi 0, %s867
    $region4: #{decoder_forward.1} parent=1 // loop_header_branch
      %74 = sbr.rel (%p72) target = $region8
    $region5: #{decoder_forward.1} parent=1 // loop_body
      %s76 = ssub.s32 %s71, 1
      %s77 = ssub.s32 %s71, 2
      %s84 = sadd.s32 1, %s79
      %p85 = scmp.ge.s32.totalorder %s84, 2
      %s86 = scalar_select %p85, 0, %s84
      %s87 = sadd.s32 1, %s78
      %s88 = scalar_select %p85, %s87, %s78
      %p89 = scmp.ge.s32.totalorder %s88, 2
      %s90 = scalar_select %p89, 0, %s88
      %s91 = ssub.s32 %s78, %s90
      %p92 = scmp.eq.s32.totalorder %s91, 0
      %s94 = sadd.s32 %s93, 1
      %s95 = scalar_select %p92, %s93, %s94
      %p98 = pneg %p92
      %p99 = scmp.eq.s32.totalorder %s71, 3
      %p100 = por %p98, %p99
      %p101 = scmp.ne.s32.totalorder %s93, %s96
      %p102 = scmp.eq.s32.totalorder %s71, 0
      %p103 = por %p101, %p102
      %p104 = scmp.ne.s32.totalorder %s93, %s96
      %p105 = scmp.eq.s32.totalorder %s76, 3
      %p106 = por %p104, %p105
      %p107 = scmp.ne.s32.totalorder %s96, %s97
      %p108 = scmp.eq.s32.totalorder %s76, 0
      %p109 = por %p107, %p108
      %p110 = scmp.ne.s32.totalorder %s96, %s97
      %p111 = scmp.eq.s32.totalorder %s77, 3
      %p112 = por %p110, %p111
      %p114 = scmp.ne.s32.totalorder %s97, %s113
      %p115 = scmp.eq.s32.totalorder %s77, 0
      %p116 = por %p114, %p115
      %s117 = ssub.s32 %s78, %s90
      %p118 = scmp.eq.s32.totalorder %s117, 0
      %s120 = sadd.s32 %s119, 1
      %s121 = scalar_select %p118, %s119, %s120
      %p124 = pneg %p118
      %p125 = scmp.eq.s32.totalorder %s71, 3
      %p126 = por %p124, %p125
      %p127 = scmp.ne.s32.totalorder %s119, %s122
      %p128 = scmp.eq.s32.totalorder %s71, 0
      %p129 = por %p127, %p128
      %p130 = scmp.ne.s32.totalorder %s119, %s122
      %p131 = scmp.eq.s32.totalorder %s76, 3
      %p132 = por %p130, %p131
      %p133 = scmp.ne.s32.totalorder %s122, %s123
      %p134 = scmp.eq.s32.totalorder %s76, 0
      %p135 = por %p133, %p134
      %p136 = scmp.ne.s32.totalorder %s122, %s123
      %p137 = scmp.eq.s32.totalorder %s77, 3
      %p138 = por %p136, %p137
      %p140 = scmp.ne.s32.totalorder %s123, %s139
      %p141 = scmp.eq.s32.totalorder %s77, 0
      %p142 = por %p140, %p141
      %s143 = ssub.s32 %s78, %s90
      %p144 = scmp.eq.s32.totalorder %s143, 0
      %s146 = sadd.s32 %s145, 1
      %s147 = scalar_select %p144, %s145, %s146
      %p150 = pneg %p144
      %p151 = scmp.eq.s32.totalorder %s71, 3
      %p152 = por %p150, %p151
      %p153 = scmp.ne.s32.totalorder %s145, %s148
      %p154 = scmp.eq.s32.totalorder %s71, 0
      %p155 = por %p153, %p154
      %p156 = scmp.ne.s32.totalorder %s145, %s148
      %p157 = scmp.eq.s32.totalorder %s76, 3
      %p158 = por %p156, %p157
      %p159 = scmp.ne.s32.totalorder %s148, %s149
      %p160 = scmp.eq.s32.totalorder %s76, 0
      %p161 = por %p159, %p160
      %p162 = scmp.ne.s32.totalorder %s148, %s149
      %p163 = scmp.eq.s32.totalorder %s77, 3
      %p164 = por %p162, %p163
      %p166 = scmp.ne.s32.totalorder %s149, %s165
      %p167 = scmp.eq.s32.totalorder %s77, 0
      %p168 = por %p166, %p167
      %s169 = ssub.s32 %s79, %s86
      %p170 = scmp.eq.s32.totalorder %s169, 0
      %s172 = sadd.s32 %s171, 1
      %s173 = scalar_select %p170, %s171, %s172
      %p176 = pneg %p170
      %p177 = scmp.eq.s32.totalorder %s71, 3
      %p178 = por %p176, %p177
      %p179 = scmp.ne.s32.totalorder %s171, %s174
      %p180 = scmp.eq.s32.totalorder %s71, 0
      %p181 = por %p179, %p180
      %p182 = scmp.ne.s32.totalorder %s171, %s174
      %p183 = scmp.eq.s32.totalorder %s76, 3
      %p184 = por %p182, %p183
      %p185 = scmp.ne.s32.totalorder %s174, %s175
      %p186 = scmp.eq.s32.totalorder %s76, 0
      %p187 = por %p185, %p186
      %p188 = scmp.ne.s32.totalorder %s174, %s175
      %p189 = scmp.eq.s32.totalorder %s77, 3
      %p190 = por %p188, %p189
      %p192 = scmp.ne.s32.totalorder %s175, %s191
      %p193 = scmp.eq.s32.totalorder %s77, 0
      %p194 = por %p192, %p193
      %s195 = ssub.s32 %s79, %s86
      %p196 = scmp.eq.s32.totalorder %s195, 0
      %s198 = sadd.s32 %s197, 1
      %s199 = scalar_select %p196, %s197, %s198
      %p202 = pneg %p196
      %p203 = scmp.eq.s32.totalorder %s71, 3
      %p204 = por %p202, %p203
      %p205 = scmp.ne.s32.totalorder %s197, %s200
      %p206 = scmp.eq.s32.totalorder %s71, 0
      %p207 = por %p205, %p206
      %p208 = scmp.ne.s32.totalorder %s197, %s200
      %p209 = scmp.eq.s32.totalorder %s76, 3
      %p210 = por %p208, %p209
      %p211 = scmp.ne.s32.totalorder %s200, %s201
      %p212 = scmp.eq.s32.totalorder %s76, 0
      %p213 = por %p211, %p212
      %p214 = scmp.ne.s32.totalorder %s200, %s201
      %p215 = scmp.eq.s32.totalorder %s77, 3
      %p216 = por %p214, %p215
      %p218 = scmp.ne.s32.totalorder %s201, %s217
      %p219 = scmp.eq.s32.totalorder %s77, 0
      %p220 = por %p218, %p219
      %s221 = ssub.s32 %s79, %s86
      %p222 = scmp.eq.s32.totalorder %s221, 0
      %s224 = sadd.s32 %s223, 1
      %s225 = scalar_select %p222, %s223, %s224
      %p228 = pneg %p222
      %p229 = scmp.eq.s32.totalorder %s71, 3
      %p230 = por %p228, %p229
      %p231 = scmp.ne.s32.totalorder %s223, %s226
      %p232 = scmp.eq.s32.totalorder %s71, 0
      %p233 = por %p231, %p232
      %p234 = scmp.ne.s32.totalorder %s223, %s226
      %p235 = scmp.eq.s32.totalorder %s76, 3
      %p236 = por %p234, %p235
      %p237 = scmp.ne.s32.totalorder %s226, %s227
      %p238 = scmp.eq.s32.totalorder %s76, 0
      %p239 = por %p237, %p238
      %p240 = scmp.ne.s32.totalorder %s226, %s227
      %p241 = scmp.eq.s32.totalorder %s77, 3
      %p242 = por %p240, %p241
      %p244 = scmp.ne.s32.totalorder %s227, %s243
      %p245 = scmp.eq.s32.totalorder %s77, 0
      %p246 = por %p244, %p245
      %s247 = ssub.s32 %s79, %s86
      %p248 = scmp.eq.s32.totalorder %s247, 0
      %s250 = sadd.s32 %s249, 1
      %s251 = scalar_select %p248, %s249, %s250
      %p254 = pneg %p248
      %p255 = scmp.eq.s32.totalorder %s71, 3
      %p256 = por %p254, %p255
      %p257 = scmp.ne.s32.totalorder %s249, %s252
      %p258 = scmp.eq.s32.totalorder %s71, 0
      %p259 = por %p257, %p258
      %p260 = scmp.ne.s32.totalorder %s249, %s252
      %p261 = scmp.eq.s32.totalorder %s76, 3
      %p262 = por %p260, %p261
      %p263 = scmp.ne.s32.totalorder %s252, %s253
      %p264 = scmp.eq.s32.totalorder %s76, 0
      %p265 = por %p263, %p264
      %p266 = scmp.ne.s32.totalorder %s252, %s253
      %p267 = scmp.eq.s32.totalorder %s77, 3
      %p268 = por %p266, %p267
      %p270 = scmp.ne.s32.totalorder %s253, %s269
      %p271 = scmp.eq.s32.totalorder %s77, 0
      %p272 = por %p270, %p271
      %s273 = ssub.s32 %s79, %s86
      %p274 = scmp.eq.s32.totalorder %s273, 0
      %s276 = sadd.s32 %s275, 1
      %s277 = scalar_select %p274, %s275, %s276
      %p280 = pneg %p274
      %p281 = scmp.eq.s32.totalorder %s71, 3
      %p282 = por %p280, %p281
      %p283 = scmp.ne.s32.totalorder %s275, %s278
      %p284 = scmp.eq.s32.totalorder %s71, 0
      %p285 = por %p283, %p284
      %p286 = scmp.ne.s32.totalorder %s275, %s278
      %p287 = scmp.eq.s32.totalorder %s76, 3
      %p288 = por %p286, %p287
      %p289 = scmp.ne.s32.totalorder %s278, %s279
      %p290 = scmp.eq.s32.totalorder %s76, 0
      %p291 = por %p289, %p290
      %p292 = scmp.ne.s32.totalorder %s278, %s279
      %p293 = scmp.eq.s32.totalorder %s77, 3
      %p294 = por %p292, %p293
      %p296 = scmp.ne.s32.totalorder %s279, %s295
      %p297 = scmp.eq.s32.totalorder %s77, 0
      %p298 = por %p296, %p297
      %s299 = ssub.s32 %s79, %s86
      %p300 = scmp.eq.s32.totalorder %s299, 0
      %s302 = sadd.s32 %s301, 1
      %s303 = scalar_select %p300, %s301, %s302
      %p306 = pneg %p300
      %p307 = scmp.eq.s32.totalorder %s71, 3
      %p308 = por %p306, %p307
      %p309 = scmp.ne.s32.totalorder %s301, %s304
      %p310 = scmp.eq.s32.totalorder %s71, 0
      %p311 = por %p309, %p310
      %p312 = scmp.ne.s32.totalorder %s301, %s304
      %p313 = scmp.eq.s32.totalorder %s76, 3
      %p314 = por %p312, %p313
      %p315 = scmp.ne.s32.totalorder %s304, %s305
      %p316 = scmp.eq.s32.totalorder %s76, 0
      %p317 = por %p315, %p316
      %p318 = scmp.ne.s32.totalorder %s304, %s305
      %p319 = scmp.eq.s32.totalorder %s77, 3
      %p320 = por %p318, %p319
      %p322 = scmp.ne.s32.totalorder %s305, %s321
      %p323 = scmp.eq.s32.totalorder %s77, 0
      %p324 = por %p322, %p323
      %s325 = ssub.s32 %s79, %s86
      %p326 = scmp.eq.s32.totalorder %s325, 0
      %s328 = sadd.s32 %s327, 1
      %s329 = scalar_select %p326, %s327, %s328
      %p332 = pneg %p326
      %p333 = scmp.eq.s32.totalorder %s71, 3
      %p334 = por %p332, %p333
      %p335 = scmp.ne.s32.totalorder %s327, %s330
      %p336 = scmp.eq.s32.totalorder %s71, 0
      %p337 = por %p335, %p336
      %p338 = scmp.ne.s32.totalorder %s327, %s330
      %p339 = scmp.eq.s32.totalorder %s76, 3
      %p340 = por %p338, %p339
      %p341 = scmp.ne.s32.totalorder %s330, %s331
      %p342 = scmp.eq.s32.totalorder %s76, 0
      %p343 = por %p341, %p342
      %p344 = scmp.ne.s32.totalorder %s330, %s331
      %p345 = scmp.eq.s32.totalorder %s77, 3
      %p346 = por %p344, %p345
      %p348 = scmp.ne.s32.totalorder %s331, %s347
      %p349 = scmp.eq.s32.totalorder %s77, 0
      %p350 = por %p348, %p349
      %s351 = ssub.s32 %s79, %s86
      %p352 = scmp.eq.s32.totalorder %s351, 0
      %s354 = sadd.s32 %s353, 1
      %s355 = scalar_select %p352, %s353, %s354
      %p358 = pneg %p352
      %p359 = scmp.eq.s32.totalorder %s71, 3
      %p360 = por %p358, %p359
      %p361 = scmp.ne.s32.totalorder %s353, %s356
      %p362 = scmp.eq.s32.totalorder %s71, 0
      %p363 = por %p361, %p362
      %p364 = scmp.ne.s32.totalorder %s353, %s356
      %p365 = scmp.eq.s32.totalorder %s76, 3
      %p366 = por %p364, %p365
      %p367 = scmp.ne.s32.totalorder %s356, %s357
      %p368 = scmp.eq.s32.totalorder %s76, 0
      %p369 = por %p367, %p368
      %p370 = scmp.ne.s32.totalorder %s356, %s357
      %p371 = scmp.eq.s32.totalorder %s77, 3
      %p372 = por %p370, %p371
      %p374 = scmp.ne.s32.totalorder %s357, %s373
      %p375 = scmp.eq.s32.totalorder %s77, 0
      %p376 = por %p374, %p375
      %s377 = ssub.s32 %s79, %s86
      %p378 = scmp.eq.s32.totalorder %s377, 0
      %s380 = sadd.s32 %s379, 1
      %s381 = scalar_select %p378, %s379, %s380
      %p384 = pneg %p378
      %p385 = scmp.eq.s32.totalorder %s71, 3
      %p386 = por %p384, %p385
      %p387 = scmp.ne.s32.totalorder %s379, %s382
      %p388 = scmp.eq.s32.totalorder %s71, 0
      %p389 = por %p387, %p388
      %p390 = scmp.ne.s32.totalorder %s379, %s382
      %p391 = scmp.eq.s32.totalorder %s76, 3
      %p392 = por %p390, %p391
      %p393 = scmp.ne.s32.totalorder %s382, %s383
      %p394 = scmp.eq.s32.totalorder %s76, 0
      %p395 = por %p393, %p394
      %p396 = scmp.ne.s32.totalorder %s382, %s383
      %p397 = scmp.eq.s32.totalorder %s77, 3
      %p398 = por %p396, %p397
      %p400 = scmp.ne.s32.totalorder %s383, %s399
      %p401 = scmp.eq.s32.totalorder %s77, 0
      %p402 = por %p400, %p401
      %s403 = ssub.s32 %s79, %s86
      %p404 = scmp.eq.s32.totalorder %s403, 0
      %s406 = sadd.s32 %s405, 1
      %s407 = scalar_select %p404, %s405, %s406
      %p410 = pneg %p404
      %p411 = scmp.eq.s32.totalorder %s71, 3
      %p412 = por %p410, %p411
      %p413 = scmp.ne.s32.totalorder %s405, %s408
      %p414 = scmp.eq.s32.totalorder %s71, 0
      %p415 = por %p413, %p414
      %p416 = scmp.ne.s32.totalorder %s405, %s408
      %p417 = scmp.eq.s32.totalorder %s76, 3
      %p418 = por %p416, %p417
      %p419 = scmp.ne.s32.totalorder %s408, %s409
      %p420 = scmp.eq.s32.totalorder %s76, 0
      %p421 = por %p419, %p420
      %p422 = scmp.ne.s32.totalorder %s408, %s409
      %p423 = scmp.eq.s32.totalorder %s77, 3
      %p424 = por %p422, %p423
      %p426 = scmp.ne.s32.totalorder %s409, %s425
      %p427 = scmp.eq.s32.totalorder %s77, 0
      %p428 = por %p426, %p427
      %s429 = ssub.s32 %s79, %s86
      %p430 = scmp.eq.s32.totalorder %s429, 0
      %s432 = sadd.s32 %s431, 1
      %s433 = scalar_select %p430, %s431, %s432
      %p436 = pneg %p430
      %p437 = scmp.eq.s32.totalorder %s71, 3
      %p438 = por %p436, %p437
      %p439 = scmp.ne.s32.totalorder %s431, %s434
      %p440 = scmp.eq.s32.totalorder %s71, 0
      %p441 = por %p439, %p440
      %p442 = scmp.ne.s32.totalorder %s431, %s434
      %p443 = scmp.eq.s32.totalorder %s76, 3
      %p444 = por %p442, %p443
      %p445 = scmp.ne.s32.totalorder %s434, %s435
      %p446 = scmp.eq.s32.totalorder %s76, 0
      %p447 = por %p445, %p446
      %p448 = scmp.ne.s32.totalorder %s434, %s435
      %p449 = scmp.eq.s32.totalorder %s77, 3
      %p450 = por %p448, %p449
      %p452 = scmp.ne.s32.totalorder %s435, %s451
      %p453 = scmp.eq.s32.totalorder %s77, 0
      %p454 = por %p452, %p453
      %s455 = ssub.s32 %s79, %s86
      %p456 = scmp.eq.s32.totalorder %s455, 0
      %s458 = sadd.s32 %s457, 1
      %s459 = scalar_select %p456, %s457, %s458
      %p462 = pneg %p456
      %p463 = scmp.eq.s32.totalorder %s71, 3
      %p464 = por %p462, %p463
      %p465 = scmp.ne.s32.totalorder %s457, %s460
      %p466 = scmp.eq.s32.totalorder %s71, 0
      %p467 = por %p465, %p466
      %p468 = scmp.ne.s32.totalorder %s457, %s460
      %p469 = scmp.eq.s32.totalorder %s76, 3
      %p470 = por %p468, %p469
      %p471 = scmp.ne.s32.totalorder %s460, %s461
      %p472 = scmp.eq.s32.totalorder %s76, 0
      %p473 = por %p471, %p472
      %p474 = scmp.ne.s32.totalorder %s460, %s461
      %p475 = scmp.eq.s32.totalorder %s77, 3
      %p476 = por %p474, %p475
      %p478 = scmp.ne.s32.totalorder %s461, %s477
      %p479 = scmp.eq.s32.totalorder %s77, 0
      %p480 = por %p478, %p479
      %s481 = ssub.s32 %s79, %s86
      %p482 = scmp.eq.s32.totalorder %s481, 0
      %s484 = sadd.s32 %s483, 1
      %s485 = scalar_select %p482, %s483, %s484
      %p488 = pneg %p482
      %p489 = scmp.eq.s32.totalorder %s71, 3
      %p490 = por %p488, %p489
      %p491 = scmp.ne.s32.totalorder %s483, %s486
      %p492 = scmp.eq.s32.totalorder %s71, 0
      %p493 = por %p491, %p492
      %p494 = scmp.ne.s32.totalorder %s483, %s486
      %p495 = scmp.eq.s32.totalorder %s76, 3
      %p496 = por %p494, %p495
      %p497 = scmp.ne.s32.totalorder %s486, %s487
      %p498 = scmp.eq.s32.totalorder %s76, 0
      %p499 = por %p497, %p498
      %p500 = scmp.ne.s32.totalorder %s486, %s487
      %p501 = scmp.eq.s32.totalorder %s77, 3
      %p502 = por %p500, %p501
      %p504 = scmp.ne.s32.totalorder %s487, %s503
      %p505 = scmp.eq.s32.totalorder %s77, 0
      %p506 = por %p504, %p505
      %s507 = ssub.s32 %s79, %s86
      %p508 = scmp.eq.s32.totalorder %s507, 0
      %s510 = sadd.s32 %s509, 1
      %s511 = scalar_select %p508, %s509, %s510
      %p514 = pneg %p508
      %p515 = scmp.eq.s32.totalorder %s71, 3
      %p516 = por %p514, %p515
      %p517 = scmp.ne.s32.totalorder %s509, %s512
      %p518 = scmp.eq.s32.totalorder %s71, 0
      %p519 = por %p517, %p518
      %p520 = scmp.ne.s32.totalorder %s509, %s512
      %p521 = scmp.eq.s32.totalorder %s76, 3
      %p522 = por %p520, %p521
      %p523 = scmp.ne.s32.totalorder %s512, %s513
      %p524 = scmp.eq.s32.totalorder %s76, 0
      %p525 = por %p523, %p524
      %p526 = scmp.ne.s32.totalorder %s512, %s513
      %p527 = scmp.eq.s32.totalorder %s77, 3
      %p528 = por %p526, %p527
      %p530 = scmp.ne.s32.totalorder %s513, %s529
      %p531 = scmp.eq.s32.totalorder %s77, 0
      %p532 = por %p530, %p531
      %s533 = ssub.s32 %s79, %s86
      %p534 = scmp.eq.s32.totalorder %s533, 0
      %s536 = sadd.s32 %s535, 1
      %s537 = scalar_select %p534, %s535, %s536
      %p540 = pneg %p534
      %p541 = scmp.eq.s32.totalorder %s71, 3
      %p542 = por %p540, %p541
      %p543 = scmp.ne.s32.totalorder %s535, %s538
      %p544 = scmp.eq.s32.totalorder %s71, 0
      %p545 = por %p543, %p544
      %p546 = scmp.ne.s32.totalorder %s535, %s538
      %p547 = scmp.eq.s32.totalorder %s76, 3
      %p548 = por %p546, %p547
      %p549 = scmp.ne.s32.totalorder %s538, %s539
      %p550 = scmp.eq.s32.totalorder %s76, 0
      %p551 = por %p549, %p550
      %p552 = scmp.ne.s32.totalorder %s538, %s539
      %p553 = scmp.eq.s32.totalorder %s77, 3
      %p554 = por %p552, %p553
      %p556 = scmp.ne.s32.totalorder %s539, %s555
      %p557 = scmp.eq.s32.totalorder %s77, 0
      %p558 = por %p556, %p557
      %s559 = ssub.s32 %s79, %s86
      %p560 = scmp.eq.s32.totalorder %s559, 0
      %s562 = sadd.s32 %s561, 1
      %s563 = scalar_select %p560, %s561, %s562
      %p566 = pneg %p560
      %p567 = scmp.eq.s32.totalorder %s71, 3
      %p568 = por %p566, %p567
      %p569 = scmp.ne.s32.totalorder %s561, %s564
      %p570 = scmp.eq.s32.totalorder %s71, 0
      %p571 = por %p569, %p570
      %p572 = scmp.ne.s32.totalorder %s561, %s564
      %p573 = scmp.eq.s32.totalorder %s76, 3
      %p574 = por %p572, %p573
      %p575 = scmp.ne.s32.totalorder %s564, %s565
      %p576 = scmp.eq.s32.totalorder %s76, 0
      %p577 = por %p575, %p576
      %p578 = scmp.ne.s32.totalorder %s564, %s565
      %p579 = scmp.eq.s32.totalorder %s77, 3
      %p580 = por %p578, %p579
      %p582 = scmp.ne.s32.totalorder %s565, %s581
      %p583 = scmp.eq.s32.totalorder %s77, 0
      %p584 = por %p582, %p583
      %s585 = ssub.s32 %s79, %s86
      %p586 = scmp.eq.s32.totalorder %s585, 0
      %s588 = sadd.s32 %s587, 1
      %s589 = scalar_select %p586, %s587, %s588
      %p592 = pneg %p586
      %p593 = scmp.eq.s32.totalorder %s71, 3
      %p594 = por %p592, %p593
      %p595 = scmp.ne.s32.totalorder %s587, %s590
      %p596 = scmp.eq.s32.totalorder %s71, 0
      %p597 = por %p595, %p596
      %p598 = scmp.ne.s32.totalorder %s587, %s590
      %p599 = scmp.eq.s32.totalorder %s76, 3
      %p600 = por %p598, %p599
      %p601 = scmp.ne.s32.totalorder %s590, %s591
      %p602 = scmp.eq.s32.totalorder %s76, 0
      %p603 = por %p601, %p602
      %p604 = scmp.ne.s32.totalorder %s590, %s591
      %p605 = scmp.eq.s32.totalorder %s77, 3
      %p606 = por %p604, %p605
      %p608 = scmp.ne.s32.totalorder %s591, %s607
      %p609 = scmp.eq.s32.totalorder %s77, 0
      %p610 = por %p608, %p609
      %s611 = ssub.s32 %s79, %s86
      %p612 = scmp.eq.s32.totalorder %s611, 0
      %s614 = sadd.s32 %s613, 1
      %s615 = scalar_select %p612, %s613, %s614
      %p618 = pneg %p612
      %p619 = scmp.eq.s32.totalorder %s71, 3
      %p620 = por %p618, %p619
      %p621 = scmp.ne.s32.totalorder %s613, %s616
      %p622 = scmp.eq.s32.totalorder %s71, 0
      %p623 = por %p621, %p622
      %p624 = scmp.ne.s32.totalorder %s613, %s616
      %p625 = scmp.eq.s32.totalorder %s76, 3
      %p626 = por %p624, %p625
      %p627 = scmp.ne.s32.totalorder %s616, %s617
      %p628 = scmp.eq.s32.totalorder %s76, 0
      %p629 = por %p627, %p628
      %p630 = scmp.ne.s32.totalorder %s616, %s617
      %p631 = scmp.eq.s32.totalorder %s77, 3
      %p632 = por %p630, %p631
      %p634 = scmp.ne.s32.totalorder %s617, %s633
      %p635 = scmp.eq.s32.totalorder %s77, 0
      %p636 = por %p634, %p635
      %s637 = ssub.s32 %s79, %s86
      %p638 = scmp.eq.s32.totalorder %s637, 0
      %s640 = sadd.s32 %s639, 1
      %s641 = scalar_select %p638, %s639, %s640
      %p644 = pneg %p638
      %p645 = scmp.eq.s32.totalorder %s71, 3
      %p646 = por %p644, %p645
      %p647 = scmp.ne.s32.totalorder %s639, %s642
      %p648 = scmp.eq.s32.totalorder %s71, 0
      %p649 = por %p647, %p648
      %p650 = scmp.ne.s32.totalorder %s639, %s642
      %p651 = scmp.eq.s32.totalorder %s76, 3
      %p652 = por %p650, %p651
      %p653 = scmp.ne.s32.totalorder %s642, %s643
      %p654 = scmp.eq.s32.totalorder %s76, 0
      %p655 = por %p653, %p654
      %p656 = scmp.ne.s32.totalorder %s642, %s643
      %p657 = scmp.eq.s32.totalorder %s77, 3
      %p658 = por %p656, %p657
      %p660 = scmp.ne.s32.totalorder %s643, %s659
      %p661 = scmp.eq.s32.totalorder %s77, 0
      %p662 = por %p660, %p661
      %s663 = ssub.s32 %s79, %s86
      %p664 = scmp.eq.s32.totalorder %s663, 0
      %s666 = sadd.s32 %s665, 1
      %s667 = scalar_select %p664, %s665, %s666
      %p670 = pneg %p664
      %p671 = scmp.eq.s32.totalorder %s71, 3
      %p672 = por %p670, %p671
      %p673 = scmp.ne.s32.totalorder %s665, %s668
      %p674 = scmp.eq.s32.totalorder %s71, 0
      %p675 = por %p673, %p674
      %p676 = scmp.ne.s32.totalorder %s665, %s668
      %p677 = scmp.eq.s32.totalorder %s76, 3
      %p678 = por %p676, %p677
      %p679 = scmp.ne.s32.totalorder %s668, %s669
      %p680 = scmp.eq.s32.totalorder %s76, 0
      %p681 = por %p679, %p680
      %p682 = scmp.ne.s32.totalorder %s668, %s669
      %p683 = scmp.eq.s32.totalorder %s77, 3
      %p684 = por %p682, %p683
      %p686 = scmp.ne.s32.totalorder %s669, %s685
      %p687 = scmp.eq.s32.totalorder %s77, 0
      %p688 = por %p686, %p687
      %s689 = ssub.s32 %s79, %s86
      %p690 = scmp.eq.s32.totalorder %s689, 0
      %s692 = sadd.s32 %s691, 1
      %s693 = scalar_select %p690, %s691, %s692
      %p696 = pneg %p690
      %p697 = scmp.eq.s32.totalorder %s71, 3
      %p698 = por %p696, %p697
      %p699 = scmp.ne.s32.totalorder %s691, %s694
      %p700 = scmp.eq.s32.totalorder %s71, 0
      %p701 = por %p699, %p700
      %p702 = scmp.ne.s32.totalorder %s691, %s694
      %p703 = scmp.eq.s32.totalorder %s76, 3
      %p704 = por %p702, %p703
      %p705 = scmp.ne.s32.totalorder %s694, %s695
      %p706 = scmp.eq.s32.totalorder %s76, 0
      %p707 = por %p705, %p706
      %p708 = scmp.ne.s32.totalorder %s694, %s695
      %p709 = scmp.eq.s32.totalorder %s77, 3
      %p710 = por %p708, %p709
      %p712 = scmp.ne.s32.totalorder %s695, %s711
      %p713 = scmp.eq.s32.totalorder %s77, 0
      %p714 = por %p712, %p713
      %s715 = ssub.s32 %s79, %s86
      %p716 = scmp.eq.s32.totalorder %s715, 0
      %s718 = sadd.s32 %s717, 1
      %s719 = scalar_select %p716, %s717, %s718
      %p722 = pneg %p716
      %p723 = scmp.eq.s32.totalorder %s71, 3
      %p724 = por %p722, %p723
      %p725 = scmp.ne.s32.totalorder %s717, %s720
      %p726 = scmp.eq.s32.totalorder %s71, 0
      %p727 = por %p725, %p726
      %p728 = scmp.ne.s32.totalorder %s717, %s720
      %p729 = scmp.eq.s32.totalorder %s76, 3
      %p730 = por %p728, %p729
      %p731 = scmp.ne.s32.totalorder %s720, %s721
      %p732 = scmp.eq.s32.totalorder %s76, 0
      %p733 = por %p731, %p732
      %p734 = scmp.ne.s32.totalorder %s720, %s721
      %p735 = scmp.eq.s32.totalorder %s77, 3
      %p736 = por %p734, %p735
      %p738 = scmp.ne.s32.totalorder %s721, %s737
      %p739 = scmp.eq.s32.totalorder %s77, 0
      %p740 = por %p738, %p739
      %s741 = ssub.s32 %s79, %s86
      %p742 = scmp.eq.s32.totalorder %s741, 0
      %s744 = sadd.s32 %s743, 1
      %s745 = scalar_select %p742, %s743, %s744
      %p748 = pneg %p742
      %p749 = scmp.eq.s32.totalorder %s71, 3
      %p750 = por %p748, %p749
      %p751 = scmp.ne.s32.totalorder %s743, %s746
      %p752 = scmp.eq.s32.totalorder %s71, 0
      %p753 = por %p751, %p752
      %p754 = scmp.ne.s32.totalorder %s743, %s746
      %p755 = scmp.eq.s32.totalorder %s76, 3
      %p756 = por %p754, %p755
      %p757 = scmp.ne.s32.totalorder %s746, %s747
      %p758 = scmp.eq.s32.totalorder %s76, 0
      %p759 = por %p757, %p758
      %p760 = scmp.ne.s32.totalorder %s746, %s747
      %p761 = scmp.eq.s32.totalorder %s77, 3
      %p762 = por %p760, %p761
      %p764 = scmp.ne.s32.totalorder %s747, %s763
      %p765 = scmp.eq.s32.totalorder %s77, 0
      %p766 = por %p764, %p765
      %s767 = ssub.s32 %s79, %s86
      %p768 = scmp.eq.s32.totalorder %s767, 0
      %s770 = sadd.s32 %s769, 1
      %s771 = scalar_select %p768, %s769, %s770
      %p774 = pneg %p768
      %p775 = scmp.eq.s32.totalorder %s71, 3
      %p776 = por %p774, %p775
      %p777 = scmp.ne.s32.totalorder %s769, %s772
      %p778 = scmp.eq.s32.totalorder %s71, 0
      %p779 = por %p777, %p778
      %p780 = scmp.ne.s32.totalorder %s769, %s772
      %p781 = scmp.eq.s32.totalorder %s76, 3
      %p782 = por %p780, %p781
      %p783 = scmp.ne.s32.totalorder %s772, %s773
      %p784 = scmp.eq.s32.totalorder %s76, 0
      %p785 = por %p783, %p784
      %p786 = scmp.ne.s32.totalorder %s772, %s773
      %p787 = scmp.eq.s32.totalorder %s77, 3
      %p788 = por %p786, %p787
      %p790 = scmp.ne.s32.totalorder %s773, %s789
      %p791 = scmp.eq.s32.totalorder %s77, 0
      %p792 = por %p790, %p791
      %s794 = sadd.s32 %s793, 1
      %p797 = scmp.eq.s32.totalorder %s71, 3
      %p798 = scmp.ne.s32.totalorder %s793, %s795
      %p799 = scmp.eq.s32.totalorder %s71, 0
      %p800 = por %p798, %p799
      %p801 = scmp.ne.s32.totalorder %s793, %s795
      %p802 = scmp.eq.s32.totalorder %s76, 3
      %p803 = por %p801, %p802
      %p804 = scmp.ne.s32.totalorder %s795, %s796
      %p805 = scmp.eq.s32.totalorder %s76, 0
      %p806 = por %p804, %p805
      %p807 = scmp.ne.s32.totalorder %s795, %s796
      %p808 = scmp.eq.s32.totalorder %s77, 3
      %p809 = por %p807, %p808
      %p811 = scmp.ne.s32.totalorder %s796, %s810
      %p812 = scmp.eq.s32.totalorder %s77, 0
      %p813 = por %p811, %p812
      %s815 = sadd.s32 %s814, 1
      %p818 = scmp.eq.s32.totalorder %s71, 3
      %p819 = scmp.ne.s32.totalorder %s814, %s816
      %p820 = scmp.eq.s32.totalorder %s71, 0
      %p821 = por %p819, %p820
      %p822 = scmp.ne.s32.totalorder %s814, %s816
      %p823 = scmp.eq.s32.totalorder %s76, 3
      %p824 = por %p822, %p823
      %p825 = scmp.ne.s32.totalorder %s816, %s817
      %p826 = scmp.eq.s32.totalorder %s76, 0
      %p827 = por %p825, %p826
      %p828 = scmp.ne.s32.totalorder %s816, %s817
      %p829 = scmp.eq.s32.totalorder %s77, 3
      %p830 = por %p828, %p829
      %p832 = scmp.ne.s32.totalorder %s817, %s831
      %p833 = scmp.eq.s32.totalorder %s77, 0
      %p834 = por %p832, %p833
      %s835 = ssub.s32 %s78, %s90
      %p836 = scmp.eq.s32.totalorder %s835, 0
      %s838 = sadd.s32 %s837, 1
      %s839 = scalar_select %p836, %s837, %s838
      %p842 = pneg %p836
      %p843 = scmp.eq.s32.totalorder %s71, 3
      %p844 = por %p842, %p843
      %p845 = scmp.ne.s32.totalorder %s837, %s840
      %p846 = scmp.eq.s32.totalorder %s71, 0
      %p847 = por %p845, %p846
      %p848 = scmp.ne.s32.totalorder %s837, %s840
      %p849 = scmp.eq.s32.totalorder %s76, 3
      %p850 = por %p848, %p849
      %p851 = scmp.ne.s32.totalorder %s840, %s841
      %p852 = scmp.eq.s32.totalorder %s76, 0
      %p853 = por %p851, %p852
      %p854 = scmp.ne.s32.totalorder %s840, %s841
      %p855 = scmp.eq.s32.totalorder %s77, 3
      %p856 = por %p854, %p855
      %p858 = scmp.ne.s32.totalorder %s841, %s857
      %p859 = scmp.eq.s32.totalorder %s77, 0
      %p860 = por %p858, %p859
      %s861 = ssub.s32 %s78, %s90
      %p862 = scmp.eq.s32.totalorder %s861, 0
      %s864 = sadd.s32 %s863, 1
      %s865 = scalar_select %p862, %s863, %s864
      %p868 = pneg %p862
      %p869 = scmp.eq.s32.totalorder %s71, 3
      %p870 = por %p868, %p869
      %p871 = scmp.ne.s32.totalorder %s863, %s866
      %p872 = scmp.eq.s32.totalorder %s71, 0
      %p873 = por %p871, %p872
      %p874 = scmp.ne.s32.totalorder %s863, %s866
      %p875 = scmp.eq.s32.totalorder %s76, 3
      %p876 = por %p874, %p875
      %p877 = scmp.ne.s32.totalorder %s866, %s867
      %p878 = scmp.eq.s32.totalorder %s76, 0
      %p879 = por %p877, %p878
      %p880 = scmp.ne.s32.totalorder %s866, %s867
      %p881 = scmp.eq.s32.totalorder %s77, 3
      %p882 = por %p880, %p881
      %p884 = scmp.ne.s32.totalorder %s867, %s883
      %p885 = scmp.eq.s32.totalorder %s77, 0
      %p886 = por %p884, %p885
      %p887 = scmp.le.s32.totalorder 1, %s71
      %p888 = scmp.lt.s32.totalorder %s71, 5
      %p889 = pnand %p887, %p888
      %p890 = pneg %p889
      // Predicated region
      $region9: #{decoder_forward.1} parent=5 // pred_check
        _
      $region10: #{decoder_forward.1} parent=5 // pred_check_branch
        %892 = sbr.rel (%p889) target = $region12
      $region11: #{decoder_forward.1} parent=5 // pred_region
        %s893 = ssub.s32 %s71, 1
        // Predicated region
        $region13: #{decoder_forward.1} parent=11 // pred_check
          %p894 = pneg %p806
        $region14: #{decoder_forward.1} parent=11 // pred_check_branch
          %896 = sbr.rel (%p894) target = $region16
        $region15: #{decoder_forward.1} parent=11 // pred_region
          _
        $region16: #{decoder_forward.1} parent=11 // pred_fallthru
          _
        // Predicated region
        $region17: #{decoder_forward.1} parent=11 // pred_check
          %p897 = pneg %p827
        $region18: #{decoder_forward.1} parent=11 // pred_check_branch
          %899 = sbr.rel (%p897) target = $region20
        $region19: #{decoder_forward.1} parent=11 // pred_region
          _
        $region20: #{decoder_forward.1} parent=11 // pred_fallthru
          _
      $region12: #{decoder_forward.1} parent=5 // pred_fallthru
        _
      %p900 = scmp.lt.s32.totalorder %s71, 4
      // Predicated region
      $region21: #{decoder_forward.1} parent=5 // pred_check
        %p901 = pneg %p900
      $region22: #{decoder_forward.1} parent=5 // pred_check_branch
        %903 = sbr.rel (%p901) target = $region24
      $region23: #{decoder_forward.1} parent=5 // pred_region
        // Predicated region
        $region25: #{decoder_forward.1} parent=23 // pred_check
          %p904 = pneg %p103
        $region26: #{decoder_forward.1} parent=23 // pred_check_branch
          %906 = sbr.rel (%p904) target = $region28
        $region27: #{decoder_forward.1} parent=23 // pred_region
          %p907 = scmp.lt.s32.totalorder %s78, 1
          %s908 = scalar_select %p907, %s78, 1
          %s909 = smul.addr %s908, 8
          %s910 = scalar_lea.vmem %s1, %s909
        $region28: #{decoder_forward.1} parent=23 // pred_fallthru
          _
        // Predicated region
        $region29: #{decoder_forward.1} parent=23 // pred_check
          %p911 = pneg %p129
        $region30: #{decoder_forward.1} parent=23 // pred_check_branch
          %913 = sbr.rel (%p911) target = $region32
        $region31: #{decoder_forward.1} parent=23 // pred_region
          %p914 = scmp.lt.s32.totalorder %s78, 1
          %s915 = scalar_select %p914, %s78, 1
          %s916 = smul.addr %s915, 8
          %s917 = scalar_lea.vmem %s3, %s916
        $region32: #{decoder_forward.1} parent=23 // pred_fallthru
          _
        // Predicated region
        $region33: #{decoder_forward.1} parent=23 // pred_check
          %p918 = pneg %p155
        $region34: #{decoder_forward.1} parent=23 // pred_check_branch
          %920 = sbr.rel (%p918) target = $region36
        $region35: #{decoder_forward.1} parent=23 // pred_region
          %p921 = scmp.lt.s32.totalorder %s78, 1
          %s922 = scalar_select %p921, %s78, 1
          %s923 = smul.addr %s922, 2
          %s924 = smul.addr %s923, 8
          %s925 = scalar_lea.vmem %s5, %s924
        $region36: #{decoder_forward.1} parent=23 // pred_fallthru
          _
        // Predicated region
        $region37: #{decoder_forward.1} parent=23 // pred_check
          %p926 = pneg %p181
        $region38: #{decoder_forward.1} parent=23 // pred_check_branch
          %928 = sbr.rel (%p926) target = $region40
        $region39: #{decoder_forward.1} parent=23 // pred_region
          %p929 = scmp.lt.s32.totalorder %s79, 1
          %s930 = scalar_select %p929, %s79, 1
          %s931 = smul.addr %s930, 4
          %s932 = smul.addr %s931, 8
          %s933 = scalar_lea.vmem %s7, %s932
        $region40: #{decoder_forward.1} parent=23 // pred_fallthru
          _
        // Predicated region
        $region41: #{decoder_forward.1} parent=23 // pred_check
          %p934 = pneg %p207
        $region42: #{decoder_forward.1} parent=23 // pred_check_branch
          %936 = sbr.rel (%p934) target = $region44
        $region43: #{decoder_forward.1} parent=23 // pred_region
          %p937 = scmp.lt.s32.totalorder %s79, 1
          %s938 = scalar_select %p937, %s79, 1
          %s939 = scalar_lea.vmem %s9, %s938
        $region44: #{decoder_forward.1} parent=23 // pred_fallthru
          _
        // Predicated region
        $region45: #{decoder_forward.1} parent=23 // pred_check
          %p940 = pneg %p233
        $region46: #{decoder_forward.1} parent=23 // pred_check_branch
          %942 = sbr.rel (%p940) target = $region48
        $region47: #{decoder_forward.1} parent=23 // pred_region
          %p943 = scmp.lt.s32.totalorder %s79, 1
          %s944 = scalar_select %p943, %s79, 1
          %s945 = smul.addr %s944, 4
          %s946 = smul.addr %s945, 8
          %s947 = scalar_lea.vmem %s11, %s946
        $region48: #{decoder_forward.1} parent=23 // pred_fallthru
          _
        // Predicated region
        $region49: #{decoder_forward.1} parent=23 // pred_check
          %p948 = pneg %p259
        $region50: #{decoder_forward.1} parent=23 // pred_check_branch
          %950 = sbr.rel (%p948) target = $region52
        $region51: #{decoder_forward.1} parent=23 // pred_region
          %p951 = scmp.lt.s32.totalorder %s79, 1
          %s952 = scalar_select %p951, %s79, 1
          %s953 = scalar_lea.vmem %s13, %s952
        $region52: #{decoder_forward.1} parent=23 // pred_fallthru
          _
        // Predicated region
        $region53: #{decoder_forward.1} parent=23 // pred_check
          %p954 = pneg %p285
        $region54: #{decoder_forward.1} parent=23 // pred_check_branch
          %956 = sbr.rel (%p954) target = $region56
        $region55: #{decoder_forward.1} parent=23 // pred_region
          %p957 = scmp.lt.s32.totalorder %s79, 1
          %s958 = scalar_select %p957, %s79, 1
          %s959 = smul.addr %s958, 4
          %s960 = smul.addr %s959, 8
          %s961 = scalar_lea.vmem %s15, %s960
        $region56: #{decoder_forward.1} parent=23 // pred_fallthru
          _
        // Predicated region
        $region57: #{decoder_forward.1} parent=23 // pred_check
          %p962 = pneg %p311
        $region58: #{decoder_forward.1} parent=23 // pred_check_branch
          %964 = sbr.rel (%p962) target = $region60
        $region59: #{decoder_forward.1} parent=23 // pred_region
          %p965 = scmp.lt.s32.totalorder %s79, 1
          %s966 = scalar_select %p965, %s79, 1
          %s967 = scalar_lea.vmem %s17, %s966
        $region60: #{decoder_forward.1} parent=23 // pred_fallthru
          _
        // Predicated region
        $region61: #{decoder_forward.1} parent=23 // pred_check
          %p968 = pneg %p337
        $region62: #{decoder_forward.1} parent=23 // pred_check_branch
          %970 = sbr.rel (%p968) target = $region64
        $region63: #{decoder_forward.1} parent=23 // pred_region
          %p971 = scmp.lt.s32.totalorder %s79, 1
          %s972 = scalar_select %p971, %s79, 1
          %s973 = smul.addr %s972, 4
          %s974 = smul.addr %s973, 8
          %s975 = scalar_lea.vmem %s19, %s974
        $region64: #{decoder_forward.1} parent=23 // pred_fallthru
          _
        // Predicated region
        $region65: #{decoder_forward.1} parent=23 // pred_check
          %p976 = pneg %p363
        $region66: #{decoder_forward.1} parent=23 // pred_check_branch
          %978 = sbr.rel (%p976) target = $region68
        $region67: #{decoder_forward.1} parent=23 // pred_region
          %p979 = scmp.lt.s32.totalorder %s79, 1
          %s980 = scalar_select %p979, %s79, 1
          %s981 = scalar_lea.vmem %s21, %s980
        $region68: #{decoder_forward.1} parent=23 // pred_fallthru
          _
        // Predicated region
        $region69: #{decoder_forward.1} parent=23 // pred_check
          %p982 = pneg %p389
        $region70: #{decoder_forward.1} parent=23 // pred_check_branch
          %984 = sbr.rel (%p982) target = $region72
        $region71: #{decoder_forward.1} parent=23 // pred_region
          %p985 = scmp.lt.s32.totalorder %s79, 1
          %s986 = scalar_select %p985, %s79, 1
          %s987 = smul.addr %s986, 4
          %s988 = smul.addr %s987, 8
          %s989 = scalar_lea.vmem %s23, %s988
        $region72: #{decoder_forward.1} parent=23 // pred_fallthru
          _
        // Predicated region
        $region73: #{decoder_forward.1} parent=23 // pred_check
          %p990 = pneg %p415
        $region74: #{decoder_forward.1} parent=23 // pred_check_branch
          %992 = sbr.rel (%p990) target = $region76
        $region75: #{decoder_forward.1} parent=23 // pred_region
          %p993 = scmp.lt.s32.totalorder %s79, 1
          %s994 = scalar_select %p993, %s79, 1
          %s995 = scalar_lea.vmem %s25, %s994
        $region76: #{decoder_forward.1} parent=23 // pred_fallthru
          _
        // Predicated region
        $region77: #{decoder_forward.1} parent=23 // pred_check
          %p996 = pneg %p441
        $region78: #{decoder_forward.1} parent=23 // pred_check_branch
          %998 = sbr.rel (%p996) target = $region80
        $region79: #{decoder_forward.1} parent=23 // pred_region
          %p999 = scmp.lt.s32.totalorder %s79, 1
          %s1000 = scalar_select %p999, %s79, 1
          %s1001 = smul.addr %s1000, 4
          %s1002 = smul.addr %s1001, 8
          %s1003 = scalar_lea.vmem %s27, %s1002
        $region80: #{decoder_forward.1} parent=23 // pred_fallthru
          _
        // Predicated region
        $region81: #{decoder_forward.1} parent=23 // pred_check
          %p1004 = pneg %p467
        $region82: #{decoder_forward.1} parent=23 // pred_check_branch
          %1006 = sbr.rel (%p1004) target = $region84
        $region83: #{decoder_forward.1} parent=23 // pred_region
          %p1007 = scmp.lt.s32.totalorder %s79, 1
          %s1008 = scalar_select %p1007, %s79, 1
          %s1009 = scalar_lea.vmem %s29, %s1008
        $region84: #{decoder_forward.1} parent=23 // pred_fallthru
          _
        // Predicated region
        $region85: #{decoder_forward.1} parent=23 // pred_check
          %p1010 = pneg %p493
        $region86: #{decoder_forward.1} parent=23 // pred_check_branch
          %1012 = sbr.rel (%p1010) target = $region88
        $region87: #{decoder_forward.1} parent=23 // pred_region
          %p1013 = scmp.lt.s32.totalorder %s79, 1
          %s1014 = scalar_select %p1013, %s79, 1
          %s1015 = scalar_lea.vmem %s31, %s1014
        $region88: #{decoder_forward.1} parent=23 // pred_fallthru
          _
        // Predicated region
        $region89: #{decoder_forward.1} parent=23 // pred_check
          %p1016 = pneg %p519
        $region90: #{decoder_forward.1} parent=23 // pred_check_branch
          %1018 = sbr.rel (%p1016) target = $region92
        $region91: #{decoder_forward.1} parent=23 // pred_region
          %p1019 = scmp.lt.s32.totalorder %s79, 1
          %s1020 = scalar_select %p1019, %s79, 1
          %s1021 = scalar_lea.vmem %s33, %s1020
        $region92: #{decoder_forward.1} parent=23 // pred_fallthru
          _
        // Predicated region
        $region93: #{decoder_forward.1} parent=23 // pred_check
          %p1022 = pneg %p545
        $region94: #{decoder_forward.1} parent=23 // pred_check_branch
          %1024 = sbr.rel (%p1022) target = $region96
        $region95: #{decoder_forward.1} parent=23 // pred_region
          %p1025 = scmp.lt.s32.totalorder %s79, 1
          %s1026 = scalar_select %p1025, %s79, 1
          %s1027 = scalar_lea.vmem %s35, %s1026
        $region96: #{decoder_forward.1} parent=23 // pred_fallthru
          _
        // Predicated region
        $region97: #{decoder_forward.1} parent=23 // pred_check
          %p1028 = pneg %p571
        $region98: #{decoder_forward.1} parent=23 // pred_check_branch
          %1030 = sbr.rel (%p1028) target = $region100
        $region99: #{decoder_forward.1} parent=23 // pred_region
          %p1031 = scmp.lt.s32.totalorder %s79, 1
          %s1032 = scalar_select %p1031, %s79, 1
          %s1033 = scalar_lea.vmem %s37, %s1032
        $region100: #{decoder_forward.1} parent=23 // pred_fallthru
          _
        // Predicated region
        $region101: #{decoder_forward.1} parent=23 // pred_check
          %p1034 = pneg %p597
        $region102: #{decoder_forward.1} parent=23 // pred_check_branch
          %1036 = sbr.rel (%p1034) target = $region104
        $region103: #{decoder_forward.1} parent=23 // pred_region
          %p1037 = scmp.lt.s32.totalorder %s79, 1
          %s1038 = scalar_select %p1037, %s79, 1
          %s1039 = scalar_lea.vmem %s39, %s1038
        $region104: #{decoder_forward.1} parent=23 // pred_fallthru
          _
        // Predicated region
        $region105: #{decoder_forward.1} parent=23 // pred_check
          %p1040 = pneg %p623
        $region106: #{decoder_forward.1} parent=23 // pred_check_branch
          %1042 = sbr.rel (%p1040) target = $region108
        $region107: #{decoder_forward.1} parent=23 // pred_region
          %p1043 = scmp.lt.s32.totalorder %s79, 1
          %s1044 = scalar_select %p1043, %s79, 1
          %s1045 = scalar_lea.vmem %s41, %s1044
        $region108: #{decoder_forward.1} parent=23 // pred_fallthru
          _
        // Predicated region
        $region109: #{decoder_forward.1} parent=23 // pred_check
          %p1046 = pneg %p649
        $region110: #{decoder_forward.1} parent=23 // pred_check_branch
          %1048 = sbr.rel (%p1046) target = $region112
        $region111: #{decoder_forward.1} parent=23 // pred_region
          %p1049 = scmp.lt.s32.totalorder %s79, 1
          %s1050 = scalar_select %p1049, %s79, 1
          %s1051 = scalar_lea.vmem %s43, %s1050
        $region112: #{decoder_forward.1} parent=23 // pred_fallthru
          _
        // Predicated region
        $region113: #{decoder_forward.1} parent=23 // pred_check
          %p1052 = pneg %p675
        $region114: #{decoder_forward.1} parent=23 // pred_check_branch
          %1054 = sbr.rel (%p1052) target = $region116
        $region115: #{decoder_forward.1} parent=23 // pred_region
          %p1055 = scmp.lt.s32.totalorder %s79, 1
          %s1056 = scalar_select %p1055, %s79, 1
          %s1057 = scalar_lea.vmem %s45, %s1056
        $region116: #{decoder_forward.1} parent=23 // pred_fallthru
          _
        // Predicated region
        $region117: #{decoder_forward.1} parent=23 // pred_check
          %p1058 = pneg %p701
        $region118: #{decoder_forward.1} parent=23 // pred_check_branch
          %1060 = sbr.rel (%p1058) target = $region120
        $region119: #{decoder_forward.1} parent=23 // pred_region
          %p1061 = scmp.lt.s32.totalorder %s79, 1
          %s1062 = scalar_select %p1061, %s79, 1
          %s1063 = smul.addr %s1062, 4
          %s1064 = smul.addr %s1063, 8
          %s1065 = scalar_lea.vmem %s47, %s1064
        $region120: #{decoder_forward.1} parent=23 // pred_fallthru
          _
        // Predicated region
        $region121: #{decoder_forward.1} parent=23 // pred_check
          %p1066 = pneg %p727
        $region122: #{decoder_forward.1} parent=23 // pred_check_branch
          %1068 = sbr.rel (%p1066) target = $region124
        $region123: #{decoder_forward.1} parent=23 // pred_region
          %p1069 = scmp.lt.s32.totalorder %s79, 1
          %s1070 = scalar_select %p1069, %s79, 1
          %s1071 = scalar_lea.vmem %s49, %s1070
        $region124: #{decoder_forward.1} parent=23 // pred_fallthru
          _
        // Predicated region
        $region125: #{decoder_forward.1} parent=23 // pred_check
          %p1072 = pneg %p753
        $region126: #{decoder_forward.1} parent=23 // pred_check_branch
          %1074 = sbr.rel (%p1072) target = $region128
        $region127: #{decoder_forward.1} parent=23 // pred_region
          %p1075 = scmp.lt.s32.totalorder %s79, 1
          %s1076 = scalar_select %p1075, %s79, 1
          %s1077 = smul.addr %s1076, 8
          %s1078 = smul.addr %s1077, 8
          %s1079 = scalar_lea.vmem %s51, %s1078
        $region128: #{decoder_forward.1} parent=23 // pred_fallthru
          _
        // Predicated region
        $region129: #{decoder_forward.1} parent=23 // pred_check
          %p1080 = pneg %p779
        $region130: #{decoder_forward.1} parent=23 // pred_check_branch
          %1082 = sbr.rel (%p1080) target = $region132
        $region131: #{decoder_forward.1} parent=23 // pred_region
          %p1083 = scmp.lt.s32.totalorder %s79, 1
          %s1084 = scalar_select %p1083, %s79, 1
          %s1085 = scalar_lea.vmem %s53, %s1084
        $region132: #{decoder_forward.1} parent=23 // pred_fallthru
          _
      $region24: #{decoder_forward.1} parent=5 // pred_fallthru
        _
      %p1086 = scmp.le.s32.totalorder 1, %s71
      %p1087 = scmp.lt.s32.totalorder %s71, 5
      %p1088 = pnand %p1086, %p1087
      %p1089 = pneg %p1088
      // Predicated region
      $region133: #{decoder_forward.1} parent=5 // pred_check
        _
      $region134: #{decoder_forward.1} parent=5 // pred_check_branch
        %1091 = sbr.rel (%p1088) target = $region136
      $region135: #{decoder_forward.1} parent=5 // pred_region
        %s1092 = ssub.s32 %s71, 1
        %p1093 = scmp.lt.s32.totalorder %s80, 1
        %s1094 = scalar_select %p1093, %s80, 1
        %s1095 = smul.addr %s1094, 8
        %s1096 = scalar_lea.vmem %s1, %s1095
        %p1097 = pneg %p109
        %p1098 = pneg %p106
        %p1099 = scmp.lt.s32.totalorder %s80, 1
        %s1100 = scalar_select %p1099, %s80, 1
        %s1101 = smul.addr %s1100, 8
        %s1102 = scalar_lea.vmem %s3, %s1101
        %p1103 = pneg %p135
        %p1104 = pneg %p132
        %p1105 = scmp.lt.s32.totalorder %s80, 1
        %s1106 = scalar_select %p1105, %s80, 1
        %s1107 = smul.addr %s1106, 2
        %s1108 = smul.addr %s1107, 8
        %s1109 = scalar_lea.vmem %s5, %s1108
        %p1110 = pneg %p161
        %p1111 = pneg %p158
        %p1112 = scmp.lt.s32.totalorder %s81, 1
        %s1113 = scalar_select %p1112, %s81, 1
        %s1114 = smul.addr %s1113, 4
        %s1115 = smul.addr %s1114, 8
        %s1116 = scalar_lea.vmem %s7, %s1115
        %p1117 = pneg %p187
        %p1118 = pneg %p184
        %p1119 = scmp.lt.s32.totalorder %s81, 1
        %s1120 = scalar_select %p1119, %s81, 1
        %s1121 = scalar_lea.vmem %s9, %s1120
        %p1122 = pneg %p213
        %p1123 = pneg %p210
        %p1124 = scmp.lt.s32.totalorder %s81, 1
        %s1125 = scalar_select %p1124, %s81, 1
        %s1126 = smul.addr %s1125, 4
        %s1127 = smul.addr %s1126, 8
        %s1128 = scalar_lea.vmem %s11, %s1127
        %p1129 = pneg %p239
        %p1130 = pneg %p236
        %p1131 = scmp.lt.s32.totalorder %s81, 1
        %s1132 = scalar_select %p1131, %s81, 1
        %s1133 = scalar_lea.vmem %s13, %s1132
        %p1134 = pneg %p265
        %p1135 = pneg %p262
        %p1136 = scmp.lt.s32.totalorder %s81, 1
        %s1137 = scalar_select %p1136, %s81, 1
        %s1138 = smul.addr %s1137, 4
        %s1139 = smul.addr %s1138, 8
        %s1140 = scalar_lea.vmem %s15, %s1139
        %p1141 = pneg %p291
        %p1142 = pneg %p288
        %p1143 = scmp.lt.s32.totalorder %s81, 1
        %s1144 = scalar_select %p1143, %s81, 1
        %s1145 = scalar_lea.vmem %s17, %s1144
        %p1146 = pneg %p317
        %p1147 = pneg %p314
        %p1148 = scmp.lt.s32.totalorder %s81, 1
        %s1149 = scalar_select %p1148, %s81, 1
        %s1150 = smul.addr %s1149, 4
        %s1151 = smul.addr %s1150, 8
        %s1152 = scalar_lea.vmem %s19, %s1151
        %p1153 = pneg %p343
        %p1154 = pneg %p340
        %p1155 = scmp.lt.s32.totalorder %s81, 1
        %s1156 = scalar_select %p1155, %s81, 1
        %s1157 = scalar_lea.vmem %s21, %s1156
        %p1158 = pneg %p369
        %p1159 = pneg %p366
        %p1160 = scmp.lt.s32.totalorder %s81, 1
        %s1161 = scalar_select %p1160, %s81, 1
        %s1162 = smul.addr %s1161, 4
        %s1163 = smul.addr %s1162, 8
        %s1164 = scalar_lea.vmem %s23, %s1163
        %p1165 = pneg %p395
        %p1166 = pneg %p392
        %p1167 = scmp.lt.s32.totalorder %s81, 1
        %s1168 = scalar_select %p1167, %s81, 1
        %s1169 = scalar_lea.vmem %s25, %s1168
        %p1170 = pneg %p421
        %p1171 = pneg %p418
        %p1172 = scmp.lt.s32.totalorder %s81, 1
        %s1173 = scalar_select %p1172, %s81, 1
        %s1174 = smul.addr %s1173, 4
        %s1175 = smul.addr %s1174, 8
        %s1176 = scalar_lea.vmem %s27, %s1175
        %p1177 = pneg %p447
        %p1178 = pneg %p444
        %p1179 = scmp.lt.s32.totalorder %s81, 1
        %s1180 = scalar_select %p1179, %s81, 1
        %s1181 = scalar_lea.vmem %s29, %s1180
        %p1182 = pneg %p473
        %p1183 = pneg %p470
        %p1184 = scmp.lt.s32.totalorder %s81, 1
        %s1185 = scalar_select %p1184, %s81, 1
        %s1186 = scalar_lea.vmem %s31, %s1185
        %p1187 = pneg %p499
        %p1188 = pneg %p496
        %p1189 = scmp.lt.s32.totalorder %s81, 1
        %s1190 = scalar_select %p1189, %s81, 1
        %s1191 = scalar_lea.vmem %s33, %s1190
        %p1192 = pneg %p525
        %p1193 = pneg %p522
        %p1194 = scmp.lt.s32.totalorder %s81, 1
        %s1195 = scalar_select %p1194, %s81, 1
        %s1196 = scalar_lea.vmem %s35, %s1195
        %p1197 = pneg %p551
        %p1198 = pneg %p548
        %p1199 = scmp.lt.s32.totalorder %s81, 1
        %s1200 = scalar_select %p1199, %s81, 1
        %s1201 = scalar_lea.vmem %s37, %s1200
        %p1202 = pneg %p577
        %p1203 = pneg %p574
        %p1204 = scmp.lt.s32.totalorder %s81, 1
        %s1205 = scalar_select %p1204, %s81, 1
        %s1206 = scalar_lea.vmem %s39, %s1205
        %p1207 = pneg %p603
        %p1208 = pneg %p600
        %p1209 = scmp.lt.s32.totalorder %s81, 1
        %s1210 = scalar_select %p1209, %s81, 1
        %s1211 = scalar_lea.vmem %s41, %s1210
        %p1212 = pneg %p629
        %p1213 = pneg %p626
        %p1214 = scmp.lt.s32.totalorder %s81, 1
        %s1215 = scalar_select %p1214, %s81, 1
        %s1216 = scalar_lea.vmem %s43, %s1215
        %p1217 = pneg %p655
        %p1218 = pneg %p652
        %p1219 = scmp.lt.s32.totalorder %s81, 1
        %s1220 = scalar_select %p1219, %s81, 1
        %s1221 = scalar_lea.vmem %s45, %s1220
        %p1222 = pneg %p681
        %p1223 = pneg %p678
        %p1224 = scmp.lt.s32.totalorder %s81, 1
        %s1225 = scalar_select %p1224, %s81, 1
        %s1226 = smul.addr %s1225, 4
        %s1227 = smul.addr %s1226, 8
        %s1228 = scalar_lea.vmem %s47, %s1227
        %p1229 = pneg %p707
        %p1230 = pneg %p704
        %p1231 = scmp.lt.s32.totalorder %s81, 1
        %s1232 = scalar_select %p1231, %s81, 1
        %s1233 = scalar_lea.vmem %s49, %s1232
        %p1234 = pneg %p733
        %p1235 = pneg %p730
        %p1236 = scmp.lt.s32.totalorder %s81, 1
        %s1237 = scalar_select %p1236, %s81, 1
        %s1238 = smul.addr %s1237, 8
        %s1239 = smul.addr %s1238, 8
        %s1240 = scalar_lea.vmem %s51, %s1239
        %p1241 = pneg %p759
        %p1242 = pneg %p756
        %p1243 = scmp.lt.s32.totalorder %s81, 1
        %s1244 = scalar_select %p1243, %s81, 1
        %s1245 = scalar_lea.vmem %s53, %s1244
        %p1246 = pneg %p785
        %p1247 = pneg %p782
        %p1248 = pneg %p806
        %p1249 = pneg %p803
        %p1250 = pneg %p827
        %p1251 = pneg %p824
        %p1252 = pneg %p853
        %p1253 = pneg %p850
        %s1254 = sand.u32 %s840, 1
        %s1255 = scalar_lea.sflag [#allocation5], %s1254
        %s1256 = sand.u32 %s840, 1
        %s1257 = smul.addr %s1256, 8
        %s1258 = scalar_lea.vmem [#allocation4], %s1257
        %p1259 = pneg %p879
        %p1260 = pneg %p876
        %p1261 = scmp.lt.s32.totalorder %s80, 1
        %s1262 = scalar_select %p1261, %s80, 1
        %s1263 = smul.addr %s1262, 8
        %s1264 = scalar_lea.vmem %s61, %s1263
        %p1265 = scmp.lt.s32.totalorder %s80, 1
        %s1266 = scalar_select %p1265, %s80, 1
        %s1267 = smul.addr %s1266, 8
        %s1268 = scalar_lea.vmem %s1, %s1267
        %p1269 = scmp.lt.s32.totalorder %s80, 1
        %s1270 = scalar_select %p1269, %s80, 1
        %s1271 = smul.addr %s1270, 8
        %s1272 = scalar_lea.vmem %s3, %s1271
        %p1273 = scmp.lt.s32.totalorder %s80, 1
        %s1274 = scalar_select %p1273, %s80, 1
        %s1275 = smul.addr %s1274, 2
        %s1276 = smul.addr %s1275, 8
        %s1277 = scalar_lea.vmem %s5, %s1276
        %p1278 = scmp.lt.s32.totalorder %s81, 1
        %s1279 = scalar_select %p1278, %s81, 1
        %s1280 = smul.addr %s1279, 4
        %s1281 = smul.addr %s1280, 8
        %s1282 = scalar_lea.vmem %s7, %s1281
        %p1283 = scmp.lt.s32.totalorder %s81, 1
        %s1284 = scalar_select %p1283, %s81, 1
        %s1285 = scalar_lea.vmem %s9, %s1284
        %p1286 = scmp.lt.s32.totalorder %s81, 1
        %s1287 = scalar_select %p1286, %s81, 1
        %s1288 = smul.addr %s1287, 4
        %s1289 = smul.addr %s1288, 8
        %s1290 = scalar_lea.vmem %s11, %s1289
        %p1291 = scmp.lt.s32.totalorder %s81, 1
        %s1292 = scalar_select %p1291, %s81, 1
        %s1293 = scalar_lea.vmem %s13, %s1292
        %p1294 = scmp.lt.s32.totalorder %s81, 1
        %s1295 = scalar_select %p1294, %s81, 1
        %s1296 = smul.addr %s1295, 4
        %s1297 = smul.addr %s1296, 8
        %s1298 = scalar_lea.vmem %s15, %s1297
        %p1299 = scmp.lt.s32.totalorder %s81, 1
        %s1300 = scalar_select %p1299, %s81, 1
        %s1301 = scalar_lea.vmem %s17, %s1300
        %p1302 = scmp.lt.s32.totalorder %s81, 1
        %s1303 = scalar_select %p1302, %s81, 1
        %s1304 = smul.addr %s1303, 4
        %s1305 = smul.addr %s1304, 8
        %s1306 = scalar_lea.vmem %s19, %s1305
        %p1307 = scmp.lt.s32.totalorder %s81, 1
        %s1308 = scalar_select %p1307, %s81, 1
        %s1309 = scalar_lea.vmem %s21, %s1308
        %p1310 = scmp.lt.s32.totalorder %s81, 1
        %s1311 = scalar_select %p1310, %s81, 1
        %s1312 = smul.addr %s1311, 4
        %s1313 = smul.addr %s1312, 8
        %s1314 = scalar_lea.vmem %s23, %s1313
        %p1315 = scmp.lt.s32.totalorder %s81, 1
        %s1316 = scalar_select %p1315, %s81, 1
        %s1317 = scalar_lea.vmem %s25, %s1316
        %p1318 = scmp.lt.s32.totalorder %s81, 1
        %s1319 = scalar_select %p1318, %s81, 1
        %s1320 = smul.addr %s1319, 4
        %s1321 = smul.addr %s1320, 8
        %s1322 = scalar_lea.vmem %s27, %s1321
        %p1323 = scmp.lt.s32.totalorder %s81, 1
        %s1324 = scalar_select %p1323, %s81, 1
        %s1325 = scalar_lea.vmem %s29, %s1324
        %p1326 = scmp.lt.s32.totalorder %s81, 1
        %s1327 = scalar_select %p1326, %s81, 1
        %s1328 = scalar_lea.vmem %s31, %s1327
        %p1329 = scmp.lt.s32.totalorder %s81, 1
        %s1330 = scalar_select %p1329, %s81, 1
        %s1331 = scalar_lea.vmem %s33, %s1330
        %p1332 = scmp.lt.s32.totalorder %s81, 1
        %s1333 = scalar_select %p1332, %s81, 1
        %s1334 = scalar_lea.vmem %s35, %s1333
        %p1335 = scmp.lt.s32.totalorder %s81, 1
        %s1336 = scalar_select %p1335, %s81, 1
        %s1337 = scalar_lea.vmem %s37, %s1336
        %p1338 = scmp.lt.s32.totalorder %s81, 1
        %s1339 = scalar_select %p1338, %s81, 1
        %s1340 = scalar_lea.vmem %s39, %s1339
        %p1341 = scmp.lt.s32.totalorder %s81, 1
        %s1342 = scalar_select %p1341, %s81, 1
        %s1343 = scalar_lea.vmem %s41, %s1342
        %p1344 = scmp.lt.s32.totalorder %s81, 1
        %s1345 = scalar_select %p1344, %s81, 1
        %s1346 = scalar_lea.vmem %s43, %s1345
        %p1347 = scmp.lt.s32.totalorder %s81, 1
        %s1348 = scalar_select %p1347, %s81, 1
        %s1349 = scalar_lea.vmem %s45, %s1348
        %p1350 = scmp.lt.s32.totalorder %s81, 1
        %s1351 = scalar_select %p1350, %s81, 1
        %s1352 = smul.addr %s1351, 4
        %s1353 = smul.addr %s1352, 8
        %s1354 = scalar_lea.vmem %s47, %s1353
        %p1355 = scmp.lt.s32.totalorder %s81, 1
        %s1356 = scalar_select %p1355, %s81, 1
        %s1357 = scalar_lea.vmem %s49, %s1356
        %p1358 = scmp.lt.s32.totalorder %s81, 1
        %s1359 = scalar_select %p1358, %s81, 1
        %s1360 = smul.addr %s1359, 8
        %s1361 = smul.addr %s1360, 8
        %s1362 = scalar_lea.vmem %s51, %s1361
        %p1363 = scmp.lt.s32.totalorder %s81, 1
        %s1364 = scalar_select %p1363, %s81, 1
        %s1365 = scalar_lea.vmem %s53, %s1364
        %p1366 = scmp.lt.s32.totalorder %s80, 1
        %s1367 = scalar_select %p1366, %s80, 1
        %s1368 = smul.addr %s1367, 8
        %s1369 = scalar_lea.vmem %s61, %s1368
        %p1370 = scmp.eq.s32.totalorder %s81, 0
        %p1371 = scmp.eq.s32.totalorder %s81, 1
        // Predicated region
        $region137: #{decoder_forward.1} parent=135 // pred_check
          %p1372 = pneg %p1370
        $region138: #{decoder_forward.1} parent=135 // pred_check_branch
          %1374 = sbr.rel (%p1372) target = $region140
        $region139: #{decoder_forward.1} parent=135 // pred_region
          %v1375 = vld [vmem:[%s1268] sm:$0xff]
          %vm1376 = vcmask 261120
          %1377 = vst.msk [vmem:[#allocation2] sm:$0xff] %vm1376, %v1375
          %v1378 = vld [vmem:[%s1272] sm:$0xff]
          %1379 = vst.msk [vmem:[#allocation3] sm:$0xff] %vm1376, %v1378
        $region140: #{decoder_forward.1} parent=135 // pred_fallthru
          _
        %v1380 = vld [vmem:[#allocation2] sm:$0xff]
        %v1381 = vld [vmem:[#allocation3] sm:$0xff]
        %v1382 = vld [vmem:[%s1277] sm:$0xff]
        %v1383 = vld [vmem:[%s1277 + $0x8] sm:$0xff]
        %v1384 = vld [vmem:[%s1328] sm:$0x1]
        %v1385 = vld [vmem:[%s1331] sm:$0x1]
        %vm1386 = vcmask 261120
        %v1387 = vsel %vm1386, %v1380, 0.0
        %1388 = vadd.xlane.f32.xlu0 %v1387
        %v1389 = vpop.xlane.xlu0 %1388
        %v1390 = vrcp.pop 32.0
        %v1391 = vmul.f32 %v1389, %v1390
        %v1392 = vsub.f32 %v1380, %v1391
        %v1393 = vmul.f32 %v1392, %v1392
        %v1394 = vsel %vm1386, %v1393, 0.0
        %1395 = vadd.xlane.f32.xlu0 %v1394
        %v1396 = vpop.xlane.xlu0 %1395
        %v1397 = vmul.f32 %v1396, %v1390
        %v1398 = vadd.f32 %v1397, 1e-05
        %v1399 = vrsqrt.pop %v1398
        %v1400 = vmul.f32 %v1392, %v1399
        %v1402 = vlaneseq
        %v1403 = vshrl.u32 %v1402, 7
        %v1404 = vsub.s32 0, %v1403
        %v1405 = vrot.slane %v1384, %v1404
        %v1407 = vmul.f32 %v1400, %v1405
        %v1409 = vlaneseq
        %v1410 = vshrl.u32 %v1409, 7
        %v1411 = vsub.s32 0, %v1410
        %v1412 = vrot.slane %v1385, %v1411
        %v1414 = vadd.f32 %v1407, %v1412
        %v1415 = vld [vmem:[%s1334] sm:$0x1]
        %v1416 = vld [vmem:[%s1337] sm:$0x1]
        %v1417 = vsel %vm1386, %v1381, 0.0
        %1418 = vadd.xlane.f32.xlu0 %v1417
        %v1419 = vpop.xlane.xlu0 %1418
        %v1420 = vmul.f32 %v1419, %v1390
        %v1421 = vsub.f32 %v1381, %v1420
        %v1422 = vmul.f32 %v1421, %v1421
        %v1423 = vsel %vm1386, %v1422, 0.0
        %1424 = vadd.xlane.f32.xlu0 %v1423
        %v1425 = vpop.xlane.xlu0 %1424
        %v1426 = vmul.f32 %v1425, %v1390
        %v1427 = vadd.f32 %v1426, 1e-05
        %v1428 = vrsqrt.pop %v1427
        %v1429 = vmul.f32 %v1421, %v1428
        %v1431 = vlaneseq
        %v1432 = vshrl.u32 %v1431, 7
        %v1433 = vsub.s32 0, %v1432
        %v1434 = vrot.slane %v1415, %v1433
        %v1436 = vmul.f32 %v1429, %v1434
        %v1438 = vlaneseq
        %v1439 = vshrl.u32 %v1438, 7
        %v1440 = vsub.s32 0, %v1439
        %v1441 = vrot.slane %v1416, %v1440
        %v1443 = vadd.f32 %v1436, %v1441
        %v1444 = vld [vmem:[%s1290] sm:$0xff]
        %v1445 = vld [vmem:[%s1290 + $0x8] sm:$0xff]
        %v1446 = vld [vmem:[%s1290 + $0x10] sm:$0xff]
        %v1447 = vld [vmem:[%s1290 + $0x18] sm:$0xff]
        %v1448 = vld [vmem:[%s1293] sm:$0x1]
        %v1450 = vlaneseq
        %v1451 = vshrl.u32 %v1450, 7
        %v1452 = vsub.s32 0, %v1451
        %v1453 = vrot.slane %v1448, %v1452
        %v1456 = vsel %vm1386, %v1443, 0
        %1458 = vmatprep.subr.mxu0 0.0
        %1459 = vmatpush1.msra.mxu0 0.0
        %1460 = vmatprep.subr.mxu0 0.0
        %1461 = vmatpush1.msra.mxu0 0.0
        %1462 = vmatprep.subr.mxu0 0.0
        %1463 = vmatpush1.msra.mxu0 0.0
        %1464 = vmatprep.subr.mxu0 0.0
        %1465 = vmatpush1.msra.mxu0 0.0
        %1466 = vmatprep.subr.mxu0 0.0
        %1467 = vmatpush1.msra.mxu0 0.0
        %1468 = vmatprep.subr.mxu0 0.0
        %1469 = vmatpush1.msra.mxu0 0.0
        %1470 = vmatprep.subr.mxu0 0.0
        %1471 = vmatpush1.msra.mxu0 0.0
        %1472 = vmatprep.subr.mxu0 0.0
        %1473 = vmatpush1.msra.mxu0 0.0
        %1474 = vmatprep.subr.mxu0 0.0
        %1475 = vmatpush1.msra.mxu0 0.0
        %1476 = vmatprep.subr.mxu0 0.0
        %1477 = vmatpush1.msra.mxu0 0.0
        %1478 = vmatprep.subr.mxu0 0.0
        %1479 = vmatpush1.msra.mxu0 0.0
        %1480 = vmatprep.subr.mxu0 0.0
        %1481 = vmatpush1.msra.mxu0 0.0
        %1482 = vmatprep.subr.mxu0 0.0
        %1483 = vmatpush1.msra.mxu0 %v1447
        %1484 = vmatprep.subr.mxu0 0.0
        %1485 = vmatpush1.msra.mxu0 %v1446
        %1486 = vmatprep.subr.mxu0 0.0
        %1487 = vmatpush1.msra.mxu0 %v1445
        %1488 = vmatprep.subr.mxu0 0.0
        %1489 = vmatpush1.msra.mxu0 %v1444
        %1490 = vmatprep.subr.mxu0 0.0
        %1491 = vmatpush2.msra.mxu0 0.0
        %1492 = vmatprep.subr.mxu0 0.0
        %1493 = vmatpush2.msra.mxu0 0.0
        %1494 = vmatprep.subr.mxu0 0.0
        %1495 = vmatpush2.msra.mxu0 0.0
        %1496 = vmatprep.subr.mxu0 0.0
        %1497 = vmatpush2.msra.mxu0 0.0
        %1498 = vmatprep.subr.mxu0 0.0
        %1499 = vmatpush2.msra.mxu0 0.0
        %1500 = vmatprep.subr.mxu0 0.0
        %1501 = vmatpush2.msra.mxu0 0.0
        %1502 = vmatprep.subr.mxu0 0.0
        %1503 = vmatpush2.msra.mxu0 0.0
        %1504 = vmatprep.subr.mxu0 0.0
        %1505 = vmatpush2.msra.mxu0 0.0
        %1506 = vmatprep.subr.mxu0 0.0
        %1507 = vmatpush2.msra.mxu0 0.0
        %1508 = vmatprep.subr.mxu0 0.0
        %1509 = vmatpush2.msra.mxu0 0.0
        %1510 = vmatprep.subr.mxu0 0.0
        %1511 = vmatpush2.msra.mxu0 0.0
        %1512 = vmatprep.subr.mxu0 0.0
        %1513 = vmatpush2.msra.mxu0 0.0
        %1514 = vmatprep.subr.mxu0 0.0
        %1515 = vmatpush2.msra.mxu0 0.0
        %1516 = vmatprep.subr.mxu0 0.0
        %1517 = vmatpush2.msra.mxu0 0.0
        %1518 = vmatprep.subr.mxu0 0.0
        %1519 = vmatpush2.msra.mxu0 0.0
        %1520 = vmatprep.subr.mxu0 0.0
        %1521 = vmatpush2.msra.mxu0 0.0
        %1522 = vmatprep.mubr.f32.mxu0 0.0
        %1523 = vmatmul.mubr.f32.gmra.mxu0 %v1456
        %v1524 = vpop.f32.mrf.mxu0
        %v1525 = vadd.f32 %v1453, %v1524
        %v1526 = vpop.f32.mrf.mxu0
        %1527 = vdwg.mxu0
        %v1528 = vld [vmem:[%s1314] sm:$0xff]
        %v1529 = vld [vmem:[%s1314 + $0x8] sm:$0xff]
        %v1530 = vld [vmem:[%s1314 + $0x10] sm:$0xff]
        %v1531 = vld [vmem:[%s1314 + $0x18] sm:$0xff]
        %v1532 = vld [vmem:[%s1317] sm:$0x1]
        %v1534 = vlaneseq
        %v1535 = vshrl.u32 %v1534, 7
        %v1536 = vsub.s32 0, %v1535
        %v1537 = vrot.slane %v1532, %v1536
        %v1540 = vsel %vm1386, %v1382, 0
        %v1543 = vsel %vm1386, %v1383, 0
        %1545 = vmatprep.subr.mxu0 0.0
        %1546 = vmatpush1.msra.mxu0 0.0
        %1547 = vmatprep.subr.mxu0 0.0
        %1548 = vmatpush1.msra.mxu0 0.0
        %1549 = vmatprep.subr.mxu0 0.0
        %1550 = vmatpush1.msra.mxu0 0.0
        %1551 = vmatprep.subr.mxu0 0.0
        %1552 = vmatpush1.msra.mxu0 0.0
        %1553 = vmatprep.subr.mxu0 0.0
        %1554 = vmatpush1.msra.mxu0 0.0
        %1555 = vmatprep.subr.mxu0 0.0
        %1556 = vmatpush1.msra.mxu0 0.0
        %1557 = vmatprep.subr.mxu0 0.0
        %1558 = vmatpush1.msra.mxu0 0.0
        %1559 = vmatprep.subr.mxu0 0.0
        %1560 = vmatpush1.msra.mxu0 0.0
        %1561 = vmatprep.subr.mxu0 0.0
        %1562 = vmatpush1.msra.mxu0 0.0
        %1563 = vmatprep.subr.mxu0 0.0
        %1564 = vmatpush1.msra.mxu0 0.0
        %1565 = vmatprep.subr.mxu0 0.0
        %1566 = vmatpush1.msra.mxu0 0.0
        %1567 = vmatprep.subr.mxu0 0.0
        %1568 = vmatpush1.msra.mxu0 0.0
        %1569 = vmatprep.subr.mxu0 0.0
        %1570 = vmatpush1.msra.mxu0 %v1531
        %1571 = vmatprep.subr.mxu0 0.0
        %1572 = vmatpush1.msra.mxu0 %v1530
        %1573 = vmatprep.subr.mxu0 0.0
        %1574 = vmatpush1.msra.mxu0 %v1529
        %1575 = vmatprep.subr.mxu0 0.0
        %1576 = vmatpush1.msra.mxu0 %v1528
        %1577 = vmatprep.subr.mxu0 0.0
        %1578 = vmatpush2.msra.mxu0 0.0
        %1579 = vmatprep.subr.mxu0 0.0
        %1580 = vmatpush2.msra.mxu0 0.0
        %1581 = vmatprep.subr.mxu0 0.0
        %1582 = vmatpush2.msra.mxu0 0.0
        %1583 = vmatprep.subr.mxu0 0.0
        %1584 = vmatpush2.msra.mxu0 0.0
        %1585 = vmatprep.subr.mxu0 0.0
        %1586 = vmatpush2.msra.mxu0 0.0
        %1587 = vmatprep.subr.mxu0 0.0
        %1588 = vmatpush2.msra.mxu0 0.0
        %1589 = vmatprep.subr.mxu0 0.0
        %1590 = vmatpush2.msra.mxu0 0.0
        %1591 = vmatprep.subr.mxu0 0.0
        %1592 = vmatpush2.msra.mxu0 0.0
        %1593 = vmatprep.subr.mxu0 0.0
        %1594 = vmatpush2.msra.mxu0 0.0
        %1595 = vmatprep.subr.mxu0 0.0
        %1596 = vmatpush2.msra.mxu0 0.0
        %1597 = vmatprep.subr.mxu0 0.0
        %1598 = vmatpush2.msra.mxu0 0.0
        %1599 = vmatprep.subr.mxu0 0.0
        %1600 = vmatpush2.msra.mxu0 0.0
        %1601 = vmatprep.subr.mxu0 0.0
        %1602 = vmatpush2.msra.mxu0 0.0
        %1603 = vmatprep.subr.mxu0 0.0
        %1604 = vmatpush2.msra.mxu0 0.0
        %1605 = vmatprep.subr.mxu0 0.0
        %1606 = vmatpush2.msra.mxu0 0.0
        %1607 = vmatprep.subr.mxu0 0.0
        %1608 = vmatpush2.msra.mxu0 0.0
        %1609 = vmatprep.mubr.f32.mxu0 0.0
        %1610 = vmatmul.mubr.f32.gmra.mxu0 %v1540
        %v1611 = vpop.f32.mrf.mxu0
        %v1612 = vadd.f32 %v1537, %v1611
        %v1613 = vpop.f32.mrf.mxu0
        %1614 = vmatprep.mubr.f32.mxu0 0.0
        %1615 = vmatmul.mubr.f32.gmra.mxu0 %v1543
        %v1616 = vpop.f32.mrf.mxu0
        %v1617 = vadd.f32 %v1537, %v1616
        %v1618 = vpop.f32.mrf.mxu0
        %1619 = vdwg.mxu0
        %v1620 = vld [vmem:[%s1282] sm:$0xff]
        %v1621 = vld [vmem:[%s1282 + $0x8] sm:$0xff]
        %v1622 = vld [vmem:[%s1282 + $0x10] sm:$0xff]
        %v1623 = vld [vmem:[%s1282 + $0x18] sm:$0xff]
        %v1624 = vld [vmem:[%s1285] sm:$0x1]
        %v1625 = vld [vmem:[%s1298] sm:$0xff]
        %v1626 = vld [vmem:[%s1298 + $0x8] sm:$0xff]
        %v1627 = vld [vmem:[%s1298 + $0x10] sm:$0xff]
        %v1628 = vld [vmem:[%s1298 + $0x18] sm:$0xff]
        %v1629 = vld [vmem:[%s1301] sm:$0x1]
        %v1631 = vlaneseq
        %v1632 = vshrl.u32 %v1631, 7
        %v1633 = vsub.s32 0, %v1632
        %v1634 = vrot.slane %v1624, %v1633
        %v1637 = vsel %vm1386, %v1414, 0
        %1639 = vmatprep.subr.mxu0 0.0
        %1640 = vmatpush1.msra.mxu0 0.0
        %1641 = vmatprep.subr.mxu0 0.0
        %1642 = vmatpush1.msra.mxu0 0.0
        %1643 = vmatprep.subr.mxu0 0.0
        %1644 = vmatpush1.msra.mxu0 0.0
        %1645 = vmatprep.subr.mxu0 0.0
        %1646 = vmatpush1.msra.mxu0 0.0
        %1647 = vmatprep.subr.mxu0 0.0
        %1648 = vmatpush1.msra.mxu0 0.0
        %1649 = vmatprep.subr.mxu0 0.0
        %1650 = vmatpush1.msra.mxu0 0.0
        %1651 = vmatprep.subr.mxu0 0.0
        %1652 = vmatpush1.msra.mxu0 0.0
        %1653 = vmatprep.subr.mxu0 0.0
        %1654 = vmatpush1.msra.mxu0 0.0
        %1655 = vmatprep.subr.mxu0 0.0
        %1656 = vmatpush1.msra.mxu0 0.0
        %1657 = vmatprep.subr.mxu0 0.0
        %1658 = vmatpush1.msra.mxu0 0.0
        %1659 = vmatprep.subr.mxu0 0.0
        %1660 = vmatpush1.msra.mxu0 0.0
        %1661 = vmatprep.subr.mxu0 0.0
        %1662 = vmatpush1.msra.mxu0 0.0
        %1663 = vmatprep.subr.mxu0 0.0
        %1664 = vmatpush1.msra.mxu0 %v1623
        %1665 = vmatprep.subr.mxu0 0.0
        %1666 = vmatpush1.msra.mxu0 %v1622
        %1667 = vmatprep.subr.mxu0 0.0
        %1668 = vmatpush1.msra.mxu0 %v1621
        %1669 = vmatprep.subr.mxu0 0.0
        %1670 = vmatpush1.msra.mxu0 %v1620
        %1671 = vmatprep.subr.mxu0 0.0
        %1672 = vmatpush2.msra.mxu0 0.0
        %1673 = vmatprep.subr.mxu0 0.0
        %1674 = vmatpush2.msra.mxu0 0.0
        %1675 = vmatprep.subr.mxu0 0.0
        %1676 = vmatpush2.msra.mxu0 0.0
        %1677 = vmatprep.subr.mxu0 0.0
        %1678 = vmatpush2.msra.mxu0 0.0
        %1679 = vmatprep.subr.mxu0 0.0
        %1680 = vmatpush2.msra.mxu0 0.0
        %1681 = vmatprep.subr.mxu0 0.0
        %1682 = vmatpush2.msra.mxu0 0.0
        %1683 = vmatprep.subr.mxu0 0.0
        %1684 = vmatpush2.msra.mxu0 0.0
        %1685 = vmatprep.subr.mxu0 0.0
        %1686 = vmatpush2.msra.mxu0 0.0
        %1687 = vmatprep.subr.mxu0 0.0
        %1688 = vmatpush2.msra.mxu0 0.0
        %1689 = vmatprep.subr.mxu0 0.0
        %1690 = vmatpush2.msra.mxu0 0.0
        %1691 = vmatprep.subr.mxu0 0.0
        %1692 = vmatpush2.msra.mxu0 0.0
        %1693 = vmatprep.subr.mxu0 0.0
        %1694 = vmatpush2.msra.mxu0 0.0
        %1695 = vmatprep.subr.mxu0 0.0
        %1696 = vmatpush2.msra.mxu0 0.0
        %1697 = vmatprep.subr.mxu0 0.0
        %1698 = vmatpush2.msra.mxu0 0.0
        %1699 = vmatprep.subr.mxu0 0.0
        %1700 = vmatpush2.msra.mxu0 0.0
        %1701 = vmatprep.subr.mxu0 0.0
        %1702 = vmatpush2.msra.mxu0 0.0
        %1703 = vmatprep.mubr.f32.mxu0 0.0
        %1704 = vmatmul.mubr.f32.gmra.mxu0 %v1637
        %v1705 = vpop.f32.mrf.mxu0
        %v1706 = vadd.f32 %v1634, %v1705
        %v1707 = vpop.f32.mrf.mxu0
        %1708 = vdwg.mxu0
        %vm1709 = vcmask 64512
        %v1711 = vsel %vm1709, %v1706, 0
        %v1714 = vsel %vm1709, %v1525, 0
        %1716 = vmatprep.subr.mxu0 0.0
        %1717 = vmatpush1.xpose.msra.mxu0 0.0
        %1718 = vmatprep.subr.mxu0 0.0
        %1719 = vmatpush1.xpose.msra.mxu0 0.0
        %1720 = vmatprep.subr.mxu0 0.0
        %1721 = vmatpush1.xpose.msra.mxu0 0.0
        %1722 = vmatprep.subr.mxu0 0.0
        %1723 = vmatpush1.xpose.msra.mxu0 0.0
        %1724 = vmatprep.subr.mxu0 0.0
        %1725 = vmatpush1.xpose.msra.mxu0 0.0
        %1726 = vmatprep.subr.mxu0 0.0
        %1727 = vmatpush1.xpose.msra.mxu0 0.0
        %1728 = vmatprep.subr.mxu0 0.0
        %1729 = vmatpush1.xpose.msra.mxu0 0.0
        %1730 = vmatprep.subr.mxu0 0.0
        %1731 = vmatpush1.xpose.msra.mxu0 0.0
        %1732 = vmatprep.subr.mxu0 0.0
        %1733 = vmatpush1.xpose.msra.mxu0 0.0
        %1734 = vmatprep.subr.mxu0 0.0
        %1735 = vmatpush1.xpose.msra.mxu0 0.0
        %1736 = vmatprep.subr.mxu0 0.0
        %1737 = vmatpush1.xpose.msra.mxu0 0.0
        %1738 = vmatprep.subr.mxu0 0.0
        %1739 = vmatpush1.xpose.msra.mxu0 0.0
        %1740 = vmatprep.subr.mxu0 0.0
        %1741 = vmatpush1.xpose.msra.mxu0 0.0
        %1742 = vmatprep.subr.mxu0 0.0
        %1743 = vmatpush1.xpose.msra.mxu0 0.0
        %1744 = vmatprep.subr.mxu0 0.0
        %1745 = vmatpush1.xpose.msra.mxu0 0.0
        %1746 = vmatprep.subr.mxu0 0.0
        %1747 = vmatpush1.xpose.msra.mxu0 %v1714
        %1748 = vmatprep.subr.mxu0 0.0
        %1749 = vmatpush2.xpose.msra.mxu0 0.0
        %1750 = vmatprep.subr.mxu0 0.0
        %1751 = vmatpush2.xpose.msra.mxu0 0.0
        %1752 = vmatprep.subr.mxu0 0.0
        %1753 = vmatpush2.xpose.msra.mxu0 0.0
        %1754 = vmatprep.subr.mxu0 0.0
        %1755 = vmatpush2.xpose.msra.mxu0 0.0
        %1756 = vmatprep.subr.mxu0 0.0
        %1757 = vmatpush2.xpose.msra.mxu0 0.0
        %1758 = vmatprep.subr.mxu0 0.0
        %1759 = vmatpush2.xpose.msra.mxu0 0.0
        %1760 = vmatprep.subr.mxu0 0.0
        %1761 = vmatpush2.xpose.msra.mxu0 0.0
        %1762 = vmatprep.subr.mxu0 0.0
        %1763 = vmatpush2.xpose.msra.mxu0 0.0
        %1764 = vmatprep.subr.mxu0 0.0
        %1765 = vmatpush2.xpose.msra.mxu0 0.0
        %1766 = vmatprep.subr.mxu0 0.0
        %1767 = vmatpush2.xpose.msra.mxu0 0.0
        %1768 = vmatprep.subr.mxu0 0.0
        %1769 = vmatpush2.xpose.msra.mxu0 0.0
        %1770 = vmatprep.subr.mxu0 0.0
        %1771 = vmatpush2.xpose.msra.mxu0 0.0
        %1772 = vmatprep.subr.mxu0 0.0
        %1773 = vmatpush2.xpose.msra.mxu0 0.0
        %1774 = vmatprep.subr.mxu0 0.0
        %1775 = vmatpush2.xpose.msra.mxu0 0.0
        %1776 = vmatprep.subr.mxu0 0.0
        %1777 = vmatpush2.xpose.msra.mxu0 0.0
        %1778 = vmatprep.subr.mxu0 0.0
        %1779 = vmatpush2.xpose.msra.mxu0 0.0
        %1780 = vmatprep.mubr.f32.mxu0 0.0
        %1781 = vmatmul.mubr.f32.gmra.mxu0 %v1711
        %v1782 = vpop.f32.mrf.mxu0
        %v1783 = vadd.f32 0.0, %v1782
        %v1784 = vpop.f32.mrf.mxu0
        %1785 = vdwg.mxu0
        %v1786 = vsel %vm1709, %v1783, -inf
        %1787 = vmax.xlane.f32.xlu0 %v1786
        %v1788 = vpop.xlane.xlu0 %1787
        %v1789 = vsub.f32 %v1783, %v1788
        %v1790 = vmul.f32 %v1789, 1.442695
        %v1791 = vpow.pop %v1790
        %v1792 = vsel %vm1709, %v1791, 0.0
        %1793 = vadd.xlane.f32.xlu0 %v1792
        %v1794 = vpop.xlane.xlu0 %1793
        %v1795 = vrcp.pop %v1794
        %v1796 = vmul.f32 %v1791, %v1795
        %1797 = vrot.lane.b32.xlu0 %v1525, 96
        %v1798 = vpop.permute.xlu0 %1797
        %v1801 = vsel %vm1709, %v1796, 0
        %1803 = vmatprep.subr.mxu0 0.0
        %1804 = vmatpush1.msra.mxu0 0.0
        %1805 = vmatprep.subr.mxu0 0.0
        %1806 = vmatpush1.msra.mxu0 0.0
        %1807 = vmatprep.subr.mxu0 0.0
        %1808 = vmatpush1.msra.mxu0 0.0
        %1809 = vmatprep.subr.mxu0 0.0
        %1810 = vmatpush1.msra.mxu0 0.0
        %1811 = vmatprep.subr.mxu0 0.0
        %1812 = vmatpush1.msra.mxu0 0.0
        %1813 = vmatprep.subr.mxu0 0.0
        %1814 = vmatpush1.msra.mxu0 0.0
        %1815 = vmatprep.subr.mxu0 0.0
        %1816 = vmatpush1.msra.mxu0 0.0
        %1817 = vmatprep.subr.mxu0 0.0
        %1818 = vmatpush1.msra.mxu0 0.0
        %1819 = vmatprep.subr.mxu0 0.0
        %1820 = vmatpush1.msra.mxu0 0.0
        %1821 = vmatprep.subr.mxu0 0.0
        %1822 = vmatpush1.msra.mxu0 0.0
        %1823 = vmatprep.subr.mxu0 0.0
        %1824 = vmatpush1.msra.mxu0 0.0
        %1825 = vmatprep.subr.mxu0 0.0
        %1826 = vmatpush1.msra.mxu0 0.0
        %1827 = vmatprep.subr.mxu0 0.0
        %1828 = vmatpush1.msra.mxu0 0.0
        %1829 = vmatprep.subr.mxu0 0.0
        %1830 = vmatpush1.msra.mxu0 0.0
        %1831 = vmatprep.subr.mxu0 0.0
        %1832 = vmatpush1.msra.mxu0 0.0
        %1833 = vmatprep.subr.mxu0 0.0
        %1834 = vmatpush1.msra.mxu0 %v1798
        %1835 = vmatprep.subr.mxu0 0.0
        %1836 = vmatpush2.msra.mxu0 0.0
        %1837 = vmatprep.subr.mxu0 0.0
        %1838 = vmatpush2.msra.mxu0 0.0
        %1839 = vmatprep.subr.mxu0 0.0
        %1840 = vmatpush2.msra.mxu0 0.0
        %1841 = vmatprep.subr.mxu0 0.0
        %1842 = vmatpush2.msra.mxu0 0.0
        %1843 = vmatprep.subr.mxu0 0.0
        %1844 = vmatpush2.msra.mxu0 0.0
        %1845 = vmatprep.subr.mxu0 0.0
        %1846 = vmatpush2.msra.mxu0 0.0
        %1847 = vmatprep.subr.mxu0 0.0
        %1848 = vmatpush2.msra.mxu0 0.0
        %1849 = vmatprep.subr.mxu0 0.0
        %1850 = vmatpush2.msra.mxu0 0.0
        %1851 = vmatprep.subr.mxu0 0.0
        %1852 = vmatpush2.msra.mxu0 0.0
        %1853 = vmatprep.subr.mxu0 0.0
        %1854 = vmatpush2.msra.mxu0 0.0
        %1855 = vmatprep.subr.mxu0 0.0
        %1856 = vmatpush2.msra.mxu0 0.0
        %1857 = vmatprep.subr.mxu0 0.0
        %1858 = vmatpush2.msra.mxu0 0.0
        %1859 = vmatprep.subr.mxu0 0.0
        %1860 = vmatpush2.msra.mxu0 0.0
        %1861 = vmatprep.subr.mxu0 0.0
        %1862 = vmatpush2.msra.mxu0 0.0
        %1863 = vmatprep.subr.mxu0 0.0
        %1864 = vmatpush2.msra.mxu0 0.0
        %1865 = vmatprep.subr.mxu0 0.0
        %1866 = vmatpush2.msra.mxu0 0.0
        %1867 = vmatprep.mubr.f32.mxu0 0.0
        %1868 = vmatmul.mubr.f32.gmra.mxu0 %v1801
        %v1869 = vpop.f32.mrf.mxu0
        %v1870 = vadd.f32 0.0, %v1869
        %v1871 = vpop.f32.mrf.mxu0
        %1872 = vdwg.mxu0
        %1873 = vrot.lane.b32.xlu0 %v1706, 120
        %v1874 = vpop.permute.xlu0 %1873
        %1875 = vrot.lane.b32.xlu0 %v1525, 120
        %v1876 = vpop.permute.xlu0 %1875
        %v1877 = vsel %vm1709, %v1874, 0
        %v1879 = vsel %vm1709, %v1876, 0
        %1881 = vmatprep.subr.mxu0 0.0
        %1882 = vmatpush1.xpose.msra.mxu0 0.0
        %1883 = vmatprep.subr.mxu0 0.0
        %1884 = vmatpush1.xpose.msra.mxu0 0.0
        %1885 = vmatprep.subr.mxu0 0.0
        %1886 = vmatpush1.xpose.msra.mxu0 0.0
        %1887 = vmatprep.subr.mxu0 0.0
        %1888 = vmatpush1.xpose.msra.mxu0 0.0
        %1889 = vmatprep.subr.mxu0 0.0
        %1890 = vmatpush1.xpose.msra.mxu0 0.0
        %1891 = vmatprep.subr.mxu0 0.0
        %1892 = vmatpush1.xpose.msra.mxu0 0.0
        %1893 = vmatprep.subr.mxu0 0.0
        %1894 = vmatpush1.xpose.msra.mxu0 0.0
        %1895 = vmatprep.subr.mxu0 0.0
        %1896 = vmatpush1.xpose.msra.mxu0 0.0
        %1897 = vmatprep.subr.mxu0 0.0
        %1898 = vmatpush1.xpose.msra.mxu0 0.0
        %1899 = vmatprep.subr.mxu0 0.0
        %1900 = vmatpush1.xpose.msra.mxu0 0.0
        %1901 = vmatprep.subr.mxu0 0.0
        %1902 = vmatpush1.xpose.msra.mxu0 0.0
        %1903 = vmatprep.subr.mxu0 0.0
        %1904 = vmatpush1.xpose.msra.mxu0 0.0
        %1905 = vmatprep.subr.mxu0 0.0
        %1906 = vmatpush1.xpose.msra.mxu0 0.0
        %1907 = vmatprep.subr.mxu0 0.0
        %1908 = vmatpush1.xpose.msra.mxu0 0.0
        %1909 = vmatprep.subr.mxu0 0.0
        %1910 = vmatpush1.xpose.msra.mxu0 0.0
        %1911 = vmatprep.subr.mxu0 0.0
        %1912 = vmatpush1.xpose.msra.mxu0 %v1879
        %1913 = vmatprep.subr.mxu0 0.0
        %1914 = vmatpush2.xpose.msra.mxu0 0.0
        %1915 = vmatprep.subr.mxu0 0.0
        %1916 = vmatpush2.xpose.msra.mxu0 0.0
        %1917 = vmatprep.subr.mxu0 0.0
        %1918 = vmatpush2.xpose.msra.mxu0 0.0
        %1919 = vmatprep.subr.mxu0 0.0
        %1920 = vmatpush2.xpose.msra.mxu0 0.0
        %1921 = vmatprep.subr.mxu0 0.0
        %1922 = vmatpush2.xpose.msra.mxu0 0.0
        %1923 = vmatprep.subr.mxu0 0.0
        %1924 = vmatpush2.xpose.msra.mxu0 0.0
        %1925 = vmatprep.subr.mxu0 0.0
        %1926 = vmatpush2.xpose.msra.mxu0 0.0
        %1927 = vmatprep.subr.mxu0 0.0
        %1928 = vmatpush2.xpose.msra.mxu0 0.0
        %1929 = vmatprep.subr.mxu0 0.0
        %1930 = vmatpush2.xpose.msra.mxu0 0.0
        %1931 = vmatprep.subr.mxu0 0.0
        %1932 = vmatpush2.xpose.msra.mxu0 0.0
        %1933 = vmatprep.subr.mxu0 0.0
        %1934 = vmatpush2.xpose.msra.mxu0 0.0
        %1935 = vmatprep.subr.mxu0 0.0
        %1936 = vmatpush2.xpose.msra.mxu0 0.0
        %1937 = vmatprep.subr.mxu0 0.0
        %1938 = vmatpush2.xpose.msra.mxu0 0.0
        %1939 = vmatprep.subr.mxu0 0.0
        %1940 = vmatpush2.xpose.msra.mxu0 0.0
        %1941 = vmatprep.subr.mxu0 0.0
        %1942 = vmatpush2.xpose.msra.mxu0 0.0
        %1943 = vmatprep.subr.mxu0 0.0
        %1944 = vmatpush2.xpose.msra.mxu0 0.0
        %1945 = vmatprep.mubr.f32.mxu0 0.0
        %1946 = vmatmul.mubr.f32.gmra.mxu0 %v1877
        %v1947 = vpop.f32.mrf.mxu0
        %v1948 = vadd.f32 0.0, %v1947
        %v1949 = vpop.f32.mrf.mxu0
        %1950 = vdwg.mxu0
        %v1951 = vsel %vm1709, %v1948, -inf
        %1952 = vmax.xlane.f32.xlu0 %v1951
        %v1953 = vpop.xlane.xlu0 %1952
        %v1954 = vsub.f32 %v1948, %v1953
        %v1955 = vmul.f32 %v1954, 1.442695
        %v1956 = vpow.pop %v1955
        %v1957 = vsel %vm1709, %v1956, 0.0
        %1958 = vadd.xlane.f32.xlu0 %v1957
        %v1959 = vpop.xlane.xlu0 %1958
        %v1960 = vrcp.pop %v1959
        %v1961 = vmul.f32 %v1956, %v1960
        %1962 = vrot.lane.b32.xlu0 %v1525, 88
        %v1963 = vpop.permute.xlu0 %1962
        %v1966 = vsel %vm1709, %v1961, 0
        %1968 = vmatprep.subr.mxu0 0.0
        %1969 = vmatpush1.msra.mxu0 0.0
        %1970 = vmatprep.subr.mxu0 0.0
        %1971 = vmatpush1.msra.mxu0 0.0
        %1972 = vmatprep.subr.mxu0 0.0
        %1973 = vmatpush1.msra.mxu0 0.0
        %1974 = vmatprep.subr.mxu0 0.0
        %1975 = vmatpush1.msra.mxu0 0.0
        %1976 = vmatprep.subr.mxu0 0.0
        %1977 = vmatpush1.msra.mxu0 0.0
        %1978 = vmatprep.subr.mxu0 0.0
        %1979 = vmatpush1.msra.mxu0 0.0
        %1980 = vmatprep.subr.mxu0 0.0
        %1981 = vmatpush1.msra.mxu0 0.0
        %1982 = vmatprep.subr.mxu0 0.0
        %1983 = vmatpush1.msra.mxu0 0.0
        %1984 = vmatprep.subr.mxu0 0.0
        %1985 = vmatpush1.msra.mxu0 0.0
        %1986 = vmatprep.subr.mxu0 0.0
        %1987 = vmatpush1.msra.mxu0 0.0
        %1988 = vmatprep.subr.mxu0 0.0
        %1989 = vmatpush1.msra.mxu0 0.0
        %1990 = vmatprep.subr.mxu0 0.0
        %1991 = vmatpush1.msra.mxu0 0.0
        %1992 = vmatprep.subr.mxu0 0.0
        %1993 = vmatpush1.msra.mxu0 0.0
        %1994 = vmatprep.subr.mxu0 0.0
        %1995 = vmatpush1.msra.mxu0 0.0
        %1996 = vmatprep.subr.mxu0 0.0
        %1997 = vmatpush1.msra.mxu0 0.0
        %1998 = vmatprep.subr.mxu0 0.0
        %1999 = vmatpush1.msra.mxu0 %v1963
        %2000 = vmatprep.subr.mxu0 0.0
        %2001 = vmatpush2.msra.mxu0 0.0
        %2002 = vmatprep.subr.mxu0 0.0
        %2003 = vmatpush2.msra.mxu0 0.0
        %2004 = vmatprep.subr.mxu0 0.0
        %2005 = vmatpush2.msra.mxu0 0.0
        %2006 = vmatprep.subr.mxu0 0.0
        %2007 = vmatpush2.msra.mxu0 0.0
        %2008 = vmatprep.subr.mxu0 0.0
        %2009 = vmatpush2.msra.mxu0 0.0
        %2010 = vmatprep.subr.mxu0 0.0
        %2011 = vmatpush2.msra.mxu0 0.0
        %2012 = vmatprep.subr.mxu0 0.0
        %2013 = vmatpush2.msra.mxu0 0.0
        %2014 = vmatprep.subr.mxu0 0.0
        %2015 = vmatpush2.msra.mxu0 0.0
        %2016 = vmatprep.subr.mxu0 0.0
        %2017 = vmatpush2.msra.mxu0 0.0
        %2018 = vmatprep.subr.mxu0 0.0
        %2019 = vmatpush2.msra.mxu0 0.0
        %2020 = vmatprep.subr.mxu0 0.0
        %2021 = vmatpush2.msra.mxu0 0.0
        %2022 = vmatprep.subr.mxu0 0.0
        %2023 = vmatpush2.msra.mxu0 0.0
        %2024 = vmatprep.subr.mxu0 0.0
        %2025 = vmatpush2.msra.mxu0 0.0
        %2026 = vmatprep.subr.mxu0 0.0
        %2027 = vmatpush2.msra.mxu0 0.0
        %2028 = vmatprep.subr.mxu0 0.0
        %2029 = vmatpush2.msra.mxu0 0.0
        %2030 = vmatprep.subr.mxu0 0.0
        %2031 = vmatpush2.msra.mxu0 0.0
        %2032 = vmatprep.mubr.f32.mxu0 0.0
        %2033 = vmatmul.mubr.f32.gmra.mxu0 %v1966
        %v2034 = vpop.f32.mrf.mxu0
        %v2035 = vadd.f32 0.0, %v2034
        %v2036 = vpop.f32.mrf.mxu0
        %2037 = vdwg.mxu0
        %v2038 = vadd.f32 %v1796, %v1961
        %2039 = vrot.lane.b32.xlu0 %v1706, 112
        %v2040 = vpop.permute.xlu0 %2039
        %2041 = vrot.lane.b32.xlu0 %v1525, 112
        %v2042 = vpop.permute.xlu0 %2041
        %v2043 = vsel %vm1709, %v2040, 0
        %v2045 = vsel %vm1709, %v2042, 0
        %2047 = vmatprep.subr.mxu0 0.0
        %2048 = vmatpush1.xpose.msra.mxu0 0.0
        %2049 = vmatprep.subr.mxu0 0.0
        %2050 = vmatpush1.xpose.msra.mxu0 0.0
        %2051 = vmatprep.subr.mxu0 0.0
        %2052 = vmatpush1.xpose.msra.mxu0 0.0
        %2053 = vmatprep.subr.mxu0 0.0
        %2054 = vmatpush1.xpose.msra.mxu0 0.0
        %2055 = vmatprep.subr.mxu0 0.0
        %2056 = vmatpush1.xpose.msra.mxu0 0.0
        %2057 = vmatprep.subr.mxu0 0.0
        %2058 = vmatpush1.xpose.msra.mxu0 0.0
        %2059 = vmatprep.subr.mxu0 0.0
        %2060 = vmatpush1.xpose.msra.mxu0 0.0
        %2061 = vmatprep.subr.mxu0 0.0
        %2062 = vmatpush1.xpose.msra.mxu0 0.0
        %2063 = vmatprep.subr.mxu0 0.0
        %2064 = vmatpush1.xpose.msra.mxu0 0.0
        %2065 = vmatprep.subr.mxu0 0.0
        %2066 = vmatpush1.xpose.msra.mxu0 0.0
        %2067 = vmatprep.subr.mxu0 0.0
        %2068 = vmatpush1.xpose.msra.mxu0 0.0
        %2069 = vmatprep.subr.mxu0 0.0
        %2070 = vmatpush1.xpose.msra.mxu0 0.0
        %2071 = vmatprep.subr.mxu0 0.0
        %2072 = vmatpush1.xpose.msra.mxu0 0.0
        %2073 = vmatprep.subr.mxu0 0.0
        %2074 = vmatpush1.xpose.msra.mxu0 0.0
        %2075 = vmatprep.subr.mxu0 0.0
        %2076 = vmatpush1.xpose.msra.mxu0 0.0
        %2077 = vmatprep.subr.mxu0 0.0
        %2078 = vmatpush1.xpose.msra.mxu0 %v2045
        %2079 = vmatprep.subr.mxu0 0.0
        %2080 = vmatpush2.xpose.msra.mxu0 0.0
        %2081 = vmatprep.subr.mxu0 0.0
        %2082 = vmatpush2.xpose.msra.mxu0 0.0
        %2083 = vmatprep.subr.mxu0 0.0
        %2084 = vmatpush2.xpose.msra.mxu0 0.0
        %2085 = vmatprep.subr.mxu0 0.0
        %2086 = vmatpush2.xpose.msra.mxu0 0.0
        %2087 = vmatprep.subr.mxu0 0.0
        %2088 = vmatpush2.xpose.msra.mxu0 0.0
        %2089 = vmatprep.subr.mxu0 0.0
        %2090 = vmatpush2.xpose.msra.mxu0 0.0
        %2091 = vmatprep.subr.mxu0 0.0
        %2092 = vmatpush2.xpose.msra.mxu0 0.0
        %2093 = vmatprep.subr.mxu0 0.0
        %2094 = vmatpush2.xpose.msra.mxu0 0.0
        %2095 = vmatprep.subr.mxu0 0.0
        %2096 = vmatpush2.xpose.msra.mxu0 0.0
        %2097 = vmatprep.subr.mxu0 0.0
        %2098 = vmatpush2.xpose.msra.mxu0 0.0
        %2099 = vmatprep.subr.mxu0 0.0
        %2100 = vmatpush2.xpose.msra.mxu0 0.0
        %2101 = vmatprep.subr.mxu0 0.0
        %2102 = vmatpush2.xpose.msra.mxu0 0.0
        %2103 = vmatprep.subr.mxu0 0.0
        %2104 = vmatpush2.xpose.msra.mxu0 0.0
        %2105 = vmatprep.subr.mxu0 0.0
        %2106 = vmatpush2.xpose.msra.mxu0 0.0
        %2107 = vmatprep.subr.mxu0 0.0
        %2108 = vmatpush2.xpose.msra.mxu0 0.0
        %2109 = vmatprep.subr.mxu0 0.0
        %2110 = vmatpush2.xpose.msra.mxu0 0.0
        %2111 = vmatprep.mubr.f32.mxu0 0.0
        %2112 = vmatmul.mubr.f32.gmra.mxu0 %v2043
        %v2113 = vpop.f32.mrf.mxu0
        %v2114 = vadd.f32 0.0, %v2113
        %v2115 = vpop.f32.mrf.mxu0
        %2116 = vdwg.mxu0
        %v2117 = vsel %vm1709, %v2114, -inf
        %2118 = vmax.xlane.f32.xlu0 %v2117
        %v2119 = vpop.xlane.xlu0 %2118
        %v2120 = vsub.f32 %v2114, %v2119
        %v2121 = vmul.f32 %v2120, 1.442695
        %v2122 = vpow.pop %v2121
        %v2123 = vsel %vm1709, %v2122, 0.0
        %2124 = vadd.xlane.f32.xlu0 %v2123
        %v2125 = vpop.xlane.xlu0 %2124
        %v2126 = vrcp.pop %v2125
        %v2127 = vmul.f32 %v2122, %v2126
        %2128 = vrot.lane.b32.xlu0 %v1525, 80
        %v2129 = vpop.permute.xlu0 %2128
        %v2132 = vsel %vm1709, %v2127, 0
        %2134 = vmatprep.subr.mxu0 0.0
        %2135 = vmatpush1.msra.mxu0 0.0
        %2136 = vmatprep.subr.mxu0 0.0
        %2137 = vmatpush1.msra.mxu0 0.0
        %2138 = vmatprep.subr.mxu0 0.0
        %2139 = vmatpush1.msra.mxu0 0.0
        %2140 = vmatprep.subr.mxu0 0.0
        %2141 = vmatpush1.msra.mxu0 0.0
        %2142 = vmatprep.subr.mxu0 0.0
        %2143 = vmatpush1.msra.mxu0 0.0
        %2144 = vmatprep.subr.mxu0 0.0
        %2145 = vmatpush1.msra.mxu0 0.0
        %2146 = vmatprep.subr.mxu0 0.0
        %2147 = vmatpush1.msra.mxu0 0.0
        %2148 = vmatprep.subr.mxu0 0.0
        %2149 = vmatpush1.msra.mxu0 0.0
        %2150 = vmatprep.subr.mxu0 0.0
        %2151 = vmatpush1.msra.mxu0 0.0
        %2152 = vmatprep.subr.mxu0 0.0
        %2153 = vmatpush1.msra.mxu0 0.0
        %2154 = vmatprep.subr.mxu0 0.0
        %2155 = vmatpush1.msra.mxu0 0.0
        %2156 = vmatprep.subr.mxu0 0.0
        %2157 = vmatpush1.msra.mxu0 0.0
        %2158 = vmatprep.subr.mxu0 0.0
        %2159 = vmatpush1.msra.mxu0 0.0
        %2160 = vmatprep.subr.mxu0 0.0
        %2161 = vmatpush1.msra.mxu0 0.0
        %2162 = vmatprep.subr.mxu0 0.0
        %2163 = vmatpush1.msra.mxu0 0.0
        %2164 = vmatprep.subr.mxu0 0.0
        %2165 = vmatpush1.msra.mxu0 %v2129
        %2166 = vmatprep.subr.mxu0 0.0
        %2167 = vmatpush2.msra.mxu0 0.0
        %2168 = vmatprep.subr.mxu0 0.0
        %2169 = vmatpush2.msra.mxu0 0.0
        %2170 = vmatprep.subr.mxu0 0.0
        %2171 = vmatpush2.msra.mxu0 0.0
        %2172 = vmatprep.subr.mxu0 0.0
        %2173 = vmatpush2.msra.mxu0 0.0
        %2174 = vmatprep.subr.mxu0 0.0
        %2175 = vmatpush2.msra.mxu0 0.0
        %2176 = vmatprep.subr.mxu0 0.0
        %2177 = vmatpush2.msra.mxu0 0.0
        %2178 = vmatprep.subr.mxu0 0.0
        %2179 = vmatpush2.msra.mxu0 0.0
        %2180 = vmatprep.subr.mxu0 0.0
        %2181 = vmatpush2.msra.mxu0 0.0
        %2182 = vmatprep.subr.mxu0 0.0
        %2183 = vmatpush2.msra.mxu0 0.0
        %2184 = vmatprep.subr.mxu0 0.0
        %2185 = vmatpush2.msra.mxu0 0.0
        %2186 = vmatprep.subr.mxu0 0.0
        %2187 = vmatpush2.msra.mxu0 0.0
        %2188 = vmatprep.subr.mxu0 0.0
        %2189 = vmatpush2.msra.mxu0 0.0
        %2190 = vmatprep.subr.mxu0 0.0
        %2191 = vmatpush2.msra.mxu0 0.0
        %2192 = vmatprep.subr.mxu0 0.0
        %2193 = vmatpush2.msra.mxu0 0.0
        %2194 = vmatprep.subr.mxu0 0.0
        %2195 = vmatpush2.msra.mxu0 0.0
        %2196 = vmatprep.subr.mxu0 0.0
        %2197 = vmatpush2.msra.mxu0 0.0
        %2198 = vmatprep.mubr.f32.mxu0 0.0
        %2199 = vmatmul.mubr.f32.gmra.mxu0 %v2132
        %v2200 = vpop.f32.mrf.mxu0
        %v2201 = vadd.f32 0.0, %v2200
        %v2202 = vpop.f32.mrf.mxu0
        %2203 = vdwg.mxu0
        %v2204 = vadd.f32 %v2038, %v2127
        %2205 = vrot.lane.b32.xlu0 %v1706, 104
        %v2206 = vpop.permute.xlu0 %2205
        %2207 = vrot.lane.b32.xlu0 %v1525, 104
        %v2208 = vpop.permute.xlu0 %2207
        %v2209 = vsel %vm1709, %v2206, 0
        %v2211 = vsel %vm1709, %v2208, 0
        %2213 = vmatprep.subr.mxu0 0.0
        %2214 = vmatpush1.xpose.msra.mxu0 0.0
        %2215 = vmatprep.subr.mxu0 0.0
        %2216 = vmatpush1.xpose.msra.mxu0 0.0
        %2217 = vmatprep.subr.mxu0 0.0
        %2218 = vmatpush1.xpose.msra.mxu0 0.0
        %2219 = vmatprep.subr.mxu0 0.0
        %2220 = vmatpush1.xpose.msra.mxu0 0.0
        %2221 = vmatprep.subr.mxu0 0.0
        %2222 = vmatpush1.xpose.msra.mxu0 0.0
        %2223 = vmatprep.subr.mxu0 0.0
        %2224 = vmatpush1.xpose.msra.mxu0 0.0
        %2225 = vmatprep.subr.mxu0 0.0
        %2226 = vmatpush1.xpose.msra.mxu0 0.0
        %2227 = vmatprep.subr.mxu0 0.0
        %2228 = vmatpush1.xpose.msra.mxu0 0.0
        %2229 = vmatprep.subr.mxu0 0.0
        %2230 = vmatpush1.xpose.msra.mxu0 0.0
        %2231 = vmatprep.subr.mxu0 0.0
        %2232 = vmatpush1.xpose.msra.mxu0 0.0
        %2233 = vmatprep.subr.mxu0 0.0
        %2234 = vmatpush1.xpose.msra.mxu0 0.0
        %2235 = vmatprep.subr.mxu0 0.0
        %2236 = vmatpush1.xpose.msra.mxu0 0.0
        %2237 = vmatprep.subr.mxu0 0.0
        %2238 = vmatpush1.xpose.msra.mxu0 0.0
        %2239 = vmatprep.subr.mxu0 0.0
        %2240 = vmatpush1.xpose.msra.mxu0 0.0
        %2241 = vmatprep.subr.mxu0 0.0
        %2242 = vmatpush1.xpose.msra.mxu0 0.0
        %2243 = vmatprep.subr.mxu0 0.0
        %2244 = vmatpush1.xpose.msra.mxu0 %v2211
        %2245 = vmatprep.subr.mxu0 0.0
        %2246 = vmatpush2.xpose.msra.mxu0 0.0
        %2247 = vmatprep.subr.mxu0 0.0
        %2248 = vmatpush2.xpose.msra.mxu0 0.0
        %2249 = vmatprep.subr.mxu0 0.0
        %2250 = vmatpush2.xpose.msra.mxu0 0.0
        %2251 = vmatprep.subr.mxu0 0.0
        %2252 = vmatpush2.xpose.msra.mxu0 0.0
        %2253 = vmatprep.subr.mxu0 0.0
        %2254 = vmatpush2.xpose.msra.mxu0 0.0
        %2255 = vmatprep.subr.mxu0 0.0
        %2256 = vmatpush2.xpose.msra.mxu0 0.0
        %2257 = vmatprep.subr.mxu0 0.0
        %2258 = vmatpush2.xpose.msra.mxu0 0.0
        %2259 = vmatprep.subr.mxu0 0.0
        %2260 = vmatpush2.xpose.msra.mxu0 0.0
        %2261 = vmatprep.subr.mxu0 0.0
        %2262 = vmatpush2.xpose.msra.mxu0 0.0
        %2263 = vmatprep.subr.mxu0 0.0
        %2264 = vmatpush2.xpose.msra.mxu0 0.0
        %2265 = vmatprep.subr.mxu0 0.0
        %2266 = vmatpush2.xpose.msra.mxu0 0.0
        %2267 = vmatprep.subr.mxu0 0.0
        %2268 = vmatpush2.xpose.msra.mxu0 0.0
        %2269 = vmatprep.subr.mxu0 0.0
        %2270 = vmatpush2.xpose.msra.mxu0 0.0
        %2271 = vmatprep.subr.mxu0 0.0
        %2272 = vmatpush2.xpose.msra.mxu0 0.0
        %2273 = vmatprep.subr.mxu0 0.0
        %2274 = vmatpush2.xpose.msra.mxu0 0.0
        %2275 = vmatprep.subr.mxu0 0.0
        %2276 = vmatpush2.xpose.msra.mxu0 0.0
        %2277 = vmatprep.mubr.f32.mxu0 0.0
        %2278 = vmatmul.mubr.f32.gmra.mxu0 %v2209
        %v2279 = vpop.f32.mrf.mxu0
        %v2280 = vadd.f32 0.0, %v2279
        %v2281 = vpop.f32.mrf.mxu0
        %2282 = vdwg.mxu0
        %v2283 = vsel %vm1709, %v2280, -inf
        %2284 = vmax.xlane.f32.xlu0 %v2283
        %v2285 = vpop.xlane.xlu0 %2284
        %v2286 = vsub.f32 %v2280, %v2285
        %v2287 = vmul.f32 %v2286, 1.442695
        %v2288 = vpow.pop %v2287
        %v2289 = vsel %vm1709, %v2288, 0.0
        %2290 = vadd.xlane.f32.xlu0 %v2289
        %v2291 = vpop.xlane.xlu0 %2290
        %v2292 = vrcp.pop %v2291
        %v2293 = vmul.f32 %v2288, %v2292
        %2294 = vrot.lane.b32.xlu0 %v1525, 72
        %v2295 = vpop.permute.xlu0 %2294
        %v2298 = vsel %vm1709, %v2293, 0
        %2300 = vmatprep.subr.mxu0 0.0
        %2301 = vmatpush1.msra.mxu0 0.0
        %2302 = vmatprep.subr.mxu0 0.0
        %2303 = vmatpush1.msra.mxu0 0.0
        %2304 = vmatprep.subr.mxu0 0.0
        %2305 = vmatpush1.msra.mxu0 0.0
        %2306 = vmatprep.subr.mxu0 0.0
        %2307 = vmatpush1.msra.mxu0 0.0
        %2308 = vmatprep.subr.mxu0 0.0
        %2309 = vmatpush1.msra.mxu0 0.0
        %2310 = vmatprep.subr.mxu0 0.0
        %2311 = vmatpush1.msra.mxu0 0.0
        %2312 = vmatprep.subr.mxu0 0.0
        %2313 = vmatpush1.msra.mxu0 0.0
        %2314 = vmatprep.subr.mxu0 0.0
        %2315 = vmatpush1.msra.mxu0 0.0
        %2316 = vmatprep.subr.mxu0 0.0
        %2317 = vmatpush1.msra.mxu0 0.0
        %2318 = vmatprep.subr.mxu0 0.0
        %2319 = vmatpush1.msra.mxu0 0.0
        %2320 = vmatprep.subr.mxu0 0.0
        %2321 = vmatpush1.msra.mxu0 0.0
        %2322 = vmatprep.subr.mxu0 0.0
        %2323 = vmatpush1.msra.mxu0 0.0
        %2324 = vmatprep.subr.mxu0 0.0
        %2325 = vmatpush1.msra.mxu0 0.0
        %2326 = vmatprep.subr.mxu0 0.0
        %2327 = vmatpush1.msra.mxu0 0.0
        %2328 = vmatprep.subr.mxu0 0.0
        %2329 = vmatpush1.msra.mxu0 0.0
        %2330 = vmatprep.subr.mxu0 0.0
        %2331 = vmatpush1.msra.mxu0 %v2295
        %2332 = vmatprep.subr.mxu0 0.0
        %2333 = vmatpush2.msra.mxu0 0.0
        %2334 = vmatprep.subr.mxu0 0.0
        %2335 = vmatpush2.msra.mxu0 0.0
        %2336 = vmatprep.subr.mxu0 0.0
        %2337 = vmatpush2.msra.mxu0 0.0
        %2338 = vmatprep.subr.mxu0 0.0
        %2339 = vmatpush2.msra.mxu0 0.0
        %2340 = vmatprep.subr.mxu0 0.0
        %2341 = vmatpush2.msra.mxu0 0.0
        %2342 = vmatprep.subr.mxu0 0.0
        %2343 = vmatpush2.msra.mxu0 0.0
        %2344 = vmatprep.subr.mxu0 0.0
        %2345 = vmatpush2.msra.mxu0 0.0
        %2346 = vmatprep.subr.mxu0 0.0
        %2347 = vmatpush2.msra.mxu0 0.0
        %2348 = vmatprep.subr.mxu0 0.0
        %2349 = vmatpush2.msra.mxu0 0.0
        %2350 = vmatprep.subr.mxu0 0.0
        %2351 = vmatpush2.msra.mxu0 0.0
        %2352 = vmatprep.subr.mxu0 0.0
        %2353 = vmatpush2.msra.mxu0 0.0
        %2354 = vmatprep.subr.mxu0 0.0
        %2355 = vmatpush2.msra.mxu0 0.0
        %2356 = vmatprep.subr.mxu0 0.0
        %2357 = vmatpush2.msra.mxu0 0.0
        %2358 = vmatprep.subr.mxu0 0.0
        %2359 = vmatpush2.msra.mxu0 0.0
        %2360 = vmatprep.subr.mxu0 0.0
        %2361 = vmatpush2.msra.mxu0 0.0
        %2362 = vmatprep.subr.mxu0 0.0
        %2363 = vmatpush2.msra.mxu0 0.0
        %2364 = vmatprep.mubr.f32.mxu0 0.0
        %2365 = vmatmul.mubr.f32.gmra.mxu0 %v2298
        %v2366 = vpop.f32.mrf.mxu0
        %v2367 = vadd.f32 0.0, %v2366
        %v2368 = vpop.f32.mrf.mxu0
        %2369 = vdwg.mxu0
        %v2370 = vadd.f32 %v2204, %v2293
        %2372 = vrot.lane.b32.xlu0 %v2035, 8
        %v2373 = vpop.permute.xlu0 %2372
        %2376 = vrot.lane.b32.xlu0 %v2201, 16
        %v2377 = vpop.permute.xlu0 %2376
        %2380 = vrot.lane.b32.xlu0 %v2367, 24
        %v2381 = vpop.permute.xlu0 %2380
        %v2383 = vsel %vm1709, %v1870, %v2373
        %vm2384 = vcmask 130048
        %v2385 = vsel %vm2384, %v2383, %v2377
        %vm2386 = vcmask 195584
        %v2387 = vsel %vm2386, %v2385, %v2381
        %v2389 = vlaneseq
        %v2390 = vshrl.u32 %v2389, 7
        %v2391 = vsub.s32 0, %v2390
        %v2392 = vrot.slane %v1629, %v2391
        %v2395 = vsel %vm1386, %v2387, 0
        %2397 = vmatprep.subr.mxu0 0.0
        %2398 = vmatpush1.msra.mxu0 0.0
        %2399 = vmatprep.subr.mxu0 0.0
        %2400 = vmatpush1.msra.mxu0 0.0
        %2401 = vmatprep.subr.mxu0 0.0
        %2402 = vmatpush1.msra.mxu0 0.0
        %2403 = vmatprep.subr.mxu0 0.0
        %2404 = vmatpush1.msra.mxu0 0.0
        %2405 = vmatprep.subr.mxu0 0.0
        %2406 = vmatpush1.msra.mxu0 0.0
        %2407 = vmatprep.subr.mxu0 0.0
        %2408 = vmatpush1.msra.mxu0 0.0
        %2409 = vmatprep.subr.mxu0 0.0
        %2410 = vmatpush1.msra.mxu0 0.0
        %2411 = vmatprep.subr.mxu0 0.0
        %2412 = vmatpush1.msra.mxu0 0.0
        %2413 = vmatprep.subr.mxu0 0.0
        %2414 = vmatpush1.msra.mxu0 0.0
        %2415 = vmatprep.subr.mxu0 0.0
        %2416 = vmatpush1.msra.mxu0 0.0
        %2417 = vmatprep.subr.mxu0 0.0
        %2418 = vmatpush1.msra.mxu0 0.0
        %2419 = vmatprep.subr.mxu0 0.0
        %2420 = vmatpush1.msra.mxu0 0.0
        %2421 = vmatprep.subr.mxu0 0.0
        %2422 = vmatpush1.msra.mxu0 %v1628
        %2423 = vmatprep.subr.mxu0 0.0
        %2424 = vmatpush1.msra.mxu0 %v1627
        %2425 = vmatprep.subr.mxu0 0.0
        %2426 = vmatpush1.msra.mxu0 %v1626
        %2427 = vmatprep.subr.mxu0 0.0
        %2428 = vmatpush1.msra.mxu0 %v1625
        %2429 = vmatprep.subr.mxu0 0.0
        %2430 = vmatpush2.msra.mxu0 0.0
        %2431 = vmatprep.subr.mxu0 0.0
        %2432 = vmatpush2.msra.mxu0 0.0
        %2433 = vmatprep.subr.mxu0 0.0
        %2434 = vmatpush2.msra.mxu0 0.0
        %2435 = vmatprep.subr.mxu0 0.0
        %2436 = vmatpush2.msra.mxu0 0.0
        %2437 = vmatprep.subr.mxu0 0.0
        %2438 = vmatpush2.msra.mxu0 0.0
        %2439 = vmatprep.subr.mxu0 0.0
        %2440 = vmatpush2.msra.mxu0 0.0
        %2441 = vmatprep.subr.mxu0 0.0
        %2442 = vmatpush2.msra.mxu0 0.0
        %2443 = vmatprep.subr.mxu0 0.0
        %2444 = vmatpush2.msra.mxu0 0.0
        %2445 = vmatprep.subr.mxu0 0.0
        %2446 = vmatpush2.msra.mxu0 0.0
        %2447 = vmatprep.subr.mxu0 0.0
        %2448 = vmatpush2.msra.mxu0 0.0
        %2449 = vmatprep.subr.mxu0 0.0
        %2450 = vmatpush2.msra.mxu0 0.0
        %2451 = vmatprep.subr.mxu0 0.0
        %2452 = vmatpush2.msra.mxu0 0.0
        %2453 = vmatprep.subr.mxu0 0.0
        %2454 = vmatpush2.msra.mxu0 0.0
        %2455 = vmatprep.subr.mxu0 0.0
        %2456 = vmatpush2.msra.mxu0 0.0
        %2457 = vmatprep.subr.mxu0 0.0
        %2458 = vmatpush2.msra.mxu0 0.0
        %2459 = vmatprep.subr.mxu0 0.0
        %2460 = vmatpush2.msra.mxu0 0.0
        %2461 = vmatprep.mubr.f32.mxu0 0.0
        %2462 = vmatmul.mubr.f32.gmra.mxu0 %v2395
        %v2463 = vpop.f32.mrf.mxu0
        %v2464 = vadd.f32 %v2392, %v2463
        %v2465 = vpop.f32.mrf.mxu0
        %2466 = vdwg.mxu0
        %v2467 = vmul.f32 %v2370, 0.25
        %v2468 = vadd.f32 %v1380, %v2464
        %v2469 = vld [vmem:[%s1340] sm:$0x1]
        %v2470 = vld [vmem:[%s1343] sm:$0x1]
        %v2471 = vsel %vm1386, %v2468, 0.0
        %2472 = vadd.xlane.f32.xlu0 %v2471
        %v2473 = vpop.xlane.xlu0 %2472
        %v2474 = vmul.f32 %v2473, %v1390
        %v2475 = vsub.f32 %v2468, %v2474
        %v2476 = vmul.f32 %v2475, %v2475
        %v2477 = vsel %vm1386, %v2476, 0.0
        %2478 = vadd.xlane.f32.xlu0 %v2477
        %v2479 = vpop.xlane.xlu0 %2478
        %v2480 = vmul.f32 %v2479, %v1390
        %v2481 = vadd.f32 %v2480, 1e-05
        %v2482 = vrsqrt.pop %v2481
        %v2483 = vmul.f32 %v2475, %v2482
        %v2485 = vlaneseq
        %v2486 = vshrl.u32 %v2485, 7
        %v2487 = vsub.s32 0, %v2486
        %v2488 = vrot.slane %v2469, %v2487
        %v2490 = vmul.f32 %v2483, %v2488
        %v2492 = vlaneseq
        %v2493 = vshrl.u32 %v2492, 7
        %v2494 = vsub.s32 0, %v2493
        %v2495 = vrot.slane %v2470, %v2494
        %v2497 = vadd.f32 %v2490, %v2495
        %v2498 = vld [vmem:[%s1306] sm:$0xff]
        %v2499 = vld [vmem:[%s1306 + $0x8] sm:$0xff]
        %v2500 = vld [vmem:[%s1306 + $0x10] sm:$0xff]
        %v2501 = vld [vmem:[%s1306 + $0x18] sm:$0xff]
        %v2502 = vld [vmem:[%s1309] sm:$0x1]
        %v2503 = vld [vmem:[%s1322] sm:$0xff]
        %v2504 = vld [vmem:[%s1322 + $0x8] sm:$0xff]
        %v2505 = vld [vmem:[%s1322 + $0x10] sm:$0xff]
        %v2506 = vld [vmem:[%s1322 + $0x18] sm:$0xff]
        %v2507 = vld [vmem:[%s1325] sm:$0x1]
        %v2509 = vlaneseq
        %v2510 = vshrl.u32 %v2509, 7
        %v2511 = vsub.s32 0, %v2510
        %v2512 = vrot.slane %v2502, %v2511
        %v2515 = vsel %vm1386, %v2497, 0
        %2517 = vmatprep.subr.mxu0 0.0
        %2518 = vmatpush1.msra.mxu0 0.0
        %2519 = vmatprep.subr.mxu0 0.0
        %2520 = vmatpush1.msra.mxu0 0.0
        %2521 = vmatprep.subr.mxu0 0.0
        %2522 = vmatpush1.msra.mxu0 0.0
        %2523 = vmatprep.subr.mxu0 0.0
        %2524 = vmatpush1.msra.mxu0 0.0
        %2525 = vmatprep.subr.mxu0 0.0
        %2526 = vmatpush1.msra.mxu0 0.0
        %2527 = vmatprep.subr.mxu0 0.0
        %2528 = vmatpush1.msra.mxu0 0.0
        %2529 = vmatprep.subr.mxu0 0.0
        %2530 = vmatpush1.msra.mxu0 0.0
        %2531 = vmatprep.subr.mxu0 0.0
        %2532 = vmatpush1.msra.mxu0 0.0
        %2533 = vmatprep.subr.mxu0 0.0
        %2534 = vmatpush1.msra.mxu0 0.0
        %2535 = vmatprep.subr.mxu0 0.0
        %2536 = vmatpush1.msra.mxu0 0.0
        %2537 = vmatprep.subr.mxu0 0.0
        %2538 = vmatpush1.msra.mxu0 0.0
        %2539 = vmatprep.subr.mxu0 0.0
        %2540 = vmatpush1.msra.mxu0 0.0
        %2541 = vmatprep.subr.mxu0 0.0
        %2542 = vmatpush1.msra.mxu0 %v2501
        %2543 = vmatprep.subr.mxu0 0.0
        %2544 = vmatpush1.msra.mxu0 %v2500
        %2545 = vmatprep.subr.mxu0 0.0
        %2546 = vmatpush1.msra.mxu0 %v2499
        %2547 = vmatprep.subr.mxu0 0.0
        %2548 = vmatpush1.msra.mxu0 %v2498
        %2549 = vmatprep.subr.mxu0 0.0
        %2550 = vmatpush2.msra.mxu0 0.0
        %2551 = vmatprep.subr.mxu0 0.0
        %2552 = vmatpush2.msra.mxu0 0.0
        %2553 = vmatprep.subr.mxu0 0.0
        %2554 = vmatpush2.msra.mxu0 0.0
        %2555 = vmatprep.subr.mxu0 0.0
        %2556 = vmatpush2.msra.mxu0 0.0
        %2557 = vmatprep.subr.mxu0 0.0
        %2558 = vmatpush2.msra.mxu0 0.0
        %2559 = vmatprep.subr.mxu0 0.0
        %2560 = vmatpush2.msra.mxu0 0.0
        %2561 = vmatprep.subr.mxu0 0.0
        %2562 = vmatpush2.msra.mxu0 0.0
        %2563 = vmatprep.subr.mxu0 0.0
        %2564 = vmatpush2.msra.mxu0 0.0
        %2565 = vmatprep.subr.mxu0 0.0
        %2566 = vmatpush2.msra.mxu0 0.0
        %2567 = vmatprep.subr.mxu0 0.0
        %2568 = vmatpush2.msra.mxu0 0.0
        %2569 = vmatprep.subr.mxu0 0.0
        %2570 = vmatpush2.msra.mxu0 0.0
        %2571 = vmatprep.subr.mxu0 0.0
        %2572 = vmatpush2.msra.mxu0 0.0
        %2573 = vmatprep.subr.mxu0 0.0
        %2574 = vmatpush2.msra.mxu0 0.0
        %2575 = vmatprep.subr.mxu0 0.0
        %2576 = vmatpush2.msra.mxu0 0.0
        %2577 = vmatprep.subr.mxu0 0.0
        %2578 = vmatpush2.msra.mxu0 0.0
        %2579 = vmatprep.subr.mxu0 0.0
        %2580 = vmatpush2.msra.mxu0 0.0
        %2581 = vmatprep.mubr.f32.mxu0 0.0
        %2582 = vmatmul.mubr.f32.gmra.mxu0 %v2515
        %v2583 = vpop.f32.mrf.mxu0
        %v2584 = vadd.f32 %v2512, %v2583
        %v2585 = vpop.f32.mrf.mxu0
        %2586 = vdwg.mxu0
        %v2588 = vsel %vm1709, %v2584, 0
        %v2591 = vsel %vm1709, %v1612, 0
        %v2594 = vsel %vm1709, %v1617, 0
        %2596 = vmatprep.subr.mxu0 0.0
        %2597 = vmatpush1.xpose.msra.mxu0 0.0
        %2598 = vmatprep.subr.mxu0 0.0
        %2599 = vmatpush1.xpose.msra.mxu0 0.0
        %2600 = vmatprep.subr.mxu0 0.0
        %2601 = vmatpush1.xpose.msra.mxu0 0.0
        %2602 = vmatprep.subr.mxu0 0.0
        %2603 = vmatpush1.xpose.msra.mxu0 0.0
        %2604 = vmatprep.subr.mxu0 0.0
        %2605 = vmatpush1.xpose.msra.mxu0 0.0
        %2606 = vmatprep.subr.mxu0 0.0
        %2607 = vmatpush1.xpose.msra.mxu0 0.0
        %2608 = vmatprep.subr.mxu0 0.0
        %2609 = vmatpush1.xpose.msra.mxu0 0.0
        %2610 = vmatprep.subr.mxu0 0.0
        %2611 = vmatpush1.xpose.msra.mxu0 0.0
        %2612 = vmatprep.subr.mxu0 0.0
        %2613 = vmatpush1.xpose.msra.mxu0 0.0
        %2614 = vmatprep.subr.mxu0 0.0
        %2615 = vmatpush1.xpose.msra.mxu0 0.0
        %2616 = vmatprep.subr.mxu0 0.0
        %2617 = vmatpush1.xpose.msra.mxu0 0.0
        %2618 = vmatprep.subr.mxu0 0.0
        %2619 = vmatpush1.xpose.msra.mxu0 0.0
        %2620 = vmatprep.subr.mxu0 0.0
        %2621 = vmatpush1.xpose.msra.mxu0 0.0
        %2622 = vmatprep.subr.mxu0 0.0
        %2623 = vmatpush1.xpose.msra.mxu0 0.0
        %2624 = vmatprep.subr.mxu0 0.0
        %2625 = vmatpush1.xpose.msra.mxu0 %v2594
        %2626 = vmatprep.subr.mxu0 0.0
        %2627 = vmatpush1.xpose.msra.mxu0 %v2591
        %2628 = vmatprep.subr.mxu0 0.0
        %2629 = vmatpush2.xpose.msra.mxu0 0.0
        %2630 = vmatprep.subr.mxu0 0.0
        %2631 = vmatpush2.xpose.msra.mxu0 0.0
        %2632 = vmatprep.subr.mxu0 0.0
        %2633 = vmatpush2.xpose.msra.mxu0 0.0
        %2634 = vmatprep.subr.mxu0 0.0
        %2635 = vmatpush2.xpose.msra.mxu0 0.0
        %2636 = vmatprep.subr.mxu0 0.0
        %2637 = vmatpush2.xpose.msra.mxu0 0.0
        %2638 = vmatprep.subr.mxu0 0.0
        %2639 = vmatpush2.xpose.msra.mxu0 0.0
        %2640 = vmatprep.subr.mxu0 0.0
        %2641 = vmatpush2.xpose.msra.mxu0 0.0
        %2642 = vmatprep.subr.mxu0 0.0
        %2643 = vmatpush2.xpose.msra.mxu0 0.0
        %2644 = vmatprep.subr.mxu0 0.0
        %2645 = vmatpush2.xpose.msra.mxu0 0.0
        %2646 = vmatprep.subr.mxu0 0.0
        %2647 = vmatpush2.xpose.msra.mxu0 0.0
        %2648 = vmatprep.subr.mxu0 0.0
        %2649 = vmatpush2.xpose.msra.mxu0 0.0
        %2650 = vmatprep.subr.mxu0 0.0
        %2651 = vmatpush2.xpose.msra.mxu0 0.0
        %2652 = vmatprep.subr.mxu0 0.0
        %2653 = vmatpush2.xpose.msra.mxu0 0.0
        %2654 = vmatprep.subr.mxu0 0.0
        %2655 = vmatpush2.xpose.msra.mxu0 0.0
        %2656 = vmatprep.subr.mxu0 0.0
        %2657 = vmatpush2.xpose.msra.mxu0 0.0
        %2658 = vmatprep.subr.mxu0 0.0
        %2659 = vmatpush2.xpose.msra.mxu0 0.0
        %2660 = vmatprep.mubr.f32.mxu0 0.0
        %2661 = vmatmul.mubr.f32.gmra.mxu0 %v2588
        %v2662 = vpop.f32.mrf.mxu0
        %v2663 = vadd.f32 0.0, %v2662
        %v2664 = vpop.f32.mrf.mxu0
        %2665 = vdwg.mxu0
        %v2666 = vsel %vm2384, %v2663, -inf
        %2667 = vmax.xlane.f32.xlu0 %v2666
        %v2668 = vpop.xlane.xlu0 %2667
        %v2669 = vsub.f32 %v2663, %v2668
        %v2670 = vmul.f32 %v2669, 1.442695
        %v2671 = vpow.pop %v2670
        %v2672 = vsel %vm2384, %v2671, 0.0
        %2673 = vadd.xlane.f32.xlu0 %v2672
        %v2674 = vpop.xlane.xlu0 %2673
        %v2675 = vrcp.pop %v2674
        %v2676 = vmul.f32 %v2671, %v2675
        %2677 = vrot.lane.b32.xlu0 %v1612, 96
        %v2678 = vpop.permute.xlu0 %2677
        %2679 = vrot.lane.b32.xlu0 %v1617, 96
        %v2680 = vpop.permute.xlu0 %2679
        %v2684 = vsel %vm2384, %v2676, 0
        %2686 = vmatprep.subr.mxu0 0.0
        %2687 = vmatpush1.msra.mxu0 0.0
        %2688 = vmatprep.subr.mxu0 0.0
        %2689 = vmatpush1.msra.mxu0 0.0
        %2690 = vmatprep.subr.mxu0 0.0
        %2691 = vmatpush1.msra.mxu0 0.0
        %2692 = vmatprep.subr.mxu0 0.0
        %2693 = vmatpush1.msra.mxu0 0.0
        %2694 = vmatprep.subr.mxu0 0.0
        %2695 = vmatpush1.msra.mxu0 0.0
        %2696 = vmatprep.subr.mxu0 0.0
        %2697 = vmatpush1.msra.mxu0 0.0
        %2698 = vmatprep.subr.mxu0 0.0
        %2699 = vmatpush1.msra.mxu0 0.0
        %2700 = vmatprep.subr.mxu0 0.0
        %2701 = vmatpush1.msra.mxu0 0.0
        %2702 = vmatprep.subr.mxu0 0.0
        %2703 = vmatpush1.msra.mxu0 0.0
        %2704 = vmatprep.subr.mxu0 0.0
        %2705 = vmatpush1.msra.mxu0 0.0
        %2706 = vmatprep.subr.mxu0 0.0
        %2707 = vmatpush1.msra.mxu0 0.0
        %2708 = vmatprep.subr.mxu0 0.0
        %2709 = vmatpush1.msra.mxu0 0.0
        %2710 = vmatprep.subr.mxu0 0.0
        %2711 = vmatpush1.msra.mxu0 0.0
        %2712 = vmatprep.subr.mxu0 0.0
        %2713 = vmatpush1.msra.mxu0 0.0
        %2714 = vmatprep.subr.mxu0 0.0
        %2715 = vmatpush1.msra.mxu0 %v2680
        %2716 = vmatprep.subr.mxu0 0.0
        %2717 = vmatpush1.msra.mxu0 %v2678
        %2718 = vmatprep.subr.mxu0 0.0
        %2719 = vmatpush2.msra.mxu0 0.0
        %2720 = vmatprep.subr.mxu0 0.0
        %2721 = vmatpush2.msra.mxu0 0.0
        %2722 = vmatprep.subr.mxu0 0.0
        %2723 = vmatpush2.msra.mxu0 0.0
        %2724 = vmatprep.subr.mxu0 0.0
        %2725 = vmatpush2.msra.mxu0 0.0
        %2726 = vmatprep.subr.mxu0 0.0
        %2727 = vmatpush2.msra.mxu0 0.0
        %2728 = vmatprep.subr.mxu0 0.0
        %2729 = vmatpush2.msra.mxu0 0.0
        %2730 = vmatprep.subr.mxu0 0.0
        %2731 = vmatpush2.msra.mxu0 0.0
        %2732 = vmatprep.subr.mxu0 0.0
        %2733 = vmatpush2.msra.mxu0 0.0
        %2734 = vmatprep.subr.mxu0 0.0
        %2735 = vmatpush2.msra.mxu0 0.0
        %2736 = vmatprep.subr.mxu0 0.0
        %2737 = vmatpush2.msra.mxu0 0.0
        %2738 = vmatprep.subr.mxu0 0.0
        %2739 = vmatpush2.msra.mxu0 0.0
        %2740 = vmatprep.subr.mxu0 0.0
        %2741 = vmatpush2.msra.mxu0 0.0
        %2742 = vmatprep.subr.mxu0 0.0
        %2743 = vmatpush2.msra.mxu0 0.0
        %2744 = vmatprep.subr.mxu0 0.0
        %2745 = vmatpush2.msra.mxu0 0.0
        %2746 = vmatprep.subr.mxu0 0.0
        %2747 = vmatpush2.msra.mxu0 0.0
        %2748 = vmatprep.subr.mxu0 0.0
        %2749 = vmatpush2.msra.mxu0 0.0
        %2750 = vmatprep.mubr.f32.mxu0 0.0
        %2751 = vmatmul.mubr.f32.gmra.mxu0 %v2684
        %v2752 = vpop.f32.mrf.mxu0
        %v2753 = vadd.f32 0.0, %v2752
        %v2754 = vpop.f32.mrf.mxu0
        %2755 = vdwg.mxu0
        %2756 = vrot.lane.b32.xlu0 %v2584, 120
        %v2757 = vpop.permute.xlu0 %2756
        %2758 = vrot.lane.b32.xlu0 %v1612, 120
        %v2759 = vpop.permute.xlu0 %2758
        %2760 = vrot.lane.b32.xlu0 %v1617, 120
        %v2761 = vpop.permute.xlu0 %2760
        %v2762 = vsel %vm1709, %v2757, 0
        %v2764 = vsel %vm1709, %v2759, 0
        %v2766 = vsel %vm1709, %v2761, 0
        %2768 = vmatprep.subr.mxu0 0.0
        %2769 = vmatpush1.xpose.msra.mxu0 0.0
        %2770 = vmatprep.subr.mxu0 0.0
        %2771 = vmatpush1.xpose.msra.mxu0 0.0
        %2772 = vmatprep.subr.mxu0 0.0
        %2773 = vmatpush1.xpose.msra.mxu0 0.0
        %2774 = vmatprep.subr.mxu0 0.0
        %2775 = vmatpush1.xpose.msra.mxu0 0.0
        %2776 = vmatprep.subr.mxu0 0.0
        %2777 = vmatpush1.xpose.msra.mxu0 0.0
        %2778 = vmatprep.subr.mxu0 0.0
        %2779 = vmatpush1.xpose.msra.mxu0 0.0
        %2780 = vmatprep.subr.mxu0 0.0
        %2781 = vmatpush1.xpose.msra.mxu0 0.0
        %2782 = vmatprep.subr.mxu0 0.0
        %2783 = vmatpush1.xpose.msra.mxu0 0.0
        %2784 = vmatprep.subr.mxu0 0.0
        %2785 = vmatpush1.xpose.msra.mxu0 0.0
        %2786 = vmatprep.subr.mxu0 0.0
        %2787 = vmatpush1.xpose.msra.mxu0 0.0
        %2788 = vmatprep.subr.mxu0 0.0
        %2789 = vmatpush1.xpose.msra.mxu0 0.0
        %2790 = vmatprep.subr.mxu0 0.0
        %2791 = vmatpush1.xpose.msra.mxu0 0.0
        %2792 = vmatprep.subr.mxu0 0.0
        %2793 = vmatpush1.xpose.msra.mxu0 0.0
        %2794 = vmatprep.subr.mxu0 0.0
        %2795 = vmatpush1.xpose.msra.mxu0 0.0
        %2796 = vmatprep.subr.mxu0 0.0
        %2797 = vmatpush1.xpose.msra.mxu0 %v2766
        %2798 = vmatprep.subr.mxu0 0.0
        %2799 = vmatpush1.xpose.msra.mxu0 %v2764
        %2800 = vmatprep.subr.mxu0 0.0
        %2801 = vmatpush2.xpose.msra.mxu0 0.0
        %2802 = vmatprep.subr.mxu0 0.0
        %2803 = vmatpush2.xpose.msra.mxu0 0.0
        %2804 = vmatprep.subr.mxu0 0.0
        %2805 = vmatpush2.xpose.msra.mxu0 0.0
        %2806 = vmatprep.subr.mxu0 0.0
        %2807 = vmatpush2.xpose.msra.mxu0 0.0
        %2808 = vmatprep.subr.mxu0 0.0
        %2809 = vmatpush2.xpose.msra.mxu0 0.0
        %2810 = vmatprep.subr.mxu0 0.0
        %2811 = vmatpush2.xpose.msra.mxu0 0.0
        %2812 = vmatprep.subr.mxu0 0.0
        %2813 = vmatpush2.xpose.msra.mxu0 0.0
        %2814 = vmatprep.subr.mxu0 0.0
        %2815 = vmatpush2.xpose.msra.mxu0 0.0
        %2816 = vmatprep.subr.mxu0 0.0
        %2817 = vmatpush2.xpose.msra.mxu0 0.0
        %2818 = vmatprep.subr.mxu0 0.0
        %2819 = vmatpush2.xpose.msra.mxu0 0.0
        %2820 = vmatprep.subr.mxu0 0.0
        %2821 = vmatpush2.xpose.msra.mxu0 0.0
        %2822 = vmatprep.subr.mxu0 0.0
        %2823 = vmatpush2.xpose.msra.mxu0 0.0
        %2824 = vmatprep.subr.mxu0 0.0
        %2825 = vmatpush2.xpose.msra.mxu0 0.0
        %2826 = vmatprep.subr.mxu0 0.0
        %2827 = vmatpush2.xpose.msra.mxu0 0.0
        %2828 = vmatprep.subr.mxu0 0.0
        %2829 = vmatpush2.xpose.msra.mxu0 0.0
        %2830 = vmatprep.subr.mxu0 0.0
        %2831 = vmatpush2.xpose.msra.mxu0 0.0
        %2832 = vmatprep.mubr.f32.mxu0 0.0
        %2833 = vmatmul.mubr.f32.gmra.mxu0 %v2762
        %v2834 = vpop.f32.mrf.mxu0
        %v2835 = vadd.f32 0.0, %v2834
        %v2836 = vpop.f32.mrf.mxu0
        %2837 = vdwg.mxu0
        %v2838 = vsel %vm2384, %v2835, -inf
        %2839 = vmax.xlane.f32.xlu0 %v2838
        %v2840 = vpop.xlane.xlu0 %2839
        %v2841 = vsub.f32 %v2835, %v2840
        %v2842 = vmul.f32 %v2841, 1.442695
        %v2843 = vpow.pop %v2842
        %v2844 = vsel %vm2384, %v2843, 0.0
        %2845 = vadd.xlane.f32.xlu0 %v2844
        %v2846 = vpop.xlane.xlu0 %2845
        %v2847 = vrcp.pop %v2846
        %v2848 = vmul.f32 %v2843, %v2847
        %2849 = vrot.lane.b32.xlu0 %v1612, 88
        %v2850 = vpop.permute.xlu0 %2849
        %2851 = vrot.lane.b32.xlu0 %v1617, 88
        %v2852 = vpop.permute.xlu0 %2851
        %v2856 = vsel %vm2384, %v2848, 0
        %2858 = vmatprep.subr.mxu0 0.0
        %2859 = vmatpush1.msra.mxu0 0.0
        %2860 = vmatprep.subr.mxu0 0.0
        %2861 = vmatpush1.msra.mxu0 0.0
        %2862 = vmatprep.subr.mxu0 0.0
        %2863 = vmatpush1.msra.mxu0 0.0
        %2864 = vmatprep.subr.mxu0 0.0
        %2865 = vmatpush1.msra.mxu0 0.0
        %2866 = vmatprep.subr.mxu0 0.0
        %2867 = vmatpush1.msra.mxu0 0.0
        %2868 = vmatprep.subr.mxu0 0.0
        %2869 = vmatpush1.msra.mxu0 0.0
        %2870 = vmatprep.subr.mxu0 0.0
        %2871 = vmatpush1.msra.mxu0 0.0
        %2872 = vmatprep.subr.mxu0 0.0
        %2873 = vmatpush1.msra.mxu0 0.0
        %2874 = vmatprep.subr.mxu0 0.0
        %2875 = vmatpush1.msra.mxu0 0.0
        %2876 = vmatprep.subr.mxu0 0.0
        %2877 = vmatpush1.msra.mxu0 0.0
        %2878 = vmatprep.subr.mxu0 0.0
        %2879 = vmatpush1.msra.mxu0 0.0
        %2880 = vmatprep.subr.mxu0 0.0
        %2881 = vmatpush1.msra.mxu0 0.0
        %2882 = vmatprep.subr.mxu0 0.0
        %2883 = vmatpush1.msra.mxu0 0.0
        %2884 = vmatprep.subr.mxu0 0.0
        %2885 = vmatpush1.msra.mxu0 0.0
        %2886 = vmatprep.subr.mxu0 0.0
        %2887 = vmatpush1.msra.mxu0 %v2852
        %2888 = vmatprep.subr.mxu0 0.0
        %2889 = vmatpush1.msra.mxu0 %v2850
        %2890 = vmatprep.subr.mxu0 0.0
        %2891 = vmatpush2.msra.mxu0 0.0
        %2892 = vmatprep.subr.mxu0 0.0
        %2893 = vmatpush2.msra.mxu0 0.0
        %2894 = vmatprep.subr.mxu0 0.0
        %2895 = vmatpush2.msra.mxu0 0.0
        %2896 = vmatprep.subr.mxu0 0.0
        %2897 = vmatpush2.msra.mxu0 0.0
        %2898 = vmatprep.subr.mxu0 0.0
        %2899 = vmatpush2.msra.mxu0 0.0
        %2900 = vmatprep.subr.mxu0 0.0
        %2901 = vmatpush2.msra.mxu0 0.0
        %2902 = vmatprep.subr.mxu0 0.0
        %2903 = vmatpush2.msra.mxu0 0.0
        %2904 = vmatprep.subr.mxu0 0.0
        %2905 = vmatpush2.msra.mxu0 0.0
        %2906 = vmatprep.subr.mxu0 0.0
        %2907 = vmatpush2.msra.mxu0 0.0
        %2908 = vmatprep.subr.mxu0 0.0
        %2909 = vmatpush2.msra.mxu0 0.0
        %2910 = vmatprep.subr.mxu0 0.0
        %2911 = vmatpush2.msra.mxu0 0.0
        %2912 = vmatprep.subr.mxu0 0.0
        %2913 = vmatpush2.msra.mxu0 0.0
        %2914 = vmatprep.subr.mxu0 0.0
        %2915 = vmatpush2.msra.mxu0 0.0
        %2916 = vmatprep.subr.mxu0 0.0
        %2917 = vmatpush2.msra.mxu0 0.0
        %2918 = vmatprep.subr.mxu0 0.0
        %2919 = vmatpush2.msra.mxu0 0.0
        %2920 = vmatprep.subr.mxu0 0.0
        %2921 = vmatpush2.msra.mxu0 0.0
        %2922 = vmatprep.mubr.f32.mxu0 0.0
        %2923 = vmatmul.mubr.f32.gmra.mxu0 %v2856
        %v2924 = vpop.f32.mrf.mxu0
        %v2925 = vadd.f32 0.0, %v2924
        %v2926 = vpop.f32.mrf.mxu0
        %2927 = vdwg.mxu0
        %v2928 = vadd.f32 %v2676, %v2848
        %2929 = vrot.lane.b32.xlu0 %v2584, 112
        %v2930 = vpop.permute.xlu0 %2929
        %2931 = vrot.lane.b32.xlu0 %v1612, 112
        %v2932 = vpop.permute.xlu0 %2931
        %2933 = vrot.lane.b32.xlu0 %v1617, 112
        %v2934 = vpop.permute.xlu0 %2933
        %v2935 = vsel %vm1709, %v2930, 0
        %v2937 = vsel %vm1709, %v2932, 0
        %v2939 = vsel %vm1709, %v2934, 0
        %2941 = vmatprep.subr.mxu0 0.0
        %2942 = vmatpush1.xpose.msra.mxu0 0.0
        %2943 = vmatprep.subr.mxu0 0.0
        %2944 = vmatpush1.xpose.msra.mxu0 0.0
        %2945 = vmatprep.subr.mxu0 0.0
        %2946 = vmatpush1.xpose.msra.mxu0 0.0
        %2947 = vmatprep.subr.mxu0 0.0
        %2948 = vmatpush1.xpose.msra.mxu0 0.0
        %2949 = vmatprep.subr.mxu0 0.0
        %2950 = vmatpush1.xpose.msra.mxu0 0.0
        %2951 = vmatprep.subr.mxu0 0.0
        %2952 = vmatpush1.xpose.msra.mxu0 0.0
        %2953 = vmatprep.subr.mxu0 0.0
        %2954 = vmatpush1.xpose.msra.mxu0 0.0
        %2955 = vmatprep.subr.mxu0 0.0
        %2956 = vmatpush1.xpose.msra.mxu0 0.0
        %2957 = vmatprep.subr.mxu0 0.0
        %2958 = vmatpush1.xpose.msra.mxu0 0.0
        %2959 = vmatprep.subr.mxu0 0.0
        %2960 = vmatpush1.xpose.msra.mxu0 0.0
        %2961 = vmatprep.subr.mxu0 0.0
        %2962 = vmatpush1.xpose.msra.mxu0 0.0
        %2963 = vmatprep.subr.mxu0 0.0
        %2964 = vmatpush1.xpose.msra.mxu0 0.0
        %2965 = vmatprep.subr.mxu0 0.0
        %2966 = vmatpush1.xpose.msra.mxu0 0.0
        %2967 = vmatprep.subr.mxu0 0.0
        %2968 = vmatpush1.xpose.msra.mxu0 0.0
        %2969 = vmatprep.subr.mxu0 0.0
        %2970 = vmatpush1.xpose.msra.mxu0 %v2939
        %2971 = vmatprep.subr.mxu0 0.0
        %2972 = vmatpush1.xpose.msra.mxu0 %v2937
        %2973 = vmatprep.subr.mxu0 0.0
        %2974 = vmatpush2.xpose.msra.mxu0 0.0
        %2975 = vmatprep.subr.mxu0 0.0
        %2976 = vmatpush2.xpose.msra.mxu0 0.0
        %2977 = vmatprep.subr.mxu0 0.0
        %2978 = vmatpush2.xpose.msra.mxu0 0.0
        %2979 = vmatprep.subr.mxu0 0.0
        %2980 = vmatpush2.xpose.msra.mxu0 0.0
        %2981 = vmatprep.subr.mxu0 0.0
        %2982 = vmatpush2.xpose.msra.mxu0 0.0
        %2983 = vmatprep.subr.mxu0 0.0
        %2984 = vmatpush2.xpose.msra.mxu0 0.0
        %2985 = vmatprep.subr.mxu0 0.0
        %2986 = vmatpush2.xpose.msra.mxu0 0.0
        %2987 = vmatprep.subr.mxu0 0.0
        %2988 = vmatpush2.xpose.msra.mxu0 0.0
        %2989 = vmatprep.subr.mxu0 0.0
        %2990 = vmatpush2.xpose.msra.mxu0 0.0
        %2991 = vmatprep.subr.mxu0 0.0
        %2992 = vmatpush2.xpose.msra.mxu0 0.0
        %2993 = vmatprep.subr.mxu0 0.0
        %2994 = vmatpush2.xpose.msra.mxu0 0.0
        %2995 = vmatprep.subr.mxu0 0.0
        %2996 = vmatpush2.xpose.msra.mxu0 0.0
        %2997 = vmatprep.subr.mxu0 0.0
        %2998 = vmatpush2.xpose.msra.mxu0 0.0
        %2999 = vmatprep.subr.mxu0 0.0
        %3000 = vmatpush2.xpose.msra.mxu0 0.0
        %3001 = vmatprep.subr.mxu0 0.0
        %3002 = vmatpush2.xpose.msra.mxu0 0.0
        %3003 = vmatprep.subr.mxu0 0.0
        %3004 = vmatpush2.xpose.msra.mxu0 0.0
        %3005 = vmatprep.mubr.f32.mxu0 0.0
        %3006 = vmatmul.mubr.f32.gmra.mxu0 %v2935
        %v3007 = vpop.f32.mrf.mxu0
        %v3008 = vadd.f32 0.0, %v3007
        %v3009 = vpop.f32.mrf.mxu0
        %3010 = vdwg.mxu0
        %v3011 = vsel %vm2384, %v3008, -inf
        %3012 = vmax.xlane.f32.xlu0 %v3011
        %v3013 = vpop.xlane.xlu0 %3012
        %v3014 = vsub.f32 %v3008, %v3013
        %v3015 = vmul.f32 %v3014, 1.442695
        %v3016 = vpow.pop %v3015
        %v3017 = vsel %vm2384, %v3016, 0.0
        %3018 = vadd.xlane.f32.xlu0 %v3017
        %v3019 = vpop.xlane.xlu0 %3018
        %v3020 = vrcp.pop %v3019
        %v3021 = vmul.f32 %v3016, %v3020
        %3022 = vrot.lane.b32.xlu0 %v1612, 80
        %v3023 = vpop.permute.xlu0 %3022
        %3024 = vrot.lane.b32.xlu0 %v1617, 80
        %v3025 = vpop.permute.xlu0 %3024
        %v3029 = vsel %vm2384, %v3021, 0
        %3031 = vmatprep.subr.mxu0 0.0
        %3032 = vmatpush1.msra.mxu0 0.0
        %3033 = vmatprep.subr.mxu0 0.0
        %3034 = vmatpush1.msra.mxu0 0.0
        %3035 = vmatprep.subr.mxu0 0.0
        %3036 = vmatpush1.msra.mxu0 0.0
        %3037 = vmatprep.subr.mxu0 0.0
        %3038 = vmatpush1.msra.mxu0 0.0
        %3039 = vmatprep.subr.mxu0 0.0
        %3040 = vmatpush1.msra.mxu0 0.0
        %3041 = vmatprep.subr.mxu0 0.0
        %3042 = vmatpush1.msra.mxu0 0.0
        %3043 = vmatprep.subr.mxu0 0.0
        %3044 = vmatpush1.msra.mxu0 0.0
        %3045 = vmatprep.subr.mxu0 0.0
        %3046 = vmatpush1.msra.mxu0 0.0
        %3047 = vmatprep.subr.mxu0 0.0
        %3048 = vmatpush1.msra.mxu0 0.0
        %3049 = vmatprep.subr.mxu0 0.0
        %3050 = vmatpush1.msra.mxu0 0.0
        %3051 = vmatprep.subr.mxu0 0.0
        %3052 = vmatpush1.msra.mxu0 0.0
        %3053 = vmatprep.subr.mxu0 0.0
        %3054 = vmatpush1.msra.mxu0 0.0
        %3055 = vmatprep.subr.mxu0 0.0
        %3056 = vmatpush1.msra.mxu0 0.0
        %3057 = vmatprep.subr.mxu0 0.0
        %3058 = vmatpush1.msra.mxu0 0.0
        %3059 = vmatprep.subr.mxu0 0.0
        %3060 = vmatpush1.msra.mxu0 %v3025
        %3061 = vmatprep.subr.mxu0 0.0
        %3062 = vmatpush1.msra.mxu0 %v3023
        %3063 = vmatprep.subr.mxu0 0.0
        %3064 = vmatpush2.msra.mxu0 0.0
        %3065 = vmatprep.subr.mxu0 0.0
        %3066 = vmatpush2.msra.mxu0 0.0
        %3067 = vmatprep.subr.mxu0 0.0
        %3068 = vmatpush2.msra.mxu0 0.0
        %3069 = vmatprep.subr.mxu0 0.0
        %3070 = vmatpush2.msra.mxu0 0.0
        %3071 = vmatprep.subr.mxu0 0.0
        %3072 = vmatpush2.msra.mxu0 0.0
        %3073 = vmatprep.subr.mxu0 0.0
        %3074 = vmatpush2.msra.mxu0 0.0
        %3075 = vmatprep.subr.mxu0 0.0
        %3076 = vmatpush2.msra.mxu0 0.0
        %3077 = vmatprep.subr.mxu0 0.0
        %3078 = vmatpush2.msra.mxu0 0.0
        %3079 = vmatprep.subr.mxu0 0.0
        %3080 = vmatpush2.msra.mxu0 0.0
        %3081 = vmatprep.subr.mxu0 0.0
        %3082 = vmatpush2.msra.mxu0 0.0
        %3083 = vmatprep.subr.mxu0 0.0
        %3084 = vmatpush2.msra.mxu0 0.0
        %3085 = vmatprep.subr.mxu0 0.0
        %3086 = vmatpush2.msra.mxu0 0.0
        %3087 = vmatprep.subr.mxu0 0.0
        %3088 = vmatpush2.msra.mxu0 0.0
        %3089 = vmatprep.subr.mxu0 0.0
        %3090 = vmatpush2.msra.mxu0 0.0
        %3091 = vmatprep.subr.mxu0 0.0
        %3092 = vmatpush2.msra.mxu0 0.0
        %3093 = vmatprep.subr.mxu0 0.0
        %3094 = vmatpush2.msra.mxu0 0.0
        %3095 = vmatprep.mubr.f32.mxu0 0.0
        %3096 = vmatmul.mubr.f32.gmra.mxu0 %v3029
        %v3097 = vpop.f32.mrf.mxu0
        %v3098 = vadd.f32 0.0, %v3097
        %v3099 = vpop.f32.mrf.mxu0
        %3100 = vdwg.mxu0
        %v3101 = vadd.f32 %v2928, %v3021
        %3102 = vrot.lane.b32.xlu0 %v2584, 104
        %v3103 = vpop.permute.xlu0 %3102
        %3104 = vrot.lane.b32.xlu0 %v1612, 104
        %v3105 = vpop.permute.xlu0 %3104
        %3106 = vrot.lane.b32.xlu0 %v1617, 104
        %v3107 = vpop.permute.xlu0 %3106
        %v3108 = vsel %vm1709, %v3103, 0
        %v3110 = vsel %vm1709, %v3105, 0
        %v3112 = vsel %vm1709, %v3107, 0
        %3114 = vmatprep.subr.mxu0 0.0
        %3115 = vmatpush1.xpose.msra.mxu0 0.0
        %3116 = vmatprep.subr.mxu0 0.0
        %3117 = vmatpush1.xpose.msra.mxu0 0.0
        %3118 = vmatprep.subr.mxu0 0.0
        %3119 = vmatpush1.xpose.msra.mxu0 0.0
        %3120 = vmatprep.subr.mxu0 0.0
        %3121 = vmatpush1.xpose.msra.mxu0 0.0
        %3122 = vmatprep.subr.mxu0 0.0
        %3123 = vmatpush1.xpose.msra.mxu0 0.0
        %3124 = vmatprep.subr.mxu0 0.0
        %3125 = vmatpush1.xpose.msra.mxu0 0.0
        %3126 = vmatprep.subr.mxu0 0.0
        %3127 = vmatpush1.xpose.msra.mxu0 0.0
        %3128 = vmatprep.subr.mxu0 0.0
        %3129 = vmatpush1.xpose.msra.mxu0 0.0
        %3130 = vmatprep.subr.mxu0 0.0
        %3131 = vmatpush1.xpose.msra.mxu0 0.0
        %3132 = vmatprep.subr.mxu0 0.0
        %3133 = vmatpush1.xpose.msra.mxu0 0.0
        %3134 = vmatprep.subr.mxu0 0.0
        %3135 = vmatpush1.xpose.msra.mxu0 0.0
        %3136 = vmatprep.subr.mxu0 0.0
        %3137 = vmatpush1.xpose.msra.mxu0 0.0
        %3138 = vmatprep.subr.mxu0 0.0
        %3139 = vmatpush1.xpose.msra.mxu0 0.0
        %3140 = vmatprep.subr.mxu0 0.0
        %3141 = vmatpush1.xpose.msra.mxu0 0.0
        %3142 = vmatprep.subr.mxu0 0.0
        %3143 = vmatpush1.xpose.msra.mxu0 %v3112
        %3144 = vmatprep.subr.mxu0 0.0
        %3145 = vmatpush1.xpose.msra.mxu0 %v3110
        %3146 = vmatprep.subr.mxu0 0.0
        %3147 = vmatpush2.xpose.msra.mxu0 0.0
        %3148 = vmatprep.subr.mxu0 0.0
        %3149 = vmatpush2.xpose.msra.mxu0 0.0
        %3150 = vmatprep.subr.mxu0 0.0
        %3151 = vmatpush2.xpose.msra.mxu0 0.0
        %3152 = vmatprep.subr.mxu0 0.0
        %3153 = vmatpush2.xpose.msra.mxu0 0.0
        %3154 = vmatprep.subr.mxu0 0.0
        %3155 = vmatpush2.xpose.msra.mxu0 0.0
        %3156 = vmatprep.subr.mxu0 0.0
        %3157 = vmatpush2.xpose.msra.mxu0 0.0
        %3158 = vmatprep.subr.mxu0 0.0
        %3159 = vmatpush2.xpose.msra.mxu0 0.0
        %3160 = vmatprep.subr.mxu0 0.0
        %3161 = vmatpush2.xpose.msra.mxu0 0.0
        %3162 = vmatprep.subr.mxu0 0.0
        %3163 = vmatpush2.xpose.msra.mxu0 0.0
        %3164 = vmatprep.subr.mxu0 0.0
        %3165 = vmatpush2.xpose.msra.mxu0 0.0
        %3166 = vmatprep.subr.mxu0 0.0
        %3167 = vmatpush2.xpose.msra.mxu0 0.0
        %3168 = vmatprep.subr.mxu0 0.0
        %3169 = vmatpush2.xpose.msra.mxu0 0.0
        %3170 = vmatprep.subr.mxu0 0.0
        %3171 = vmatpush2.xpose.msra.mxu0 0.0
        %3172 = vmatprep.subr.mxu0 0.0
        %3173 = vmatpush2.xpose.msra.mxu0 0.0
        %3174 = vmatprep.subr.mxu0 0.0
        %3175 = vmatpush2.xpose.msra.mxu0 0.0
        %3176 = vmatprep.subr.mxu0 0.0
        %3177 = vmatpush2.xpose.msra.mxu0 0.0
        %3178 = vmatprep.mubr.f32.mxu0 0.0
        %3179 = vmatmul.mubr.f32.gmra.mxu0 %v3108
        %v3180 = vpop.f32.mrf.mxu0
        %v3181 = vadd.f32 0.0, %v3180
        %v3182 = vpop.f32.mrf.mxu0
        %3183 = vdwg.mxu0
        %v3184 = vsel %vm2384, %v3181, -inf
        %3185 = vmax.xlane.f32.xlu0 %v3184
        %v3186 = vpop.xlane.xlu0 %3185
        %v3187 = vsub.f32 %v3181, %v3186
        %v3188 = vmul.f32 %v3187, 1.442695
        %v3189 = vpow.pop %v3188
        %v3190 = vsel %vm2384, %v3189, 0.0
        %3191 = vadd.xlane.f32.xlu0 %v3190
        %v3192 = vpop.xlane.xlu0 %3191
        %v3193 = vrcp.pop %v3192
        %v3194 = vmul.f32 %v3189, %v3193
        %3195 = vrot.lane.b32.xlu0 %v1612, 72
        %v3196 = vpop.permute.xlu0 %3195
        %3197 = vrot.lane.b32.xlu0 %v1617, 72
        %v3198 = vpop.permute.xlu0 %3197
        %v3202 = vsel %vm2384, %v3194, 0
        %3204 = vmatprep.subr.mxu0 0.0
        %3205 = vmatpush1.msra.mxu0 0.0
        %3206 = vmatprep.subr.mxu0 0.0
        %3207 = vmatpush1.msra.mxu0 0.0
        %3208 = vmatprep.subr.mxu0 0.0
        %3209 = vmatpush1.msra.mxu0 0.0
        %3210 = vmatprep.subr.mxu0 0.0
        %3211 = vmatpush1.msra.mxu0 0.0
        %3212 = vmatprep.subr.mxu0 0.0
        %3213 = vmatpush1.msra.mxu0 0.0
        %3214 = vmatprep.subr.mxu0 0.0
        %3215 = vmatpush1.msra.mxu0 0.0
        %3216 = vmatprep.subr.mxu0 0.0
        %3217 = vmatpush1.msra.mxu0 0.0
        %3218 = vmatprep.subr.mxu0 0.0
        %3219 = vmatpush1.msra.mxu0 0.0
        %3220 = vmatprep.subr.mxu0 0.0
        %3221 = vmatpush1.msra.mxu0 0.0
        %3222 = vmatprep.subr.mxu0 0.0
        %3223 = vmatpush1.msra.mxu0 0.0
        %3224 = vmatprep.subr.mxu0 0.0
        %3225 = vmatpush1.msra.mxu0 0.0
        %3226 = vmatprep.subr.mxu0 0.0
        %3227 = vmatpush1.msra.mxu0 0.0
        %3228 = vmatprep.subr.mxu0 0.0
        %3229 = vmatpush1.msra.mxu0 0.0
        %3230 = vmatprep.subr.mxu0 0.0
        %3231 = vmatpush1.msra.mxu0 0.0
        %3232 = vmatprep.subr.mxu0 0.0
        %3233 = vmatpush1.msra.mxu0 %v3198
        %3234 = vmatprep.subr.mxu0 0.0
        %3235 = vmatpush1.msra.mxu0 %v3196
        %3236 = vmatprep.subr.mxu0 0.0
        %3237 = vmatpush2.msra.mxu0 0.0
        %3238 = vmatprep.subr.mxu0 0.0
        %3239 = vmatpush2.msra.mxu0 0.0
        %3240 = vmatprep.subr.mxu0 0.0
        %3241 = vmatpush2.msra.mxu0 0.0
        %3242 = vmatprep.subr.mxu0 0.0
        %3243 = vmatpush2.msra.mxu0 0.0
        %3244 = vmatprep.subr.mxu0 0.0
        %3245 = vmatpush2.msra.mxu0 0.0
        %3246 = vmatprep.subr.mxu0 0.0
        %3247 = vmatpush2.msra.mxu0 0.0
        %3248 = vmatprep.subr.mxu0 0.0
        %3249 = vmatpush2.msra.mxu0 0.0
        %3250 = vmatprep.subr.mxu0 0.0
        %3251 = vmatpush2.msra.mxu0 0.0
        %3252 = vmatprep.subr.mxu0 0.0
        %3253 = vmatpush2.msra.mxu0 0.0
        %3254 = vmatprep.subr.mxu0 0.0
        %3255 = vmatpush2.msra.mxu0 0.0
        %3256 = vmatprep.subr.mxu0 0.0
        %3257 = vmatpush2.msra.mxu0 0.0
        %3258 = vmatprep.subr.mxu0 0.0
        %3259 = vmatpush2.msra.mxu0 0.0
        %3260 = vmatprep.subr.mxu0 0.0
        %3261 = vmatpush2.msra.mxu0 0.0
        %3262 = vmatprep.subr.mxu0 0.0
        %3263 = vmatpush2.msra.mxu0 0.0
        %3264 = vmatprep.subr.mxu0 0.0
        %3265 = vmatpush2.msra.mxu0 0.0
        %3266 = vmatprep.subr.mxu0 0.0
        %3267 = vmatpush2.msra.mxu0 0.0
        %3268 = vmatprep.mubr.f32.mxu0 0.0
        %3269 = vmatmul.mubr.f32.gmra.mxu0 %v3202
        %v3270 = vpop.f32.mrf.mxu0
        %v3271 = vadd.f32 0.0, %v3270
        %v3272 = vpop.f32.mrf.mxu0
        %3273 = vdwg.mxu0
        %v3274 = vadd.f32 %v3101, %v3194
        %3276 = vrot.lane.b32.xlu0 %v2925, 8
        %v3277 = vpop.permute.xlu0 %3276
        %3280 = vrot.lane.b32.xlu0 %v3098, 16
        %v3281 = vpop.permute.xlu0 %3280
        %3284 = vrot.lane.b32.xlu0 %v3271, 24
        %v3285 = vpop.permute.xlu0 %3284
        %v3287 = vsel %vm1709, %v2753, %v3277
        %v3288 = vsel %vm2384, %v3287, %v3281
        %v3289 = vsel %vm2386, %v3288, %v3285
        %v3291 = vlaneseq
        %v3292 = vshrl.u32 %v3291, 7
        %v3293 = vsub.s32 0, %v3292
        %v3294 = vrot.slane %v2507, %v3293
        %v3297 = vsel %vm1386, %v3289, 0
        %3299 = vmatprep.subr.mxu0 0.0
        %3300 = vmatpush1.msra.mxu0 0.0
        %3301 = vmatprep.subr.mxu0 0.0
        %3302 = vmatpush1.msra.mxu0 0.0
        %3303 = vmatprep.subr.mxu0 0.0
        %3304 = vmatpush1.msra.mxu0 0.0
        %3305 = vmatprep.subr.mxu0 0.0
        %3306 = vmatpush1.msra.mxu0 0.0
        %3307 = vmatprep.subr.mxu0 0.0
        %3308 = vmatpush1.msra.mxu0 0.0
        %3309 = vmatprep.subr.mxu0 0.0
        %3310 = vmatpush1.msra.mxu0 0.0
        %3311 = vmatprep.subr.mxu0 0.0
        %3312 = vmatpush1.msra.mxu0 0.0
        %3313 = vmatprep.subr.mxu0 0.0
        %3314 = vmatpush1.msra.mxu0 0.0
        %3315 = vmatprep.subr.mxu0 0.0
        %3316 = vmatpush1.msra.mxu0 0.0
        %3317 = vmatprep.subr.mxu0 0.0
        %3318 = vmatpush1.msra.mxu0 0.0
        %3319 = vmatprep.subr.mxu0 0.0
        %3320 = vmatpush1.msra.mxu0 0.0
        %3321 = vmatprep.subr.mxu0 0.0
        %3322 = vmatpush1.msra.mxu0 0.0
        %3323 = vmatprep.subr.mxu0 0.0
        %3324 = vmatpush1.msra.mxu0 %v2506
        %3325 = vmatprep.subr.mxu0 0.0
        %3326 = vmatpush1.msra.mxu0 %v2505
        %3327 = vmatprep.subr.mxu0 0.0
        %3328 = vmatpush1.msra.mxu0 %v2504
        %3329 = vmatprep.subr.mxu0 0.0
        %3330 = vmatpush1.msra.mxu0 %v2503
        %3331 = vmatprep.subr.mxu0 0.0
        %3332 = vmatpush2.msra.mxu0 0.0
        %3333 = vmatprep.subr.mxu0 0.0
        %3334 = vmatpush2.msra.mxu0 0.0
        %3335 = vmatprep.subr.mxu0 0.0
        %3336 = vmatpush2.msra.mxu0 0.0
        %3337 = vmatprep.subr.mxu0 0.0
        %3338 = vmatpush2.msra.mxu0 0.0
        %3339 = vmatprep.subr.mxu0 0.0
        %3340 = vmatpush2.msra.mxu0 0.0
        %3341 = vmatprep.subr.mxu0 0.0
        %3342 = vmatpush2.msra.mxu0 0.0
        %3343 = vmatprep.subr.mxu0 0.0
        %3344 = vmatpush2.msra.mxu0 0.0
        %3345 = vmatprep.subr.mxu0 0.0
        %3346 = vmatpush2.msra.mxu0 0.0
        %3347 = vmatprep.subr.mxu0 0.0
        %3348 = vmatpush2.msra.mxu0 0.0
        %3349 = vmatprep.subr.mxu0 0.0
        %3350 = vmatpush2.msra.mxu0 0.0
        %3351 = vmatprep.subr.mxu0 0.0
        %3352 = vmatpush2.msra.mxu0 0.0
        %3353 = vmatprep.subr.mxu0 0.0
        %3354 = vmatpush2.msra.mxu0 0.0
        %3355 = vmatprep.subr.mxu0 0.0
        %3356 = vmatpush2.msra.mxu0 0.0
        %3357 = vmatprep.subr.mxu0 0.0
        %3358 = vmatpush2.msra.mxu0 0.0
        %3359 = vmatprep.subr.mxu0 0.0
        %3360 = vmatpush2.msra.mxu0 0.0
        %3361 = vmatprep.subr.mxu0 0.0
        %3362 = vmatpush2.msra.mxu0 0.0
        %3363 = vmatprep.mubr.f32.mxu0 0.0
        %3364 = vmatmul.mubr.f32.gmra.mxu0 %v3297
        %v3365 = vpop.f32.mrf.mxu0
        %v3366 = vadd.f32 %v3294, %v3365
        %v3367 = vpop.f32.mrf.mxu0
        %3368 = vdwg.mxu0
        %v3369 = vmul.f32 %v3274, 0.25
        %v3370 = vadd.f32 %v2468, %v3366
        %v3371 = vld [vmem:[%s1346] sm:$0x1]
        %v3372 = vld [vmem:[%s1349] sm:$0x1]
        %v3373 = vsel %vm1386, %v3370, 0.0
        %3374 = vadd.xlane.f32.xlu0 %v3373
        %v3375 = vpop.xlane.xlu0 %3374
        %v3376 = vmul.f32 %v3375, %v1390
        %v3377 = vsub.f32 %v3370, %v3376
        %v3378 = vmul.f32 %v3377, %v3377
        %v3379 = vsel %vm1386, %v3378, 0.0
        %3380 = vadd.xlane.f32.xlu0 %v3379
        %v3381 = vpop.xlane.xlu0 %3380
        %v3382 = vmul.f32 %v3381, %v1390
        %v3383 = vadd.f32 %v3382, 1e-05
        %v3384 = vrsqrt.pop %v3383
        %v3385 = vmul.f32 %v3377, %v3384
        %v3387 = vlaneseq
        %v3388 = vshrl.u32 %v3387, 7
        %v3389 = vsub.s32 0, %v3388
        %v3390 = vrot.slane %v3371, %v3389
        %v3392 = vmul.f32 %v3385, %v3390
        %v3394 = vlaneseq
        %v3395 = vshrl.u32 %v3394, 7
        %v3396 = vsub.s32 0, %v3395
        %v3397 = vrot.slane %v3372, %v3396
        %v3399 = vadd.f32 %v3392, %v3397
        %v3400 = vld [vmem:[%s1354] sm:$0xff]
        %v3401 = vld [vmem:[%s1354 + $0x8] sm:$0xff]
        %v3402 = vld [vmem:[%s1354 + $0x10] sm:$0xff]
        %v3403 = vld [vmem:[%s1354 + $0x18] sm:$0xff]
        %v3404 = vld [vmem:[%s1357] sm:$0x1]
        %v3406 = vlaneseq
        %v3407 = vshrl.u32 %v3406, 7
        %v3408 = vsub.s32 0, %v3407
        %v3409 = vrot.slane %v3404, %v3408
        %v3412 = vsel %vm1386, %v3399, 0
        %3414 = vmatprep.subr.mxu0 0.0
        %3415 = vmatpush1.msra.mxu0 0.0
        %3416 = vmatprep.subr.mxu0 0.0
        %3417 = vmatpush1.msra.mxu0 0.0
        %3418 = vmatprep.subr.mxu0 0.0
        %3419 = vmatpush1.msra.mxu0 0.0
        %3420 = vmatprep.subr.mxu0 0.0
        %3421 = vmatpush1.msra.mxu0 0.0
        %3422 = vmatprep.subr.mxu0 0.0
        %3423 = vmatpush1.msra.mxu0 0.0
        %3424 = vmatprep.subr.mxu0 0.0
        %3425 = vmatpush1.msra.mxu0 0.0
        %3426 = vmatprep.subr.mxu0 0.0
        %3427 = vmatpush1.msra.mxu0 0.0
        %3428 = vmatprep.subr.mxu0 0.0
        %3429 = vmatpush1.msra.mxu0 0.0
        %3430 = vmatprep.subr.mxu0 0.0
        %3431 = vmatpush1.msra.mxu0 0.0
        %3432 = vmatprep.subr.mxu0 0.0
        %3433 = vmatpush1.msra.mxu0 0.0
        %3434 = vmatprep.subr.mxu0 0.0
        %3435 = vmatpush1.msra.mxu0 0.0
        %3436 = vmatprep.subr.mxu0 0.0
        %3437 = vmatpush1.msra.mxu0 0.0
        %3438 = vmatprep.subr.mxu0 0.0
        %3439 = vmatpush1.msra.mxu0 %v3403
        %3440 = vmatprep.subr.mxu0 0.0
        %3441 = vmatpush1.msra.mxu0 %v3402
        %3442 = vmatprep.subr.mxu0 0.0
        %3443 = vmatpush1.msra.mxu0 %v3401
        %3444 = vmatprep.subr.mxu0 0.0
        %3445 = vmatpush1.msra.mxu0 %v3400
        %3446 = vmatprep.subr.mxu0 0.0
        %3447 = vmatpush2.msra.mxu0 0.0
        %3448 = vmatprep.subr.mxu0 0.0
        %3449 = vmatpush2.msra.mxu0 0.0
        %3450 = vmatprep.subr.mxu0 0.0
        %3451 = vmatpush2.msra.mxu0 0.0
        %3452 = vmatprep.subr.mxu0 0.0
        %3453 = vmatpush2.msra.mxu0 0.0
        %3454 = vmatprep.subr.mxu0 0.0
        %3455 = vmatpush2.msra.mxu0 0.0
        %3456 = vmatprep.subr.mxu0 0.0
        %3457 = vmatpush2.msra.mxu0 0.0
        %3458 = vmatprep.subr.mxu0 0.0
        %3459 = vmatpush2.msra.mxu0 0.0
        %3460 = vmatprep.subr.mxu0 0.0
        %3461 = vmatpush2.msra.mxu0 0.0
        %3462 = vmatprep.subr.mxu0 0.0
        %3463 = vmatpush2.msra.mxu0 0.0
        %3464 = vmatprep.subr.mxu0 0.0
        %3465 = vmatpush2.msra.mxu0 0.0
        %3466 = vmatprep.subr.mxu0 0.0
        %3467 = vmatpush2.msra.mxu0 0.0
        %3468 = vmatprep.subr.mxu0 0.0
        %3469 = vmatpush2.msra.mxu0 0.0
        %3470 = vmatprep.subr.mxu0 0.0
        %3471 = vmatpush2.msra.mxu0 0.0
        %3472 = vmatprep.subr.mxu0 0.0
        %3473 = vmatpush2.msra.mxu0 0.0
        %3474 = vmatprep.subr.mxu0 0.0
        %3475 = vmatpush2.msra.mxu0 0.0
        %3476 = vmatprep.subr.mxu0 0.0
        %3477 = vmatpush2.msra.mxu0 0.0
        %3478 = vmatprep.mubr.f32.mxu0 0.0
        %3479 = vmatmul.mubr.f32.gmra.mxu0 %v3412
        %v3480 = vpop.f32.mrf.mxu0
        %v3481 = vadd.f32 %v3409, %v3480
        %v3482 = vpop.f32.mrf.mxu0
        %3483 = vdwg.mxu0
        %v3484 = vmul.f32 %v3481, 0.5
        %v3485 = vmul.f32 %v3481, 0.70710677
        %v3486 = verf.f32.pop %v3485
        %v3487 = vadd.f32 %v3486, 1.0
        %v3488 = vmul.f32 %v3484, %v3487
        %v3489 = vld [vmem:[%s1362] sm:$0xff]
        %v3490 = vld [vmem:[%s1362 + $0x8] sm:$0xff]
        %v3491 = vld [vmem:[%s1362 + $0x10] sm:$0xff]
        %v3492 = vld [vmem:[%s1362 + $0x18] sm:$0xff]
        %v3493 = vld [vmem:[%s1362 + $0x20] sm:$0xff]
        %v3494 = vld [vmem:[%s1362 + $0x28] sm:$0xff]
        %v3495 = vld [vmem:[%s1362 + $0x30] sm:$0xff]
        %v3496 = vld [vmem:[%s1362 + $0x38] sm:$0xff]
        %v3497 = vld [vmem:[%s1365] sm:$0x1]
        %v3499 = vlaneseq
        %v3500 = vshrl.u32 %v3499, 7
        %v3501 = vsub.s32 0, %v3500
        %v3502 = vrot.slane %v3497, %v3501
        %vm3504 = vcmask 523264
        %v3506 = vsel %vm3504, %v3488, 0
        %3508 = vmatprep.subr.mxu0 0.0
        %3509 = vmatpush1.msra.mxu0 0.0
        %3510 = vmatprep.subr.mxu0 0.0
        %3511 = vmatpush1.msra.mxu0 0.0
        %3512 = vmatprep.subr.mxu0 0.0
        %3513 = vmatpush1.msra.mxu0 0.0
        %3514 = vmatprep.subr.mxu0 0.0
        %3515 = vmatpush1.msra.mxu0 0.0
        %3516 = vmatprep.subr.mxu0 0.0
        %3517 = vmatpush1.msra.mxu0 0.0
        %3518 = vmatprep.subr.mxu0 0.0
        %3519 = vmatpush1.msra.mxu0 0.0
        %3520 = vmatprep.subr.mxu0 0.0
        %3521 = vmatpush1.msra.mxu0 0.0
        %3522 = vmatprep.subr.mxu0 0.0
        %3523 = vmatpush1.msra.mxu0 0.0
        %3524 = vmatprep.subr.mxu0 0.0
        %3525 = vmatpush1.msra.mxu0 %v3496
        %3526 = vmatprep.subr.mxu0 0.0
        %3527 = vmatpush1.msra.mxu0 %v3495
        %3528 = vmatprep.subr.mxu0 0.0
        %3529 = vmatpush1.msra.mxu0 %v3494
        %3530 = vmatprep.subr.mxu0 0.0
        %3531 = vmatpush1.msra.mxu0 %v3493
        %3532 = vmatprep.subr.mxu0 0.0
        %3533 = vmatpush1.msra.mxu0 %v3492
        %3534 = vmatprep.subr.mxu0 0.0
        %3535 = vmatpush1.msra.mxu0 %v3491
        %3536 = vmatprep.subr.mxu0 0.0
        %3537 = vmatpush1.msra.mxu0 %v3490
        %3538 = vmatprep.subr.mxu0 0.0
        %3539 = vmatpush1.msra.mxu0 %v3489
        %3540 = vmatprep.subr.mxu0 0.0
        %3541 = vmatpush2.msra.mxu0 0.0
        %3542 = vmatprep.subr.mxu0 0.0
        %3543 = vmatpush2.msra.mxu0 0.0
        %3544 = vmatprep.subr.mxu0 0.0
        %3545 = vmatpush2.msra.mxu0 0.0
        %3546 = vmatprep.subr.mxu0 0.0
        %3547 = vmatpush2.msra.mxu0 0.0
        %3548 = vmatprep.subr.mxu0 0.0
        %3549 = vmatpush2.msra.mxu0 0.0
        %3550 = vmatprep.subr.mxu0 0.0
        %3551 = vmatpush2.msra.mxu0 0.0
        %3552 = vmatprep.subr.mxu0 0.0
        %3553 = vmatpush2.msra.mxu0 0.0
        %3554 = vmatprep.subr.mxu0 0.0
        %3555 = vmatpush2.msra.mxu0 0.0
        %3556 = vmatprep.subr.mxu0 0.0
        %3557 = vmatpush2.msra.mxu0 0.0
        %3558 = vmatprep.subr.mxu0 0.0
        %3559 = vmatpush2.msra.mxu0 0.0
        %3560 = vmatprep.subr.mxu0 0.0
        %3561 = vmatpush2.msra.mxu0 0.0
        %3562 = vmatprep.subr.mxu0 0.0
        %3563 = vmatpush2.msra.mxu0 0.0
        %3564 = vmatprep.subr.mxu0 0.0
        %3565 = vmatpush2.msra.mxu0 0.0
        %3566 = vmatprep.subr.mxu0 0.0
        %3567 = vmatpush2.msra.mxu0 0.0
        %3568 = vmatprep.subr.mxu0 0.0
        %3569 = vmatpush2.msra.mxu0 0.0
        %3570 = vmatprep.subr.mxu0 0.0
        %3571 = vmatpush2.msra.mxu0 0.0
        %3572 = vmatprep.mubr.f32.mxu0 0.0
        %3573 = vmatmul.mubr.f32.gmra.mxu0 %v3506
        %v3574 = vpop.f32.mrf.mxu0
        %v3575 = vadd.f32 %v3502, %v3574
        %v3576 = vpop.f32.mrf.mxu0
        %3577 = vdwg.mxu0
        %v3578 = vadd.f32 %v3370, %v3575
        %3579 = vst.msk [vmem:[#allocation2] sm:$0xff] %vm1386, %v3578
        %p3580 = scmp.lt.s32.totalorder %s81, 1
        // Predicated region
        $region141: #{decoder_forward.1} parent=135 // pred_check
          %p3581 = pneg %p3580
        $region142: #{decoder_forward.1} parent=135 // pred_check_branch
          %3583 = sbr.rel (%p3581) target = $region144
        $region143: #{decoder_forward.1} parent=135 // pred_region
          %v3584 = vld [vmem:[%s1282] sm:$0xff]
          %v3585 = vld [vmem:[%s1282 + $0x8] sm:$0xff]
          %v3586 = vld [vmem:[%s1282 + $0x10] sm:$0xff]
          %v3587 = vld [vmem:[%s1282 + $0x18] sm:$0xff]
          %v3588 = vld [vmem:[%s1285] sm:$0x1]
          %v3589 = vld [vmem:[%s1298] sm:$0xff]
          %v3590 = vld [vmem:[%s1298 + $0x8] sm:$0xff]
          %v3591 = vld [vmem:[%s1298 + $0x10] sm:$0xff]
          %v3592 = vld [vmem:[%s1298 + $0x18] sm:$0xff]
          %v3593 = vld [vmem:[%s1301] sm:$0x1]
          %v3595 = vlaneseq
          %v3596 = vshrl.u32 %v3595, 7
          %v3597 = vsub.s32 0, %v3596
          %v3598 = vrot.slane %v3588, %v3597
          %3600 = vmatprep.subr.mxu0 0.0
          %3601 = vmatpush1.msra.mxu0 0.0
          %3602 = vmatprep.subr.mxu0 0.0
          %3603 = vmatpush1.msra.mxu0 0.0
          %3604 = vmatprep.subr.mxu0 0.0
          %3605 = vmatpush1.msra.mxu0 0.0
          %3606 = vmatprep.subr.mxu0 0.0
          %3607 = vmatpush1.msra.mxu0 0.0
          %3608 = vmatprep.subr.mxu0 0.0
          %3609 = vmatpush1.msra.mxu0 0.0
          %3610 = vmatprep.subr.mxu0 0.0
          %3611 = vmatpush1.msra.mxu0 0.0
          %3612 = vmatprep.subr.mxu0 0.0
          %3613 = vmatpush1.msra.mxu0 0.0
          %3614 = vmatprep.subr.mxu0 0.0
          %3615 = vmatpush1.msra.mxu0 0.0
          %3616 = vmatprep.subr.mxu0 0.0
          %3617 = vmatpush1.msra.mxu0 0.0
          %3618 = vmatprep.subr.mxu0 0.0
          %3619 = vmatpush1.msra.mxu0 0.0
          %3620 = vmatprep.subr.mxu0 0.0
          %3621 = vmatpush1.msra.mxu0 0.0
          %3622 = vmatprep.subr.mxu0 0.0
          %3623 = vmatpush1.msra.mxu0 0.0
          %3624 = vmatprep.subr.mxu0 0.0
          %3625 = vmatpush1.msra.mxu0 %v3587
          %3626 = vmatprep.subr.mxu0 0.0
          %3627 = vmatpush1.msra.mxu0 %v3586
          %3628 = vmatprep.subr.mxu0 0.0
          %3629 = vmatpush1.msra.mxu0 %v3585
          %3630 = vmatprep.subr.mxu0 0.0
          %3631 = vmatpush1.msra.mxu0 %v3584
          %3632 = vmatprep.subr.mxu0 0.0
          %3633 = vmatpush2.msra.mxu0 0.0
          %3634 = vmatprep.subr.mxu0 0.0
          %3635 = vmatpush2.msra.mxu0 0.0
          %3636 = vmatprep.subr.mxu0 0.0
          %3637 = vmatpush2.msra.mxu0 0.0
          %3638 = vmatprep.subr.mxu0 0.0
          %3639 = vmatpush2.msra.mxu0 0.0
          %3640 = vmatprep.subr.mxu0 0.0
          %3641 = vmatpush2.msra.mxu0 0.0
          %3642 = vmatprep.subr.mxu0 0.0
          %3643 = vmatpush2.msra.mxu0 0.0
          %3644 = vmatprep.subr.mxu0 0.0
          %3645 = vmatpush2.msra.mxu0 0.0
          %3646 = vmatprep.subr.mxu0 0.0
          %3647 = vmatpush2.msra.mxu0 0.0
          %3648 = vmatprep.subr.mxu0 0.0
          %3649 = vmatpush2.msra.mxu0 0.0
          %3650 = vmatprep.subr.mxu0 0.0
          %3651 = vmatpush2.msra.mxu0 0.0
          %3652 = vmatprep.subr.mxu0 0.0
          %3653 = vmatpush2.msra.mxu0 0.0
          %3654 = vmatprep.subr.mxu0 0.0
          %3655 = vmatpush2.msra.mxu0 0.0
          %3656 = vmatprep.subr.mxu0 0.0
          %3657 = vmatpush2.msra.mxu0 0.0
          %3658 = vmatprep.subr.mxu0 0.0
          %3659 = vmatpush2.msra.mxu0 0.0
          %3660 = vmatprep.subr.mxu0 0.0
          %3661 = vmatpush2.msra.mxu0 0.0
          %3662 = vmatprep.subr.mxu0 0.0
          %3663 = vmatpush2.msra.mxu0 0.0
          %3664 = vmatprep.mubr.f32.mxu0 0.0
          %3665 = vmatmul.mubr.f32.gmra.mxu0 %v1456
          %v3666 = vpop.f32.mrf.mxu0
          %v3667 = vadd.f32 %v3598, %v3666
          %v3668 = vpop.f32.mrf.mxu0
          %3669 = vdwg.mxu0
          %v3671 = vsel %vm1709, %v3667, 0
          %3673 = vmatprep.subr.mxu0 0.0
          %3674 = vmatpush1.xpose.msra.mxu0 0.0
          %3675 = vmatprep.subr.mxu0 0.0
          %3676 = vmatpush1.xpose.msra.mxu0 0.0
          %3677 = vmatprep.subr.mxu0 0.0
          %3678 = vmatpush1.xpose.msra.mxu0 0.0
          %3679 = vmatprep.subr.mxu0 0.0
          %3680 = vmatpush1.xpose.msra.mxu0 0.0
          %3681 = vmatprep.subr.mxu0 0.0
          %3682 = vmatpush1.xpose.msra.mxu0 0.0
          %3683 = vmatprep.subr.mxu0 0.0
          %3684 = vmatpush1.xpose.msra.mxu0 0.0
          %3685 = vmatprep.subr.mxu0 0.0
          %3686 = vmatpush1.xpose.msra.mxu0 0.0
          %3687 = vmatprep.subr.mxu0 0.0
          %3688 = vmatpush1.xpose.msra.mxu0 0.0
          %3689 = vmatprep.subr.mxu0 0.0
          %3690 = vmatpush1.xpose.msra.mxu0 0.0
          %3691 = vmatprep.subr.mxu0 0.0
          %3692 = vmatpush1.xpose.msra.mxu0 0.0
          %3693 = vmatprep.subr.mxu0 0.0
          %3694 = vmatpush1.xpose.msra.mxu0 0.0
          %3695 = vmatprep.subr.mxu0 0.0
          %3696 = vmatpush1.xpose.msra.mxu0 0.0
          %3697 = vmatprep.subr.mxu0 0.0
          %3698 = vmatpush1.xpose.msra.mxu0 0.0
          %3699 = vmatprep.subr.mxu0 0.0
          %3700 = vmatpush1.xpose.msra.mxu0 0.0
          %3701 = vmatprep.subr.mxu0 0.0
          %3702 = vmatpush1.xpose.msra.mxu0 0.0
          %3703 = vmatprep.subr.mxu0 0.0
          %3704 = vmatpush1.xpose.msra.mxu0 %v1714
          %3705 = vmatprep.subr.mxu0 0.0
          %3706 = vmatpush2.xpose.msra.mxu0 0.0
          %3707 = vmatprep.subr.mxu0 0.0
          %3708 = vmatpush2.xpose.msra.mxu0 0.0
          %3709 = vmatprep.subr.mxu0 0.0
          %3710 = vmatpush2.xpose.msra.mxu0 0.0
          %3711 = vmatprep.subr.mxu0 0.0
          %3712 = vmatpush2.xpose.msra.mxu0 0.0
          %3713 = vmatprep.subr.mxu0 0.0
          %3714 = vmatpush2.xpose.msra.mxu0 0.0
          %3715 = vmatprep.subr.mxu0 0.0
          %3716 = vmatpush2.xpose.msra.mxu0 0.0
          %3717 = vmatprep.subr.mxu0 0.0
          %3718 = vmatpush2.xpose.msra.mxu0 0.0
          %3719 = vmatprep.subr.mxu0 0.0
          %3720 = vmatpush2.xpose.msra.mxu0 0.0
          %3721 = vmatprep.subr.mxu0 0.0
          %3722 = vmatpush2.xpose.msra.mxu0 0.0
          %3723 = vmatprep.subr.mxu0 0.0
          %3724 = vmatpush2.xpose.msra.mxu0 0.0
          %3725 = vmatprep.subr.mxu0 0.0
          %3726 = vmatpush2.xpose.msra.mxu0 0.0
          %3727 = vmatprep.subr.mxu0 0.0
          %3728 = vmatpush2.xpose.msra.mxu0 0.0
          %3729 = vmatprep.subr.mxu0 0.0
          %3730 = vmatpush2.xpose.msra.mxu0 0.0
          %3731 = vmatprep.subr.mxu0 0.0
          %3732 = vmatpush2.xpose.msra.mxu0 0.0
          %3733 = vmatprep.subr.mxu0 0.0
          %3734 = vmatpush2.xpose.msra.mxu0 0.0
          %3735 = vmatprep.subr.mxu0 0.0
          %3736 = vmatpush2.xpose.msra.mxu0 0.0
          %3737 = vmatprep.mubr.f32.mxu0 0.0
          %3738 = vmatmul.mubr.f32.gmra.mxu0 %v3671
          %v3739 = vpop.f32.mrf.mxu0
          %v3740 = vadd.f32 0.0, %v3739
          %v3741 = vpop.f32.mrf.mxu0
          %3742 = vdwg.mxu0
          %v3743 = vsel %vm1709, %v3740, -inf
          %3744 = vmax.xlane.f32.xlu0 %v3743
          %v3745 = vpop.xlane.xlu0 %3744
          %v3746 = vsub.f32 %v3740, %v3745
          %v3747 = vmul.f32 %v3746, 1.442695
          %v3748 = vpow.pop %v3747
          %v3749 = vsel %vm1709, %v3748, 0.0
          %3750 = vadd.xlane.f32.xlu0 %v3749
          %v3751 = vpop.xlane.xlu0 %3750
          %v3752 = vrcp.pop %v3751
          %v3753 = vmul.f32 %v3748, %v3752
          %v3755 = vsel %vm1709, %v3753, 0
          %3757 = vmatprep.subr.mxu0 0.0
          %3758 = vmatpush1.msra.mxu0 0.0
          %3759 = vmatprep.subr.mxu0 0.0
          %3760 = vmatpush1.msra.mxu0 0.0
          %3761 = vmatprep.subr.mxu0 0.0
          %3762 = vmatpush1.msra.mxu0 0.0
          %3763 = vmatprep.subr.mxu0 0.0
          %3764 = vmatpush1.msra.mxu0 0.0
          %3765 = vmatprep.subr.mxu0 0.0
          %3766 = vmatpush1.msra.mxu0 0.0
          %3767 = vmatprep.subr.mxu0 0.0
          %3768 = vmatpush1.msra.mxu0 0.0
          %3769 = vmatprep.subr.mxu0 0.0
          %3770 = vmatpush1.msra.mxu0 0.0
          %3771 = vmatprep.subr.mxu0 0.0
          %3772 = vmatpush1.msra.mxu0 0.0
          %3773 = vmatprep.subr.mxu0 0.0
          %3774 = vmatpush1.msra.mxu0 0.0
          %3775 = vmatprep.subr.mxu0 0.0
          %3776 = vmatpush1.msra.mxu0 0.0
          %3777 = vmatprep.subr.mxu0 0.0
          %3778 = vmatpush1.msra.mxu0 0.0
          %3779 = vmatprep.subr.mxu0 0.0
          %3780 = vmatpush1.msra.mxu0 0.0
          %3781 = vmatprep.subr.mxu0 0.0
          %3782 = vmatpush1.msra.mxu0 0.0
          %3783 = vmatprep.subr.mxu0 0.0
          %3784 = vmatpush1.msra.mxu0 0.0
          %3785 = vmatprep.subr.mxu0 0.0
          %3786 = vmatpush1.msra.mxu0 0.0
          %3787 = vmatprep.subr.mxu0 0.0
          %3788 = vmatpush1.msra.mxu0 %v1798
          %3789 = vmatprep.subr.mxu0 0.0
          %3790 = vmatpush2.msra.mxu0 0.0
          %3791 = vmatprep.subr.mxu0 0.0
          %3792 = vmatpush2.msra.mxu0 0.0
          %3793 = vmatprep.subr.mxu0 0.0
          %3794 = vmatpush2.msra.mxu0 0.0
          %3795 = vmatprep.subr.mxu0 0.0
          %3796 = vmatpush2.msra.mxu0 0.0
          %3797 = vmatprep.subr.mxu0 0.0
          %3798 = vmatpush2.msra.mxu0 0.0
          %3799 = vmatprep.subr.mxu0 0.0
          %3800 = vmatpush2.msra.mxu0 0.0
          %3801 = vmatprep.subr.mxu0 0.0
          %3802 = vmatpush2.msra.mxu0 0.0
          %3803 = vmatprep.subr.mxu0 0.0
          %3804 = vmatpush2.msra.mxu0 0.0
          %3805 = vmatprep.subr.mxu0 0.0
          %3806 = vmatpush2.msra.mxu0 0.0
          %3807 = vmatprep.subr.mxu0 0.0
          %3808 = vmatpush2.msra.mxu0 0.0
          %3809 = vmatprep.subr.mxu0 0.0
          %3810 = vmatpush2.msra.mxu0 0.0
          %3811 = vmatprep.subr.mxu0 0.0
          %3812 = vmatpush2.msra.mxu0 0.0
          %3813 = vmatprep.subr.mxu0 0.0
          %3814 = vmatpush2.msra.mxu0 0.0
          %3815 = vmatprep.subr.mxu0 0.0
          %3816 = vmatpush2.msra.mxu0 0.0
          %3817 = vmatprep.subr.mxu0 0.0
          %3818 = vmatpush2.msra.mxu0 0.0
          %3819 = vmatprep.subr.mxu0 0.0
          %3820 = vmatpush2.msra.mxu0 0.0
          %3821 = vmatprep.mubr.f32.mxu0 0.0
          %3822 = vmatmul.mubr.f32.gmra.mxu0 %v3755
          %v3823 = vpop.f32.mrf.mxu0
          %v3824 = vadd.f32 0.0, %v3823
          %v3825 = vpop.f32.mrf.mxu0
          %3826 = vdwg.mxu0
          %3827 = vrot.lane.b32.xlu0 %v3667, 120
          %v3828 = vpop.permute.xlu0 %3827
          %v3829 = vsel %vm1709, %v3828, 0
          %3831 = vmatprep.subr.mxu0 0.0
          %3832 = vmatpush1.xpose.msra.mxu0 0.0
          %3833 = vmatprep.subr.mxu0 0.0
          %3834 = vmatpush1.xpose.msra.mxu0 0.0
          %3835 = vmatprep.subr.mxu0 0.0
          %3836 = vmatpush1.xpose.msra.mxu0 0.0
          %3837 = vmatprep.subr.mxu0 0.0
          %3838 = vmatpush1.xpose.msra.mxu0 0.0
          %3839 = vmatprep.subr.mxu0 0.0
          %3840 = vmatpush1.xpose.msra.mxu0 0.0
          %3841 = vmatprep.subr.mxu0 0.0
          %3842 = vmatpush1.xpose.msra.mxu0 0.0
          %3843 = vmatprep.subr.mxu0 0.0
          %3844 = vmatpush1.xpose.msra.mxu0 0.0
          %3845 = vmatprep.subr.mxu0 0.0
          %3846 = vmatpush1.xpose.msra.mxu0 0.0
          %3847 = vmatprep.subr.mxu0 0.0
          %3848 = vmatpush1.xpose.msra.mxu0 0.0
          %3849 = vmatprep.subr.mxu0 0.0
          %3850 = vmatpush1.xpose.msra.mxu0 0.0
          %3851 = vmatprep.subr.mxu0 0.0
          %3852 = vmatpush1.xpose.msra.mxu0 0.0
          %3853 = vmatprep.subr.mxu0 0.0
          %3854 = vmatpush1.xpose.msra.mxu0 0.0
          %3855 = vmatprep.subr.mxu0 0.0
          %3856 = vmatpush1.xpose.msra.mxu0 0.0
          %3857 = vmatprep.subr.mxu0 0.0
          %3858 = vmatpush1.xpose.msra.mxu0 0.0
          %3859 = vmatprep.subr.mxu0 0.0
          %3860 = vmatpush1.xpose.msra.mxu0 0.0
          %3861 = vmatprep.subr.mxu0 0.0
          %3862 = vmatpush1.xpose.msra.mxu0 %v1879
          %3863 = vmatprep.subr.mxu0 0.0
          %3864 = vmatpush2.xpose.msra.mxu0 0.0
          %3865 = vmatprep.subr.mxu0 0.0
          %3866 = vmatpush2.xpose.msra.mxu0 0.0
          %3867 = vmatprep.subr.mxu0 0.0
          %3868 = vmatpush2.xpose.msra.mxu0 0.0
          %3869 = vmatprep.subr.mxu0 0.0
          %3870 = vmatpush2.xpose.msra.mxu0 0.0
          %3871 = vmatprep.subr.mxu0 0.0
          %3872 = vmatpush2.xpose.msra.mxu0 0.0
          %3873 = vmatprep.subr.mxu0 0.0
          %3874 = vmatpush2.xpose.msra.mxu0 0.0
          %3875 = vmatprep.subr.mxu0 0.0
          %3876 = vmatpush2.xpose.msra.mxu0 0.0
          %3877 = vmatprep.subr.mxu0 0.0
          %3878 = vmatpush2.xpose.msra.mxu0 0.0
          %3879 = vmatprep.subr.mxu0 0.0
          %3880 = vmatpush2.xpose.msra.mxu0 0.0
          %3881 = vmatprep.subr.mxu0 0.0
          %3882 = vmatpush2.xpose.msra.mxu0 0.0
          %3883 = vmatprep.subr.mxu0 0.0
          %3884 = vmatpush2.xpose.msra.mxu0 0.0
          %3885 = vmatprep.subr.mxu0 0.0
          %3886 = vmatpush2.xpose.msra.mxu0 0.0
          %3887 = vmatprep.subr.mxu0 0.0
          %3888 = vmatpush2.xpose.msra.mxu0 0.0
          %3889 = vmatprep.subr.mxu0 0.0
          %3890 = vmatpush2.xpose.msra.mxu0 0.0
          %3891 = vmatprep.subr.mxu0 0.0
          %3892 = vmatpush2.xpose.msra.mxu0 0.0
          %3893 = vmatprep.subr.mxu0 0.0
          %3894 = vmatpush2.xpose.msra.mxu0 0.0
          %3895 = vmatprep.mubr.f32.mxu0 0.0
          %3896 = vmatmul.mubr.f32.gmra.mxu0 %v3829
          %v3897 = vpop.f32.mrf.mxu0
          %v3898 = vadd.f32 0.0, %v3897
          %v3899 = vpop.f32.mrf.mxu0
          %3900 = vdwg.mxu0
          %v3901 = vsel %vm1709, %v3898, -inf
          %3902 = vmax.xlane.f32.xlu0 %v3901
          %v3903 = vpop.xlane.xlu0 %3902
          %v3904 = vsub.f32 %v3898, %v3903
          %v3905 = vmul.f32 %v3904, 1.442695
          %v3906 = vpow.pop %v3905
          %v3907 = vsel %vm1709, %v3906, 0.0
          %3908 = vadd.xlane.f32.xlu0 %v3907
          %v3909 = vpop.xlane.xlu0 %3908
          %v3910 = vrcp.pop %v3909
          %v3911 = vmul.f32 %v3906, %v3910
          %v3913 = vsel %vm1709, %v3911, 0
          %3915 = vmatprep.subr.mxu0 0.0
          %3916 = vmatpush1.msra.mxu0 0.0
          %3917 = vmatprep.subr.mxu0 0.0
          %3918 = vmatpush1.msra.mxu0 0.0
          %3919 = vmatprep.subr.mxu0 0.0
          %3920 = vmatpush1.msra.mxu0 0.0
          %3921 = vmatprep.subr.mxu0 0.0
          %3922 = vmatpush1.msra.mxu0 0.0
          %3923 = vmatprep.subr.mxu0 0.0
          %3924 = vmatpush1.msra.mxu0 0.0
          %3925 = vmatprep.subr.mxu0 0.0
          %3926 = vmatpush1.msra.mxu0 0.0
          %3927 = vmatprep.subr.mxu0 0.0
          %3928 = vmatpush1.msra.mxu0 0.0
          %3929 = vmatprep.subr.mxu0 0.0
          %3930 = vmatpush1.msra.mxu0 0.0
          %3931 = vmatprep.subr.mxu0 0.0
          %3932 = vmatpush1.msra.mxu0 0.0
          %3933 = vmatprep.subr.mxu0 0.0
          %3934 = vmatpush1.msra.mxu0 0.0
          %3935 = vmatprep.subr.mxu0 0.0
          %3936 = vmatpush1.msra.mxu0 0.0
          %3937 = vmatprep.subr.mxu0 0.0
          %3938 = vmatpush1.msra.mxu0 0.0
          %3939 = vmatprep.subr.mxu0 0.0
          %3940 = vmatpush1.msra.mxu0 0.0
          %3941 = vmatprep.subr.mxu0 0.0
          %3942 = vmatpush1.msra.mxu0 0.0
          %3943 = vmatprep.subr.mxu0 0.0
          %3944 = vmatpush1.msra.mxu0 0.0
          %3945 = vmatprep.subr.mxu0 0.0
          %3946 = vmatpush1.msra.mxu0 %v1963
          %3947 = vmatprep.subr.mxu0 0.0
          %3948 = vmatpush2.msra.mxu0 0.0
          %3949 = vmatprep.subr.mxu0 0.0
          %3950 = vmatpush2.msra.mxu0 0.0
          %3951 = vmatprep.subr.mxu0 0.0
          %3952 = vmatpush2.msra.mxu0 0.0
          %3953 = vmatprep.subr.mxu0 0.0
          %3954 = vmatpush2.msra.mxu0 0.0
          %3955 = vmatprep.subr.mxu0 0.0
          %3956 = vmatpush2.msra.mxu0 0.0
          %3957 = vmatprep.subr.mxu0 0.0
          %3958 = vmatpush2.msra.mxu0 0.0
          %3959 = vmatprep.subr.mxu0 0.0
          %3960 = vmatpush2.msra.mxu0 0.0
          %3961 = vmatprep.subr.mxu0 0.0
          %3962 = vmatpush2.msra.mxu0 0.0
          %3963 = vmatprep.subr.mxu0 0.0
          %3964 = vmatpush2.msra.mxu0 0.0
          %3965 = vmatprep.subr.mxu0 0.0
          %3966 = vmatpush2.msra.mxu0 0.0
          %3967 = vmatprep.subr.mxu0 0.0
          %3968 = vmatpush2.msra.mxu0 0.0
          %3969 = vmatprep.subr.mxu0 0.0
          %3970 = vmatpush2.msra.mxu0 0.0
          %3971 = vmatprep.subr.mxu0 0.0
          %3972 = vmatpush2.msra.mxu0 0.0
          %3973 = vmatprep.subr.mxu0 0.0
          %3974 = vmatpush2.msra.mxu0 0.0
          %3975 = vmatprep.subr.mxu0 0.0
          %3976 = vmatpush2.msra.mxu0 0.0
          %3977 = vmatprep.subr.mxu0 0.0
          %3978 = vmatpush2.msra.mxu0 0.0
          %3979 = vmatprep.mubr.f32.mxu0 0.0
          %3980 = vmatmul.mubr.f32.gmra.mxu0 %v3913
          %v3981 = vpop.f32.mrf.mxu0
          %v3982 = vadd.f32 0.0, %v3981
          %v3983 = vpop.f32.mrf.mxu0
          %3984 = vdwg.mxu0
          %3985 = vrot.lane.b32.xlu0 %v3667, 112
          %v3986 = vpop.permute.xlu0 %3985
          %v3987 = vsel %vm1709, %v3986, 0
          %3989 = vmatprep.subr.mxu0 0.0
          %3990 = vmatpush1.xpose.msra.mxu0 0.0
          %3991 = vmatprep.subr.mxu0 0.0
          %3992 = vmatpush1.xpose.msra.mxu0 0.0
          %3993 = vmatprep.subr.mxu0 0.0
          %3994 = vmatpush1.xpose.msra.mxu0 0.0
          %3995 = vmatprep.subr.mxu0 0.0
          %3996 = vmatpush1.xpose.msra.mxu0 0.0
          %3997 = vmatprep.subr.mxu0 0.0
          %3998 = vmatpush1.xpose.msra.mxu0 0.0
          %3999 = vmatprep.subr.mxu0 0.0
          %4000 = vmatpush1.xpose.msra.mxu0 0.0
          %4001 = vmatprep.subr.mxu0 0.0
          %4002 = vmatpush1.xpose.msra.mxu0 0.0
          %4003 = vmatprep.subr.mxu0 0.0
          %4004 = vmatpush1.xpose.msra.mxu0 0.0
          %4005 = vmatprep.subr.mxu0 0.0
          %4006 = vmatpush1.xpose.msra.mxu0 0.0
          %4007 = vmatprep.subr.mxu0 0.0
          %4008 = vmatpush1.xpose.msra.mxu0 0.0
          %4009 = vmatprep.subr.mxu0 0.0
          %4010 = vmatpush1.xpose.msra.mxu0 0.0
          %4011 = vmatprep.subr.mxu0 0.0
          %4012 = vmatpush1.xpose.msra.mxu0 0.0
          %4013 = vmatprep.subr.mxu0 0.0
          %4014 = vmatpush1.xpose.msra.mxu0 0.0
          %4015 = vmatprep.subr.mxu0 0.0
          %4016 = vmatpush1.xpose.msra.mxu0 0.0
          %4017 = vmatprep.subr.mxu0 0.0
          %4018 = vmatpush1.xpose.msra.mxu0 0.0
          %4019 = vmatprep.subr.mxu0 0.0
          %4020 = vmatpush1.xpose.msra.mxu0 %v2045
          %4021 = vmatprep.subr.mxu0 0.0
          %4022 = vmatpush2.xpose.msra.mxu0 0.0
          %4023 = vmatprep.subr.mxu0 0.0
          %4024 = vmatpush2.xpose.msra.mxu0 0.0
          %4025 = vmatprep.subr.mxu0 0.0
          %4026 = vmatpush2.xpose.msra.mxu0 0.0
          %4027 = vmatprep.subr.mxu0 0.0
          %4028 = vmatpush2.xpose.msra.mxu0 0.0
          %4029 = vmatprep.subr.mxu0 0.0
          %4030 = vmatpush2.xpose.msra.mxu0 0.0
          %4031 = vmatprep.subr.mxu0 0.0
          %4032 = vmatpush2.xpose.msra.mxu0 0.0
          %4033 = vmatprep.subr.mxu0 0.0
          %4034 = vmatpush2.xpose.msra.mxu0 0.0
          %4035 = vmatprep.subr.mxu0 0.0
          %4036 = vmatpush2.xpose.msra.mxu0 0.0
          %4037 = vmatprep.subr.mxu0 0.0
          %4038 = vmatpush2.xpose.msra.mxu0 0.0
          %4039 = vmatprep.subr.mxu0 0.0
          %4040 = vmatpush2.xpose.msra.mxu0 0.0
          %4041 = vmatprep.subr.mxu0 0.0
          %4042 = vmatpush2.xpose.msra.mxu0 0.0
          %4043 = vmatprep.subr.mxu0 0.0
          %4044 = vmatpush2.xpose.msra.mxu0 0.0
          %4045 = vmatprep.subr.mxu0 0.0
          %4046 = vmatpush2.xpose.msra.mxu0 0.0
          %4047 = vmatprep.subr.mxu0 0.0
          %4048 = vmatpush2.xpose.msra.mxu0 0.0
          %4049 = vmatprep.subr.mxu0 0.0
          %4050 = vmatpush2.xpose.msra.mxu0 0.0
          %4051 = vmatprep.subr.mxu0 0.0
          %4052 = vmatpush2.xpose.msra.mxu0 0.0
          %4053 = vmatprep.mubr.f32.mxu0 0.0
          %4054 = vmatmul.mubr.f32.gmra.mxu0 %v3987
          %v4055 = vpop.f32.mrf.mxu0
          %v4056 = vadd.f32 0.0, %v4055
          %v4057 = vpop.f32.mrf.mxu0
          %4058 = vdwg.mxu0
          %v4059 = vsel %vm1709, %v4056, -inf
          %4060 = vmax.xlane.f32.xlu0 %v4059
          %v4061 = vpop.xlane.xlu0 %4060
          %v4062 = vsub.f32 %v4056, %v4061
          %v4063 = vmul.f32 %v4062, 1.442695
          %v4064 = vpow.pop %v4063
          %v4065 = vsel %vm1709, %v4064, 0.0
          %4066 = vadd.xlane.f32.xlu0 %v4065
          %v4067 = vpop.xlane.xlu0 %4066
          %v4068 = vrcp.pop %v4067
          %v4069 = vmul.f32 %v4064, %v4068
          %v4071 = vsel %vm1709, %v4069, 0
          %4073 = vmatprep.subr.mxu0 0.0
          %4074 = vmatpush1.msra.mxu0 0.0
          %4075 = vmatprep.subr.mxu0 0.0
          %4076 = vmatpush1.msra.mxu0 0.0
          %4077 = vmatprep.subr.mxu0 0.0
          %4078 = vmatpush1.msra.mxu0 0.0
          %4079 = vmatprep.subr.mxu0 0.0
          %4080 = vmatpush1.msra.mxu0 0.0
          %4081 = vmatprep.subr.mxu0 0.0
          %4082 = vmatpush1.msra.mxu0 0.0
          %4083 = vmatprep.subr.mxu0 0.0
          %4084 = vmatpush1.msra.mxu0 0.0
          %4085 = vmatprep.subr.mxu0 0.0
          %4086 = vmatpush1.msra.mxu0 0.0
          %4087 = vmatprep.subr.mxu0 0.0
          %4088 = vmatpush1.msra.mxu0 0.0
          %4089 = vmatprep.subr.mxu0 0.0
          %4090 = vmatpush1.msra.mxu0 0.0
          %4091 = vmatprep.subr.mxu0 0.0
          %4092 = vmatpush1.msra.mxu0 0.0
          %4093 = vmatprep.subr.mxu0 0.0
          %4094 = vmatpush1.msra.mxu0 0.0
          %4095 = vmatprep.subr.mxu0 0.0
          %4096 = vmatpush1.msra.mxu0 0.0
          %4097 = vmatprep.subr.mxu0 0.0
          %4098 = vmatpush1.msra.mxu0 0.0
          %4099 = vmatprep.subr.mxu0 0.0
          %4100 = vmatpush1.msra.mxu0 0.0
          %4101 = vmatprep.subr.mxu0 0.0
          %4102 = vmatpush1.msra.mxu0 0.0
          %4103 = vmatprep.subr.mxu0 0.0
          %4104 = vmatpush1.msra.mxu0 %v2129
          %4105 = vmatprep.subr.mxu0 0.0
          %4106 = vmatpush2.msra.mxu0 0.0
          %4107 = vmatprep.subr.mxu0 0.0
          %4108 = vmatpush2.msra.mxu0 0.0
          %4109 = vmatprep.subr.mxu0 0.0
          %4110 = vmatpush2.msra.mxu0 0.0
          %4111 = vmatprep.subr.mxu0 0.0
          %4112 = vmatpush2.msra.mxu0 0.0
          %4113 = vmatprep.subr.mxu0 0.0
          %4114 = vmatpush2.msra.mxu0 0.0
          %4115 = vmatprep.subr.mxu0 0.0
          %4116 = vmatpush2.msra.mxu0 0.0
          %4117 = vmatprep.subr.mxu0 0.0
          %4118 = vmatpush2.msra.mxu0 0.0
          %4119 = vmatprep.subr.mxu0 0.0
          %4120 = vmatpush2.msra.mxu0 0.0
          %4121 = vmatprep.subr.mxu0 0.0
          %4122 = vmatpush2.msra.mxu0 0.0
          %4123 = vmatprep.subr.mxu0 0.0
          %4124 = vmatpush2.msra.mxu0 0.0
          %4125 = vmatprep.subr.mxu0 0.0
          %4126 = vmatpush2.msra.mxu0 0.0
          %4127 = vmatprep.subr.mxu0 0.0
          %4128 = vmatpush2.msra.mxu0 0.0
          %4129 = vmatprep.subr.mxu0 0.0
          %4130 = vmatpush2.msra.mxu0 0.0
          %4131 = vmatprep.subr.mxu0 0.0
          %4132 = vmatpush2.msra.mxu0 0.0
          %4133 = vmatprep.subr.mxu0 0.0
          %4134 = vmatpush2.msra.mxu0 0.0
          %4135 = vmatprep.subr.mxu0 0.0
          %4136 = vmatpush2.msra.mxu0 0.0
          %4137 = vmatprep.mubr.f32.mxu0 0.0
          %4138 = vmatmul.mubr.f32.gmra.mxu0 %v4071
          %v4139 = vpop.f32.mrf.mxu0
          %v4140 = vadd.f32 0.0, %v4139
          %v4141 = vpop.f32.mrf.mxu0
          %4142 = vdwg.mxu0
          %4143 = vrot.lane.b32.xlu0 %v3667, 104
          %v4144 = vpop.permute.xlu0 %4143
          %v4145 = vsel %vm1709, %v4144, 0
          %4147 = vmatprep.subr.mxu0 0.0
          %4148 = vmatpush1.xpose.msra.mxu0 0.0
          %4149 = vmatprep.subr.mxu0 0.0
          %4150 = vmatpush1.xpose.msra.mxu0 0.0
          %4151 = vmatprep.subr.mxu0 0.0
          %4152 = vmatpush1.xpose.msra.mxu0 0.0
          %4153 = vmatprep.subr.mxu0 0.0
          %4154 = vmatpush1.xpose.msra.mxu0 0.0
          %4155 = vmatprep.subr.mxu0 0.0
          %4156 = vmatpush1.xpose.msra.mxu0 0.0
          %4157 = vmatprep.subr.mxu0 0.0
          %4158 = vmatpush1.xpose.msra.mxu0 0.0
          %4159 = vmatprep.subr.mxu0 0.0
          %4160 = vmatpush1.xpose.msra.mxu0 0.0
          %4161 = vmatprep.subr.mxu0 0.0
          %4162 = vmatpush1.xpose.msra.mxu0 0.0
          %4163 = vmatprep.subr.mxu0 0.0
          %4164 = vmatpush1.xpose.msra.mxu0 0.0
          %4165 = vmatprep.subr.mxu0 0.0
          %4166 = vmatpush1.xpose.msra.mxu0 0.0
          %4167 = vmatprep.subr.mxu0 0.0
          %4168 = vmatpush1.xpose.msra.mxu0 0.0
          %4169 = vmatprep.subr.mxu0 0.0
          %4170 = vmatpush1.xpose.msra.mxu0 0.0
          %4171 = vmatprep.subr.mxu0 0.0
          %4172 = vmatpush1.xpose.msra.mxu0 0.0
          %4173 = vmatprep.subr.mxu0 0.0
          %4174 = vmatpush1.xpose.msra.mxu0 0.0
          %4175 = vmatprep.subr.mxu0 0.0
          %4176 = vmatpush1.xpose.msra.mxu0 0.0
          %4177 = vmatprep.subr.mxu0 0.0
          %4178 = vmatpush1.xpose.msra.mxu0 %v2211
          %4179 = vmatprep.subr.mxu0 0.0
          %4180 = vmatpush2.xpose.msra.mxu0 0.0
          %4181 = vmatprep.subr.mxu0 0.0
          %4182 = vmatpush2.xpose.msra.mxu0 0.0
          %4183 = vmatprep.subr.mxu0 0.0
          %4184 = vmatpush2.xpose.msra.mxu0 0.0
          %4185 = vmatprep.subr.mxu0 0.0
          %4186 = vmatpush2.xpose.msra.mxu0 0.0
          %4187 = vmatprep.subr.mxu0 0.0
          %4188 = vmatpush2.xpose.msra.mxu0 0.0
          %4189 = vmatprep.subr.mxu0 0.0
          %4190 = vmatpush2.xpose.msra.mxu0 0.0
          %4191 = vmatprep.subr.mxu0 0.0
          %4192 = vmatpush2.xpose.msra.mxu0 0.0
          %4193 = vmatprep.subr.mxu0 0.0
          %4194 = vmatpush2.xpose.msra.mxu0 0.0
          %4195 = vmatprep.subr.mxu0 0.0
          %4196 = vmatpush2.xpose.msra.mxu0 0.0
          %4197 = vmatprep.subr.mxu0 0.0
          %4198 = vmatpush2.xpose.msra.mxu0 0.0
          %4199 = vmatprep.subr.mxu0 0.0
          %4200 = vmatpush2.xpose.msra.mxu0 0.0
          %4201 = vmatprep.subr.mxu0 0.0
          %4202 = vmatpush2.xpose.msra.mxu0 0.0
          %4203 = vmatprep.subr.mxu0 0.0
          %4204 = vmatpush2.xpose.msra.mxu0 0.0
          %4205 = vmatprep.subr.mxu0 0.0
          %4206 = vmatpush2.xpose.msra.mxu0 0.0
          %4207 = vmatprep.subr.mxu0 0.0
          %4208 = vmatpush2.xpose.msra.mxu0 0.0
          %4209 = vmatprep.subr.mxu0 0.0
          %4210 = vmatpush2.xpose.msra.mxu0 0.0
          %4211 = vmatprep.mubr.f32.mxu0 0.0
          %4212 = vmatmul.mubr.f32.gmra.mxu0 %v4145
          %v4213 = vpop.f32.mrf.mxu0
          %v4214 = vadd.f32 0.0, %v4213
          %v4215 = vpop.f32.mrf.mxu0
          %4216 = vdwg.mxu0
          %v4217 = vsel %vm1709, %v4214, -inf
          %4218 = vmax.xlane.f32.xlu0 %v4217
          %v4219 = vpop.xlane.xlu0 %4218
          %v4220 = vsub.f32 %v4214, %v4219
          %v4221 = vmul.f32 %v4220, 1.442695
          %v4222 = vpow.pop %v4221
          %v4223 = vsel %vm1709, %v4222, 0.0
          %4224 = vadd.xlane.f32.xlu0 %v4223
          %v4225 = vpop.xlane.xlu0 %4224
          %v4226 = vrcp.pop %v4225
          %v4227 = vmul.f32 %v4222, %v4226
          %v4229 = vsel %vm1709, %v4227, 0
          %4231 = vmatprep.subr.mxu0 0.0
          %4232 = vmatpush1.msra.mxu0 0.0
          %4233 = vmatprep.subr.mxu0 0.0
          %4234 = vmatpush1.msra.mxu0 0.0
          %4235 = vmatprep.subr.mxu0 0.0
          %4236 = vmatpush1.msra.mxu0 0.0
          %4237 = vmatprep.subr.mxu0 0.0
          %4238 = vmatpush1.msra.mxu0 0.0
          %4239 = vmatprep.subr.mxu0 0.0
          %4240 = vmatpush1.msra.mxu0 0.0
          %4241 = vmatprep.subr.mxu0 0.0
          %4242 = vmatpush1.msra.mxu0 0.0
          %4243 = vmatprep.subr.mxu0 0.0
          %4244 = vmatpush1.msra.mxu0 0.0
          %4245 = vmatprep.subr.mxu0 0.0
          %4246 = vmatpush1.msra.mxu0 0.0
          %4247 = vmatprep.subr.mxu0 0.0
          %4248 = vmatpush1.msra.mxu0 0.0
          %4249 = vmatprep.subr.mxu0 0.0
          %4250 = vmatpush1.msra.mxu0 0.0
          %4251 = vmatprep.subr.mxu0 0.0
          %4252 = vmatpush1.msra.mxu0 0.0
          %4253 = vmatprep.subr.mxu0 0.0
          %4254 = vmatpush1.msra.mxu0 0.0
          %4255 = vmatprep.subr.mxu0 0.0
          %4256 = vmatpush1.msra.mxu0 0.0
          %4257 = vmatprep.subr.mxu0 0.0
          %4258 = vmatpush1.msra.mxu0 0.0
          %4259 = vmatprep.subr.mxu0 0.0
          %4260 = vmatpush1.msra.mxu0 0.0
          %4261 = vmatprep.subr.mxu0 0.0
          %4262 = vmatpush1.msra.mxu0 %v2295
          %4263 = vmatprep.subr.mxu0 0.0
          %4264 = vmatpush2.msra.mxu0 0.0
          %4265 = vmatprep.subr.mxu0 0.0
          %4266 = vmatpush2.msra.mxu0 0.0
          %4267 = vmatprep.subr.mxu0 0.0
          %4268 = vmatpush2.msra.mxu0 0.0
          %4269 = vmatprep.subr.mxu0 0.0
          %4270 = vmatpush2.msra.mxu0 0.0
          %4271 = vmatprep.subr.mxu0 0.0
          %4272 = vmatpush2.msra.mxu0 0.0
          %4273 = vmatprep.subr.mxu0 0.0
          %4274 = vmatpush2.msra.mxu0 0.0
          %4275 = vmatprep.subr.mxu0 0.0
          %4276 = vmatpush2.msra.mxu0 0.0
          %4277 = vmatprep.subr.mxu0 0.0
          %4278 = vmatpush2.msra.mxu0 0.0
          %4279 = vmatprep.subr.mxu0 0.0
          %4280 = vmatpush2.msra.mxu0 0.0
          %4281 = vmatprep.subr.mxu0 0.0
          %4282 = vmatpush2.msra.mxu0 0.0
          %4283 = vmatprep.subr.mxu0 0.0
          %4284 = vmatpush2.msra.mxu0 0.0
          %4285 = vmatprep.subr.mxu0 0.0
          %4286 = vmatpush2.msra.mxu0 0.0
          %4287 = vmatprep.subr.mxu0 0.0
          %4288 = vmatpush2.msra.mxu0 0.0
          %4289 = vmatprep.subr.mxu0 0.0
          %4290 = vmatpush2.msra.mxu0 0.0
          %4291 = vmatprep.subr.mxu0 0.0
          %4292 = vmatpush2.msra.mxu0 0.0
          %4293 = vmatprep.subr.mxu0 0.0
          %4294 = vmatpush2.msra.mxu0 0.0
          %4295 = vmatprep.mubr.f32.mxu0 0.0
          %4296 = vmatmul.mubr.f32.gmra.mxu0 %v4229
          %v4297 = vpop.f32.mrf.mxu0
          %v4298 = vadd.f32 0.0, %v4297
          %v4299 = vpop.f32.mrf.mxu0
          %4300 = vdwg.mxu0
          %4302 = vrot.lane.b32.xlu0 %v3982, 8
          %v4303 = vpop.permute.xlu0 %4302
          %4306 = vrot.lane.b32.xlu0 %v4140, 16
          %v4307 = vpop.permute.xlu0 %4306
          %4310 = vrot.lane.b32.xlu0 %v4298, 24
          %v4311 = vpop.permute.xlu0 %4310
          %v4313 = vsel %vm1709, %v3824, %v4303
          %v4314 = vsel %vm2384, %v4313, %v4307
          %v4315 = vsel %vm2386, %v4314, %v4311
          %v4317 = vlaneseq
          %v4318 = vshrl.u32 %v4317, 7
          %v4319 = vsub.s32 0, %v4318
          %v4320 = vrot.slane %v3593, %v4319
          %v4323 = vsel %vm1386, %v4315, 0
          %4325 = vmatprep.subr.mxu0 0.0
          %4326 = vmatpush1.msra.mxu0 0.0
          %4327 = vmatprep.subr.mxu0 0.0
          %4328 = vmatpush1.msra.mxu0 0.0
          %4329 = vmatprep.subr.mxu0 0.0
          %4330 = vmatpush1.msra.mxu0 0.0
          %4331 = vmatprep.subr.mxu0 0.0
          %4332 = vmatpush1.msra.mxu0 0.0
          %4333 = vmatprep.subr.mxu0 0.0
          %4334 = vmatpush1.msra.mxu0 0.0
          %4335 = vmatprep.subr.mxu0 0.0
          %4336 = vmatpush1.msra.mxu0 0.0
          %4337 = vmatprep.subr.mxu0 0.0
          %4338 = vmatpush1.msra.mxu0 0.0
          %4339 = vmatprep.subr.mxu0 0.0
          %4340 = vmatpush1.msra.mxu0 0.0
          %4341 = vmatprep.subr.mxu0 0.0
          %4342 = vmatpush1.msra.mxu0 0.0
          %4343 = vmatprep.subr.mxu0 0.0
          %4344 = vmatpush1.msra.mxu0 0.0
          %4345 = vmatprep.subr.mxu0 0.0
          %4346 = vmatpush1.msra.mxu0 0.0
          %4347 = vmatprep.subr.mxu0 0.0
          %4348 = vmatpush1.msra.mxu0 0.0
          %4349 = vmatprep.subr.mxu0 0.0
          %4350 = vmatpush1.msra.mxu0 %v3592
          %4351 = vmatprep.subr.mxu0 0.0
          %4352 = vmatpush1.msra.mxu0 %v3591
          %4353 = vmatprep.subr.mxu0 0.0
          %4354 = vmatpush1.msra.mxu0 %v3590
          %4355 = vmatprep.subr.mxu0 0.0
          %4356 = vmatpush1.msra.mxu0 %v3589
          %4357 = vmatprep.subr.mxu0 0.0
          %4358 = vmatpush2.msra.mxu0 0.0
          %4359 = vmatprep.subr.mxu0 0.0
          %4360 = vmatpush2.msra.mxu0 0.0
          %4361 = vmatprep.subr.mxu0 0.0
          %4362 = vmatpush2.msra.mxu0 0.0
          %4363 = vmatprep.subr.mxu0 0.0
          %4364 = vmatpush2.msra.mxu0 0.0
          %4365 = vmatprep.subr.mxu0 0.0
          %4366 = vmatpush2.msra.mxu0 0.0
          %4367 = vmatprep.subr.mxu0 0.0
          %4368 = vmatpush2.msra.mxu0 0.0
          %4369 = vmatprep.subr.mxu0 0.0
          %4370 = vmatpush2.msra.mxu0 0.0
          %4371 = vmatprep.subr.mxu0 0.0
          %4372 = vmatpush2.msra.mxu0 0.0
          %4373 = vmatprep.subr.mxu0 0.0
          %4374 = vmatpush2.msra.mxu0 0.0
          %4375 = vmatprep.subr.mxu0 0.0
          %4376 = vmatpush2.msra.mxu0 0.0
          %4377 = vmatprep.subr.mxu0 0.0
          %4378 = vmatpush2.msra.mxu0 0.0
          %4379 = vmatprep.subr.mxu0 0.0
          %4380 = vmatpush2.msra.mxu0 0.0
          %4381 = vmatprep.subr.mxu0 0.0
          %4382 = vmatpush2.msra.mxu0 0.0
          %4383 = vmatprep.subr.mxu0 0.0
          %4384 = vmatpush2.msra.mxu0 0.0
          %4385 = vmatprep.subr.mxu0 0.0
          %4386 = vmatpush2.msra.mxu0 0.0
          %4387 = vmatprep.subr.mxu0 0.0
          %4388 = vmatpush2.msra.mxu0 0.0
          %4389 = vmatprep.mubr.f32.mxu0 0.0
          %4390 = vmatmul.mubr.f32.gmra.mxu0 %v4323
          %v4391 = vpop.f32.mrf.mxu0
          %v4392 = vadd.f32 %v4320, %v4391
          %v4393 = vpop.f32.mrf.mxu0
          %4394 = vdwg.mxu0
          %v4395 = vadd.f32 %v1381, %v4392
          %v4396 = vld [vmem:[%s1340] sm:$0x1]
          %v4397 = vld [vmem:[%s1343] sm:$0x1]
          %v4398 = vsel %vm1386, %v4395, 0.0
          %4399 = vadd.xlane.f32.xlu0 %v4398
          %v4400 = vpop.xlane.xlu0 %4399
          %v4401 = vmul.f32 %v4400, %v1390
          %v4402 = vsub.f32 %v4395, %v4401
          %v4403 = vmul.f32 %v4402, %v4402
          %v4404 = vsel %vm1386, %v4403, 0.0
          %4405 = vadd.xlane.f32.xlu0 %v4404
          %v4406 = vpop.xlane.xlu0 %4405
          %v4407 = vmul.f32 %v4406, %v1390
          %v4408 = vadd.f32 %v4407, 1e-05
          %v4409 = vrsqrt.pop %v4408
          %v4410 = vmul.f32 %v4402, %v4409
          %v4412 = vlaneseq
          %v4413 = vshrl.u32 %v4412, 7
          %v4414 = vsub.s32 0, %v4413
          %v4415 = vrot.slane %v4396, %v4414
          %v4417 = vmul.f32 %v4410, %v4415
          %v4419 = vlaneseq
          %v4420 = vshrl.u32 %v4419, 7
          %v4421 = vsub.s32 0, %v4420
          %v4422 = vrot.slane %v4397, %v4421
          %v4424 = vadd.f32 %v4417, %v4422
          %v4425 = vld [vmem:[%s1306] sm:$0xff]
          %v4426 = vld [vmem:[%s1306 + $0x8] sm:$0xff]
          %v4427 = vld [vmem:[%s1306 + $0x10] sm:$0xff]
          %v4428 = vld [vmem:[%s1306 + $0x18] sm:$0xff]
          %v4429 = vld [vmem:[%s1309] sm:$0x1]
          %v4430 = vld [vmem:[%s1322] sm:$0xff]
          %v4431 = vld [vmem:[%s1322 + $0x8] sm:$0xff]
          %v4432 = vld [vmem:[%s1322 + $0x10] sm:$0xff]
          %v4433 = vld [vmem:[%s1322 + $0x18] sm:$0xff]
          %v4434 = vld [vmem:[%s1325] sm:$0x1]
          %v4436 = vlaneseq
          %v4437 = vshrl.u32 %v4436, 7
          %v4438 = vsub.s32 0, %v4437
          %v4439 = vrot.slane %v4429, %v4438
          %v4442 = vsel %vm1386, %v4424, 0
          %4444 = vmatprep.subr.mxu0 0.0
          %4445 = vmatpush1.msra.mxu0 0.0
          %4446 = vmatprep.subr.mxu0 0.0
          %4447 = vmatpush1.msra.mxu0 0.0
          %4448 = vmatprep.subr.mxu0 0.0
          %4449 = vmatpush1.msra.mxu0 0.0
          %4450 = vmatprep.subr.mxu0 0.0
          %4451 = vmatpush1.msra.mxu0 0.0
          %4452 = vmatprep.subr.mxu0 0.0
          %4453 = vmatpush1.msra.mxu0 0.0
          %4454 = vmatprep.subr.mxu0 0.0
          %4455 = vmatpush1.msra.mxu0 0.0
          %4456 = vmatprep.subr.mxu0 0.0
          %4457 = vmatpush1.msra.mxu0 0.0
          %4458 = vmatprep.subr.mxu0 0.0
          %4459 = vmatpush1.msra.mxu0 0.0
          %4460 = vmatprep.subr.mxu0 0.0
          %4461 = vmatpush1.msra.mxu0 0.0
          %4462 = vmatprep.subr.mxu0 0.0
          %4463 = vmatpush1.msra.mxu0 0.0
          %4464 = vmatprep.subr.mxu0 0.0
          %4465 = vmatpush1.msra.mxu0 0.0
          %4466 = vmatprep.subr.mxu0 0.0
          %4467 = vmatpush1.msra.mxu0 0.0
          %4468 = vmatprep.subr.mxu0 0.0
          %4469 = vmatpush1.msra.mxu0 %v4428
          %4470 = vmatprep.subr.mxu0 0.0
          %4471 = vmatpush1.msra.mxu0 %v4427
          %4472 = vmatprep.subr.mxu0 0.0
          %4473 = vmatpush1.msra.mxu0 %v4426
          %4474 = vmatprep.subr.mxu0 0.0
          %4475 = vmatpush1.msra.mxu0 %v4425
          %4476 = vmatprep.subr.mxu0 0.0
          %4477 = vmatpush2.msra.mxu0 0.0
          %4478 = vmatprep.subr.mxu0 0.0
          %4479 = vmatpush2.msra.mxu0 0.0
          %4480 = vmatprep.subr.mxu0 0.0
          %4481 = vmatpush2.msra.mxu0 0.0
          %4482 = vmatprep.subr.mxu0 0.0
          %4483 = vmatpush2.msra.mxu0 0.0
          %4484 = vmatprep.subr.mxu0 0.0
          %4485 = vmatpush2.msra.mxu0 0.0
          %4486 = vmatprep.subr.mxu0 0.0
          %4487 = vmatpush2.msra.mxu0 0.0
          %4488 = vmatprep.subr.mxu0 0.0
          %4489 = vmatpush2.msra.mxu0 0.0
          %4490 = vmatprep.subr.mxu0 0.0
          %4491 = vmatpush2.msra.mxu0 0.0
          %4492 = vmatprep.subr.mxu0 0.0
          %4493 = vmatpush2.msra.mxu0 0.0
          %4494 = vmatprep.subr.mxu0 0.0
          %4495 = vmatpush2.msra.mxu0 0.0
          %4496 = vmatprep.subr.mxu0 0.0
          %4497 = vmatpush2.msra.mxu0 0.0
          %4498 = vmatprep.subr.mxu0 0.0
          %4499 = vmatpush2.msra.mxu0 0.0
          %4500 = vmatprep.subr.mxu0 0.0
          %4501 = vmatpush2.msra.mxu0 0.0
          %4502 = vmatprep.subr.mxu0 0.0
          %4503 = vmatpush2.msra.mxu0 0.0
          %4504 = vmatprep.subr.mxu0 0.0
          %4505 = vmatpush2.msra.mxu0 0.0
          %4506 = vmatprep.subr.mxu0 0.0
          %4507 = vmatpush2.msra.mxu0 0.0
          %4508 = vmatprep.mubr.f32.mxu0 0.0
          %4509 = vmatmul.mubr.f32.gmra.mxu0 %v4442
          %v4510 = vpop.f32.mrf.mxu0
          %v4511 = vadd.f32 %v4439, %v4510
          %v4512 = vpop.f32.mrf.mxu0
          %4513 = vdwg.mxu0
          %v4515 = vsel %vm1709, %v4511, 0
          %4517 = vmatprep.subr.mxu0 0.0
          %4518 = vmatpush1.xpose.msra.mxu0 0.0
          %4519 = vmatprep.subr.mxu0 0.0
          %4520 = vmatpush1.xpose.msra.mxu0 0.0
          %4521 = vmatprep.subr.mxu0 0.0
          %4522 = vmatpush1.xpose.msra.mxu0 0.0
          %4523 = vmatprep.subr.mxu0 0.0
          %4524 = vmatpush1.xpose.msra.mxu0 0.0
          %4525 = vmatprep.subr.mxu0 0.0
          %4526 = vmatpush1.xpose.msra.mxu0 0.0
          %4527 = vmatprep.subr.mxu0 0.0
          %4528 = vmatpush1.xpose.msra.mxu0 0.0
          %4529 = vmatprep.subr.mxu0 0.0
          %4530 = vmatpush1.xpose.msra.mxu0 0.0
          %4531 = vmatprep.subr.mxu0 0.0
          %4532 = vmatpush1.xpose.msra.mxu0 0.0
          %4533 = vmatprep.subr.mxu0 0.0
          %4534 = vmatpush1.xpose.msra.mxu0 0.0
          %4535 = vmatprep.subr.mxu0 0.0
          %4536 = vmatpush1.xpose.msra.mxu0 0.0
          %4537 = vmatprep.subr.mxu0 0.0
          %4538 = vmatpush1.xpose.msra.mxu0 0.0
          %4539 = vmatprep.subr.mxu0 0.0
          %4540 = vmatpush1.xpose.msra.mxu0 0.0
          %4541 = vmatprep.subr.mxu0 0.0
          %4542 = vmatpush1.xpose.msra.mxu0 0.0
          %4543 = vmatprep.subr.mxu0 0.0
          %4544 = vmatpush1.xpose.msra.mxu0 0.0
          %4545 = vmatprep.subr.mxu0 0.0
          %4546 = vmatpush1.xpose.msra.mxu0 %v2594
          %4547 = vmatprep.subr.mxu0 0.0
          %4548 = vmatpush1.xpose.msra.mxu0 %v2591
          %4549 = vmatprep.subr.mxu0 0.0
          %4550 = vmatpush2.xpose.msra.mxu0 0.0
          %4551 = vmatprep.subr.mxu0 0.0
          %4552 = vmatpush2.xpose.msra.mxu0 0.0
          %4553 = vmatprep.subr.mxu0 0.0
          %4554 = vmatpush2.xpose.msra.mxu0 0.0
          %4555 = vmatprep.subr.mxu0 0.0
          %4556 = vmatpush2.xpose.msra.mxu0 0.0
          %4557 = vmatprep.subr.mxu0 0.0
          %4558 = vmatpush2.xpose.msra.mxu0 0.0
          %4559 = vmatprep.subr.mxu0 0.0
          %4560 = vmatpush2.xpose.msra.mxu0 0.0
          %4561 = vmatprep.subr.mxu0 0.0
          %4562 = vmatpush2.xpose.msra.mxu0 0.0
          %4563 = vmatprep.subr.mxu0 0.0
          %4564 = vmatpush2.xpose.msra.mxu0 0.0
          %4565 = vmatprep.subr.mxu0 0.0
          %4566 = vmatpush2.xpose.msra.mxu0 0.0
          %4567 = vmatprep.subr.mxu0 0.0
          %4568 = vmatpush2.xpose.msra.mxu0 0.0
          %4569 = vmatprep.subr.mxu0 0.0
          %4570 = vmatpush2.xpose.msra.mxu0 0.0
          %4571 = vmatprep.subr.mxu0 0.0
          %4572 = vmatpush2.xpose.msra.mxu0 0.0
          %4573 = vmatprep.subr.mxu0 0.0
          %4574 = vmatpush2.xpose.msra.mxu0 0.0
          %4575 = vmatprep.subr.mxu0 0.0
          %4576 = vmatpush2.xpose.msra.mxu0 0.0
          %4577 = vmatprep.subr.mxu0 0.0
          %4578 = vmatpush2.xpose.msra.mxu0 0.0
          %4579 = vmatprep.subr.mxu0 0.0
          %4580 = vmatpush2.xpose.msra.mxu0 0.0
          %4581 = vmatprep.mubr.f32.mxu0 0.0
          %4582 = vmatmul.mubr.f32.gmra.mxu0 %v4515
          %v4583 = vpop.f32.mrf.mxu0
          %v4584 = vadd.f32 0.0, %v4583
          %v4585 = vpop.f32.mrf.mxu0
          %4586 = vdwg.mxu0
          %v4587 = vsel %vm2384, %v4584, -inf
          %4588 = vmax.xlane.f32.xlu0 %v4587
          %v4589 = vpop.xlane.xlu0 %4588
          %v4590 = vsub.f32 %v4584, %v4589
          %v4591 = vmul.f32 %v4590, 1.442695
          %v4592 = vpow.pop %v4591
          %v4593 = vsel %vm2384, %v4592, 0.0
          %4594 = vadd.xlane.f32.xlu0 %v4593
          %v4595 = vpop.xlane.xlu0 %4594
          %v4596 = vrcp.pop %v4595
          %v4597 = vmul.f32 %v4592, %v4596
          %v4599 = vsel %vm2384, %v4597, 0
          %4601 = vmatprep.subr.mxu0 0.0
          %4602 = vmatpush1.msra.mxu0 0.0
          %4603 = vmatprep.subr.mxu0 0.0
          %4604 = vmatpush1.msra.mxu0 0.0
          %4605 = vmatprep.subr.mxu0 0.0
          %4606 = vmatpush1.msra.mxu0 0.0
          %4607 = vmatprep.subr.mxu0 0.0
          %4608 = vmatpush1.msra.mxu0 0.0
          %4609 = vmatprep.subr.mxu0 0.0
          %4610 = vmatpush1.msra.mxu0 0.0
          %4611 = vmatprep.subr.mxu0 0.0
          %4612 = vmatpush1.msra.mxu0 0.0
          %4613 = vmatprep.subr.mxu0 0.0
          %4614 = vmatpush1.msra.mxu0 0.0
          %4615 = vmatprep.subr.mxu0 0.0
          %4616 = vmatpush1.msra.mxu0 0.0
          %4617 = vmatprep.subr.mxu0 0.0
          %4618 = vmatpush1.msra.mxu0 0.0
          %4619 = vmatprep.subr.mxu0 0.0
          %4620 = vmatpush1.msra.mxu0 0.0
          %4621 = vmatprep.subr.mxu0 0.0
          %4622 = vmatpush1.msra.mxu0 0.0
          %4623 = vmatprep.subr.mxu0 0.0
          %4624 = vmatpush1.msra.mxu0 0.0
          %4625 = vmatprep.subr.mxu0 0.0
          %4626 = vmatpush1.msra.mxu0 0.0
          %4627 = vmatprep.subr.mxu0 0.0
          %4628 = vmatpush1.msra.mxu0 0.0
          %4629 = vmatprep.subr.mxu0 0.0
          %4630 = vmatpush1.msra.mxu0 %v2680
          %4631 = vmatprep.subr.mxu0 0.0
          %4632 = vmatpush1.msra.mxu0 %v2678
          %4633 = vmatprep.subr.mxu0 0.0
          %4634 = vmatpush2.msra.mxu0 0.0
          %4635 = vmatprep.subr.mxu0 0.0
          %4636 = vmatpush2.msra.mxu0 0.0
          %4637 = vmatprep.subr.mxu0 0.0
          %4638 = vmatpush2.msra.mxu0 0.0
          %4639 = vmatprep.subr.mxu0 0.0
          %4640 = vmatpush2.msra.mxu0 0.0
          %4641 = vmatprep.subr.mxu0 0.0
          %4642 = vmatpush2.msra.mxu0 0.0
          %4643 = vmatprep.subr.mxu0 0.0
          %4644 = vmatpush2.msra.mxu0 0.0
          %4645 = vmatprep.subr.mxu0 0.0
          %4646 = vmatpush2.msra.mxu0 0.0
          %4647 = vmatprep.subr.mxu0 0.0
          %4648 = vmatpush2.msra.mxu0 0.0
          %4649 = vmatprep.subr.mxu0 0.0
          %4650 = vmatpush2.msra.mxu0 0.0
          %4651 = vmatprep.subr.mxu0 0.0
          %4652 = vmatpush2.msra.mxu0 0.0
          %4653 = vmatprep.subr.mxu0 0.0
          %4654 = vmatpush2.msra.mxu0 0.0
          %4655 = vmatprep.subr.mxu0 0.0
          %4656 = vmatpush2.msra.mxu0 0.0
          %4657 = vmatprep.subr.mxu0 0.0
          %4658 = vmatpush2.msra.mxu0 0.0
          %4659 = vmatprep.subr.mxu0 0.0
          %4660 = vmatpush2.msra.mxu0 0.0
          %4661 = vmatprep.subr.mxu0 0.0
          %4662 = vmatpush2.msra.mxu0 0.0
          %4663 = vmatprep.subr.mxu0 0.0
          %4664 = vmatpush2.msra.mxu0 0.0
          %4665 = vmatprep.mubr.f32.mxu0 0.0
          %4666 = vmatmul.mubr.f32.gmra.mxu0 %v4599
          %v4667 = vpop.f32.mrf.mxu0
          %v4668 = vadd.f32 0.0, %v4667
          %v4669 = vpop.f32.mrf.mxu0
          %4670 = vdwg.mxu0
          %4671 = vrot.lane.b32.xlu0 %v4511, 120
          %v4672 = vpop.permute.xlu0 %4671
          %v4673 = vsel %vm1709, %v4672, 0
          %4675 = vmatprep.subr.mxu0 0.0
          %4676 = vmatpush1.xpose.msra.mxu0 0.0
          %4677 = vmatprep.subr.mxu0 0.0
          %4678 = vmatpush1.xpose.msra.mxu0 0.0
          %4679 = vmatprep.subr.mxu0 0.0
          %4680 = vmatpush1.xpose.msra.mxu0 0.0
          %4681 = vmatprep.subr.mxu0 0.0
          %4682 = vmatpush1.xpose.msra.mxu0 0.0
          %4683 = vmatprep.subr.mxu0 0.0
          %4684 = vmatpush1.xpose.msra.mxu0 0.0
          %4685 = vmatprep.subr.mxu0 0.0
          %4686 = vmatpush1.xpose.msra.mxu0 0.0
          %4687 = vmatprep.subr.mxu0 0.0
          %4688 = vmatpush1.xpose.msra.mxu0 0.0
          %4689 = vmatprep.subr.mxu0 0.0
          %4690 = vmatpush1.xpose.msra.mxu0 0.0
          %4691 = vmatprep.subr.mxu0 0.0
          %4692 = vmatpush1.xpose.msra.mxu0 0.0
          %4693 = vmatprep.subr.mxu0 0.0
          %4694 = vmatpush1.xpose.msra.mxu0 0.0
          %4695 = vmatprep.subr.mxu0 0.0
          %4696 = vmatpush1.xpose.msra.mxu0 0.0
          %4697 = vmatprep.subr.mxu0 0.0
          %4698 = vmatpush1.xpose.msra.mxu0 0.0
          %4699 = vmatprep.subr.mxu0 0.0
          %4700 = vmatpush1.xpose.msra.mxu0 0.0
          %4701 = vmatprep.subr.mxu0 0.0
          %4702 = vmatpush1.xpose.msra.mxu0 0.0
          %4703 = vmatprep.subr.mxu0 0.0
          %4704 = vmatpush1.xpose.msra.mxu0 %v2766
          %4705 = vmatprep.subr.mxu0 0.0
          %4706 = vmatpush1.xpose.msra.mxu0 %v2764
          %4707 = vmatprep.subr.mxu0 0.0
          %4708 = vmatpush2.xpose.msra.mxu0 0.0
          %4709 = vmatprep.subr.mxu0 0.0
          %4710 = vmatpush2.xpose.msra.mxu0 0.0
          %4711 = vmatprep.subr.mxu0 0.0
          %4712 = vmatpush2.xpose.msra.mxu0 0.0
          %4713 = vmatprep.subr.mxu0 0.0
          %4714 = vmatpush2.xpose.msra.mxu0 0.0
          %4715 = vmatprep.subr.mxu0 0.0
          %4716 = vmatpush2.xpose.msra.mxu0 0.0
          %4717 = vmatprep.subr.mxu0 0.0
          %4718 = vmatpush2.xpose.msra.mxu0 0.0
          %4719 = vmatprep.subr.mxu0 0.0
          %4720 = vmatpush2.xpose.msra.mxu0 0.0
          %4721 = vmatprep.subr.mxu0 0.0
          %4722 = vmatpush2.xpose.msra.mxu0 0.0
          %4723 = vmatprep.subr.mxu0 0.0
          %4724 = vmatpush2.xpose.msra.mxu0 0.0
          %4725 = vmatprep.subr.mxu0 0.0
          %4726 = vmatpush2.xpose.msra.mxu0 0.0
          %4727 = vmatprep.subr.mxu0 0.0
          %4728 = vmatpush2.xpose.msra.mxu0 0.0
          %4729 = vmatprep.subr.mxu0 0.0
          %4730 = vmatpush2.xpose.msra.mxu0 0.0
          %4731 = vmatprep.subr.mxu0 0.0
          %4732 = vmatpush2.xpose.msra.mxu0 0.0
          %4733 = vmatprep.subr.mxu0 0.0
          %4734 = vmatpush2.xpose.msra.mxu0 0.0
          %4735 = vmatprep.subr.mxu0 0.0
          %4736 = vmatpush2.xpose.msra.mxu0 0.0
          %4737 = vmatprep.subr.mxu0 0.0
          %4738 = vmatpush2.xpose.msra.mxu0 0.0
          %4739 = vmatprep.mubr.f32.mxu0 0.0
          %4740 = vmatmul.mubr.f32.gmra.mxu0 %v4673
          %v4741 = vpop.f32.mrf.mxu0
          %v4742 = vadd.f32 0.0, %v4741
          %v4743 = vpop.f32.mrf.mxu0
          %4744 = vdwg.mxu0
          %v4745 = vsel %vm2384, %v4742, -inf
          %4746 = vmax.xlane.f32.xlu0 %v4745
          %v4747 = vpop.xlane.xlu0 %4746
          %v4748 = vsub.f32 %v4742, %v4747
          %v4749 = vmul.f32 %v4748, 1.442695
          %v4750 = vpow.pop %v4749
          %v4751 = vsel %vm2384, %v4750, 0.0
          %4752 = vadd.xlane.f32.xlu0 %v4751
          %v4753 = vpop.xlane.xlu0 %4752
          %v4754 = vrcp.pop %v4753
          %v4755 = vmul.f32 %v4750, %v4754
          %v4757 = vsel %vm2384, %v4755, 0
          %4759 = vmatprep.subr.mxu0 0.0
          %4760 = vmatpush1.msra.mxu0 0.0
          %4761 = vmatprep.subr.mxu0 0.0
          %4762 = vmatpush1.msra.mxu0 0.0
          %4763 = vmatprep.subr.mxu0 0.0
          %4764 = vmatpush1.msra.mxu0 0.0
          %4765 = vmatprep.subr.mxu0 0.0
          %4766 = vmatpush1.msra.mxu0 0.0
          %4767 = vmatprep.subr.mxu0 0.0
          %4768 = vmatpush1.msra.mxu0 0.0
          %4769 = vmatprep.subr.mxu0 0.0
          %4770 = vmatpush1.msra.mxu0 0.0
          %4771 = vmatprep.subr.mxu0 0.0
          %4772 = vmatpush1.msra.mxu0 0.0
          %4773 = vmatprep.subr.mxu0 0.0
          %4774 = vmatpush1.msra.mxu0 0.0
          %4775 = vmatprep.subr.mxu0 0.0
          %4776 = vmatpush1.msra.mxu0 0.0
          %4777 = vmatprep.subr.mxu0 0.0
          %4778 = vmatpush1.msra.mxu0 0.0
          %4779 = vmatprep.subr.mxu0 0.0
          %4780 = vmatpush1.msra.mxu0 0.0
          %4781 = vmatprep.subr.mxu0 0.0
          %4782 = vmatpush1.msra.mxu0 0.0
          %4783 = vmatprep.subr.mxu0 0.0
          %4784 = vmatpush1.msra.mxu0 0.0
          %4785 = vmatprep.subr.mxu0 0.0
          %4786 = vmatpush1.msra.mxu0 0.0
          %4787 = vmatprep.subr.mxu0 0.0
          %4788 = vmatpush1.msra.mxu0 %v2852
          %4789 = vmatprep.subr.mxu0 0.0
          %4790 = vmatpush1.msra.mxu0 %v2850
          %4791 = vmatprep.subr.mxu0 0.0
          %4792 = vmatpush2.msra.mxu0 0.0
          %4793 = vmatprep.subr.mxu0 0.0
          %4794 = vmatpush2.msra.mxu0 0.0
          %4795 = vmatprep.subr.mxu0 0.0
          %4796 = vmatpush2.msra.mxu0 0.0
          %4797 = vmatprep.subr.mxu0 0.0
          %4798 = vmatpush2.msra.mxu0 0.0
          %4799 = vmatprep.subr.mxu0 0.0
          %4800 = vmatpush2.msra.mxu0 0.0
          %4801 = vmatprep.subr.mxu0 0.0
          %4802 = vmatpush2.msra.mxu0 0.0
          %4803 = vmatprep.subr.mxu0 0.0
          %4804 = vmatpush2.msra.mxu0 0.0
          %4805 = vmatprep.subr.mxu0 0.0
          %4806 = vmatpush2.msra.mxu0 0.0
          %4807 = vmatprep.subr.mxu0 0.0
          %4808 = vmatpush2.msra.mxu0 0.0
          %4809 = vmatprep.subr.mxu0 0.0
          %4810 = vmatpush2.msra.mxu0 0.0
          %4811 = vmatprep.subr.mxu0 0.0
          %4812 = vmatpush2.msra.mxu0 0.0
          %4813 = vmatprep.subr.mxu0 0.0
          %4814 = vmatpush2.msra.mxu0 0.0
          %4815 = vmatprep.subr.mxu0 0.0
          %4816 = vmatpush2.msra.mxu0 0.0
          %4817 = vmatprep.subr.mxu0 0.0
          %4818 = vmatpush2.msra.mxu0 0.0
          %4819 = vmatprep.subr.mxu0 0.0
          %4820 = vmatpush2.msra.mxu0 0.0
          %4821 = vmatprep.subr.mxu0 0.0
          %4822 = vmatpush2.msra.mxu0 0.0
          %4823 = vmatprep.mubr.f32.mxu0 0.0
          %4824 = vmatmul.mubr.f32.gmra.mxu0 %v4757
          %v4825 = vpop.f32.mrf.mxu0
          %v4826 = vadd.f32 0.0, %v4825
          %v4827 = vpop.f32.mrf.mxu0
          %4828 = vdwg.mxu0
          %4829 = vrot.lane.b32.xlu0 %v4511, 112
          %v4830 = vpop.permute.xlu0 %4829
          %v4831 = vsel %vm1709, %v4830, 0
          %4833 = vmatprep.subr.mxu0 0.0
          %4834 = vmatpush1.xpose.msra.mxu0 0.0
          %4835 = vmatprep.subr.mxu0 0.0
          %4836 = vmatpush1.xpose.msra.mxu0 0.0
          %4837 = vmatprep.subr.mxu0 0.0
          %4838 = vmatpush1.xpose.msra.mxu0 0.0
          %4839 = vmatprep.subr.mxu0 0.0
          %4840 = vmatpush1.xpose.msra.mxu0 0.0
          %4841 = vmatprep.subr.mxu0 0.0
          %4842 = vmatpush1.xpose.msra.mxu0 0.0
          %4843 = vmatprep.subr.mxu0 0.0
          %4844 = vmatpush1.xpose.msra.mxu0 0.0
          %4845 = vmatprep.subr.mxu0 0.0
          %4846 = vmatpush1.xpose.msra.mxu0 0.0
          %4847 = vmatprep.subr.mxu0 0.0
          %4848 = vmatpush1.xpose.msra.mxu0 0.0
          %4849 = vmatprep.subr.mxu0 0.0
          %4850 = vmatpush1.xpose.msra.mxu0 0.0
          %4851 = vmatprep.subr.mxu0 0.0
          %4852 = vmatpush1.xpose.msra.mxu0 0.0
          %4853 = vmatprep.subr.mxu0 0.0
          %4854 = vmatpush1.xpose.msra.mxu0 0.0
          %4855 = vmatprep.subr.mxu0 0.0
          %4856 = vmatpush1.xpose.msra.mxu0 0.0
          %4857 = vmatprep.subr.mxu0 0.0
          %4858 = vmatpush1.xpose.msra.mxu0 0.0
          %4859 = vmatprep.subr.mxu0 0.0
          %4860 = vmatpush1.xpose.msra.mxu0 0.0
          %4861 = vmatprep.subr.mxu0 0.0
          %4862 = vmatpush1.xpose.msra.mxu0 %v2939
          %4863 = vmatprep.subr.mxu0 0.0
          %4864 = vmatpush1.xpose.msra.mxu0 %v2937
          %4865 = vmatprep.subr.mxu0 0.0
          %4866 = vmatpush2.xpose.msra.mxu0 0.0
          %4867 = vmatprep.subr.mxu0 0.0
          %4868 = vmatpush2.xpose.msra.mxu0 0.0
          %4869 = vmatprep.subr.mxu0 0.0
          %4870 = vmatpush2.xpose.msra.mxu0 0.0
          %4871 = vmatprep.subr.mxu0 0.0
          %4872 = vmatpush2.xpose.msra.mxu0 0.0
          %4873 = vmatprep.subr.mxu0 0.0
          %4874 = vmatpush2.xpose.msra.mxu0 0.0
          %4875 = vmatprep.subr.mxu0 0.0
          %4876 = vmatpush2.xpose.msra.mxu0 0.0
          %4877 = vmatprep.subr.mxu0 0.0
          %4878 = vmatpush2.xpose.msra.mxu0 0.0
          %4879 = vmatprep.subr.mxu0 0.0
          %4880 = vmatpush2.xpose.msra.mxu0 0.0
          %4881 = vmatprep.subr.mxu0 0.0
          %4882 = vmatpush2.xpose.msra.mxu0 0.0
          %4883 = vmatprep.subr.mxu0 0.0
          %4884 = vmatpush2.xpose.msra.mxu0 0.0
          %4885 = vmatprep.subr.mxu0 0.0
          %4886 = vmatpush2.xpose.msra.mxu0 0.0
          %4887 = vmatprep.subr.mxu0 0.0
          %4888 = vmatpush2.xpose.msra.mxu0 0.0
          %4889 = vmatprep.subr.mxu0 0.0
          %4890 = vmatpush2.xpose.msra.mxu0 0.0
          %4891 = vmatprep.subr.mxu0 0.0
          %4892 = vmatpush2.xpose.msra.mxu0 0.0
          %4893 = vmatprep.subr.mxu0 0.0
          %4894 = vmatpush2.xpose.msra.mxu0 0.0
          %4895 = vmatprep.subr.mxu0 0.0
          %4896 = vmatpush2.xpose.msra.mxu0 0.0
          %4897 = vmatprep.mubr.f32.mxu0 0.0
          %4898 = vmatmul.mubr.f32.gmra.mxu0 %v4831
          %v4899 = vpop.f32.mrf.mxu0
          %v4900 = vadd.f32 0.0, %v4899
          %v4901 = vpop.f32.mrf.mxu0
          %4902 = vdwg.mxu0
          %v4903 = vsel %vm2384, %v4900, -inf
          %4904 = vmax.xlane.f32.xlu0 %v4903
          %v4905 = vpop.xlane.xlu0 %4904
          %v4906 = vsub.f32 %v4900, %v4905
          %v4907 = vmul.f32 %v4906, 1.442695
          %v4908 = vpow.pop %v4907
          %v4909 = vsel %vm2384, %v4908, 0.0
          %4910 = vadd.xlane.f32.xlu0 %v4909
          %v4911 = vpop.xlane.xlu0 %4910
          %v4912 = vrcp.pop %v4911
          %v4913 = vmul.f32 %v4908, %v4912
          %v4915 = vsel %vm2384, %v4913, 0
          %4917 = vmatprep.subr.mxu0 0.0
          %4918 = vmatpush1.msra.mxu0 0.0
          %4919 = vmatprep.subr.mxu0 0.0
          %4920 = vmatpush1.msra.mxu0 0.0
          %4921 = vmatprep.subr.mxu0 0.0
          %4922 = vmatpush1.msra.mxu0 0.0
          %4923 = vmatprep.subr.mxu0 0.0
          %4924 = vmatpush1.msra.mxu0 0.0
          %4925 = vmatprep.subr.mxu0 0.0
          %4926 = vmatpush1.msra.mxu0 0.0
          %4927 = vmatprep.subr.mxu0 0.0
          %4928 = vmatpush1.msra.mxu0 0.0
          %4929 = vmatprep.subr.mxu0 0.0
          %4930 = vmatpush1.msra.mxu0 0.0
          %4931 = vmatprep.subr.mxu0 0.0
          %4932 = vmatpush1.msra.mxu0 0.0
          %4933 = vmatprep.subr.mxu0 0.0
          %4934 = vmatpush1.msra.mxu0 0.0
          %4935 = vmatprep.subr.mxu0 0.0
          %4936 = vmatpush1.msra.mxu0 0.0
          %4937 = vmatprep.subr.mxu0 0.0
          %4938 = vmatpush1.msra.mxu0 0.0
          %4939 = vmatprep.subr.mxu0 0.0
          %4940 = vmatpush1.msra.mxu0 0.0
          %4941 = vmatprep.subr.mxu0 0.0
          %4942 = vmatpush1.msra.mxu0 0.0
          %4943 = vmatprep.subr.mxu0 0.0
          %4944 = vmatpush1.msra.mxu0 0.0
          %4945 = vmatprep.subr.mxu0 0.0
          %4946 = vmatpush1.msra.mxu0 %v3025
          %4947 = vmatprep.subr.mxu0 0.0
          %4948 = vmatpush1.msra.mxu0 %v3023
          %4949 = vmatprep.subr.mxu0 0.0
          %4950 = vmatpush2.msra.mxu0 0.0
          %4951 = vmatprep.subr.mxu0 0.0
          %4952 = vmatpush2.msra.mxu0 0.0
          %4953 = vmatprep.subr.mxu0 0.0
          %4954 = vmatpush2.msra.mxu0 0.0
          %4955 = vmatprep.subr.mxu0 0.0
          %4956 = vmatpush2.msra.mxu0 0.0
          %4957 = vmatprep.subr.mxu0 0.0
          %4958 = vmatpush2.msra.mxu0 0.0
          %4959 = vmatprep.subr.mxu0 0.0
          %4960 = vmatpush2.msra.mxu0 0.0
          %4961 = vmatprep.subr.mxu0 0.0
          %4962 = vmatpush2.msra.mxu0 0.0
          %4963 = vmatprep.subr.mxu0 0.0
          %4964 = vmatpush2.msra.mxu0 0.0
          %4965 = vmatprep.subr.mxu0 0.0
          %4966 = vmatpush2.msra.mxu0 0.0
          %4967 = vmatprep.subr.mxu0 0.0
          %4968 = vmatpush2.msra.mxu0 0.0
          %4969 = vmatprep.subr.mxu0 0.0
          %4970 = vmatpush2.msra.mxu0 0.0
          %4971 = vmatprep.subr.mxu0 0.0
          %4972 = vmatpush2.msra.mxu0 0.0
          %4973 = vmatprep.subr.mxu0 0.0
          %4974 = vmatpush2.msra.mxu0 0.0
          %4975 = vmatprep.subr.mxu0 0.0
          %4976 = vmatpush2.msra.mxu0 0.0
          %4977 = vmatprep.subr.mxu0 0.0
          %4978 = vmatpush2.msra.mxu0 0.0
          %4979 = vmatprep.subr.mxu0 0.0
          %4980 = vmatpush2.msra.mxu0 0.0
          %4981 = vmatprep.mubr.f32.mxu0 0.0
          %4982 = vmatmul.mubr.f32.gmra.mxu0 %v4915
          %v4983 = vpop.f32.mrf.mxu0
          %v4984 = vadd.f32 0.0, %v4983
          %v4985 = vpop.f32.mrf.mxu0
          %4986 = vdwg.mxu0
          %4987 = vrot.lane.b32.xlu0 %v4511, 104
          %v4988 = vpop.permute.xlu0 %4987
          %v4989 = vsel %vm1709, %v4988, 0
          %4991 = vmatprep.subr.mxu0 0.0
          %4992 = vmatpush1.xpose.msra.mxu0 0.0
          %4993 = vmatprep.subr.mxu0 0.0
          %4994 = vmatpush1.xpose.msra.mxu0 0.0
          %4995 = vmatprep.subr.mxu0 0.0
          %4996 = vmatpush1.xpose.msra.mxu0 0.0
          %4997 = vmatprep.subr.mxu0 0.0
          %4998 = vmatpush1.xpose.msra.mxu0 0.0
          %4999 = vmatprep.subr.mxu0 0.0
          %5000 = vmatpush1.xpose.msra.mxu0 0.0
          %5001 = vmatprep.subr.mxu0 0.0
          %5002 = vmatpush1.xpose.msra.mxu0 0.0
          %5003 = vmatprep.subr.mxu0 0.0
          %5004 = vmatpush1.xpose.msra.mxu0 0.0
          %5005 = vmatprep.subr.mxu0 0.0
          %5006 = vmatpush1.xpose.msra.mxu0 0.0
          %5007 = vmatprep.subr.mxu0 0.0
          %5008 = vmatpush1.xpose.msra.mxu0 0.0
          %5009 = vmatprep.subr.mxu0 0.0
          %5010 = vmatpush1.xpose.msra.mxu0 0.0
          %5011 = vmatprep.subr.mxu0 0.0
          %5012 = vmatpush1.xpose.msra.mxu0 0.0
          %5013 = vmatprep.subr.mxu0 0.0
          %5014 = vmatpush1.xpose.msra.mxu0 0.0
          %5015 = vmatprep.subr.mxu0 0.0
          %5016 = vmatpush1.xpose.msra.mxu0 0.0
          %5017 = vmatprep.subr.mxu0 0.0
          %5018 = vmatpush1.xpose.msra.mxu0 0.0
          %5019 = vmatprep.subr.mxu0 0.0
          %5020 = vmatpush1.xpose.msra.mxu0 %v3112
          %5021 = vmatprep.subr.mxu0 0.0
          %5022 = vmatpush1.xpose.msra.mxu0 %v3110
          %5023 = vmatprep.subr.mxu0 0.0
          %5024 = vmatpush2.xpose.msra.mxu0 0.0
          %5025 = vmatprep.subr.mxu0 0.0
          %5026 = vmatpush2.xpose.msra.mxu0 0.0
          %5027 = vmatprep.subr.mxu0 0.0
          %5028 = vmatpush2.xpose.msra.mxu0 0.0
          %5029 = vmatprep.subr.mxu0 0.0
          %5030 = vmatpush2.xpose.msra.mxu0 0.0
          %5031 = vmatprep.subr.mxu0 0.0
          %5032 = vmatpush2.xpose.msra.mxu0 0.0
          %5033 = vmatprep.subr.mxu0 0.0
          %5034 = vmatpush2.xpose.msra.mxu0 0.0
          %5035 = vmatprep.subr.mxu0 0.0
          %5036 = vmatpush2.xpose.msra.mxu0 0.0
          %5037 = vmatprep.subr.mxu0 0.0
          %5038 = vmatpush2.xpose.msra.mxu0 0.0
          %5039 = vmatprep.subr.mxu0 0.0
          %5040 = vmatpush2.xpose.msra.mxu0 0.0
          %5041 = vmatprep.subr.mxu0 0.0
          %5042 = vmatpush2.xpose.msra.mxu0 0.0
          %5043 = vmatprep.subr.mxu0 0.0
          %5044 = vmatpush2.xpose.msra.mxu0 0.0
          %5045 = vmatprep.subr.mxu0 0.0
          %5046 = vmatpush2.xpose.msra.mxu0 0.0
          %5047 = vmatprep.subr.mxu0 0.0
          %5048 = vmatpush2.xpose.msra.mxu0 0.0
          %5049 = vmatprep.subr.mxu0 0.0
          %5050 = vmatpush2.xpose.msra.mxu0 0.0
          %5051 = vmatprep.subr.mxu0 0.0
          %5052 = vmatpush2.xpose.msra.mxu0 0.0
          %5053 = vmatprep.subr.mxu0 0.0
          %5054 = vmatpush2.xpose.msra.mxu0 0.0
          %5055 = vmatprep.mubr.f32.mxu0 0.0
          %5056 = vmatmul.mubr.f32.gmra.mxu0 %v4989
          %v5057 = vpop.f32.mrf.mxu0
          %v5058 = vadd.f32 0.0, %v5057
          %v5059 = vpop.f32.mrf.mxu0
          %5060 = vdwg.mxu0
          %v5061 = vsel %vm2384, %v5058, -inf
          %5062 = vmax.xlane.f32.xlu0 %v5061
          %v5063 = vpop.xlane.xlu0 %5062
          %v5064 = vsub.f32 %v5058, %v5063
          %v5065 = vmul.f32 %v5064, 1.442695
          %v5066 = vpow.pop %v5065
          %v5067 = vsel %vm2384, %v5066, 0.0
          %5068 = vadd.xlane.f32.xlu0 %v5067
          %v5069 = vpop.xlane.xlu0 %5068
          %v5070 = vrcp.pop %v5069
          %v5071 = vmul.f32 %v5066, %v5070
          %v5073 = vsel %vm2384, %v5071, 0
          %5075 = vmatprep.subr.mxu0 0.0
          %5076 = vmatpush1.msra.mxu0 0.0
          %5077 = vmatprep.subr.mxu0 0.0
          %5078 = vmatpush1.msra.mxu0 0.0
          %5079 = vmatprep.subr.mxu0 0.0
          %5080 = vmatpush1.msra.mxu0 0.0
          %5081 = vmatprep.subr.mxu0 0.0
          %5082 = vmatpush1.msra.mxu0 0.0
          %5083 = vmatprep.subr.mxu0 0.0
          %5084 = vmatpush1.msra.mxu0 0.0
          %5085 = vmatprep.subr.mxu0 0.0
          %5086 = vmatpush1.msra.mxu0 0.0
          %5087 = vmatprep.subr.mxu0 0.0
          %5088 = vmatpush1.msra.mxu0 0.0
          %5089 = vmatprep.subr.mxu0 0.0
          %5090 = vmatpush1.msra.mxu0 0.0
          %5091 = vmatprep.subr.mxu0 0.0
          %5092 = vmatpush1.msra.mxu0 0.0
          %5093 = vmatprep.subr.mxu0 0.0
          %5094 = vmatpush1.msra.mxu0 0.0
          %5095 = vmatprep.subr.mxu0 0.0
          %5096 = vmatpush1.msra.mxu0 0.0
          %5097 = vmatprep.subr.mxu0 0.0
          %5098 = vmatpush1.msra.mxu0 0.0
          %5099 = vmatprep.subr.mxu0 0.0
          %5100 = vmatpush1.msra.mxu0 0.0
          %5101 = vmatprep.subr.mxu0 0.0
          %5102 = vmatpush1.msra.mxu0 0.0
          %5103 = vmatprep.subr.mxu0 0.0
          %5104 = vmatpush1.msra.mxu0 %v3198
          %5105 = vmatprep.subr.mxu0 0.0
          %5106 = vmatpush1.msra.mxu0 %v3196
          %5107 = vmatprep.subr.mxu0 0.0
          %5108 = vmatpush2.msra.mxu0 0.0
          %5109 = vmatprep.subr.mxu0 0.0
          %5110 = vmatpush2.msra.mxu0 0.0
          %5111 = vmatprep.subr.mxu0 0.0
          %5112 = vmatpush2.msra.mxu0 0.0
          %5113 = vmatprep.subr.mxu0 0.0
          %5114 = vmatpush2.msra.mxu0 0.0
          %5115 = vmatprep.subr.mxu0 0.0
          %5116 = vmatpush2.msra.mxu0 0.0
          %5117 = vmatprep.subr.mxu0 0.0
          %5118 = vmatpush2.msra.mxu0 0.0
          %5119 = vmatprep.subr.mxu0 0.0
          %5120 = vmatpush2.msra.mxu0 0.0
          %5121 = vmatprep.subr.mxu0 0.0
          %5122 = vmatpush2.msra.mxu0 0.0
          %5123 = vmatprep.subr.mxu0 0.0
          %5124 = vmatpush2.msra.mxu0 0.0
          %5125 = vmatprep.subr.mxu0 0.0
          %5126 = vmatpush2.msra.mxu0 0.0
          %5127 = vmatprep.subr.mxu0 0.0
          %5128 = vmatpush2.msra.mxu0 0.0
          %5129 = vmatprep.subr.mxu0 0.0
          %5130 = vmatpush2.msra.mxu0 0.0
          %5131 = vmatprep.subr.mxu0 0.0
          %5132 = vmatpush2.msra.mxu0 0.0
          %5133 = vmatprep.subr.mxu0 0.0
          %5134 = vmatpush2.msra.mxu0 0.0
          %5135 = vmatprep.subr.mxu0 0.0
          %5136 = vmatpush2.msra.mxu0 0.0
          %5137 = vmatprep.subr.mxu0 0.0
          %5138 = vmatpush2.msra.mxu0 0.0
          %5139 = vmatprep.mubr.f32.mxu0 0.0
          %5140 = vmatmul.mubr.f32.gmra.mxu0 %v5073
          %v5141 = vpop.f32.mrf.mxu0
          %v5142 = vadd.f32 0.0, %v5141
          %v5143 = vpop.f32.mrf.mxu0
          %5144 = vdwg.mxu0
          %5146 = vrot.lane.b32.xlu0 %v4826, 8
          %v5147 = vpop.permute.xlu0 %5146
          %5150 = vrot.lane.b32.xlu0 %v4984, 16
          %v5151 = vpop.permute.xlu0 %5150
          %5154 = vrot.lane.b32.xlu0 %v5142, 24
          %v5155 = vpop.permute.xlu0 %5154
          %v5157 = vsel %vm1709, %v4668, %v5147
          %v5158 = vsel %vm2384, %v5157, %v5151
          %v5159 = vsel %vm2386, %v5158, %v5155
          %v5161 = vlaneseq
          %v5162 = vshrl.u32 %v5161, 7
          %v5163 = vsub.s32 0, %v5162
          %v5164 = vrot.slane %v4434, %v5163
          %v5167 = vsel %vm1386, %v5159, 0
          %5169 = vmatprep.subr.mxu0 0.0
          %5170 = vmatpush1.msra.mxu0 0.0
          %5171 = vmatprep.subr.mxu0 0.0
          %5172 = vmatpush1.msra.mxu0 0.0
          %5173 = vmatprep.subr.mxu0 0.0
          %5174 = vmatpush1.msra.mxu0 0.0
          %5175 = vmatprep.subr.mxu0 0.0
          %5176 = vmatpush1.msra.mxu0 0.0
          %5177 = vmatprep.subr.mxu0 0.0
          %5178 = vmatpush1.msra.mxu0 0.0
          %5179 = vmatprep.subr.mxu0 0.0
          %5180 = vmatpush1.msra.mxu0 0.0
          %5181 = vmatprep.subr.mxu0 0.0
          %5182 = vmatpush1.msra.mxu0 0.0
          %5183 = vmatprep.subr.mxu0 0.0
          %5184 = vmatpush1.msra.mxu0 0.0
          %5185 = vmatprep.subr.mxu0 0.0
          %5186 = vmatpush1.msra.mxu0 0.0
          %5187 = vmatprep.subr.mxu0 0.0
          %5188 = vmatpush1.msra.mxu0 0.0
          %5189 = vmatprep.subr.mxu0 0.0
          %5190 = vmatpush1.msra.mxu0 0.0
          %5191 = vmatprep.subr.mxu0 0.0
          %5192 = vmatpush1.msra.mxu0 0.0
          %5193 = vmatprep.subr.mxu0 0.0
          %5194 = vmatpush1.msra.mxu0 %v4433
          %5195 = vmatprep.subr.mxu0 0.0
          %5196 = vmatpush1.msra.mxu0 %v4432
          %5197 = vmatprep.subr.mxu0 0.0
          %5198 = vmatpush1.msra.mxu0 %v4431
          %5199 = vmatprep.subr.mxu0 0.0
          %5200 = vmatpush1.msra.mxu0 %v4430
          %5201 = vmatprep.subr.mxu0 0.0
          %5202 = vmatpush2.msra.mxu0 0.0
          %5203 = vmatprep.subr.mxu0 0.0
          %5204 = vmatpush2.msra.mxu0 0.0
          %5205 = vmatprep.subr.mxu0 0.0
          %5206 = vmatpush2.msra.mxu0 0.0
          %5207 = vmatprep.subr.mxu0 0.0
          %5208 = vmatpush2.msra.mxu0 0.0
          %5209 = vmatprep.subr.mxu0 0.0
          %5210 = vmatpush2.msra.mxu0 0.0
          %5211 = vmatprep.subr.mxu0 0.0
          %5212 = vmatpush2.msra.mxu0 0.0
          %5213 = vmatprep.subr.mxu0 0.0
          %5214 = vmatpush2.msra.mxu0 0.0
          %5215 = vmatprep.subr.mxu0 0.0
          %5216 = vmatpush2.msra.mxu0 0.0
          %5217 = vmatprep.subr.mxu0 0.0
          %5218 = vmatpush2.msra.mxu0 0.0
          %5219 = vmatprep.subr.mxu0 0.0
          %5220 = vmatpush2.msra.mxu0 0.0
          %5221 = vmatprep.subr.mxu0 0.0
          %5222 = vmatpush2.msra.mxu0 0.0
          %5223 = vmatprep.subr.mxu0 0.0
          %5224 = vmatpush2.msra.mxu0 0.0
          %5225 = vmatprep.subr.mxu0 0.0
          %5226 = vmatpush2.msra.mxu0 0.0
          %5227 = vmatprep.subr.mxu0 0.0
          %5228 = vmatpush2.msra.mxu0 0.0
          %5229 = vmatprep.subr.mxu0 0.0
          %5230 = vmatpush2.msra.mxu0 0.0
          %5231 = vmatprep.subr.mxu0 0.0
          %5232 = vmatpush2.msra.mxu0 0.0
          %5233 = vmatprep.mubr.f32.mxu0 0.0
          %5234 = vmatmul.mubr.f32.gmra.mxu0 %v5167
          %v5235 = vpop.f32.mrf.mxu0
          %v5236 = vadd.f32 %v5164, %v5235
          %v5237 = vpop.f32.mrf.mxu0
          %5238 = vdwg.mxu0
          %v5239 = vadd.f32 %v4395, %v5236
          %v5240 = vld [vmem:[%s1346] sm:$0x1]
          %v5241 = vld [vmem:[%s1349] sm:$0x1]
          %v5242 = vsel %vm1386, %v5239, 0.0
          %5243 = vadd.xlane.f32.xlu0 %v5242
          %v5244 = vpop.xlane.xlu0 %5243
          %v5245 = vmul.f32 %v5244, %v1390
          %v5246 = vsub.f32 %v5239, %v5245
          %v5247 = vmul.f32 %v5246, %v5246
          %v5248 = vsel %vm1386, %v5247, 0.0
          %5249 = vadd.xlane.f32.xlu0 %v5248
          %v5250 = vpop.xlane.xlu0 %5249
          %v5251 = vmul.f32 %v5250, %v1390
          %v5252 = vadd.f32 %v5251, 1e-05
          %v5253 = vrsqrt.pop %v5252
          %v5254 = vmul.f32 %v5246, %v5253
          %v5256 = vlaneseq
          %v5257 = vshrl.u32 %v5256, 7
          %v5258 = vsub.s32 0, %v5257
          %v5259 = vrot.slane %v5240, %v5258
          %v5261 = vmul.f32 %v5254, %v5259
          %v5263 = vlaneseq
          %v5264 = vshrl.u32 %v5263, 7
          %v5265 = vsub.s32 0, %v5264
          %v5266 = vrot.slane %v5241, %v5265
          %v5268 = vadd.f32 %v5261, %v5266
          %v5269 = vld [vmem:[%s1354] sm:$0xff]
          %v5270 = vld [vmem:[%s1354 + $0x8] sm:$0xff]
          %v5271 = vld [vmem:[%s1354 + $0x10] sm:$0xff]
          %v5272 = vld [vmem:[%s1354 + $0x18] sm:$0xff]
          %v5273 = vld [vmem:[%s1357] sm:$0x1]
          %v5275 = vlaneseq
          %v5276 = vshrl.u32 %v5275, 7
          %v5277 = vsub.s32 0, %v5276
          %v5278 = vrot.slane %v5273, %v5277
          %v5281 = vsel %vm1386, %v5268, 0
          %5283 = vmatprep.subr.mxu0 0.0
          %5284 = vmatpush1.msra.mxu0 0.0
          %5285 = vmatprep.subr.mxu0 0.0
          %5286 = vmatpush1.msra.mxu0 0.0
          %5287 = vmatprep.subr.mxu0 0.0
          %5288 = vmatpush1.msra.mxu0 0.0
          %5289 = vmatprep.subr.mxu0 0.0
          %5290 = vmatpush1.msra.mxu0 0.0
          %5291 = vmatprep.subr.mxu0 0.0
          %5292 = vmatpush1.msra.mxu0 0.0
          %5293 = vmatprep.subr.mxu0 0.0
          %5294 = vmatpush1.msra.mxu0 0.0
          %5295 = vmatprep.subr.mxu0 0.0
          %5296 = vmatpush1.msra.mxu0 0.0
          %5297 = vmatprep.subr.mxu0 0.0
          %5298 = vmatpush1.msra.mxu0 0.0
          %5299 = vmatprep.subr.mxu0 0.0
          %5300 = vmatpush1.msra.mxu0 0.0
          %5301 = vmatprep.subr.mxu0 0.0
          %5302 = vmatpush1.msra.mxu0 0.0
          %5303 = vmatprep.subr.mxu0 0.0
          %5304 = vmatpush1.msra.mxu0 0.0
          %5305 = vmatprep.subr.mxu0 0.0
          %5306 = vmatpush1.msra.mxu0 0.0
          %5307 = vmatprep.subr.mxu0 0.0
          %5308 = vmatpush1.msra.mxu0 %v5272
          %5309 = vmatprep.subr.mxu0 0.0
          %5310 = vmatpush1.msra.mxu0 %v5271
          %5311 = vmatprep.subr.mxu0 0.0
          %5312 = vmatpush1.msra.mxu0 %v5270
          %5313 = vmatprep.subr.mxu0 0.0
          %5314 = vmatpush1.msra.mxu0 %v5269
          %5315 = vmatprep.subr.mxu0 0.0
          %5316 = vmatpush2.msra.mxu0 0.0
          %5317 = vmatprep.subr.mxu0 0.0
          %5318 = vmatpush2.msra.mxu0 0.0
          %5319 = vmatprep.subr.mxu0 0.0
          %5320 = vmatpush2.msra.mxu0 0.0
          %5321 = vmatprep.subr.mxu0 0.0
          %5322 = vmatpush2.msra.mxu0 0.0
          %5323 = vmatprep.subr.mxu0 0.0
          %5324 = vmatpush2.msra.mxu0 0.0
          %5325 = vmatprep.subr.mxu0 0.0
          %5326 = vmatpush2.msra.mxu0 0.0
          %5327 = vmatprep.subr.mxu0 0.0
          %5328 = vmatpush2.msra.mxu0 0.0
          %5329 = vmatprep.subr.mxu0 0.0
          %5330 = vmatpush2.msra.mxu0 0.0
          %5331 = vmatprep.subr.mxu0 0.0
          %5332 = vmatpush2.msra.mxu0 0.0
          %5333 = vmatprep.subr.mxu0 0.0
          %5334 = vmatpush2.msra.mxu0 0.0
          %5335 = vmatprep.subr.mxu0 0.0
          %5336 = vmatpush2.msra.mxu0 0.0
          %5337 = vmatprep.subr.mxu0 0.0
          %5338 = vmatpush2.msra.mxu0 0.0
          %5339 = vmatprep.subr.mxu0 0.0
          %5340 = vmatpush2.msra.mxu0 0.0
          %5341 = vmatprep.subr.mxu0 0.0
          %5342 = vmatpush2.msra.mxu0 0.0
          %5343 = vmatprep.subr.mxu0 0.0
          %5344 = vmatpush2.msra.mxu0 0.0
          %5345 = vmatprep.subr.mxu0 0.0
          %5346 = vmatpush2.msra.mxu0 0.0
          %5347 = vmatprep.mubr.f32.mxu0 0.0
          %5348 = vmatmul.mubr.f32.gmra.mxu0 %v5281
          %v5349 = vpop.f32.mrf.mxu0
          %v5350 = vadd.f32 %v5278, %v5349
          %v5351 = vpop.f32.mrf.mxu0
          %5352 = vdwg.mxu0
          %v5353 = vmul.f32 %v5350, 0.5
          %v5354 = vmul.f32 %v5350, 0.70710677
          %v5355 = verf.f32.pop %v5354
          %v5356 = vadd.f32 %v5355, 1.0
          %v5357 = vmul.f32 %v5353, %v5356
          %v5358 = vld [vmem:[%s1362] sm:$0xff]
          %v5359 = vld [vmem:[%s1362 + $0x8] sm:$0xff]
          %v5360 = vld [vmem:[%s1362 + $0x10] sm:$0xff]
          %v5361 = vld [vmem:[%s1362 + $0x18] sm:$0xff]
          %v5362 = vld [vmem:[%s1362 + $0x20] sm:$0xff]
          %v5363 = vld [vmem:[%s1362 + $0x28] sm:$0xff]
          %v5364 = vld [vmem:[%s1362 + $0x30] sm:$0xff]
          %v5365 = vld [vmem:[%s1362 + $0x38] sm:$0xff]
          %v5366 = vld [vmem:[%s1365] sm:$0x1]
          %v5368 = vlaneseq
          %v5369 = vshrl.u32 %v5368, 7
          %v5370 = vsub.s32 0, %v5369
          %v5371 = vrot.slane %v5366, %v5370
          %v5374 = vsel %vm3504, %v5357, 0
          %5376 = vmatprep.subr.mxu0 0.0
          %5377 = vmatpush1.msra.mxu0 0.0
          %5378 = vmatprep.subr.mxu0 0.0
          %5379 = vmatpush1.msra.mxu0 0.0
          %5380 = vmatprep.subr.mxu0 0.0
          %5381 = vmatpush1.msra.mxu0 0.0
          %5382 = vmatprep.subr.mxu0 0.0
          %5383 = vmatpush1.msra.mxu0 0.0
          %5384 = vmatprep.subr.mxu0 0.0
          %5385 = vmatpush1.msra.mxu0 0.0
          %5386 = vmatprep.subr.mxu0 0.0
          %5387 = vmatpush1.msra.mxu0 0.0
          %5388 = vmatprep.subr.mxu0 0.0
          %5389 = vmatpush1.msra.mxu0 0.0
          %5390 = vmatprep.subr.mxu0 0.0
          %5391 = vmatpush1.msra.mxu0 0.0
          %5392 = vmatprep.subr.mxu0 0.0
          %5393 = vmatpush1.msra.mxu0 %v5365
          %5394 = vmatprep.subr.mxu0 0.0
          %5395 = vmatpush1.msra.mxu0 %v5364
          %5396 = vmatprep.subr.mxu0 0.0
          %5397 = vmatpush1.msra.mxu0 %v5363
          %5398 = vmatprep.subr.mxu0 0.0
          %5399 = vmatpush1.msra.mxu0 %v5362
          %5400 = vmatprep.subr.mxu0 0.0
          %5401 = vmatpush1.msra.mxu0 %v5361
          %5402 = vmatprep.subr.mxu0 0.0
          %5403 = vmatpush1.msra.mxu0 %v5360
          %5404 = vmatprep.subr.mxu0 0.0
          %5405 = vmatpush1.msra.mxu0 %v5359
          %5406 = vmatprep.subr.mxu0 0.0
          %5407 = vmatpush1.msra.mxu0 %v5358
          %5408 = vmatprep.subr.mxu0 0.0
          %5409 = vmatpush2.msra.mxu0 0.0
          %5410 = vmatprep.subr.mxu0 0.0
          %5411 = vmatpush2.msra.mxu0 0.0
          %5412 = vmatprep.subr.mxu0 0.0
          %5413 = vmatpush2.msra.mxu0 0.0
          %5414 = vmatprep.subr.mxu0 0.0
          %5415 = vmatpush2.msra.mxu0 0.0
          %5416 = vmatprep.subr.mxu0 0.0
          %5417 = vmatpush2.msra.mxu0 0.0
          %5418 = vmatprep.subr.mxu0 0.0
          %5419 = vmatpush2.msra.mxu0 0.0
          %5420 = vmatprep.subr.mxu0 0.0
          %5421 = vmatpush2.msra.mxu0 0.0
          %5422 = vmatprep.subr.mxu0 0.0
          %5423 = vmatpush2.msra.mxu0 0.0
          %5424 = vmatprep.subr.mxu0 0.0
          %5425 = vmatpush2.msra.mxu0 0.0
          %5426 = vmatprep.subr.mxu0 0.0
          %5427 = vmatpush2.msra.mxu0 0.0
          %5428 = vmatprep.subr.mxu0 0.0
          %5429 = vmatpush2.msra.mxu0 0.0
          %5430 = vmatprep.subr.mxu0 0.0
          %5431 = vmatpush2.msra.mxu0 0.0
          %5432 = vmatprep.subr.mxu0 0.0
          %5433 = vmatpush2.msra.mxu0 0.0
          %5434 = vmatprep.subr.mxu0 0.0
          %5435 = vmatpush2.msra.mxu0 0.0
          %5436 = vmatprep.subr.mxu0 0.0
          %5437 = vmatpush2.msra.mxu0 0.0
          %5438 = vmatprep.subr.mxu0 0.0
          %5439 = vmatpush2.msra.mxu0 0.0
          %5440 = vmatprep.mubr.f32.mxu0 0.0
          %5441 = vmatmul.mubr.f32.gmra.mxu0 %v5374
          %v5442 = vpop.f32.mrf.mxu0
          %v5443 = vadd.f32 %v5371, %v5442
          %v5444 = vpop.f32.mrf.mxu0
          %5445 = vdwg.mxu0
          %v5446 = vadd.f32 %v5239, %v5443
          %5447 = vst.msk [vmem:[#allocation3] sm:$0xff] %vm1386, %v5446
        $region144: #{decoder_forward.1} parent=135 // pred_fallthru
          _
        // Predicated region
        $region145: #{decoder_forward.1} parent=135 // pred_check
          %p5448 = pneg %p1371
        $region146: #{decoder_forward.1} parent=135 // pred_check_branch
          %5450 = sbr.rel (%p5448) target = $region148
        $region147: #{decoder_forward.1} parent=135 // pred_region
          %v5451 = vld [vmem:[%s55] sm:$0x1]
          %v5452 = vld [vmem:[%s57] sm:$0x1]
          %v5453 = vsel %vm1386, %v3578, 0.0
          %5454 = vadd.xlane.f32.xlu0 %v5453
          %v5455 = vpop.xlane.xlu0 %5454
          %v5456 = vmul.f32 %v5455, %v1390
          %v5457 = vsub.f32 %v3578, %v5456
          %v5458 = vmul.f32 %v5457, %v5457
          %v5459 = vsel %vm1386, %v5458, 0.0
          %5460 = vadd.xlane.f32.xlu0 %v5459
          %v5461 = vpop.xlane.xlu0 %5460
          %v5462 = vmul.f32 %v5461, %v1390
          %v5463 = vadd.f32 %v5462, 1e-05
          %v5464 = vrsqrt.pop %v5463
          %v5465 = vmul.f32 %v5457, %v5464
          %v5467 = vlaneseq
          %v5468 = vshrl.u32 %v5467, 7
          %v5469 = vsub.s32 0, %v5468
          %v5470 = vrot.slane %v5451, %v5469
          %v5472 = vmul.f32 %v5465, %v5470
          %v5474 = vlaneseq
          %v5475 = vshrl.u32 %v5474, 7
          %v5476 = vsub.s32 0, %v5475
          %v5477 = vrot.slane %v5452, %v5476
          %v5479 = vadd.f32 %v5472, %v5477
          %5480 = vst.msk [vmem:[%s1258] sm:$0xff] %vm1386, %v5479
          %5482 = vrot.lane.b32.xlu0 %v3369, 8
          %v5483 = vpop.permute.xlu0 %5482
          %v5485 = vsel %vm1709, %v2467, %v5483
          %v5486 = vsel %vm2386, %v5485, 0.0
          %5487 = vst [vmem:[%s1369] sm:$0xff] %v5486
        $region148: #{decoder_forward.1} parent=135 // pred_fallthru
          _
        %s5488 = sand.u32 %s840, 1
        %s5489 = scalar_lea.sflag [#allocation5], %s5488
        %s5490 = sand.u32 %s840, 1
        %s5491 = smul.addr %s5490, 8
        %s5492 = scalar_lea.vmem [#allocation4], %s5491
        %p5493 = scmp.lt.s32.totalorder %s80, 1
        %s5494 = scalar_select %p5493, %s80, 1
        %s5495 = smul.addr %s5494, 8
        %s5496 = scalar_lea.vmem %s61, %s5495
        // Predicated region
        $region149: #{decoder_forward.1} parent=135 // pred_check
          %p5497 = pneg %p850
        $region150: #{decoder_forward.1} parent=135 // pred_check_branch
          %5499 = sbr.rel (%p5497) target = $region152
        $region151: #{decoder_forward.1} parent=135 // pred_region
          %s5501 = ssub.s32 128, 128
          %5502 = vsyncadd %s5489, %s5501
          %s5503 = smul.addr %s80, 128
          %s5504 = scalar_lea.hbm %s59, %s5503
          %s5506 = sshll.u32 %s5492, 4
          %s5507 = int_to_ptr.vmem [resolvable:$true] %s5506
          %5509 = dma.vmem_to_hbm [thread:$0]  %s5507, 128, %s5504, %s5489
        $region152: #{decoder_forward.1} parent=135 // pred_fallthru
          _
        // Predicated region
        $region153: #{decoder_forward.1} parent=135 // pred_check
          %p5510 = pneg %p876
        $region154: #{decoder_forward.1} parent=135 // pred_check_branch
          %5512 = sbr.rel (%p5510) target = $region156
        $region155: #{decoder_forward.1} parent=135 // pred_region
          _
        $region156: #{decoder_forward.1} parent=135 // pred_fallthru
          _
      $region136: #{decoder_forward.1} parent=5 // pred_fallthru
        _
      %p5513 = scmp.le.s32.totalorder 2, %s71
      // Predicated region
      $region157: #{decoder_forward.1} parent=5 // pred_check
        %p5514 = pneg %p5513
      $region158: #{decoder_forward.1} parent=5 // pred_check_branch
        %5516 = sbr.rel (%p5514) target = $region160
      $region159: #{decoder_forward.1} parent=5 // pred_region
        %s5517 = ssub.s32 %s71, 2
        // Predicated region
        $region161: #{decoder_forward.1} parent=159 // pred_check
          %p5518 = pneg %p856
        $region162: #{decoder_forward.1} parent=159 // pred_check_branch
          %5520 = sbr.rel (%p5518) target = $region164
        $region163: #{decoder_forward.1} parent=159 // pred_region
          %s5521 = sand.u32 %s841, 1
          %s5522 = scalar_lea.sflag [#allocation5], %s5521
          %s5523 = sand.u32 %s841, 1
          %s5524 = smul.addr %s5523, 8
          %s5525 = scalar_lea.vmem [#allocation4], %s5524
          %5526 = dma.done %s5522, 128
        $region164: #{decoder_forward.1} parent=159 // pred_fallthru
          _
        // Predicated region
        $region165: #{decoder_forward.1} parent=159 // pred_check
          %p5527 = pneg %p882
        $region166: #{decoder_forward.1} parent=159 // pred_check_branch
          %5529 = sbr.rel (%p5527) target = $region168
        $region167: #{decoder_forward.1} parent=159 // pred_region
          %p5530 = scmp.lt.s32.totalorder %s82, 1
          %s5531 = scalar_select %p5530, %s82, 1
          %s5532 = smul.addr %s5531, 8
          %s5533 = scalar_lea.vmem %s61, %s5532
        $region168: #{decoder_forward.1} parent=159 // pred_fallthru
          _
      $region160: #{decoder_forward.1} parent=5 // pred_fallthru
        _
    $region6: #{decoder_forward.1} parent=1 // loop_footer
      %s75 = sadd.s32 1, %s71
    $region7: #{decoder_forward.1} parent=1 // loop_footer_branch
      %70 = sbr.rel target = $region3
    $region8: #{decoder_forward.1} parent=1 // loop_exit
      _
    %5534 = vsyncpa [#allocation5], 1
    %s5535 = scalar_lea.sflag [#allocation5], 1
    %5536 = vsyncpa %s5535, 1

</llo_original>
